<compile_context>
chip_gen: v5e
topology: v5e:2x2
jax: 0.10.0
libtpu: 0.0.40
codegen_flags: <defaults>
</compile_context>

<pallas_src>
import jax
import jax.numpy as jnp
from jax.experimental import pallas as pl
from jax.experimental.pallas import tpu as pltpu


# ServoNet conv stack: five 3x3 convs, (Cout, Cin, stride).
_A, _B, _C, _D = 24, 36, 48, 64
CONV_SPECS = [(_A, 3, 2), (_B, _A, 2), (_C, _B, 1), (_D, _C, 1), (10, _D, 1)]


def _conv_out_hw(h, w):
    for _, _, s in CONV_SPECS:
        h = (h - 3) // s + 1
        w = (w - 3) // s + 1
    return h, w


def _full_spec(shape):
    nd = len(shape)
    return pl.BlockSpec(shape, lambda i, _nd=nd: (0,) * _nd)


# --------------------------- fused forward kernel -------------------------- #
def _build_kernel(batch, height, width):
    f32, bf16 = jnp.float32, jnp.bfloat16

    # Static per-layer spatial sizes.
    oh0, ow0 = (height - 3) // 2 + 1, (width - 3) // 2 + 1   # conv0 output
    n0h, n0w = (oh0 + 1) // 2, (ow0 + 1) // 2                # s2d cells of conv0 out
    oh1, ow1 = (oh0 - 3) // 2 + 1, (ow0 - 3) // 2 + 1        # conv1 output

    def kernel(xs4_ref,
               w0_ref, b0_ref, w1_ref, b1_ref, w2_ref, b2_ref,
               w3_ref, b3_ref, w4_ref, b4_ref,
               wf1_ref, bf1_ref, wf2_ref, bf2_ref,
               out_ref):

        def conv_from_taps(taps, w_ref, b_ref):
            # taps: 9 bf16 arrays (B, OH, OW, Cin), tap t = 3*di + dj.
            # w_ref: (9, Cin, Cout) bf16.  b_ref: (1, Cout) f32.
            _, oh, ow, cin = taps[0].shape
            cout = w_ref.shape[-1]
            m = batch * oh * ow
            acc = jnp.zeros((m, cout), f32)
            for t, tap in enumerate(taps):
                acc = acc + jnp.dot(tap.reshape(m, cin), w_ref[t],
                                    preferred_element_type=f32)
            acc = acc + b_ref[...]
            return acc.reshape(batch, oh, ow, cout).astype(bf16)

        # ---- conv0: 3x3, stride 2, read from the space-to-depth-by-4 input,
        # written as four space-to-depth-by-2 channel blocks a0[(p, q)] so that
        # conv1's stride-2 taps become contiguous slices.
        a0 = {}
        for p in range(2):
            for q in range(2):
                taps = []
                for di in range(3):
                    for dj in range(3):
                        ay, ry = divmod(2 * p + di, 4)
                        ax, rx = divmod(2 * q + dj, 4)
                        taps.append(xs4_ref[ry * 4 + rx, :,
                                            ay:ay + n0h, ax:ax + n0w, :])
                a0[(p, q)] = conv_from_taps(taps, w0_ref, b0_ref)

        # ---- conv1: 3x3, stride 2; every tap is a contiguous slice of one of
        # the four s2d blocks (cell offset di//2, dj//2; block di%2, dj%2).
        taps = []
        for di in range(3):
            for dj in range(3):
                blk = a0[(di % 2, dj % 2)]
                taps.append(blk[:, di // 2:di // 2 + oh1,
                                dj // 2:dj // 2 + ow1, :])
        act = conv_from_taps(taps, w1_ref, b1_ref)

        # ---- conv2..conv4: plain 3x3 stride-1 convs.
        for w_ref, b_ref in ((w2_ref, b2_ref), (w3_ref, b3_ref),
                             (w4_ref, b4_ref)):
            oh, ow = act.shape[1] - 2, act.shape[2] - 2
            taps = [act[:, di:di + oh, dj:dj + ow, :]
                    for di in range(3) for dj in range(3)]
            act = conv_from_taps(taps, w_ref, b_ref)

        # ---- classifier: Linear(flat_fts, 10) -> Linear(10, 1).
        # NHWC flatten; wf1 columns were pre-permuted at init so this matches
        # PyTorch's view(-1, flat_fts) over (C, H, W).
        flat = act.reshape(batch, -1)
        h = (jnp.dot(flat, wf1_ref[...], preferred_element_type=f32)
             + bf1_ref[...])
        # fc2 on the VPU: elementwise mul + cross-lane reduce (no N=1 matmul).
        out = jnp.sum(h * wf2_ref[...], axis=-1, keepdims=True) + bf2_ref[...]
        out_ref[...] = out

    return kernel


def servonet_forward(params, x_nchw):
    """ServoNet.forward: 5 convs + 2 linears, no nonlinearities."""
    batch, _, height, width = x_nchw.shape
    oh0, ow0 = (height - 3) // 2 + 1, (width - 3) // 2 + 1
    n0h, n0w = (oh0 + 1) // 2, (ow0 + 1) // 2
    nch = max((height + 3) // 4, n0h + 1)
    ncw = max((width + 3) // 4, n0w + 1)

    # Space-to-depth-by-4 relayout of the input (pure layout glue under jit;
    # replaces the old HBM-materialized im2col).
    x = jnp.transpose(x_nchw, (0, 2, 3, 1))                               # NHWC
    x = jnp.pad(x, ((0, 0), (0, 4 * nch - height),
                    (0, 4 * ncw - width), (0, 0)))
    x = x.reshape(batch, nch, 4, ncw, 4, 3)
    x = jnp.transpose(x, (2, 4, 0, 1, 3, 5))               # (ry, rx, B, Yc, Xc, C)
    xs4 = x.reshape(16, batch, nch, ncw, 3).astype(jnp.bfloat16)

    inputs = [xs4]
    for i in range(len(CONV_SPECS)):
        inputs += [params[f"w{i}"], params[f"b{i}"]]
    inputs += [params["wf1"], params["bf1"], params["wf2"], params["bf2"]]

    return pl.pallas_call(
        _build_kernel(batch, height, width),
        out_shape=jax.ShapeDtypeStruct((batch, 1), jnp.float32),
        grid=(1,),
        in_specs=[_full_spec(a.shape) for a in inputs],
        out_specs=_full_spec((batch, 1)),
        compiler_params=pltpu.CompilerParams(
            dimension_semantics=("arbitrary",)),
        # TODO(synk): for large batch / image sizes, tile the conv M dimension
        # over a "parallel" grid axis (megacore on v7x) instead of grid=(1,).
    )(*inputs)


# ------------------------------ parameters --------------------------------- #
def init_raw_params(key, shape_hw):
    """Synthetic parameters in PyTorch layout (Conv2d OIHW, Linear (out, in))."""
    h, w = shape_hw
    raw = {}
    for i, (cout, cin, _) in enumerate(CONV_SPECS):
        key, kw_, kb_ = jax.random.split(key, 3)
        raw[f"conv{i}_w"] = (jax.random.normal(kw_, (cout, cin, 3, 3),
                                               jnp.float32)
                             / jnp.sqrt(float(cin * 9)))
        raw[f"conv{i}_b"] = 0.1 * jax.random.normal(kb_, (cout,), jnp.float32)
    oh, ow = _conv_out_hw(h, w)
    flat_fts = CONV_SPECS[-1][0] * oh * ow
    key, k1, k2, k3, k4 = jax.random.split(key, 5)
    raw["fc1_w"] = (jax.random.normal(k1, (10, flat_fts), jnp.float32)
                    / jnp.sqrt(float(flat_fts)))
    raw["fc1_b"] = 0.1 * jax.random.normal(k2, (10,), jnp.float32)
    raw["fc2_w"] = jax.random.normal(k3, (1, 10), jnp.float32) / jnp.sqrt(10.0)
    raw["fc2_b"] = 0.1 * jax.random.normal(k4, (1,), jnp.float32)
    return raw


def prepare_params(raw, shape_hw):
    """One-time conversion to kernel layouts (all transposes hoisted to init)."""
    h, w = shape_hw
    oh, ow = _conv_out_hw(h, w)
    c_last = CONV_SPECS[-1][0]
    flat_fts = c_last * oh * ow
    params = {}
    for i, (cout, cin, _) in enumerate(CONV_SPECS):
        wmat = jnp.transpose(raw[f"conv{i}_w"], (2, 3, 1, 0))   # (3,3,Cin,Cout)
        params[f"w{i}"] = wmat.reshape(9, cin, cout).astype(jnp.bfloat16)
        params[f"b{i}"] = raw[f"conv{i}_b"].reshape(1, cout).astype(jnp.float32)
    # fc1: permute input dim from PyTorch's (C,H,W) flatten to NHWC (H,W,C),
    # and pre-transpose to (in, out).
    wf1 = raw["fc1_w"].reshape(10, c_last, oh, ow)
    wf1 = jnp.transpose(wf1, (0, 2, 3, 1)).reshape(10, flat_fts)
    params["wf1"] = jnp.transpose(wf1).astype(jnp.bfloat16)      # (flat_fts, 10)
    params["bf1"] = raw["fc1_b"].reshape(1, 10).astype(jnp.float32)
    params["wf2"] = raw["fc2_w"].astype(jnp.float32)             # (1, 10) VPU path
    params["bf2"] = raw["fc2_b"].reshape(1, 1).astype(jnp.float32)
    return params


# --------------------------- pure-JAX reference ----------------------------- #
def reference_forward(raw, x_nchw):
    hi = jax.lax.Precision.HIGHEST
    x = x_nchw
    for i, (_, _, s) in enumerate(CONV_SPECS):
        x = jax.lax.conv_general_dilated(
            x, raw[f"conv{i}_w"], window_strides=(s, s), padding="VALID",
            dimension_numbers=("NCHW", "OIHW", "NCHW"), precision=hi)
        x = x + raw[f"conv{i}_b"].reshape(1, -1, 1, 1)
    flat = x.reshape(x.shape[0], -1)                # PyTorch .view(-1, flat_fts)
    h = jnp.dot(flat, raw["fc1_w"].T, precision=hi) + raw["fc1_b"]
    return jnp.dot(h, raw["fc2_w"].T, precision=hi) + raw["fc2_b"]


if __name__ == "__main__":
    # 32x32 input: conv stack yields 1x1 spatial, flat_fts = 10.
    shape_hw = (32, 32)
    key = jax.random.PRNGKey(0)
    key, pkey, xkey = jax.random.split(key, 3)
    raw = init_raw_params(pkey, shape_hw)
    params = prepare_params(raw, shape_hw)
    x = jax.random.normal(xkey, (2, 3, shape_hw[0], shape_hw[1]), jnp.float32)

    fwd = jax.jit(servonet_forward)
    out = jax.block_until_ready(fwd(params, x))
    assert out.shape == (2, 1), out.shape

    # Loose-tolerance sanity check (kernel uses bf16 operands, f32 accumulate).
    ref = reference_forward(raw, x)
    assert bool(jnp.allclose(out, ref, rtol=0.1, atol=0.1)), (out, ref)

    print("KERNEL_OK")
</pallas_src>

<mosaic_0001>
module attributes {stable_mosaic.version = 11 : i64} {
  func.func @kernel(%arg0: i32, %arg1: memref<16x2x9x9x3xbf16, #tpu.memory_space<vmem>>, %arg2: memref<9x3x24xbf16, #tpu.memory_space<vmem>>, %arg3: memref<1x24xf32, #tpu.memory_space<vmem>>, %arg4: memref<9x24x36xbf16, #tpu.memory_space<vmem>>, %arg5: memref<1x36xf32, #tpu.memory_space<vmem>>, %arg6: memref<9x36x48xbf16, #tpu.memory_space<vmem>>, %arg7: memref<1x48xf32, #tpu.memory_space<vmem>>, %arg8: memref<9x48x64xbf16, #tpu.memory_space<vmem>>, %arg9: memref<1x64xf32, #tpu.memory_space<vmem>>, %arg10: memref<9x64x10xbf16, #tpu.memory_space<vmem>>, %arg11: memref<1x10xf32, #tpu.memory_space<vmem>>, %arg12: memref<10x10xbf16, #tpu.memory_space<vmem>>, %arg13: memref<1x10xf32, #tpu.memory_space<vmem>>, %arg14: memref<1x10xf32, #tpu.memory_space<vmem>>, %arg15: memref<1x1xf32, #tpu.memory_space<vmem>>, %arg16: memref<2x1xf32, #tpu.memory_space<vmem>>) attributes {dimension_semantics = [#tpu.dimension_semantics<arbitrary>], iteration_bounds = array<i64: 1>, scalar_prefetch = 0 : i64, scratch_operands = 0 : i64, tpu.core_type = #tpu.core_type<tc>, window_params = [{pipeline_mode = #tpu.pipeline_mode<synchronous>, transform_indices = @transform_0, window_bounds = array<i64: 16, 2, 9, 9, 3>}, {pipeline_mode = #tpu.pipeline_mode<synchronous>, transform_indices = @transform_1, window_bounds = array<i64: 9, 3, 24>}, {pipeline_mode = #tpu.pipeline_mode<synchronous>, transform_indices = @transform_2, window_bounds = array<i64: 1, 24>}, {pipeline_mode = #tpu.pipeline_mode<synchronous>, transform_indices = @transform_3, window_bounds = array<i64: 9, 24, 36>}, {pipeline_mode = #tpu.pipeline_mode<synchronous>, transform_indices = @transform_4, window_bounds = array<i64: 1, 36>}, {pipeline_mode = #tpu.pipeline_mode<synchronous>, transform_indices = @transform_5, window_bounds = array<i64: 9, 36, 48>}, {pipeline_mode = #tpu.pipeline_mode<synchronous>, transform_indices = @transform_6, window_bounds = array<i64: 1, 48>}, {pipeline_mode = #tpu.pipeline_mode<synchronous>, transform_indices = @transform_7, window_bounds = array<i64: 9, 48, 64>}, {pipeline_mode = #tpu.pipeline_mode<synchronous>, transform_indices = @transform_8, window_bounds = array<i64: 1, 64>}, {pipeline_mode = #tpu.pipeline_mode<synchronous>, transform_indices = @transform_9, window_bounds = array<i64: 9, 64, 10>}, {pipeline_mode = #tpu.pipeline_mode<synchronous>, transform_indices = @transform_10, window_bounds = array<i64: 1, 10>}, {pipeline_mode = #tpu.pipeline_mode<synchronous>, transform_indices = @transform_11, window_bounds = array<i64: 10, 10>}, {pipeline_mode = #tpu.pipeline_mode<synchronous>, transform_indices = @transform_12, window_bounds = array<i64: 1, 10>}, {pipeline_mode = #tpu.pipeline_mode<synchronous>, transform_indices = @transform_13, window_bounds = array<i64: 1, 10>}, {pipeline_mode = #tpu.pipeline_mode<synchronous>, transform_indices = @transform_14, window_bounds = array<i64: 1, 1>}, {pipeline_mode = #tpu.pipeline_mode<synchronous>, transform_indices = @transform_15, window_bounds = array<i64: 2, 1>}]} {
    %c0 = arith.constant 0 : index
    %c0_0 = arith.constant 0 : index
    %c0_1 = arith.constant 0 : index
    %c0_2 = arith.constant 0 : index
    %c0_3 = arith.constant 0 : index
    %0 = vector.load %arg1[%c0, %c0_0, %c0_1, %c0_2, %c0_3] : memref<16x2x9x9x3xbf16, #tpu.memory_space<vmem>>, vector<1x2x8x8x3xbf16>
    %1 = vector.shape_cast %0 : vector<1x2x8x8x3xbf16> to vector<2x8x8x3xbf16>
    %c1 = arith.constant 1 : index
    %c0_4 = arith.constant 0 : index
    %c0_5 = arith.constant 0 : index
    %c0_6 = arith.constant 0 : index
    %c0_7 = arith.constant 0 : index
    %2 = vector.load %arg1[%c1, %c0_4, %c0_5, %c0_6, %c0_7] : memref<16x2x9x9x3xbf16, #tpu.memory_space<vmem>>, vector<1x2x8x8x3xbf16>
    %3 = vector.shape_cast %2 : vector<1x2x8x8x3xbf16> to vector<2x8x8x3xbf16>
    %c2 = arith.constant 2 : index
    %c0_8 = arith.constant 0 : index
    %c0_9 = arith.constant 0 : index
    %c0_10 = arith.constant 0 : index
    %c0_11 = arith.constant 0 : index
    %4 = vector.load %arg1[%c2, %c0_8, %c0_9, %c0_10, %c0_11] : memref<16x2x9x9x3xbf16, #tpu.memory_space<vmem>>, vector<1x2x8x8x3xbf16>
    %5 = vector.shape_cast %4 : vector<1x2x8x8x3xbf16> to vector<2x8x8x3xbf16>
    %c4 = arith.constant 4 : index
    %c0_12 = arith.constant 0 : index
    %c0_13 = arith.constant 0 : index
    %c0_14 = arith.constant 0 : index
    %c0_15 = arith.constant 0 : index
    %6 = vector.load %arg1[%c4, %c0_12, %c0_13, %c0_14, %c0_15] : memref<16x2x9x9x3xbf16, #tpu.memory_space<vmem>>, vector<1x2x8x8x3xbf16>
    %7 = vector.shape_cast %6 : vector<1x2x8x8x3xbf16> to vector<2x8x8x3xbf16>
    %c5 = arith.constant 5 : index
    %c0_16 = arith.constant 0 : index
    %c0_17 = arith.constant 0 : index
    %c0_18 = arith.constant 0 : index
    %c0_19 = arith.constant 0 : index
    %8 = vector.load %arg1[%c5, %c0_16, %c0_17, %c0_18, %c0_19] : memref<16x2x9x9x3xbf16, #tpu.memory_space<vmem>>, vector<1x2x8x8x3xbf16>
    %9 = vector.shape_cast %8 : vector<1x2x8x8x3xbf16> to vector<2x8x8x3xbf16>
    %c6 = arith.constant 6 : index
    %c0_20 = arith.constant 0 : index
    %c0_21 = arith.constant 0 : index
    %c0_22 = arith.constant 0 : index
    %c0_23 = arith.constant 0 : index
    %10 = vector.load %arg1[%c6, %c0_20, %c0_21, %c0_22, %c0_23] : memref<16x2x9x9x3xbf16, #tpu.memory_space<vmem>>, vector<1x2x8x8x3xbf16>
    %11 = vector.shape_cast %10 : vector<1x2x8x8x3xbf16> to vector<2x8x8x3xbf16>
    %c8 = arith.constant 8 : index
    %c0_24 = arith.constant 0 : index
    %c0_25 = arith.constant 0 : index
    %c0_26 = arith.constant 0 : index
    %c0_27 = arith.constant 0 : index
    %12 = vector.load %arg1[%c8, %c0_24, %c0_25, %c0_26, %c0_27] : memref<16x2x9x9x3xbf16, #tpu.memory_space<vmem>>, vector<1x2x8x8x3xbf16>
    %13 = vector.shape_cast %12 : vector<1x2x8x8x3xbf16> to vector<2x8x8x3xbf16>
    %c9 = arith.constant 9 : index
    %c0_28 = arith.constant 0 : index
    %c0_29 = arith.constant 0 : index
    %c0_30 = arith.constant 0 : index
    %c0_31 = arith.constant 0 : index
    %14 = vector.load %arg1[%c9, %c0_28, %c0_29, %c0_30, %c0_31] : memref<16x2x9x9x3xbf16, #tpu.memory_space<vmem>>, vector<1x2x8x8x3xbf16>
    %15 = vector.shape_cast %14 : vector<1x2x8x8x3xbf16> to vector<2x8x8x3xbf16>
    %c10 = arith.constant 10 : index
    %c0_32 = arith.constant 0 : index
    %c0_33 = arith.constant 0 : index
    %c0_34 = arith.constant 0 : index
    %c0_35 = arith.constant 0 : index
    %16 = vector.load %arg1[%c10, %c0_32, %c0_33, %c0_34, %c0_35] : memref<16x2x9x9x3xbf16, #tpu.memory_space<vmem>>, vector<1x2x8x8x3xbf16>
    %17 = vector.shape_cast %16 : vector<1x2x8x8x3xbf16> to vector<2x8x8x3xbf16>
    %cst = arith.constant 0.000000e+00 : f32
    %18 = vector.broadcast %cst : f32 to vector<128x24xf32>
    %19 = vector.shape_cast %1 : vector<2x8x8x3xbf16> to vector<128x3xbf16>
    %c0_36 = arith.constant 0 : index
    %c0_37 = arith.constant 0 : index
    %c0_38 = arith.constant 0 : index
    %20 = vector.load %arg2[%c0_36, %c0_37, %c0_38] : memref<9x3x24xbf16, #tpu.memory_space<vmem>>, vector<1x3x24xbf16>
    %21 = vector.shape_cast %20 : vector<1x3x24xbf16> to vector<3x24xbf16>
    %cst_39 = arith.constant dense<0.000000e+00> : vector<128x24xf32>
    %22 = tpu.matmul %19, %21, %cst_39 {dimension_numbers = #tpu.dot_dimension_numbers<[1], [0], [0], [1], [0, 0, 1, 1], [], []>} : vector<128x3xbf16>, vector<3x24xbf16>, vector<128x24xf32> -> vector<128x24xf32>
    %23 = arith.addf %18, %22 : vector<128x24xf32>
    %24 = vector.shape_cast %3 : vector<2x8x8x3xbf16> to vector<128x3xbf16>
    %c1_40 = arith.constant 1 : index
    %c0_41 = arith.constant 0 : index
    %c0_42 = arith.constant 0 : index
    %25 = vector.load %arg2[%c1_40, %c0_41, %c0_42] : memref<9x3x24xbf16, #tpu.memory_space<vmem>>, vector<1x3x24xbf16>
    %26 = vector.shape_cast %25 : vector<1x3x24xbf16> to vector<3x24xbf16>
    %cst_43 = arith.constant dense<0.000000e+00> : vector<128x24xf32>
    %27 = tpu.matmul %24, %26, %cst_43 {dimension_numbers = #tpu.dot_dimension_numbers<[1], [0], [0], [1], [0, 0, 1, 1], [], []>} : vector<128x3xbf16>, vector<3x24xbf16>, vector<128x24xf32> -> vector<128x24xf32>
    %28 = arith.addf %23, %27 : vector<128x24xf32>
    %29 = vector.shape_cast %5 : vector<2x8x8x3xbf16> to vector<128x3xbf16>
    %c2_44 = arith.constant 2 : index
    %c0_45 = arith.constant 0 : index
    %c0_46 = arith.constant 0 : index
    %30 = vector.load %arg2[%c2_44, %c0_45, %c0_46] : memref<9x3x24xbf16, #tpu.memory_space<vmem>>, vector<1x3x24xbf16>
    %31 = vector.shape_cast %30 : vector<1x3x24xbf16> to vector<3x24xbf16>
    %cst_47 = arith.constant dense<0.000000e+00> : vector<128x24xf32>
    %32 = tpu.matmul %29, %31, %cst_47 {dimension_numbers = #tpu.dot_dimension_numbers<[1], [0], [0], [1], [0, 0, 1, 1], [], []>} : vector<128x3xbf16>, vector<3x24xbf16>, vector<128x24xf32> -> vector<128x24xf32>
    %33 = arith.addf %28, %32 : vector<128x24xf32>
    %34 = vector.shape_cast %7 : vector<2x8x8x3xbf16> to vector<128x3xbf16>
    %c3 = arith.constant 3 : index
    %c0_48 = arith.constant 0 : index
    %c0_49 = arith.constant 0 : index
    %35 = vector.load %arg2[%c3, %c0_48, %c0_49] : memref<9x3x24xbf16, #tpu.memory_space<vmem>>, vector<1x3x24xbf16>
    %36 = vector.shape_cast %35 : vector<1x3x24xbf16> to vector<3x24xbf16>
    %cst_50 = arith.constant dense<0.000000e+00> : vector<128x24xf32>
    %37 = tpu.matmul %34, %36, %cst_50 {dimension_numbers = #tpu.dot_dimension_numbers<[1], [0], [0], [1], [0, 0, 1, 1], [], []>} : vector<128x3xbf16>, vector<3x24xbf16>, vector<128x24xf32> -> vector<128x24xf32>
    %38 = arith.addf %33, %37 : vector<128x24xf32>
    %39 = vector.shape_cast %9 : vector<2x8x8x3xbf16> to vector<128x3xbf16>
    %c4_51 = arith.constant 4 : index
    %c0_52 = arith.constant 0 : index
    %c0_53 = arith.constant 0 : index
    %40 = vector.load %arg2[%c4_51, %c0_52, %c0_53] : memref<9x3x24xbf16, #tpu.memory_space<vmem>>, vector<1x3x24xbf16>
    %41 = vector.shape_cast %40 : vector<1x3x24xbf16> to vector<3x24xbf16>
    %cst_54 = arith.constant dense<0.000000e+00> : vector<128x24xf32>
    %42 = tpu.matmul %39, %41, %cst_54 {dimension_numbers = #tpu.dot_dimension_numbers<[1], [0], [0], [1], [0, 0, 1, 1], [], []>} : vector<128x3xbf16>, vector<3x24xbf16>, vector<128x24xf32> -> vector<128x24xf32>
    %43 = arith.addf %38, %42 : vector<128x24xf32>
    %44 = vector.shape_cast %11 : vector<2x8x8x3xbf16> to vector<128x3xbf16>
    %c5_55 = arith.constant 5 : index
    %c0_56 = arith.constant 0 : index
    %c0_57 = arith.constant 0 : index
    %45 = vector.load %arg2[%c5_55, %c0_56, %c0_57] : memref<9x3x24xbf16, #tpu.memory_space<vmem>>, vector<1x3x24xbf16>
    %46 = vector.shape_cast %45 : vector<1x3x24xbf16> to vector<3x24xbf16>
    %cst_58 = arith.constant dense<0.000000e+00> : vector<128x24xf32>
    %47 = tpu.matmul %44, %46, %cst_58 {dimension_numbers = #tpu.dot_dimension_numbers<[1], [0], [0], [1], [0, 0, 1, 1], [], []>} : vector<128x3xbf16>, vector<3x24xbf16>, vector<128x24xf32> -> vector<128x24xf32>
    %48 = arith.addf %43, %47 : vector<128x24xf32>
    %49 = vector.shape_cast %13 : vector<2x8x8x3xbf16> to vector<128x3xbf16>
    %c6_59 = arith.constant 6 : index
    %c0_60 = arith.constant 0 : index
    %c0_61 = arith.constant 0 : index
    %50 = vector.load %arg2[%c6_59, %c0_60, %c0_61] : memref<9x3x24xbf16, #tpu.memory_space<vmem>>, vector<1x3x24xbf16>
    %51 = vector.shape_cast %50 : vector<1x3x24xbf16> to vector<3x24xbf16>
    %cst_62 = arith.constant dense<0.000000e+00> : vector<128x24xf32>
    %52 = tpu.matmul %49, %51, %cst_62 {dimension_numbers = #tpu.dot_dimension_numbers<[1], [0], [0], [1], [0, 0, 1, 1], [], []>} : vector<128x3xbf16>, vector<3x24xbf16>, vector<128x24xf32> -> vector<128x24xf32>
    %53 = arith.addf %48, %52 : vector<128x24xf32>
    %54 = vector.shape_cast %15 : vector<2x8x8x3xbf16> to vector<128x3xbf16>
    %c7 = arith.constant 7 : index
    %c0_63 = arith.constant 0 : index
    %c0_64 = arith.constant 0 : index
    %55 = vector.load %arg2[%c7, %c0_63, %c0_64] : memref<9x3x24xbf16, #tpu.memory_space<vmem>>, vector<1x3x24xbf16>
    %56 = vector.shape_cast %55 : vector<1x3x24xbf16> to vector<3x24xbf16>
    %cst_65 = arith.constant dense<0.000000e+00> : vector<128x24xf32>
    %57 = tpu.matmul %54, %56, %cst_65 {dimension_numbers = #tpu.dot_dimension_numbers<[1], [0], [0], [1], [0, 0, 1, 1], [], []>} : vector<128x3xbf16>, vector<3x24xbf16>, vector<128x24xf32> -> vector<128x24xf32>
    %58 = arith.addf %53, %57 : vector<128x24xf32>
    %59 = vector.shape_cast %17 : vector<2x8x8x3xbf16> to vector<128x3xbf16>
    %c8_66 = arith.constant 8 : index
    %c0_67 = arith.constant 0 : index
    %c0_68 = arith.constant 0 : index
    %60 = vector.load %arg2[%c8_66, %c0_67, %c0_68] : memref<9x3x24xbf16, #tpu.memory_space<vmem>>, vector<1x3x24xbf16>
    %61 = vector.shape_cast %60 : vector<1x3x24xbf16> to vector<3x24xbf16>
    %cst_69 = arith.constant dense<0.000000e+00> : vector<128x24xf32>
    %62 = tpu.matmul %59, %61, %cst_69 {dimension_numbers = #tpu.dot_dimension_numbers<[1], [0], [0], [1], [0, 0, 1, 1], [], []>} : vector<128x3xbf16>, vector<3x24xbf16>, vector<128x24xf32> -> vector<128x24xf32>
    %63 = arith.addf %58, %62 : vector<128x24xf32>
    %c0_70 = arith.constant 0 : index
    %c0_71 = arith.constant 0 : index
    %64 = vector.load %arg3[%c0_70, %c0_71] : memref<1x24xf32, #tpu.memory_space<vmem>>, vector<1x24xf32>
    %65 = vector.broadcast %64 : vector<1x24xf32> to vector<128x24xf32>
    %66 = arith.addf %63, %65 : vector<128x24xf32>
    %67 = vector.shape_cast %66 : vector<128x24xf32> to vector<2x8x8x24xf32>
    %68 = arith.truncf %67 : vector<2x8x8x24xf32> to vector<2x8x8x24xbf16>
    %c2_72 = arith.constant 2 : index
    %c0_73 = arith.constant 0 : index
    %c0_74 = arith.constant 0 : index
    %c0_75 = arith.constant 0 : index
    %c0_76 = arith.constant 0 : index
    %69 = vector.load %arg1[%c2_72, %c0_73, %c0_74, %c0_75, %c0_76] : memref<16x2x9x9x3xbf16, #tpu.memory_space<vmem>>, vector<1x2x8x8x3xbf16>
    %70 = vector.shape_cast %69 : vector<1x2x8x8x3xbf16> to vector<2x8x8x3xbf16>
    %c3_77 = arith.constant 3 : index
    %c0_78 = arith.constant 0 : index
    %c0_79 = arith.constant 0 : index
    %c0_80 = arith.constant 0 : index
    %c0_81 = arith.constant 0 : index
    %71 = vector.load %arg1[%c3_77, %c0_78, %c0_79, %c0_80, %c0_81] : memref<16x2x9x9x3xbf16, #tpu.memory_space<vmem>>, vector<1x2x8x8x3xbf16>
    %72 = vector.shape_cast %71 : vector<1x2x8x8x3xbf16> to vector<2x8x8x3xbf16>
    %c0_82 = arith.constant 0 : index
    %c0_83 = arith.constant 0 : index
    %c0_84 = arith.constant 0 : index
    %c1_85 = arith.constant 1 : index
    %c0_86 = arith.constant 0 : index
    %73 = vector.load %arg1[%c0_82, %c0_83, %c0_84, %c1_85, %c0_86] : memref<16x2x9x9x3xbf16, #tpu.memory_space<vmem>>, vector<1x2x8x8x3xbf16>
    %74 = vector.shape_cast %73 : vector<1x2x8x8x3xbf16> to vector<2x8x8x3xbf16>
    %c6_87 = arith.constant 6 : index
    %c0_88 = arith.constant 0 : index
    %c0_89 = arith.constant 0 : index
    %c0_90 = arith.constant 0 : index
    %c0_91 = arith.constant 0 : index
    %75 = vector.load %arg1[%c6_87, %c0_88, %c0_89, %c0_90, %c0_91] : memref<16x2x9x9x3xbf16, #tpu.memory_space<vmem>>, vector<1x2x8x8x3xbf16>
    %76 = vector.shape_cast %75 : vector<1x2x8x8x3xbf16> to vector<2x8x8x3xbf16>
    %c7_92 = arith.constant 7 : index
    %c0_93 = arith.constant 0 : index
    %c0_94 = arith.constant 0 : index
    %c0_95 = arith.constant 0 : index
    %c0_96 = arith.constant 0 : index
    %77 = vector.load %arg1[%c7_92, %c0_93, %c0_94, %c0_95, %c0_96] : memref<16x2x9x9x3xbf16, #tpu.memory_space<vmem>>, vector<1x2x8x8x3xbf16>
    %78 = vector.shape_cast %77 : vector<1x2x8x8x3xbf16> to vector<2x8x8x3xbf16>
    %c4_97 = arith.constant 4 : index
    %c0_98 = arith.constant 0 : index
    %c0_99 = arith.constant 0 : index
    %c1_100 = arith.constant 1 : index
    %c0_101 = arith.constant 0 : index
    %79 = vector.load %arg1[%c4_97, %c0_98, %c0_99, %c1_100, %c0_101] : memref<16x2x9x9x3xbf16, #tpu.memory_space<vmem>>, vector<1x2x8x8x3xbf16>
    %80 = vector.shape_cast %79 : vector<1x2x8x8x3xbf16> to vector<2x8x8x3xbf16>
    %c10_102 = arith.constant 10 : index
    %c0_103 = arith.constant 0 : index
    %c0_104 = arith.constant 0 : index
    %c0_105 = arith.constant 0 : index
    %c0_106 = arith.constant 0 : index
    %81 = vector.load %arg1[%c10_102, %c0_103, %c0_104, %c0_105, %c0_106] : memref<16x2x9x9x3xbf16, #tpu.memory_space<vmem>>, vector<1x2x8x8x3xbf16>
    %82 = vector.shape_cast %81 : vector<1x2x8x8x3xbf16> to vector<2x8x8x3xbf16>
    %c11 = arith.constant 11 : index
    %c0_107 = arith.constant 0 : index
    %c0_108 = arith.constant 0 : index
    %c0_109 = arith.constant 0 : index
    %c0_110 = arith.constant 0 : index
    %83 = vector.load %arg1[%c11, %c0_107, %c0_108, %c0_109, %c0_110] : memref<16x2x9x9x3xbf16, #tpu.memory_space<vmem>>, vector<1x2x8x8x3xbf16>
    %84 = vector.shape_cast %83 : vector<1x2x8x8x3xbf16> to vector<2x8x8x3xbf16>
    %c8_111 = arith.constant 8 : index
    %c0_112 = arith.constant 0 : index
    %c0_113 = arith.constant 0 : index
    %c1_114 = arith.constant 1 : index
    %c0_115 = arith.constant 0 : index
    %85 = vector.load %arg1[%c8_111, %c0_112, %c0_113, %c1_114, %c0_115] : memref<16x2x9x9x3xbf16, #tpu.memory_space<vmem>>, vector<1x2x8x8x3xbf16>
    %86 = vector.shape_cast %85 : vector<1x2x8x8x3xbf16> to vector<2x8x8x3xbf16>
    %cst_116 = arith.constant 0.000000e+00 : f32
    %87 = vector.broadcast %cst_116 : f32 to vector<128x24xf32>
    %88 = vector.shape_cast %70 : vector<2x8x8x3xbf16> to vector<128x3xbf16>
    %c0_117 = arith.constant 0 : index
    %c0_118 = arith.constant 0 : index
    %c0_119 = arith.constant 0 : index
    %89 = vector.load %arg2[%c0_117, %c0_118, %c0_119] : memref<9x3x24xbf16, #tpu.memory_space<vmem>>, vector<1x3x24xbf16>
    %90 = vector.shape_cast %89 : vector<1x3x24xbf16> to vector<3x24xbf16>
    %cst_120 = arith.constant dense<0.000000e+00> : vector<128x24xf32>
    %91 = tpu.matmul %88, %90, %cst_120 {dimension_numbers = #tpu.dot_dimension_numbers<[1], [0], [0], [1], [0, 0, 1, 1], [], []>} : vector<128x3xbf16>, vector<3x24xbf16>, vector<128x24xf32> -> vector<128x24xf32>
    %92 = arith.addf %87, %91 : vector<128x24xf32>
    %93 = vector.shape_cast %72 : vector<2x8x8x3xbf16> to vector<128x3xbf16>
    %c1_121 = arith.constant 1 : index
    %c0_122 = arith.constant 0 : index
    %c0_123 = arith.constant 0 : index
    %94 = vector.load %arg2[%c1_121, %c0_122, %c0_123] : memref<9x3x24xbf16, #tpu.memory_space<vmem>>, vector<1x3x24xbf16>
    %95 = vector.shape_cast %94 : vector<1x3x24xbf16> to vector<3x24xbf16>
    %cst_124 = arith.constant dense<0.000000e+00> : vector<128x24xf32>
    %96 = tpu.matmul %93, %95, %cst_124 {dimension_numbers = #tpu.dot_dimension_numbers<[1], [0], [0], [1], [0, 0, 1, 1], [], []>} : vector<128x3xbf16>, vector<3x24xbf16>, vector<128x24xf32> -> vector<128x24xf32>
    %97 = arith.addf %92, %96 : vector<128x24xf32>
    %98 = vector.shape_cast %74 : vector<2x8x8x3xbf16> to vector<128x3xbf16>
    %c2_125 = arith.constant 2 : index
    %c0_126 = arith.constant 0 : index
    %c0_127 = arith.constant 0 : index
    %99 = vector.load %arg2[%c2_125, %c0_126, %c0_127] : memref<9x3x24xbf16, #tpu.memory_space<vmem>>, vector<1x3x24xbf16>
    %100 = vector.shape_cast %99 : vector<1x3x24xbf16> to vector<3x24xbf16>
    %cst_128 = arith.constant dense<0.000000e+00> : vector<128x24xf32>
    %101 = tpu.matmul %98, %100, %cst_128 {dimension_numbers = #tpu.dot_dimension_numbers<[1], [0], [0], [1], [0, 0, 1, 1], [], []>} : vector<128x3xbf16>, vector<3x24xbf16>, vector<128x24xf32> -> vector<128x24xf32>
    %102 = arith.addf %97, %101 : vector<128x24xf32>
    %103 = vector.shape_cast %76 : vector<2x8x8x3xbf16> to vector<128x3xbf16>
    %c3_129 = arith.constant 3 : index
    %c0_130 = arith.constant 0 : index
    %c0_131 = arith.constant 0 : index
    %104 = vector.load %arg2[%c3_129, %c0_130, %c0_131] : memref<9x3x24xbf16, #tpu.memory_space<vmem>>, vector<1x3x24xbf16>
    %105 = vector.shape_cast %104 : vector<1x3x24xbf16> to vector<3x24xbf16>
    %cst_132 = arith.constant dense<0.000000e+00> : vector<128x24xf32>
    %106 = tpu.matmul %103, %105, %cst_132 {dimension_numbers = #tpu.dot_dimension_numbers<[1], [0], [0], [1], [0, 0, 1, 1], [], []>} : vector<128x3xbf16>, vector<3x24xbf16>, vector<128x24xf32> -> vector<128x24xf32>
    %107 = arith.addf %102, %106 : vector<128x24xf32>
    %108 = vector.shape_cast %78 : vector<2x8x8x3xbf16> to vector<128x3xbf16>
    %c4_133 = arith.constant 4 : index
    %c0_134 = arith.constant 0 : index
    %c0_135 = arith.constant 0 : index
    %109 = vector.load %arg2[%c4_133, %c0_134, %c0_135] : memref<9x3x24xbf16, #tpu.memory_space<vmem>>, vector<1x3x24xbf16>
    %110 = vector.shape_cast %109 : vector<1x3x24xbf16> to vector<3x24xbf16>
    %cst_136 = arith.constant dense<0.000000e+00> : vector<128x24xf32>
    %111 = tpu.matmul %108, %110, %cst_136 {dimension_numbers = #tpu.dot_dimension_numbers<[1], [0], [0], [1], [0, 0, 1, 1], [], []>} : vector<128x3xbf16>, vector<3x24xbf16>, vector<128x24xf32> -> vector<128x24xf32>
    %112 = arith.addf %107, %111 : vector<128x24xf32>
    %113 = vector.shape_cast %80 : vector<2x8x8x3xbf16> to vector<128x3xbf16>
    %c5_137 = arith.constant 5 : index
    %c0_138 = arith.constant 0 : index
    %c0_139 = arith.constant 0 : index
    %114 = vector.load %arg2[%c5_137, %c0_138, %c0_139] : memref<9x3x24xbf16, #tpu.memory_space<vmem>>, vector<1x3x24xbf16>
    %115 = vector.shape_cast %114 : vector<1x3x24xbf16> to vector<3x24xbf16>
    %cst_140 = arith.constant dense<0.000000e+00> : vector<128x24xf32>
    %116 = tpu.matmul %113, %115, %cst_140 {dimension_numbers = #tpu.dot_dimension_numbers<[1], [0], [0], [1], [0, 0, 1, 1], [], []>} : vector<128x3xbf16>, vector<3x24xbf16>, vector<128x24xf32> -> vector<128x24xf32>
    %117 = arith.addf %112, %116 : vector<128x24xf32>
    %118 = vector.shape_cast %82 : vector<2x8x8x3xbf16> to vector<128x3xbf16>
    %c6_141 = arith.constant 6 : index
    %c0_142 = arith.constant 0 : index
    %c0_143 = arith.constant 0 : index
    %119 = vector.load %arg2[%c6_141, %c0_142, %c0_143] : memref<9x3x24xbf16, #tpu.memory_space<vmem>>, vector<1x3x24xbf16>
    %120 = vector.shape_cast %119 : vector<1x3x24xbf16> to vector<3x24xbf16>
    %cst_144 = arith.constant dense<0.000000e+00> : vector<128x24xf32>
    %121 = tpu.matmul %118, %120, %cst_144 {dimension_numbers = #tpu.dot_dimension_numbers<[1], [0], [0], [1], [0, 0, 1, 1], [], []>} : vector<128x3xbf16>, vector<3x24xbf16>, vector<128x24xf32> -> vector<128x24xf32>
    %122 = arith.addf %117, %121 : vector<128x24xf32>
    %123 = vector.shape_cast %84 : vector<2x8x8x3xbf16> to vector<128x3xbf16>
    %c7_145 = arith.constant 7 : index
    %c0_146 = arith.constant 0 : index
    %c0_147 = arith.constant 0 : index
    %124 = vector.load %arg2[%c7_145, %c0_146, %c0_147] : memref<9x3x24xbf16, #tpu.memory_space<vmem>>, vector<1x3x24xbf16>
    %125 = vector.shape_cast %124 : vector<1x3x24xbf16> to vector<3x24xbf16>
    %cst_148 = arith.constant dense<0.000000e+00> : vector<128x24xf32>
    %126 = tpu.matmul %123, %125, %cst_148 {dimension_numbers = #tpu.dot_dimension_numbers<[1], [0], [0], [1], [0, 0, 1, 1], [], []>} : vector<128x3xbf16>, vector<3x24xbf16>, vector<128x24xf32> -> vector<128x24xf32>
    %127 = arith.addf %122, %126 : vector<128x24xf32>
    %128 = vector.shape_cast %86 : vector<2x8x8x3xbf16> to vector<128x3xbf16>
    %c8_149 = arith.constant 8 : index
    %c0_150 = arith.constant 0 : index
    %c0_151 = arith.constant 0 : index
    %129 = vector.load %arg2[%c8_149, %c0_150, %c0_151] : memref<9x3x24xbf16, #tpu.memory_space<vmem>>, vector<1x3x24xbf16>
    %130 = vector.shape_cast %129 : vector<1x3x24xbf16> to vector<3x24xbf16>
    %cst_152 = arith.constant dense<0.000000e+00> : vector<128x24xf32>
    %131 = tpu.matmul %128, %130, %cst_152 {dimension_numbers = #tpu.dot_dimension_numbers<[1], [0], [0], [1], [0, 0, 1, 1], [], []>} : vector<128x3xbf16>, vector<3x24xbf16>, vector<128x24xf32> -> vector<128x24xf32>
    %132 = arith.addf %127, %131 : vector<128x24xf32>
    %c0_153 = arith.constant 0 : index
    %c0_154 = arith.constant 0 : index
    %133 = vector.load %arg3[%c0_153, %c0_154] : memref<1x24xf32, #tpu.memory_space<vmem>>, vector<1x24xf32>
    %134 = vector.broadcast %133 : vector<1x24xf32> to vector<128x24xf32>
    %135 = arith.addf %132, %134 : vector<128x24xf32>
    %136 = vector.shape_cast %135 : vector<128x24xf32> to vector<2x8x8x24xf32>
    %137 = arith.truncf %136 : vector<2x8x8x24xf32> to vector<2x8x8x24xbf16>
    %c8_155 = arith.constant 8 : index
    %c0_156 = arith.constant 0 : index
    %c0_157 = arith.constant 0 : index
    %c0_158 = arith.constant 0 : index
    %c0_159 = arith.constant 0 : index
    %138 = vector.load %arg1[%c8_155, %c0_156, %c0_157, %c0_158, %c0_159] : memref<16x2x9x9x3xbf16, #tpu.memory_space<vmem>>, vector<1x2x8x8x3xbf16>
    %139 = vector.shape_cast %138 : vector<1x2x8x8x3xbf16> to vector<2x8x8x3xbf16>
    %c9_160 = arith.constant 9 : index
    %c0_161 = arith.constant 0 : index
    %c0_162 = arith.constant 0 : index
    %c0_163 = arith.constant 0 : index
    %c0_164 = arith.constant 0 : index
    %140 = vector.load %arg1[%c9_160, %c0_161, %c0_162, %c0_163, %c0_164] : memref<16x2x9x9x3xbf16, #tpu.memory_space<vmem>>, vector<1x2x8x8x3xbf16>
    %141 = vector.shape_cast %140 : vector<1x2x8x8x3xbf16> to vector<2x8x8x3xbf16>
    %c10_165 = arith.constant 10 : index
    %c0_166 = arith.constant 0 : index
    %c0_167 = arith.constant 0 : index
    %c0_168 = arith.constant 0 : index
    %c0_169 = arith.constant 0 : index
    %142 = vector.load %arg1[%c10_165, %c0_166, %c0_167, %c0_168, %c0_169] : memref<16x2x9x9x3xbf16, #tpu.memory_space<vmem>>, vector<1x2x8x8x3xbf16>
    %143 = vector.shape_cast %142 : vector<1x2x8x8x3xbf16> to vector<2x8x8x3xbf16>
    %c12 = arith.constant 12 : index
    %c0_170 = arith.constant 0 : index
    %c0_171 = arith.constant 0 : index
    %c0_172 = arith.constant 0 : index
    %c0_173 = arith.constant 0 : index
    %144 = vector.load %arg1[%c12, %c0_170, %c0_171, %c0_172, %c0_173] : memref<16x2x9x9x3xbf16, #tpu.memory_space<vmem>>, vector<1x2x8x8x3xbf16>
    %145 = vector.shape_cast %144 : vector<1x2x8x8x3xbf16> to vector<2x8x8x3xbf16>
    %c13 = arith.constant 13 : index
    %c0_174 = arith.constant 0 : index
    %c0_175 = arith.constant 0 : index
    %c0_176 = arith.constant 0 : index
    %c0_177 = arith.constant 0 : index
    %146 = vector.load %arg1[%c13, %c0_174, %c0_175, %c0_176, %c0_177] : memref<16x2x9x9x3xbf16, #tpu.memory_space<vmem>>, vector<1x2x8x8x3xbf16>
    %147 = vector.shape_cast %146 : vector<1x2x8x8x3xbf16> to vector<2x8x8x3xbf16>
    %c14 = arith.constant 14 : index
    %c0_178 = arith.constant 0 : index
    %c0_179 = arith.constant 0 : index
    %c0_180 = arith.constant 0 : index
    %c0_181 = arith.constant 0 : index
    %148 = vector.load %arg1[%c14, %c0_178, %c0_179, %c0_180, %c0_181] : memref<16x2x9x9x3xbf16, #tpu.memory_space<vmem>>, vector<1x2x8x8x3xbf16>
    %149 = vector.shape_cast %148 : vector<1x2x8x8x3xbf16> to vector<2x8x8x3xbf16>
    %c0_182 = arith.constant 0 : index
    %c0_183 = arith.constant 0 : index
    %c1_184 = arith.constant 1 : index
    %c0_185 = arith.constant 0 : index
    %c0_186 = arith.constant 0 : index
    %150 = vector.load %arg1[%c0_182, %c0_183, %c1_184, %c0_185, %c0_186] : memref<16x2x9x9x3xbf16, #tpu.memory_space<vmem>>, vector<1x2x8x8x3xbf16>
    %151 = vector.shape_cast %150 : vector<1x2x8x8x3xbf16> to vector<2x8x8x3xbf16>
    %c1_187 = arith.constant 1 : index
    %c0_188 = arith.constant 0 : index
    %c1_189 = arith.constant 1 : index
    %c0_190 = arith.constant 0 : index
    %c0_191 = arith.constant 0 : index
    %152 = vector.load %arg1[%c1_187, %c0_188, %c1_189, %c0_190, %c0_191] : memref<16x2x9x9x3xbf16, #tpu.memory_space<vmem>>, vector<1x2x8x8x3xbf16>
    %153 = vector.shape_cast %152 : vector<1x2x8x8x3xbf16> to vector<2x8x8x3xbf16>
    %c2_192 = arith.constant 2 : index
    %c0_193 = arith.constant 0 : index
    %c1_194 = arith.constant 1 : index
    %c0_195 = arith.constant 0 : index
    %c0_196 = arith.constant 0 : index
    %154 = vector.load %arg1[%c2_192, %c0_193, %c1_194, %c0_195, %c0_196] : memref<16x2x9x9x3xbf16, #tpu.memory_space<vmem>>, vector<1x2x8x8x3xbf16>
    %155 = vector.shape_cast %154 : vector<1x2x8x8x3xbf16> to vector<2x8x8x3xbf16>
    %cst_197 = arith.constant 0.000000e+00 : f32
    %156 = vector.broadcast %cst_197 : f32 to vector<128x24xf32>
    %157 = vector.shape_cast %139 : vector<2x8x8x3xbf16> to vector<128x3xbf16>
    %c0_198 = arith.constant 0 : index
    %c0_199 = arith.constant 0 : index
    %c0_200 = arith.constant 0 : index
    %158 = vector.load %arg2[%c0_198, %c0_199, %c0_200] : memref<9x3x24xbf16, #tpu.memory_space<vmem>>, vector<1x3x24xbf16>
    %159 = vector.shape_cast %158 : vector<1x3x24xbf16> to vector<3x24xbf16>
    %cst_201 = arith.constant dense<0.000000e+00> : vector<128x24xf32>
    %160 = tpu.matmul %157, %159, %cst_201 {dimension_numbers = #tpu.dot_dimension_numbers<[1], [0], [0], [1], [0, 0, 1, 1], [], []>} : vector<128x3xbf16>, vector<3x24xbf16>, vector<128x24xf32> -> vector<128x24xf32>
    %161 = arith.addf %156, %160 : vector<128x24xf32>
    %162 = vector.shape_cast %141 : vector<2x8x8x3xbf16> to vector<128x3xbf16>
    %c1_202 = arith.constant 1 : index
    %c0_203 = arith.constant 0 : index
    %c0_204 = arith.constant 0 : index
    %163 = vector.load %arg2[%c1_202, %c0_203, %c0_204] : memref<9x3x24xbf16, #tpu.memory_space<vmem>>, vector<1x3x24xbf16>
    %164 = vector.shape_cast %163 : vector<1x3x24xbf16> to vector<3x24xbf16>
    %cst_205 = arith.constant dense<0.000000e+00> : vector<128x24xf32>
    %165 = tpu.matmul %162, %164, %cst_205 {dimension_numbers = #tpu.dot_dimension_numbers<[1], [0], [0], [1], [0, 0, 1, 1], [], []>} : vector<128x3xbf16>, vector<3x24xbf16>, vector<128x24xf32> -> vector<128x24xf32>
    %166 = arith.addf %161, %165 : vector<128x24xf32>
    %167 = vector.shape_cast %143 : vector<2x8x8x3xbf16> to vector<128x3xbf16>
    %c2_206 = arith.constant 2 : index
    %c0_207 = arith.constant 0 : index
    %c0_208 = arith.constant 0 : index
    %168 = vector.load %arg2[%c2_206, %c0_207, %c0_208] : memref<9x3x24xbf16, #tpu.memory_space<vmem>>, vector<1x3x24xbf16>
    %169 = vector.shape_cast %168 : vector<1x3x24xbf16> to vector<3x24xbf16>
    %cst_209 = arith.constant dense<0.000000e+00> : vector<128x24xf32>
    %170 = tpu.matmul %167, %169, %cst_209 {dimension_numbers = #tpu.dot_dimension_numbers<[1], [0], [0], [1], [0, 0, 1, 1], [], []>} : vector<128x3xbf16>, vector<3x24xbf16>, vector<128x24xf32> -> vector<128x24xf32>
    %171 = arith.addf %166, %170 : vector<128x24xf32>
    %172 = vector.shape_cast %145 : vector<2x8x8x3xbf16> to vector<128x3xbf16>
    %c3_210 = arith.constant 3 : index
    %c0_211 = arith.constant 0 : index
    %c0_212 = arith.constant 0 : index
    %173 = vector.load %arg2[%c3_210, %c0_211, %c0_212] : memref<9x3x24xbf16, #tpu.memory_space<vmem>>, vector<1x3x24xbf16>
    %174 = vector.shape_cast %173 : vector<1x3x24xbf16> to vector<3x24xbf16>
    %cst_213 = arith.constant dense<0.000000e+00> : vector<128x24xf32>
    %175 = tpu.matmul %172, %174, %cst_213 {dimension_numbers = #tpu.dot_dimension_numbers<[1], [0], [0], [1], [0, 0, 1, 1], [], []>} : vector<128x3xbf16>, vector<3x24xbf16>, vector<128x24xf32> -> vector<128x24xf32>
    %176 = arith.addf %171, %175 : vector<128x24xf32>
    %177 = vector.shape_cast %147 : vector<2x8x8x3xbf16> to vector<128x3xbf16>
    %c4_214 = arith.constant 4 : index
    %c0_215 = arith.constant 0 : index
    %c0_216 = arith.constant 0 : index
    %178 = vector.load %arg2[%c4_214, %c0_215, %c0_216] : memref<9x3x24xbf16, #tpu.memory_space<vmem>>, vector<1x3x24xbf16>
    %179 = vector.shape_cast %178 : vector<1x3x24xbf16> to vector<3x24xbf16>
    %cst_217 = arith.constant dense<0.000000e+00> : vector<128x24xf32>
    %180 = tpu.matmul %177, %179, %cst_217 {dimension_numbers = #tpu.dot_dimension_numbers<[1], [0], [0], [1], [0, 0, 1, 1], [], []>} : vector<128x3xbf16>, vector<3x24xbf16>, vector<128x24xf32> -> vector<128x24xf32>
    %181 = arith.addf %176, %180 : vector<128x24xf32>
    %182 = vector.shape_cast %149 : vector<2x8x8x3xbf16> to vector<128x3xbf16>
    %c5_218 = arith.constant 5 : index
    %c0_219 = arith.constant 0 : index
    %c0_220 = arith.constant 0 : index
    %183 = vector.load %arg2[%c5_218, %c0_219, %c0_220] : memref<9x3x24xbf16, #tpu.memory_space<vmem>>, vector<1x3x24xbf16>
    %184 = vector.shape_cast %183 : vector<1x3x24xbf16> to vector<3x24xbf16>
    %cst_221 = arith.constant dense<0.000000e+00> : vector<128x24xf32>
    %185 = tpu.matmul %182, %184, %cst_221 {dimension_numbers = #tpu.dot_dimension_numbers<[1], [0], [0], [1], [0, 0, 1, 1], [], []>} : vector<128x3xbf16>, vector<3x24xbf16>, vector<128x24xf32> -> vector<128x24xf32>
    %186 = arith.addf %181, %185 : vector<128x24xf32>
    %187 = vector.shape_cast %151 : vector<2x8x8x3xbf16> to vector<128x3xbf16>
    %c6_222 = arith.constant 6 : index
    %c0_223 = arith.constant 0 : index
    %c0_224 = arith.constant 0 : index
    %188 = vector.load %arg2[%c6_222, %c0_223, %c0_224] : memref<9x3x24xbf16, #tpu.memory_space<vmem>>, vector<1x3x24xbf16>
    %189 = vector.shape_cast %188 : vector<1x3x24xbf16> to vector<3x24xbf16>
    %cst_225 = arith.constant dense<0.000000e+00> : vector<128x24xf32>
    %190 = tpu.matmul %187, %189, %cst_225 {dimension_numbers = #tpu.dot_dimension_numbers<[1], [0], [0], [1], [0, 0, 1, 1], [], []>} : vector<128x3xbf16>, vector<3x24xbf16>, vector<128x24xf32> -> vector<128x24xf32>
    %191 = arith.addf %186, %190 : vector<128x24xf32>
    %192 = vector.shape_cast %153 : vector<2x8x8x3xbf16> to vector<128x3xbf16>
    %c7_226 = arith.constant 7 : index
    %c0_227 = arith.constant 0 : index
    %c0_228 = arith.constant 0 : index
    %193 = vector.load %arg2[%c7_226, %c0_227, %c0_228] : memref<9x3x24xbf16, #tpu.memory_space<vmem>>, vector<1x3x24xbf16>
    %194 = vector.shape_cast %193 : vector<1x3x24xbf16> to vector<3x24xbf16>
    %cst_229 = arith.constant dense<0.000000e+00> : vector<128x24xf32>
    %195 = tpu.matmul %192, %194, %cst_229 {dimension_numbers = #tpu.dot_dimension_numbers<[1], [0], [0], [1], [0, 0, 1, 1], [], []>} : vector<128x3xbf16>, vector<3x24xbf16>, vector<128x24xf32> -> vector<128x24xf32>
    %196 = arith.addf %191, %195 : vector<128x24xf32>
    %197 = vector.shape_cast %155 : vector<2x8x8x3xbf16> to vector<128x3xbf16>
    %c8_230 = arith.constant 8 : index
    %c0_231 = arith.constant 0 : index
    %c0_232 = arith.constant 0 : index
    %198 = vector.load %arg2[%c8_230, %c0_231, %c0_232] : memref<9x3x24xbf16, #tpu.memory_space<vmem>>, vector<1x3x24xbf16>
    %199 = vector.shape_cast %198 : vector<1x3x24xbf16> to vector<3x24xbf16>
    %cst_233 = arith.constant dense<0.000000e+00> : vector<128x24xf32>
    %200 = tpu.matmul %197, %199, %cst_233 {dimension_numbers = #tpu.dot_dimension_numbers<[1], [0], [0], [1], [0, 0, 1, 1], [], []>} : vector<128x3xbf16>, vector<3x24xbf16>, vector<128x24xf32> -> vector<128x24xf32>
    %201 = arith.addf %196, %200 : vector<128x24xf32>
    %c0_234 = arith.constant 0 : index
    %c0_235 = arith.constant 0 : index
    %202 = vector.load %arg3[%c0_234, %c0_235] : memref<1x24xf32, #tpu.memory_space<vmem>>, vector<1x24xf32>
    %203 = vector.broadcast %202 : vector<1x24xf32> to vector<128x24xf32>
    %204 = arith.addf %201, %203 : vector<128x24xf32>
    %205 = vector.shape_cast %204 : vector<128x24xf32> to vector<2x8x8x24xf32>
    %206 = arith.truncf %205 : vector<2x8x8x24xf32> to vector<2x8x8x24xbf16>
    %c10_236 = arith.constant 10 : index
    %c0_237 = arith.constant 0 : index
    %c0_238 = arith.constant 0 : index
    %c0_239 = arith.constant 0 : index
    %c0_240 = arith.constant 0 : index
    %207 = vector.load %arg1[%c10_236, %c0_237, %c0_238, %c0_239, %c0_240] : memref<16x2x9x9x3xbf16, #tpu.memory_space<vmem>>, vector<1x2x8x8x3xbf16>
    %208 = vector.shape_cast %207 : vector<1x2x8x8x3xbf16> to vector<2x8x8x3xbf16>
    %c11_241 = arith.constant 11 : index
    %c0_242 = arith.constant 0 : index
    %c0_243 = arith.constant 0 : index
    %c0_244 = arith.constant 0 : index
    %c0_245 = arith.constant 0 : index
    %209 = vector.load %arg1[%c11_241, %c0_242, %c0_243, %c0_244, %c0_245] : memref<16x2x9x9x3xbf16, #tpu.memory_space<vmem>>, vector<1x2x8x8x3xbf16>
    %210 = vector.shape_cast %209 : vector<1x2x8x8x3xbf16> to vector<2x8x8x3xbf16>
    %c8_246 = arith.constant 8 : index
    %c0_247 = arith.constant 0 : index
    %c0_248 = arith.constant 0 : index
    %c1_249 = arith.constant 1 : index
    %c0_250 = arith.constant 0 : index
    %211 = vector.load %arg1[%c8_246, %c0_247, %c0_248, %c1_249, %c0_250] : memref<16x2x9x9x3xbf16, #tpu.memory_space<vmem>>, vector<1x2x8x8x3xbf16>
    %212 = vector.shape_cast %211 : vector<1x2x8x8x3xbf16> to vector<2x8x8x3xbf16>
    %c14_251 = arith.constant 14 : index
    %c0_252 = arith.constant 0 : index
    %c0_253 = arith.constant 0 : index
    %c0_254 = arith.constant 0 : index
    %c0_255 = arith.constant 0 : index
    %213 = vector.load %arg1[%c14_251, %c0_252, %c0_253, %c0_254, %c0_255] : memref<16x2x9x9x3xbf16, #tpu.memory_space<vmem>>, vector<1x2x8x8x3xbf16>
    %214 = vector.shape_cast %213 : vector<1x2x8x8x3xbf16> to vector<2x8x8x3xbf16>
    %c15 = arith.constant 15 : index
    %c0_256 = arith.constant 0 : index
    %c0_257 = arith.constant 0 : index
    %c0_258 = arith.constant 0 : index
    %c0_259 = arith.constant 0 : index
    %215 = vector.load %arg1[%c15, %c0_256, %c0_257, %c0_258, %c0_259] : memref<16x2x9x9x3xbf16, #tpu.memory_space<vmem>>, vector<1x2x8x8x3xbf16>
    %216 = vector.shape_cast %215 : vector<1x2x8x8x3xbf16> to vector<2x8x8x3xbf16>
    %c12_260 = arith.constant 12 : index
    %c0_261 = arith.constant 0 : index
    %c0_262 = arith.constant 0 : index
    %c1_263 = arith.constant 1 : index
    %c0_264 = arith.constant 0 : index
    %217 = vector.load %arg1[%c12_260, %c0_261, %c0_262, %c1_263, %c0_264] : memref<16x2x9x9x3xbf16, #tpu.memory_space<vmem>>, vector<1x2x8x8x3xbf16>
    %218 = vector.shape_cast %217 : vector<1x2x8x8x3xbf16> to vector<2x8x8x3xbf16>
    %c2_265 = arith.constant 2 : index
    %c0_266 = arith.constant 0 : index
    %c1_267 = arith.constant 1 : index
    %c0_268 = arith.constant 0 : index
    %c0_269 = arith.constant 0 : index
    %219 = vector.load %arg1[%c2_265, %c0_266, %c1_267, %c0_268, %c0_269] : memref<16x2x9x9x3xbf16, #tpu.memory_space<vmem>>, vector<1x2x8x8x3xbf16>
    %220 = vector.shape_cast %219 : vector<1x2x8x8x3xbf16> to vector<2x8x8x3xbf16>
    %c3_270 = arith.constant 3 : index
    %c0_271 = arith.constant 0 : index
    %c1_272 = arith.constant 1 : index
    %c0_273 = arith.constant 0 : index
    %c0_274 = arith.constant 0 : index
    %221 = vector.load %arg1[%c3_270, %c0_271, %c1_272, %c0_273, %c0_274] : memref<16x2x9x9x3xbf16, #tpu.memory_space<vmem>>, vector<1x2x8x8x3xbf16>
    %222 = vector.shape_cast %221 : vector<1x2x8x8x3xbf16> to vector<2x8x8x3xbf16>
    %c0_275 = arith.constant 0 : index
    %c0_276 = arith.constant 0 : index
    %c1_277 = arith.constant 1 : index
    %c1_278 = arith.constant 1 : index
    %c0_279 = arith.constant 0 : index
    %223 = vector.load %arg1[%c0_275, %c0_276, %c1_277, %c1_278, %c0_279] : memref<16x2x9x9x3xbf16, #tpu.memory_space<vmem>>, vector<1x2x8x8x3xbf16>
    %224 = vector.shape_cast %223 : vector<1x2x8x8x3xbf16> to vector<2x8x8x3xbf16>
    %cst_280 = arith.constant 0.000000e+00 : f32
    %225 = vector.broadcast %cst_280 : f32 to vector<128x24xf32>
    %226 = vector.shape_cast %208 : vector<2x8x8x3xbf16> to vector<128x3xbf16>
    %c0_281 = arith.constant 0 : index
    %c0_282 = arith.constant 0 : index
    %c0_283 = arith.constant 0 : index
    %227 = vector.load %arg2[%c0_281, %c0_282, %c0_283] : memref<9x3x24xbf16, #tpu.memory_space<vmem>>, vector<1x3x24xbf16>
    %228 = vector.shape_cast %227 : vector<1x3x24xbf16> to vector<3x24xbf16>
    %cst_284 = arith.constant dense<0.000000e+00> : vector<128x24xf32>
    %229 = tpu.matmul %226, %228, %cst_284 {dimension_numbers = #tpu.dot_dimension_numbers<[1], [0], [0], [1], [0, 0, 1, 1], [], []>} : vector<128x3xbf16>, vector<3x24xbf16>, vector<128x24xf32> -> vector<128x24xf32>
    %230 = arith.addf %225, %229 : vector<128x24xf32>
    %231 = vector.shape_cast %210 : vector<2x8x8x3xbf16> to vector<128x3xbf16>
    %c1_285 = arith.constant 1 : index
    %c0_286 = arith.constant 0 : index
    %c0_287 = arith.constant 0 : index
    %232 = vector.load %arg2[%c1_285, %c0_286, %c0_287] : memref<9x3x24xbf16, #tpu.memory_space<vmem>>, vector<1x3x24xbf16>
    %233 = vector.shape_cast %232 : vector<1x3x24xbf16> to vector<3x24xbf16>
    %cst_288 = arith.constant dense<0.000000e+00> : vector<128x24xf32>
    %234 = tpu.matmul %231, %233, %cst_288 {dimension_numbers = #tpu.dot_dimension_numbers<[1], [0], [0], [1], [0, 0, 1, 1], [], []>} : vector<128x3xbf16>, vector<3x24xbf16>, vector<128x24xf32> -> vector<128x24xf32>
    %235 = arith.addf %230, %234 : vector<128x24xf32>
    %236 = vector.shape_cast %212 : vector<2x8x8x3xbf16> to vector<128x3xbf16>
    %c2_289 = arith.constant 2 : index
    %c0_290 = arith.constant 0 : index
    %c0_291 = arith.constant 0 : index
    %237 = vector.load %arg2[%c2_289, %c0_290, %c0_291] : memref<9x3x24xbf16, #tpu.memory_space<vmem>>, vector<1x3x24xbf16>
    %238 = vector.shape_cast %237 : vector<1x3x24xbf16> to vector<3x24xbf16>
    %cst_292 = arith.constant dense<0.000000e+00> : vector<128x24xf32>
    %239 = tpu.matmul %236, %238, %cst_292 {dimension_numbers = #tpu.dot_dimension_numbers<[1], [0], [0], [1], [0, 0, 1, 1], [], []>} : vector<128x3xbf16>, vector<3x24xbf16>, vector<128x24xf32> -> vector<128x24xf32>
    %240 = arith.addf %235, %239 : vector<128x24xf32>
    %241 = vector.shape_cast %214 : vector<2x8x8x3xbf16> to vector<128x3xbf16>
    %c3_293 = arith.constant 3 : index
    %c0_294 = arith.constant 0 : index
    %c0_295 = arith.constant 0 : index
    %242 = vector.load %arg2[%c3_293, %c0_294, %c0_295] : memref<9x3x24xbf16, #tpu.memory_space<vmem>>, vector<1x3x24xbf16>
    %243 = vector.shape_cast %242 : vector<1x3x24xbf16> to vector<3x24xbf16>
    %cst_296 = arith.constant dense<0.000000e+00> : vector<128x24xf32>
    %244 = tpu.matmul %241, %243, %cst_296 {dimension_numbers = #tpu.dot_dimension_numbers<[1], [0], [0], [1], [0, 0, 1, 1], [], []>} : vector<128x3xbf16>, vector<3x24xbf16>, vector<128x24xf32> -> vector<128x24xf32>
    %245 = arith.addf %240, %244 : vector<128x24xf32>
    %246 = vector.shape_cast %216 : vector<2x8x8x3xbf16> to vector<128x3xbf16>
    %c4_297 = arith.constant 4 : index
    %c0_298 = arith.constant 0 : index
    %c0_299 = arith.constant 0 : index
    %247 = vector.load %arg2[%c4_297, %c0_298, %c0_299] : memref<9x3x24xbf16, #tpu.memory_space<vmem>>, vector<1x3x24xbf16>
    %248 = vector.shape_cast %247 : vector<1x3x24xbf16> to vector<3x24xbf16>
    %cst_300 = arith.constant dense<0.000000e+00> : vector<128x24xf32>
    %249 = tpu.matmul %246, %248, %cst_300 {dimension_numbers = #tpu.dot_dimension_numbers<[1], [0], [0], [1], [0, 0, 1, 1], [], []>} : vector<128x3xbf16>, vector<3x24xbf16>, vector<128x24xf32> -> vector<128x24xf32>
    %250 = arith.addf %245, %249 : vector<128x24xf32>
    %251 = vector.shape_cast %218 : vector<2x8x8x3xbf16> to vector<128x3xbf16>
    %c5_301 = arith.constant 5 : index
    %c0_302 = arith.constant 0 : index
    %c0_303 = arith.constant 0 : index
    %252 = vector.load %arg2[%c5_301, %c0_302, %c0_303] : memref<9x3x24xbf16, #tpu.memory_space<vmem>>, vector<1x3x24xbf16>
    %253 = vector.shape_cast %252 : vector<1x3x24xbf16> to vector<3x24xbf16>
    %cst_304 = arith.constant dense<0.000000e+00> : vector<128x24xf32>
    %254 = tpu.matmul %251, %253, %cst_304 {dimension_numbers = #tpu.dot_dimension_numbers<[1], [0], [0], [1], [0, 0, 1, 1], [], []>} : vector<128x3xbf16>, vector<3x24xbf16>, vector<128x24xf32> -> vector<128x24xf32>
    %255 = arith.addf %250, %254 : vector<128x24xf32>
    %256 = vector.shape_cast %220 : vector<2x8x8x3xbf16> to vector<128x3xbf16>
    %c6_305 = arith.constant 6 : index
    %c0_306 = arith.constant 0 : index
    %c0_307 = arith.constant 0 : index
    %257 = vector.load %arg2[%c6_305, %c0_306, %c0_307] : memref<9x3x24xbf16, #tpu.memory_space<vmem>>, vector<1x3x24xbf16>
    %258 = vector.shape_cast %257 : vector<1x3x24xbf16> to vector<3x24xbf16>
    %cst_308 = arith.constant dense<0.000000e+00> : vector<128x24xf32>
    %259 = tpu.matmul %256, %258, %cst_308 {dimension_numbers = #tpu.dot_dimension_numbers<[1], [0], [0], [1], [0, 0, 1, 1], [], []>} : vector<128x3xbf16>, vector<3x24xbf16>, vector<128x24xf32> -> vector<128x24xf32>
    %260 = arith.addf %255, %259 : vector<128x24xf32>
    %261 = vector.shape_cast %222 : vector<2x8x8x3xbf16> to vector<128x3xbf16>
    %c7_309 = arith.constant 7 : index
    %c0_310 = arith.constant 0 : index
    %c0_311 = arith.constant 0 : index
    %262 = vector.load %arg2[%c7_309, %c0_310, %c0_311] : memref<9x3x24xbf16, #tpu.memory_space<vmem>>, vector<1x3x24xbf16>
    %263 = vector.shape_cast %262 : vector<1x3x24xbf16> to vector<3x24xbf16>
    %cst_312 = arith.constant dense<0.000000e+00> : vector<128x24xf32>
    %264 = tpu.matmul %261, %263, %cst_312 {dimension_numbers = #tpu.dot_dimension_numbers<[1], [0], [0], [1], [0, 0, 1, 1], [], []>} : vector<128x3xbf16>, vector<3x24xbf16>, vector<128x24xf32> -> vector<128x24xf32>
    %265 = arith.addf %260, %264 : vector<128x24xf32>
    %266 = vector.shape_cast %224 : vector<2x8x8x3xbf16> to vector<128x3xbf16>
    %c8_313 = arith.constant 8 : index
    %c0_314 = arith.constant 0 : index
    %c0_315 = arith.constant 0 : index
    %267 = vector.load %arg2[%c8_313, %c0_314, %c0_315] : memref<9x3x24xbf16, #tpu.memory_space<vmem>>, vector<1x3x24xbf16>
    %268 = vector.shape_cast %267 : vector<1x3x24xbf16> to vector<3x24xbf16>
    %cst_316 = arith.constant dense<0.000000e+00> : vector<128x24xf32>
    %269 = tpu.matmul %266, %268, %cst_316 {dimension_numbers = #tpu.dot_dimension_numbers<[1], [0], [0], [1], [0, 0, 1, 1], [], []>} : vector<128x3xbf16>, vector<3x24xbf16>, vector<128x24xf32> -> vector<128x24xf32>
    %270 = arith.addf %265, %269 : vector<128x24xf32>
    %c0_317 = arith.constant 0 : index
    %c0_318 = arith.constant 0 : index
    %271 = vector.load %arg3[%c0_317, %c0_318] : memref<1x24xf32, #tpu.memory_space<vmem>>, vector<1x24xf32>
    %272 = vector.broadcast %271 : vector<1x24xf32> to vector<128x24xf32>
    %273 = arith.addf %270, %272 : vector<128x24xf32>
    %274 = vector.shape_cast %273 : vector<128x24xf32> to vector<2x8x8x24xf32>
    %275 = arith.truncf %274 : vector<2x8x8x24xf32> to vector<2x8x8x24xbf16>
    %276 = vector.extract_strided_slice %68 {offsets = [0, 0, 0, 0], sizes = [2, 7, 7, 24], strides = [1, 1, 1, 1]} : vector<2x8x8x24xbf16> to vector<2x7x7x24xbf16>
    %277 = vector.extract_strided_slice %137 {offsets = [0, 0, 0, 0], sizes = [2, 7, 7, 24], strides = [1, 1, 1, 1]} : vector<2x8x8x24xbf16> to vector<2x7x7x24xbf16>
    %278 = vector.extract_strided_slice %68 {offsets = [0, 0, 1, 0], sizes = [2, 7, 7, 24], strides = [1, 1, 1, 1]} : vector<2x8x8x24xbf16> to vector<2x7x7x24xbf16>
    %279 = vector.extract_strided_slice %206 {offsets = [0, 0, 0, 0], sizes = [2, 7, 7, 24], strides = [1, 1, 1, 1]} : vector<2x8x8x24xbf16> to vector<2x7x7x24xbf16>
    %280 = vector.extract_strided_slice %275 {offsets = [0, 0, 0, 0], sizes = [2, 7, 7, 24], strides = [1, 1, 1, 1]} : vector<2x8x8x24xbf16> to vector<2x7x7x24xbf16>
    %281 = vector.extract_strided_slice %206 {offsets = [0, 0, 1, 0], sizes = [2, 7, 7, 24], strides = [1, 1, 1, 1]} : vector<2x8x8x24xbf16> to vector<2x7x7x24xbf16>
    %282 = vector.extract_strided_slice %68 {offsets = [0, 1, 0, 0], sizes = [2, 7, 7, 24], strides = [1, 1, 1, 1]} : vector<2x8x8x24xbf16> to vector<2x7x7x24xbf16>
    %283 = vector.extract_strided_slice %137 {offsets = [0, 1, 0, 0], sizes = [2, 7, 7, 24], strides = [1, 1, 1, 1]} : vector<2x8x8x24xbf16> to vector<2x7x7x24xbf16>
    %284 = vector.extract_strided_slice %68 {offsets = [0, 1, 1, 0], sizes = [2, 7, 7, 24], strides = [1, 1, 1, 1]} : vector<2x8x8x24xbf16> to vector<2x7x7x24xbf16>
    %cst_319 = arith.constant 0.000000e+00 : f32
    %285 = vector.broadcast %cst_319 : f32 to vector<98x36xf32>
    %286 = vector.shape_cast %276 : vector<2x7x7x24xbf16> to vector<98x24xbf16>
    %c0_320 = arith.constant 0 : index
    %c0_321 = arith.constant 0 : index
    %c0_322 = arith.constant 0 : index
    %287 = vector.load %arg4[%c0_320, %c0_321, %c0_322] : memref<9x24x36xbf16, #tpu.memory_space<vmem>>, vector<1x24x36xbf16>
    %288 = vector.shape_cast %287 : vector<1x24x36xbf16> to vector<24x36xbf16>
    %cst_323 = arith.constant dense<0.000000e+00> : vector<98x36xf32>
    %289 = tpu.matmul %286, %288, %cst_323 {dimension_numbers = #tpu.dot_dimension_numbers<[1], [0], [0], [1], [0, 0, 1, 1], [], []>} : vector<98x24xbf16>, vector<24x36xbf16>, vector<98x36xf32> -> vector<98x36xf32>
    %290 = arith.addf %285, %289 : vector<98x36xf32>
    %291 = vector.shape_cast %277 : vector<2x7x7x24xbf16> to vector<98x24xbf16>
    %c1_324 = arith.constant 1 : index
    %c0_325 = arith.constant 0 : index
    %c0_326 = arith.constant 0 : index
    %292 = vector.load %arg4[%c1_324, %c0_325, %c0_326] : memref<9x24x36xbf16, #tpu.memory_space<vmem>>, vector<1x24x36xbf16>
    %293 = vector.shape_cast %292 : vector<1x24x36xbf16> to vector<24x36xbf16>
    %cst_327 = arith.constant dense<0.000000e+00> : vector<98x36xf32>
    %294 = tpu.matmul %291, %293, %cst_327 {dimension_numbers = #tpu.dot_dimension_numbers<[1], [0], [0], [1], [0, 0, 1, 1], [], []>} : vector<98x24xbf16>, vector<24x36xbf16>, vector<98x36xf32> -> vector<98x36xf32>
    %295 = arith.addf %290, %294 : vector<98x36xf32>
    %296 = vector.shape_cast %278 : vector<2x7x7x24xbf16> to vector<98x24xbf16>
    %c2_328 = arith.constant 2 : index
    %c0_329 = arith.constant 0 : index
    %c0_330 = arith.constant 0 : index
    %297 = vector.load %arg4[%c2_328, %c0_329, %c0_330] : memref<9x24x36xbf16, #tpu.memory_space<vmem>>, vector<1x24x36xbf16>
    %298 = vector.shape_cast %297 : vector<1x24x36xbf16> to vector<24x36xbf16>
    %cst_331 = arith.constant dense<0.000000e+00> : vector<98x36xf32>
    %299 = tpu.matmul %296, %298, %cst_331 {dimension_numbers = #tpu.dot_dimension_numbers<[1], [0], [0], [1], [0, 0, 1, 1], [], []>} : vector<98x24xbf16>, vector<24x36xbf16>, vector<98x36xf32> -> vector<98x36xf32>
    %300 = arith.addf %295, %299 : vector<98x36xf32>
    %301 = vector.shape_cast %279 : vector<2x7x7x24xbf16> to vector<98x24xbf16>
    %c3_332 = arith.constant 3 : index
    %c0_333 = arith.constant 0 : index
    %c0_334 = arith.constant 0 : index
    %302 = vector.load %arg4[%c3_332, %c0_333, %c0_334] : memref<9x24x36xbf16, #tpu.memory_space<vmem>>, vector<1x24x36xbf16>
    %303 = vector.shape_cast %302 : vector<1x24x36xbf16> to vector<24x36xbf16>
    %cst_335 = arith.constant dense<0.000000e+00> : vector<98x36xf32>
    %304 = tpu.matmul %301, %303, %cst_335 {dimension_numbers = #tpu.dot_dimension_numbers<[1], [0], [0], [1], [0, 0, 1, 1], [], []>} : vector<98x24xbf16>, vector<24x36xbf16>, vector<98x36xf32> -> vector<98x36xf32>
    %305 = arith.addf %300, %304 : vector<98x36xf32>
    %306 = vector.shape_cast %280 : vector<2x7x7x24xbf16> to vector<98x24xbf16>
    %c4_336 = arith.constant 4 : index
    %c0_337 = arith.constant 0 : index
    %c0_338 = arith.constant 0 : index
    %307 = vector.load %arg4[%c4_336, %c0_337, %c0_338] : memref<9x24x36xbf16, #tpu.memory_space<vmem>>, vector<1x24x36xbf16>
    %308 = vector.shape_cast %307 : vector<1x24x36xbf16> to vector<24x36xbf16>
    %cst_339 = arith.constant dense<0.000000e+00> : vector<98x36xf32>
    %309 = tpu.matmul %306, %308, %cst_339 {dimension_numbers = #tpu.dot_dimension_numbers<[1], [0], [0], [1], [0, 0, 1, 1], [], []>} : vector<98x24xbf16>, vector<24x36xbf16>, vector<98x36xf32> -> vector<98x36xf32>
    %310 = arith.addf %305, %309 : vector<98x36xf32>
    %311 = vector.shape_cast %281 : vector<2x7x7x24xbf16> to vector<98x24xbf16>
    %c5_340 = arith.constant 5 : index
    %c0_341 = arith.constant 0 : index
    %c0_342 = arith.constant 0 : index
    %312 = vector.load %arg4[%c5_340, %c0_341, %c0_342] : memref<9x24x36xbf16, #tpu.memory_space<vmem>>, vector<1x24x36xbf16>
    %313 = vector.shape_cast %312 : vector<1x24x36xbf16> to vector<24x36xbf16>
    %cst_343 = arith.constant dense<0.000000e+00> : vector<98x36xf32>
    %314 = tpu.matmul %311, %313, %cst_343 {dimension_numbers = #tpu.dot_dimension_numbers<[1], [0], [0], [1], [0, 0, 1, 1], [], []>} : vector<98x24xbf16>, vector<24x36xbf16>, vector<98x36xf32> -> vector<98x36xf32>
    %315 = arith.addf %310, %314 : vector<98x36xf32>
    %316 = vector.shape_cast %282 : vector<2x7x7x24xbf16> to vector<98x24xbf16>
    %c6_344 = arith.constant 6 : index
    %c0_345 = arith.constant 0 : index
    %c0_346 = arith.constant 0 : index
    %317 = vector.load %arg4[%c6_344, %c0_345, %c0_346] : memref<9x24x36xbf16, #tpu.memory_space<vmem>>, vector<1x24x36xbf16>
    %318 = vector.shape_cast %317 : vector<1x24x36xbf16> to vector<24x36xbf16>
    %cst_347 = arith.constant dense<0.000000e+00> : vector<98x36xf32>
    %319 = tpu.matmul %316, %318, %cst_347 {dimension_numbers = #tpu.dot_dimension_numbers<[1], [0], [0], [1], [0, 0, 1, 1], [], []>} : vector<98x24xbf16>, vector<24x36xbf16>, vector<98x36xf32> -> vector<98x36xf32>
    %320 = arith.addf %315, %319 : vector<98x36xf32>
    %321 = vector.shape_cast %283 : vector<2x7x7x24xbf16> to vector<98x24xbf16>
    %c7_348 = arith.constant 7 : index
    %c0_349 = arith.constant 0 : index
    %c0_350 = arith.constant 0 : index
    %322 = vector.load %arg4[%c7_348, %c0_349, %c0_350] : memref<9x24x36xbf16, #tpu.memory_space<vmem>>, vector<1x24x36xbf16>
    %323 = vector.shape_cast %322 : vector<1x24x36xbf16> to vector<24x36xbf16>
    %cst_351 = arith.constant dense<0.000000e+00> : vector<98x36xf32>
    %324 = tpu.matmul %321, %323, %cst_351 {dimension_numbers = #tpu.dot_dimension_numbers<[1], [0], [0], [1], [0, 0, 1, 1], [], []>} : vector<98x24xbf16>, vector<24x36xbf16>, vector<98x36xf32> -> vector<98x36xf32>
    %325 = arith.addf %320, %324 : vector<98x36xf32>
    %326 = vector.shape_cast %284 : vector<2x7x7x24xbf16> to vector<98x24xbf16>
    %c8_352 = arith.constant 8 : index
    %c0_353 = arith.constant 0 : index
    %c0_354 = arith.constant 0 : index
    %327 = vector.load %arg4[%c8_352, %c0_353, %c0_354] : memref<9x24x36xbf16, #tpu.memory_space<vmem>>, vector<1x24x36xbf16>
    %328 = vector.shape_cast %327 : vector<1x24x36xbf16> to vector<24x36xbf16>
    %cst_355 = arith.constant dense<0.000000e+00> : vector<98x36xf32>
    %329 = tpu.matmul %326, %328, %cst_355 {dimension_numbers = #tpu.dot_dimension_numbers<[1], [0], [0], [1], [0, 0, 1, 1], [], []>} : vector<98x24xbf16>, vector<24x36xbf16>, vector<98x36xf32> -> vector<98x36xf32>
    %330 = arith.addf %325, %329 : vector<98x36xf32>
    %c0_356 = arith.constant 0 : index
    %c0_357 = arith.constant 0 : index
    %331 = vector.load %arg5[%c0_356, %c0_357] : memref<1x36xf32, #tpu.memory_space<vmem>>, vector<1x36xf32>
    %332 = vector.broadcast %331 : vector<1x36xf32> to vector<98x36xf32>
    %333 = arith.addf %330, %332 : vector<98x36xf32>
    %334 = vector.shape_cast %333 : vector<98x36xf32> to vector<2x7x7x36xf32>
    %335 = arith.truncf %334 : vector<2x7x7x36xf32> to vector<2x7x7x36xbf16>
    %336 = vector.extract_strided_slice %335 {offsets = [0, 0, 0, 0], sizes = [2, 5, 5, 36], strides = [1, 1, 1, 1]} : vector<2x7x7x36xbf16> to vector<2x5x5x36xbf16>
    %337 = vector.extract_strided_slice %335 {offsets = [0, 0, 1, 0], sizes = [2, 5, 5, 36], strides = [1, 1, 1, 1]} : vector<2x7x7x36xbf16> to vector<2x5x5x36xbf16>
    %338 = vector.extract_strided_slice %335 {offsets = [0, 0, 2, 0], sizes = [2, 5, 5, 36], strides = [1, 1, 1, 1]} : vector<2x7x7x36xbf16> to vector<2x5x5x36xbf16>
    %339 = vector.extract_strided_slice %335 {offsets = [0, 1, 0, 0], sizes = [2, 5, 5, 36], strides = [1, 1, 1, 1]} : vector<2x7x7x36xbf16> to vector<2x5x5x36xbf16>
    %340 = vector.extract_strided_slice %335 {offsets = [0, 1, 1, 0], sizes = [2, 5, 5, 36], strides = [1, 1, 1, 1]} : vector<2x7x7x36xbf16> to vector<2x5x5x36xbf16>
    %341 = vector.extract_strided_slice %335 {offsets = [0, 1, 2, 0], sizes = [2, 5, 5, 36], strides = [1, 1, 1, 1]} : vector<2x7x7x36xbf16> to vector<2x5x5x36xbf16>
    %342 = vector.extract_strided_slice %335 {offsets = [0, 2, 0, 0], sizes = [2, 5, 5, 36], strides = [1, 1, 1, 1]} : vector<2x7x7x36xbf16> to vector<2x5x5x36xbf16>
    %343 = vector.extract_strided_slice %335 {offsets = [0, 2, 1, 0], sizes = [2, 5, 5, 36], strides = [1, 1, 1, 1]} : vector<2x7x7x36xbf16> to vector<2x5x5x36xbf16>
    %344 = vector.extract_strided_slice %335 {offsets = [0, 2, 2, 0], sizes = [2, 5, 5, 36], strides = [1, 1, 1, 1]} : vector<2x7x7x36xbf16> to vector<2x5x5x36xbf16>
    %cst_358 = arith.constant 0.000000e+00 : f32
    %345 = vector.broadcast %cst_358 : f32 to vector<50x48xf32>
    %346 = vector.shape_cast %336 : vector<2x5x5x36xbf16> to vector<50x36xbf16>
    %c0_359 = arith.constant 0 : index
    %c0_360 = arith.constant 0 : index
    %c0_361 = arith.constant 0 : index
    %347 = vector.load %arg6[%c0_359, %c0_360, %c0_361] : memref<9x36x48xbf16, #tpu.memory_space<vmem>>, vector<1x36x48xbf16>
    %348 = vector.shape_cast %347 : vector<1x36x48xbf16> to vector<36x48xbf16>
    %cst_362 = arith.constant dense<0.000000e+00> : vector<50x48xf32>
    %349 = tpu.matmul %346, %348, %cst_362 {dimension_numbers = #tpu.dot_dimension_numbers<[1], [0], [0], [1], [0, 0, 1, 1], [], []>} : vector<50x36xbf16>, vector<36x48xbf16>, vector<50x48xf32> -> vector<50x48xf32>
    %350 = arith.addf %345, %349 : vector<50x48xf32>
    %351 = vector.shape_cast %337 : vector<2x5x5x36xbf16> to vector<50x36xbf16>
    %c1_363 = arith.constant 1 : index
    %c0_364 = arith.constant 0 : index
    %c0_365 = arith.constant 0 : index
    %352 = vector.load %arg6[%c1_363, %c0_364, %c0_365] : memref<9x36x48xbf16, #tpu.memory_space<vmem>>, vector<1x36x48xbf16>
    %353 = vector.shape_cast %352 : vector<1x36x48xbf16> to vector<36x48xbf16>
    %cst_366 = arith.constant dense<0.000000e+00> : vector<50x48xf32>
    %354 = tpu.matmul %351, %353, %cst_366 {dimension_numbers = #tpu.dot_dimension_numbers<[1], [0], [0], [1], [0, 0, 1, 1], [], []>} : vector<50x36xbf16>, vector<36x48xbf16>, vector<50x48xf32> -> vector<50x48xf32>
    %355 = arith.addf %350, %354 : vector<50x48xf32>
    %356 = vector.shape_cast %338 : vector<2x5x5x36xbf16> to vector<50x36xbf16>
    %c2_367 = arith.constant 2 : index
    %c0_368 = arith.constant 0 : index
    %c0_369 = arith.constant 0 : index
    %357 = vector.load %arg6[%c2_367, %c0_368, %c0_369] : memref<9x36x48xbf16, #tpu.memory_space<vmem>>, vector<1x36x48xbf16>
    %358 = vector.shape_cast %357 : vector<1x36x48xbf16> to vector<36x48xbf16>
    %cst_370 = arith.constant dense<0.000000e+00> : vector<50x48xf32>
    %359 = tpu.matmul %356, %358, %cst_370 {dimension_numbers = #tpu.dot_dimension_numbers<[1], [0], [0], [1], [0, 0, 1, 1], [], []>} : vector<50x36xbf16>, vector<36x48xbf16>, vector<50x48xf32> -> vector<50x48xf32>
    %360 = arith.addf %355, %359 : vector<50x48xf32>
    %361 = vector.shape_cast %339 : vector<2x5x5x36xbf16> to vector<50x36xbf16>
    %c3_371 = arith.constant 3 : index
    %c0_372 = arith.constant 0 : index
    %c0_373 = arith.constant 0 : index
    %362 = vector.load %arg6[%c3_371, %c0_372, %c0_373] : memref<9x36x48xbf16, #tpu.memory_space<vmem>>, vector<1x36x48xbf16>
    %363 = vector.shape_cast %362 : vector<1x36x48xbf16> to vector<36x48xbf16>
    %cst_374 = arith.constant dense<0.000000e+00> : vector<50x48xf32>
    %364 = tpu.matmul %361, %363, %cst_374 {dimension_numbers = #tpu.dot_dimension_numbers<[1], [0], [0], [1], [0, 0, 1, 1], [], []>} : vector<50x36xbf16>, vector<36x48xbf16>, vector<50x48xf32> -> vector<50x48xf32>
    %365 = arith.addf %360, %364 : vector<50x48xf32>
    %366 = vector.shape_cast %340 : vector<2x5x5x36xbf16> to vector<50x36xbf16>
    %c4_375 = arith.constant 4 : index
    %c0_376 = arith.constant 0 : index
    %c0_377 = arith.constant 0 : index
    %367 = vector.load %arg6[%c4_375, %c0_376, %c0_377] : memref<9x36x48xbf16, #tpu.memory_space<vmem>>, vector<1x36x48xbf16>
    %368 = vector.shape_cast %367 : vector<1x36x48xbf16> to vector<36x48xbf16>
    %cst_378 = arith.constant dense<0.000000e+00> : vector<50x48xf32>
    %369 = tpu.matmul %366, %368, %cst_378 {dimension_numbers = #tpu.dot_dimension_numbers<[1], [0], [0], [1], [0, 0, 1, 1], [], []>} : vector<50x36xbf16>, vector<36x48xbf16>, vector<50x48xf32> -> vector<50x48xf32>
    %370 = arith.addf %365, %369 : vector<50x48xf32>
    %371 = vector.shape_cast %341 : vector<2x5x5x36xbf16> to vector<50x36xbf16>
    %c5_379 = arith.constant 5 : index
    %c0_380 = arith.constant 0 : index
    %c0_381 = arith.constant 0 : index
    %372 = vector.load %arg6[%c5_379, %c0_380, %c0_381] : memref<9x36x48xbf16, #tpu.memory_space<vmem>>, vector<1x36x48xbf16>
    %373 = vector.shape_cast %372 : vector<1x36x48xbf16> to vector<36x48xbf16>
    %cst_382 = arith.constant dense<0.000000e+00> : vector<50x48xf32>
    %374 = tpu.matmul %371, %373, %cst_382 {dimension_numbers = #tpu.dot_dimension_numbers<[1], [0], [0], [1], [0, 0, 1, 1], [], []>} : vector<50x36xbf16>, vector<36x48xbf16>, vector<50x48xf32> -> vector<50x48xf32>
    %375 = arith.addf %370, %374 : vector<50x48xf32>
    %376 = vector.shape_cast %342 : vector<2x5x5x36xbf16> to vector<50x36xbf16>
    %c6_383 = arith.constant 6 : index
    %c0_384 = arith.constant 0 : index
    %c0_385 = arith.constant 0 : index
    %377 = vector.load %arg6[%c6_383, %c0_384, %c0_385] : memref<9x36x48xbf16, #tpu.memory_space<vmem>>, vector<1x36x48xbf16>
    %378 = vector.shape_cast %377 : vector<1x36x48xbf16> to vector<36x48xbf16>
    %cst_386 = arith.constant dense<0.000000e+00> : vector<50x48xf32>
    %379 = tpu.matmul %376, %378, %cst_386 {dimension_numbers = #tpu.dot_dimension_numbers<[1], [0], [0], [1], [0, 0, 1, 1], [], []>} : vector<50x36xbf16>, vector<36x48xbf16>, vector<50x48xf32> -> vector<50x48xf32>
    %380 = arith.addf %375, %379 : vector<50x48xf32>
    %381 = vector.shape_cast %343 : vector<2x5x5x36xbf16> to vector<50x36xbf16>
    %c7_387 = arith.constant 7 : index
    %c0_388 = arith.constant 0 : index
    %c0_389 = arith.constant 0 : index
    %382 = vector.load %arg6[%c7_387, %c0_388, %c0_389] : memref<9x36x48xbf16, #tpu.memory_space<vmem>>, vector<1x36x48xbf16>
    %383 = vector.shape_cast %382 : vector<1x36x48xbf16> to vector<36x48xbf16>
    %cst_390 = arith.constant dense<0.000000e+00> : vector<50x48xf32>
    %384 = tpu.matmul %381, %383, %cst_390 {dimension_numbers = #tpu.dot_dimension_numbers<[1], [0], [0], [1], [0, 0, 1, 1], [], []>} : vector<50x36xbf16>, vector<36x48xbf16>, vector<50x48xf32> -> vector<50x48xf32>
    %385 = arith.addf %380, %384 : vector<50x48xf32>
    %386 = vector.shape_cast %344 : vector<2x5x5x36xbf16> to vector<50x36xbf16>
    %c8_391 = arith.constant 8 : index
    %c0_392 = arith.constant 0 : index
    %c0_393 = arith.constant 0 : index
    %387 = vector.load %arg6[%c8_391, %c0_392, %c0_393] : memref<9x36x48xbf16, #tpu.memory_space<vmem>>, vector<1x36x48xbf16>
    %388 = vector.shape_cast %387 : vector<1x36x48xbf16> to vector<36x48xbf16>
    %cst_394 = arith.constant dense<0.000000e+00> : vector<50x48xf32>
    %389 = tpu.matmul %386, %388, %cst_394 {dimension_numbers = #tpu.dot_dimension_numbers<[1], [0], [0], [1], [0, 0, 1, 1], [], []>} : vector<50x36xbf16>, vector<36x48xbf16>, vector<50x48xf32> -> vector<50x48xf32>
    %390 = arith.addf %385, %389 : vector<50x48xf32>
    %c0_395 = arith.constant 0 : index
    %c0_396 = arith.constant 0 : index
    %391 = vector.load %arg7[%c0_395, %c0_396] : memref<1x48xf32, #tpu.memory_space<vmem>>, vector<1x48xf32>
    %392 = vector.broadcast %391 : vector<1x48xf32> to vector<50x48xf32>
    %393 = arith.addf %390, %392 : vector<50x48xf32>
    %394 = vector.shape_cast %393 : vector<50x48xf32> to vector<2x5x5x48xf32>
    %395 = arith.truncf %394 : vector<2x5x5x48xf32> to vector<2x5x5x48xbf16>
    %396 = vector.extract_strided_slice %395 {offsets = [0, 0, 0, 0], sizes = [2, 3, 3, 48], strides = [1, 1, 1, 1]} : vector<2x5x5x48xbf16> to vector<2x3x3x48xbf16>
    %397 = vector.extract_strided_slice %395 {offsets = [0, 0, 1, 0], sizes = [2, 3, 3, 48], strides = [1, 1, 1, 1]} : vector<2x5x5x48xbf16> to vector<2x3x3x48xbf16>
    %398 = vector.extract_strided_slice %395 {offsets = [0, 0, 2, 0], sizes = [2, 3, 3, 48], strides = [1, 1, 1, 1]} : vector<2x5x5x48xbf16> to vector<2x3x3x48xbf16>
    %399 = vector.extract_strided_slice %395 {offsets = [0, 1, 0, 0], sizes = [2, 3, 3, 48], strides = [1, 1, 1, 1]} : vector<2x5x5x48xbf16> to vector<2x3x3x48xbf16>
    %400 = vector.extract_strided_slice %395 {offsets = [0, 1, 1, 0], sizes = [2, 3, 3, 48], strides = [1, 1, 1, 1]} : vector<2x5x5x48xbf16> to vector<2x3x3x48xbf16>
    %401 = vector.extract_strided_slice %395 {offsets = [0, 1, 2, 0], sizes = [2, 3, 3, 48], strides = [1, 1, 1, 1]} : vector<2x5x5x48xbf16> to vector<2x3x3x48xbf16>
    %402 = vector.extract_strided_slice %395 {offsets = [0, 2, 0, 0], sizes = [2, 3, 3, 48], strides = [1, 1, 1, 1]} : vector<2x5x5x48xbf16> to vector<2x3x3x48xbf16>
    %403 = vector.extract_strided_slice %395 {offsets = [0, 2, 1, 0], sizes = [2, 3, 3, 48], strides = [1, 1, 1, 1]} : vector<2x5x5x48xbf16> to vector<2x3x3x48xbf16>
    %404 = vector.extract_strided_slice %395 {offsets = [0, 2, 2, 0], sizes = [2, 3, 3, 48], strides = [1, 1, 1, 1]} : vector<2x5x5x48xbf16> to vector<2x3x3x48xbf16>
    %cst_397 = arith.constant 0.000000e+00 : f32
    %405 = vector.broadcast %cst_397 : f32 to vector<18x64xf32>
    %406 = vector.shape_cast %396 : vector<2x3x3x48xbf16> to vector<18x48xbf16>
    %c0_398 = arith.constant 0 : index
    %c0_399 = arith.constant 0 : index
    %c0_400 = arith.constant 0 : index
    %407 = vector.load %arg8[%c0_398, %c0_399, %c0_400] : memref<9x48x64xbf16, #tpu.memory_space<vmem>>, vector<1x48x64xbf16>
    %408 = vector.shape_cast %407 : vector<1x48x64xbf16> to vector<48x64xbf16>
    %cst_401 = arith.constant dense<0.000000e+00> : vector<18x64xf32>
    %409 = tpu.matmul %406, %408, %cst_401 {dimension_numbers = #tpu.dot_dimension_numbers<[1], [0], [0], [1], [0, 0, 1, 1], [], []>} : vector<18x48xbf16>, vector<48x64xbf16>, vector<18x64xf32> -> vector<18x64xf32>
    %410 = arith.addf %405, %409 : vector<18x64xf32>
    %411 = vector.shape_cast %397 : vector<2x3x3x48xbf16> to vector<18x48xbf16>
    %c1_402 = arith.constant 1 : index
    %c0_403 = arith.constant 0 : index
    %c0_404 = arith.constant 0 : index
    %412 = vector.load %arg8[%c1_402, %c0_403, %c0_404] : memref<9x48x64xbf16, #tpu.memory_space<vmem>>, vector<1x48x64xbf16>
    %413 = vector.shape_cast %412 : vector<1x48x64xbf16> to vector<48x64xbf16>
    %cst_405 = arith.constant dense<0.000000e+00> : vector<18x64xf32>
    %414 = tpu.matmul %411, %413, %cst_405 {dimension_numbers = #tpu.dot_dimension_numbers<[1], [0], [0], [1], [0, 0, 1, 1], [], []>} : vector<18x48xbf16>, vector<48x64xbf16>, vector<18x64xf32> -> vector<18x64xf32>
    %415 = arith.addf %410, %414 : vector<18x64xf32>
    %416 = vector.shape_cast %398 : vector<2x3x3x48xbf16> to vector<18x48xbf16>
    %c2_406 = arith.constant 2 : index
    %c0_407 = arith.constant 0 : index
    %c0_408 = arith.constant 0 : index
    %417 = vector.load %arg8[%c2_406, %c0_407, %c0_408] : memref<9x48x64xbf16, #tpu.memory_space<vmem>>, vector<1x48x64xbf16>
    %418 = vector.shape_cast %417 : vector<1x48x64xbf16> to vector<48x64xbf16>
    %cst_409 = arith.constant dense<0.000000e+00> : vector<18x64xf32>
    %419 = tpu.matmul %416, %418, %cst_409 {dimension_numbers = #tpu.dot_dimension_numbers<[1], [0], [0], [1], [0, 0, 1, 1], [], []>} : vector<18x48xbf16>, vector<48x64xbf16>, vector<18x64xf32> -> vector<18x64xf32>
    %420 = arith.addf %415, %419 : vector<18x64xf32>
    %421 = vector.shape_cast %399 : vector<2x3x3x48xbf16> to vector<18x48xbf16>
    %c3_410 = arith.constant 3 : index
    %c0_411 = arith.constant 0 : index
    %c0_412 = arith.constant 0 : index
    %422 = vector.load %arg8[%c3_410, %c0_411, %c0_412] : memref<9x48x64xbf16, #tpu.memory_space<vmem>>, vector<1x48x64xbf16>
    %423 = vector.shape_cast %422 : vector<1x48x64xbf16> to vector<48x64xbf16>
    %cst_413 = arith.constant dense<0.000000e+00> : vector<18x64xf32>
    %424 = tpu.matmul %421, %423, %cst_413 {dimension_numbers = #tpu.dot_dimension_numbers<[1], [0], [0], [1], [0, 0, 1, 1], [], []>} : vector<18x48xbf16>, vector<48x64xbf16>, vector<18x64xf32> -> vector<18x64xf32>
    %425 = arith.addf %420, %424 : vector<18x64xf32>
    %426 = vector.shape_cast %400 : vector<2x3x3x48xbf16> to vector<18x48xbf16>
    %c4_414 = arith.constant 4 : index
    %c0_415 = arith.constant 0 : index
    %c0_416 = arith.constant 0 : index
    %427 = vector.load %arg8[%c4_414, %c0_415, %c0_416] : memref<9x48x64xbf16, #tpu.memory_space<vmem>>, vector<1x48x64xbf16>
    %428 = vector.shape_cast %427 : vector<1x48x64xbf16> to vector<48x64xbf16>
    %cst_417 = arith.constant dense<0.000000e+00> : vector<18x64xf32>
    %429 = tpu.matmul %426, %428, %cst_417 {dimension_numbers = #tpu.dot_dimension_numbers<[1], [0], [0], [1], [0, 0, 1, 1], [], []>} : vector<18x48xbf16>, vector<48x64xbf16>, vector<18x64xf32> -> vector<18x64xf32>
    %430 = arith.addf %425, %429 : vector<18x64xf32>
    %431 = vector.shape_cast %401 : vector<2x3x3x48xbf16> to vector<18x48xbf16>
    %c5_418 = arith.constant 5 : index
    %c0_419 = arith.constant 0 : index
    %c0_420 = arith.constant 0 : index
    %432 = vector.load %arg8[%c5_418, %c0_419, %c0_420] : memref<9x48x64xbf16, #tpu.memory_space<vmem>>, vector<1x48x64xbf16>
    %433 = vector.shape_cast %432 : vector<1x48x64xbf16> to vector<48x64xbf16>
    %cst_421 = arith.constant dense<0.000000e+00> : vector<18x64xf32>
    %434 = tpu.matmul %431, %433, %cst_421 {dimension_numbers = #tpu.dot_dimension_numbers<[1], [0], [0], [1], [0, 0, 1, 1], [], []>} : vector<18x48xbf16>, vector<48x64xbf16>, vector<18x64xf32> -> vector<18x64xf32>
    %435 = arith.addf %430, %434 : vector<18x64xf32>
    %436 = vector.shape_cast %402 : vector<2x3x3x48xbf16> to vector<18x48xbf16>
    %c6_422 = arith.constant 6 : index
    %c0_423 = arith.constant 0 : index
    %c0_424 = arith.constant 0 : index
    %437 = vector.load %arg8[%c6_422, %c0_423, %c0_424] : memref<9x48x64xbf16, #tpu.memory_space<vmem>>, vector<1x48x64xbf16>
    %438 = vector.shape_cast %437 : vector<1x48x64xbf16> to vector<48x64xbf16>
    %cst_425 = arith.constant dense<0.000000e+00> : vector<18x64xf32>
    %439 = tpu.matmul %436, %438, %cst_425 {dimension_numbers = #tpu.dot_dimension_numbers<[1], [0], [0], [1], [0, 0, 1, 1], [], []>} : vector<18x48xbf16>, vector<48x64xbf16>, vector<18x64xf32> -> vector<18x64xf32>
    %440 = arith.addf %435, %439 : vector<18x64xf32>
    %441 = vector.shape_cast %403 : vector<2x3x3x48xbf16> to vector<18x48xbf16>
    %c7_426 = arith.constant 7 : index
    %c0_427 = arith.constant 0 : index
    %c0_428 = arith.constant 0 : index
    %442 = vector.load %arg8[%c7_426, %c0_427, %c0_428] : memref<9x48x64xbf16, #tpu.memory_space<vmem>>, vector<1x48x64xbf16>
    %443 = vector.shape_cast %442 : vector<1x48x64xbf16> to vector<48x64xbf16>
    %cst_429 = arith.constant dense<0.000000e+00> : vector<18x64xf32>
    %444 = tpu.matmul %441, %443, %cst_429 {dimension_numbers = #tpu.dot_dimension_numbers<[1], [0], [0], [1], [0, 0, 1, 1], [], []>} : vector<18x48xbf16>, vector<48x64xbf16>, vector<18x64xf32> -> vector<18x64xf32>
    %445 = arith.addf %440, %444 : vector<18x64xf32>
    %446 = vector.shape_cast %404 : vector<2x3x3x48xbf16> to vector<18x48xbf16>
    %c8_430 = arith.constant 8 : index
    %c0_431 = arith.constant 0 : index
    %c0_432 = arith.constant 0 : index
    %447 = vector.load %arg8[%c8_430, %c0_431, %c0_432] : memref<9x48x64xbf16, #tpu.memory_space<vmem>>, vector<1x48x64xbf16>
    %448 = vector.shape_cast %447 : vector<1x48x64xbf16> to vector<48x64xbf16>
    %cst_433 = arith.constant dense<0.000000e+00> : vector<18x64xf32>
    %449 = tpu.matmul %446, %448, %cst_433 {dimension_numbers = #tpu.dot_dimension_numbers<[1], [0], [0], [1], [0, 0, 1, 1], [], []>} : vector<18x48xbf16>, vector<48x64xbf16>, vector<18x64xf32> -> vector<18x64xf32>
    %450 = arith.addf %445, %449 : vector<18x64xf32>
    %c0_434 = arith.constant 0 : index
    %c0_435 = arith.constant 0 : index
    %451 = vector.load %arg9[%c0_434, %c0_435] : memref<1x64xf32, #tpu.memory_space<vmem>>, vector<1x64xf32>
    %452 = vector.broadcast %451 : vector<1x64xf32> to vector<18x64xf32>
    %453 = arith.addf %450, %452 : vector<18x64xf32>
    %454 = vector.shape_cast %453 : vector<18x64xf32> to vector<2x3x3x64xf32>
    %455 = arith.truncf %454 : vector<2x3x3x64xf32> to vector<2x3x3x64xbf16>
    %456 = vector.extract_strided_slice %455 {offsets = [0, 0, 0, 0], sizes = [2, 1, 1, 64], strides = [1, 1, 1, 1]} : vector<2x3x3x64xbf16> to vector<2x1x1x64xbf16>
    %457 = vector.extract_strided_slice %455 {offsets = [0, 0, 1, 0], sizes = [2, 1, 1, 64], strides = [1, 1, 1, 1]} : vector<2x3x3x64xbf16> to vector<2x1x1x64xbf16>
    %458 = vector.extract_strided_slice %455 {offsets = [0, 0, 2, 0], sizes = [2, 1, 1, 64], strides = [1, 1, 1, 1]} : vector<2x3x3x64xbf16> to vector<2x1x1x64xbf16>
    %459 = vector.extract_strided_slice %455 {offsets = [0, 1, 0, 0], sizes = [2, 1, 1, 64], strides = [1, 1, 1, 1]} : vector<2x3x3x64xbf16> to vector<2x1x1x64xbf16>
    %460 = vector.extract_strided_slice %455 {offsets = [0, 1, 1, 0], sizes = [2, 1, 1, 64], strides = [1, 1, 1, 1]} : vector<2x3x3x64xbf16> to vector<2x1x1x64xbf16>
    %461 = vector.extract_strided_slice %455 {offsets = [0, 1, 2, 0], sizes = [2, 1, 1, 64], strides = [1, 1, 1, 1]} : vector<2x3x3x64xbf16> to vector<2x1x1x64xbf16>
    %462 = vector.extract_strided_slice %455 {offsets = [0, 2, 0, 0], sizes = [2, 1, 1, 64], strides = [1, 1, 1, 1]} : vector<2x3x3x64xbf16> to vector<2x1x1x64xbf16>
    %463 = vector.extract_strided_slice %455 {offsets = [0, 2, 1, 0], sizes = [2, 1, 1, 64], strides = [1, 1, 1, 1]} : vector<2x3x3x64xbf16> to vector<2x1x1x64xbf16>
    %464 = vector.extract_strided_slice %455 {offsets = [0, 2, 2, 0], sizes = [2, 1, 1, 64], strides = [1, 1, 1, 1]} : vector<2x3x3x64xbf16> to vector<2x1x1x64xbf16>
    %cst_436 = arith.constant 0.000000e+00 : f32
    %465 = vector.broadcast %cst_436 : f32 to vector<2x10xf32>
    %466 = vector.shape_cast %456 : vector<2x1x1x64xbf16> to vector<2x64xbf16>
    %c0_437 = arith.constant 0 : index
    %c0_438 = arith.constant 0 : index
    %c0_439 = arith.constant 0 : index
    %467 = vector.load %arg10[%c0_437, %c0_438, %c0_439] : memref<9x64x10xbf16, #tpu.memory_space<vmem>>, vector<1x64x10xbf16>
    %468 = vector.shape_cast %467 : vector<1x64x10xbf16> to vector<64x10xbf16>
    %cst_440 = arith.constant dense<0.000000e+00> : vector<2x10xf32>
    %469 = tpu.matmul %466, %468, %cst_440 {dimension_numbers = #tpu.dot_dimension_numbers<[1], [0], [0], [1], [0, 0, 1, 1], [], []>} : vector<2x64xbf16>, vector<64x10xbf16>, vector<2x10xf32> -> vector<2x10xf32>
    %470 = arith.addf %465, %469 : vector<2x10xf32>
    %471 = vector.shape_cast %457 : vector<2x1x1x64xbf16> to vector<2x64xbf16>
    %c1_441 = arith.constant 1 : index
    %c0_442 = arith.constant 0 : index
    %c0_443 = arith.constant 0 : index
    %472 = vector.load %arg10[%c1_441, %c0_442, %c0_443] : memref<9x64x10xbf16, #tpu.memory_space<vmem>>, vector<1x64x10xbf16>
    %473 = vector.shape_cast %472 : vector<1x64x10xbf16> to vector<64x10xbf16>
    %cst_444 = arith.constant dense<0.000000e+00> : vector<2x10xf32>
    %474 = tpu.matmul %471, %473, %cst_444 {dimension_numbers = #tpu.dot_dimension_numbers<[1], [0], [0], [1], [0, 0, 1, 1], [], []>} : vector<2x64xbf16>, vector<64x10xbf16>, vector<2x10xf32> -> vector<2x10xf32>
    %475 = arith.addf %470, %474 : vector<2x10xf32>
    %476 = vector.shape_cast %458 : vector<2x1x1x64xbf16> to vector<2x64xbf16>
    %c2_445 = arith.constant 2 : index
    %c0_446 = arith.constant 0 : index
    %c0_447 = arith.constant 0 : index
    %477 = vector.load %arg10[%c2_445, %c0_446, %c0_447] : memref<9x64x10xbf16, #tpu.memory_space<vmem>>, vector<1x64x10xbf16>
    %478 = vector.shape_cast %477 : vector<1x64x10xbf16> to vector<64x10xbf16>
    %cst_448 = arith.constant dense<0.000000e+00> : vector<2x10xf32>
    %479 = tpu.matmul %476, %478, %cst_448 {dimension_numbers = #tpu.dot_dimension_numbers<[1], [0], [0], [1], [0, 0, 1, 1], [], []>} : vector<2x64xbf16>, vector<64x10xbf16>, vector<2x10xf32> -> vector<2x10xf32>
    %480 = arith.addf %475, %479 : vector<2x10xf32>
    %481 = vector.shape_cast %459 : vector<2x1x1x64xbf16> to vector<2x64xbf16>
    %c3_449 = arith.constant 3 : index
    %c0_450 = arith.constant 0 : index
    %c0_451 = arith.constant 0 : index
    %482 = vector.load %arg10[%c3_449, %c0_450, %c0_451] : memref<9x64x10xbf16, #tpu.memory_space<vmem>>, vector<1x64x10xbf16>
    %483 = vector.shape_cast %482 : vector<1x64x10xbf16> to vector<64x10xbf16>
    %cst_452 = arith.constant dense<0.000000e+00> : vector<2x10xf32>
    %484 = tpu.matmul %481, %483, %cst_452 {dimension_numbers = #tpu.dot_dimension_numbers<[1], [0], [0], [1], [0, 0, 1, 1], [], []>} : vector<2x64xbf16>, vector<64x10xbf16>, vector<2x10xf32> -> vector<2x10xf32>
    %485 = arith.addf %480, %484 : vector<2x10xf32>
    %486 = vector.shape_cast %460 : vector<2x1x1x64xbf16> to vector<2x64xbf16>
    %c4_453 = arith.constant 4 : index
    %c0_454 = arith.constant 0 : index
    %c0_455 = arith.constant 0 : index
    %487 = vector.load %arg10[%c4_453, %c0_454, %c0_455] : memref<9x64x10xbf16, #tpu.memory_space<vmem>>, vector<1x64x10xbf16>
    %488 = vector.shape_cast %487 : vector<1x64x10xbf16> to vector<64x10xbf16>
    %cst_456 = arith.constant dense<0.000000e+00> : vector<2x10xf32>
    %489 = tpu.matmul %486, %488, %cst_456 {dimension_numbers = #tpu.dot_dimension_numbers<[1], [0], [0], [1], [0, 0, 1, 1], [], []>} : vector<2x64xbf16>, vector<64x10xbf16>, vector<2x10xf32> -> vector<2x10xf32>
    %490 = arith.addf %485, %489 : vector<2x10xf32>
    %491 = vector.shape_cast %461 : vector<2x1x1x64xbf16> to vector<2x64xbf16>
    %c5_457 = arith.constant 5 : index
    %c0_458 = arith.constant 0 : index
    %c0_459 = arith.constant 0 : index
    %492 = vector.load %arg10[%c5_457, %c0_458, %c0_459] : memref<9x64x10xbf16, #tpu.memory_space<vmem>>, vector<1x64x10xbf16>
    %493 = vector.shape_cast %492 : vector<1x64x10xbf16> to vector<64x10xbf16>
    %cst_460 = arith.constant dense<0.000000e+00> : vector<2x10xf32>
    %494 = tpu.matmul %491, %493, %cst_460 {dimension_numbers = #tpu.dot_dimension_numbers<[1], [0], [0], [1], [0, 0, 1, 1], [], []>} : vector<2x64xbf16>, vector<64x10xbf16>, vector<2x10xf32> -> vector<2x10xf32>
    %495 = arith.addf %490, %494 : vector<2x10xf32>
    %496 = vector.shape_cast %462 : vector<2x1x1x64xbf16> to vector<2x64xbf16>
    %c6_461 = arith.constant 6 : index
    %c0_462 = arith.constant 0 : index
    %c0_463 = arith.constant 0 : index
    %497 = vector.load %arg10[%c6_461, %c0_462, %c0_463] : memref<9x64x10xbf16, #tpu.memory_space<vmem>>, vector<1x64x10xbf16>
    %498 = vector.shape_cast %497 : vector<1x64x10xbf16> to vector<64x10xbf16>
    %cst_464 = arith.constant dense<0.000000e+00> : vector<2x10xf32>
    %499 = tpu.matmul %496, %498, %cst_464 {dimension_numbers = #tpu.dot_dimension_numbers<[1], [0], [0], [1], [0, 0, 1, 1], [], []>} : vector<2x64xbf16>, vector<64x10xbf16>, vector<2x10xf32> -> vector<2x10xf32>
    %500 = arith.addf %495, %499 : vector<2x10xf32>
    %501 = vector.shape_cast %463 : vector<2x1x1x64xbf16> to vector<2x64xbf16>
    %c7_465 = arith.constant 7 : index
    %c0_466 = arith.constant 0 : index
    %c0_467 = arith.constant 0 : index
    %502 = vector.load %arg10[%c7_465, %c0_466, %c0_467] : memref<9x64x10xbf16, #tpu.memory_space<vmem>>, vector<1x64x10xbf16>
    %503 = vector.shape_cast %502 : vector<1x64x10xbf16> to vector<64x10xbf16>
    %cst_468 = arith.constant dense<0.000000e+00> : vector<2x10xf32>
    %504 = tpu.matmul %501, %503, %cst_468 {dimension_numbers = #tpu.dot_dimension_numbers<[1], [0], [0], [1], [0, 0, 1, 1], [], []>} : vector<2x64xbf16>, vector<64x10xbf16>, vector<2x10xf32> -> vector<2x10xf32>
    %505 = arith.addf %500, %504 : vector<2x10xf32>
    %506 = vector.shape_cast %464 : vector<2x1x1x64xbf16> to vector<2x64xbf16>
    %c8_469 = arith.constant 8 : index
    %c0_470 = arith.constant 0 : index
    %c0_471 = arith.constant 0 : index
    %507 = vector.load %arg10[%c8_469, %c0_470, %c0_471] : memref<9x64x10xbf16, #tpu.memory_space<vmem>>, vector<1x64x10xbf16>
    %508 = vector.shape_cast %507 : vector<1x64x10xbf16> to vector<64x10xbf16>
    %cst_472 = arith.constant dense<0.000000e+00> : vector<2x10xf32>
    %509 = tpu.matmul %506, %508, %cst_472 {dimension_numbers = #tpu.dot_dimension_numbers<[1], [0], [0], [1], [0, 0, 1, 1], [], []>} : vector<2x64xbf16>, vector<64x10xbf16>, vector<2x10xf32> -> vector<2x10xf32>
    %510 = arith.addf %505, %509 : vector<2x10xf32>
    %c0_473 = arith.constant 0 : index
    %c0_474 = arith.constant 0 : index
    %511 = vector.load %arg11[%c0_473, %c0_474] : memref<1x10xf32, #tpu.memory_space<vmem>>, vector<1x10xf32>
    %512 = vector.broadcast %511 : vector<1x10xf32> to vector<2x10xf32>
    %513 = arith.addf %510, %512 : vector<2x10xf32>
    %514 = vector.shape_cast %513 : vector<2x10xf32> to vector<2x1x1x10xf32>
    %515 = arith.truncf %514 : vector<2x1x1x10xf32> to vector<2x1x1x10xbf16>
    %516 = vector.shape_cast %515 : vector<2x1x1x10xbf16> to vector<2x10xbf16>
    %c0_475 = arith.constant 0 : index
    %c0_476 = arith.constant 0 : index
    %517 = vector.load %arg12[%c0_475, %c0_476] : memref<10x10xbf16, #tpu.memory_space<vmem>>, vector<10x10xbf16>
    %cst_477 = arith.constant dense<0.000000e+00> : vector<2x10xf32>
    %518 = tpu.matmul %516, %517, %cst_477 {dimension_numbers = #tpu.dot_dimension_numbers<[1], [0], [0], [1], [0, 0, 1, 1], [], []>} : vector<2x10xbf16>, vector<10x10xbf16>, vector<2x10xf32> -> vector<2x10xf32>
    %c0_478 = arith.constant 0 : index
    %c0_479 = arith.constant 0 : index
    %519 = vector.load %arg13[%c0_478, %c0_479] : memref<1x10xf32, #tpu.memory_space<vmem>>, vector<1x10xf32>
    %520 = vector.broadcast %519 : vector<1x10xf32> to vector<2x10xf32>
    %521 = arith.addf %518, %520 : vector<2x10xf32>
    %c0_480 = arith.constant 0 : index
    %c0_481 = arith.constant 0 : index
    %522 = vector.load %arg14[%c0_480, %c0_481] : memref<1x10xf32, #tpu.memory_space<vmem>>, vector<1x10xf32>
    %523 = vector.broadcast %522 : vector<1x10xf32> to vector<2x10xf32>
    %524 = arith.mulf %521, %523 : vector<2x10xf32>
    %cst_482 = arith.constant dense<0.000000e+00> : vector<2xf32>
    %525 = vector.multi_reduction <add>, %524, %cst_482 [1] : vector<2x10xf32> to vector<2xf32>
    %526 = vector.shape_cast %525 : vector<2xf32> to vector<2x1xf32>
    %c0_483 = arith.constant 0 : index
    %c0_484 = arith.constant 0 : index
    %527 = vector.load %arg15[%c0_483, %c0_484] : memref<1x1xf32, #tpu.memory_space<vmem>>, vector<1x1xf32>
    %528 = vector.broadcast %527 : vector<1x1xf32> to vector<2x1xf32>
    %529 = arith.addf %526, %528 : vector<2x1xf32>
    %c0_485 = arith.constant 0 : index
    %c0_486 = arith.constant 0 : index
    %530 = vector.load %arg16[%c0_485, %c0_486] : memref<2x1xf32, #tpu.memory_space<vmem>>, vector<2x1xf32>
    tpu.vector_store %arg16[%c0_485, %c0_486], %529 {strides = array<i32>} : memref<2x1xf32, #tpu.memory_space<vmem>>, vector<2x1xf32>,
    return
  }
  func.func @transform_0(%arg0: i32) -> (i32, i32, i32, i32, i32) {
    %c0_i32 = arith.constant 0 : i32
    %c0_i32_0 = arith.constant 0 : i32
    %c0_i32_1 = arith.constant 0 : i32
    %c0_i32_2 = arith.constant 0 : i32
    %c0_i32_3 = arith.constant 0 : i32
    %c0_i32_4 = arith.constant 0 : i32
    return %c0_i32, %c0_i32_0, %c0_i32_1, %c0_i32_2, %c0_i32_3 : i32, i32, i32, i32, i32
  }
  func.func @transform_1(%arg0: i32) -> (i32, i32, i32) {
    %c0_i32 = arith.constant 0 : i32
    %c0_i32_0 = arith.constant 0 : i32
    %c0_i32_1 = arith.constant 0 : i32
    %c0_i32_2 = arith.constant 0 : i32
    return %c0_i32, %c0_i32_0, %c0_i32_1 : i32, i32, i32
  }
  func.func @transform_2(%arg0: i32) -> (i32, i32) {
    %c0_i32 = arith.constant 0 : i32
    %c0_i32_0 = arith.constant 0 : i32
    %c0_i32_1 = arith.constant 0 : i32
    return %c0_i32, %c0_i32_0 : i32, i32
  }
  func.func @transform_3(%arg0: i32) -> (i32, i32, i32) {
    %c0_i32 = arith.constant 0 : i32
    %c0_i32_0 = arith.constant 0 : i32
    %c0_i32_1 = arith.constant 0 : i32
    %c0_i32_2 = arith.constant 0 : i32
    return %c0_i32, %c0_i32_0, %c0_i32_1 : i32, i32, i32
  }
  func.func @transform_4(%arg0: i32) -> (i32, i32) {
    %c0_i32 = arith.constant 0 : i32
    %c0_i32_0 = arith.constant 0 : i32
    %c0_i32_1 = arith.constant 0 : i32
    return %c0_i32, %c0_i32_0 : i32, i32
  }
  func.func @transform_5(%arg0: i32) -> (i32, i32, i32) {
    %c0_i32 = arith.constant 0 : i32
    %c0_i32_0 = arith.constant 0 : i32
    %c0_i32_1 = arith.constant 0 : i32
    %c0_i32_2 = arith.constant 0 : i32
    return %c0_i32, %c0_i32_0, %c0_i32_1 : i32, i32, i32
  }
  func.func @transform_6(%arg0: i32) -> (i32, i32) {
    %c0_i32 = arith.constant 0 : i32
    %c0_i32_0 = arith.constant 0 : i32
    %c0_i32_1 = arith.constant 0 : i32
    return %c0_i32, %c0_i32_0 : i32, i32
  }
  func.func @transform_7(%arg0: i32) -> (i32, i32, i32) {
    %c0_i32 = arith.constant 0 : i32
    %c0_i32_0 = arith.constant 0 : i32
    %c0_i32_1 = arith.constant 0 : i32
    %c0_i32_2 = arith.constant 0 : i32
    return %c0_i32, %c0_i32_0, %c0_i32_1 : i32, i32, i32
  }
  func.func @transform_8(%arg0: i32) -> (i32, i32) {
    %c0_i32 = arith.constant 0 : i32
    %c0_i32_0 = arith.constant 0 : i32
    %c0_i32_1 = arith.constant 0 : i32
    return %c0_i32, %c0_i32_0 : i32, i32
  }
  func.func @transform_9(%arg0: i32) -> (i32, i32, i32) {
    %c0_i32 = arith.constant 0 : i32
    %c0_i32_0 = arith.constant 0 : i32
    %c0_i32_1 = arith.constant 0 : i32
    %c0_i32_2 = arith.constant 0 : i32
    return %c0_i32, %c0_i32_0, %c0_i32_1 : i32, i32, i32
  }
  func.func @transform_10(%arg0: i32) -> (i32, i32) {
    %c0_i32 = arith.constant 0 : i32
    %c0_i32_0 = arith.constant 0 : i32
    %c0_i32_1 = arith.constant 0 : i32
    return %c0_i32, %c0_i32_0 : i32, i32
  }
  func.func @transform_11(%arg0: i32) -> (i32, i32) {
    %c0_i32 = arith.constant 0 : i32
    %c0_i32_0 = arith.constant 0 : i32
    %c0_i32_1 = arith.constant 0 : i32
    return %c0_i32, %c0_i32_0 : i32, i32
  }
  func.func @transform_12(%arg0: i32) -> (i32, i32) {
    %c0_i32 = arith.constant 0 : i32
    %c0_i32_0 = arith.constant 0 : i32
    %c0_i32_1 = arith.constant 0 : i32
    return %c0_i32, %c0_i32_0 : i32, i32
  }
  func.func @transform_13(%arg0: i32) -> (i32, i32) {
    %c0_i32 = arith.constant 0 : i32
    %c0_i32_0 = arith.constant 0 : i32
    %c0_i32_1 = arith.constant 0 : i32
    return %c0_i32, %c0_i32_0 : i32, i32
  }
  func.func @transform_14(%arg0: i32) -> (i32, i32) {
    %c0_i32 = arith.constant 0 : i32
    %c0_i32_0 = arith.constant 0 : i32
    %c0_i32_1 = arith.constant 0 : i32
    return %c0_i32, %c0_i32_0 : i32, i32
  }
  func.func @transform_15(%arg0: i32) -> (i32, i32) {
    %c0_i32 = arith.constant 0 : i32
    %c0_i32_0 = arith.constant 0 : i32
    %c0_i32_1 = arith.constant 0 : i32
    return %c0_i32, %c0_i32_0 : i32, i32
  }
}

</mosaic_0001>

<llo_original>
// kernel: servonet_forward.1
$region0: #{servonet_forward.1}
  #allocation0 [shape = 'u32[]', space=smem, size = 0x4, offset = 0x4, fixed_abs, tag = 'smem constant byte address 0x4 - core index']
  #allocation1 [shape = 'u32[72,128]{1,0:T(1,128)}', space=vmem, size = 0x9000, scoped, tag = 'internal scratch']
  #allocation2 [shape = 'f32[1,1]{1,0:T(1,128)S(1)}', space=vmem, size = 0x200, scoped, tag = 'scoped memory for servonet_forward.1']
  %s0 = inlined_call_operand.vmem [shape: bf16[16,2,9,9,3], index: 0, kind: input, shape index: {}]
  %s1 = inlined_call_operand.vmem [shape: bf16[9,3,24], index: 1, kind: input, shape index: {}]
  %s2 = inlined_call_operand.vmem [shape: f32[1,24], index: 2, kind: input, shape index: {}]
  %s3 = inlined_call_operand.vmem [shape: bf16[9,24,36], index: 3, kind: input, shape index: {}]
  %s4 = inlined_call_operand.vmem [shape: f32[1,36], index: 4, kind: input, shape index: {}]
  %s5 = inlined_call_operand.vmem [shape: bf16[9,36,48], index: 5, kind: input, shape index: {}]
  %s6 = inlined_call_operand.vmem [shape: f32[1,48], index: 6, kind: input, shape index: {}]
  %s7 = inlined_call_operand.vmem [shape: bf16[9,48,64], index: 7, kind: input, shape index: {}]
  %s8 = inlined_call_operand.vmem [shape: f32[1,64], index: 8, kind: input, shape index: {}]
  %s9 = inlined_call_operand.vmem [shape: bf16[9,64,10], index: 9, kind: input, shape index: {}]
  %s10 = inlined_call_operand.vmem [shape: f32[1,10], index: 10, kind: input, shape index: {}]
  %s11 = inlined_call_operand.vmem [shape: bf16[10,10], index: 11, kind: input, shape index: {}]
  %s12 = inlined_call_operand.vmem [shape: f32[1,10], index: 12, kind: input, shape index: {}]
  %s13 = inlined_call_operand.vmem [shape: f32[1,10], index: 13, kind: input, shape index: {}]
  %s14 = inlined_call_operand.<no memory space> [shape: f32[1,1], index: 14, kind: input, shape index: {}]
  %s15 = inlined_call_operand.vmem [shape: f32[2,1], index: 15, kind: output, shape index: {}]
  %s16 = sld [smem:[#allocation0]]
  $region70: #{servonet_forward.1} parent=0
    _
  %s18 = ssub.s32 1, %s16
  %s19 = scalar_select 0, %s18, %s16
  %v20 = vstv %s14
  %21 = vst [vmem:[#allocation2] sm:$0x1] %v20
  // Predicated region
  $region2: #{servonet_forward.1} parent=0 // pred_check
    _
  $region3: #{servonet_forward.1} parent=0 // pred_check_branch
    %23 = sbr.rel (0) target = $region5
  $region4: #{servonet_forward.1} parent=0 // pred_region
    _
  $region5: #{servonet_forward.1} parent=0 // pred_fallthru
    _
  // Predicated region
  $region6: #{servonet_forward.1} parent=0 // pred_check
    _
  $region7: #{servonet_forward.1} parent=0 // pred_check_branch
    %25 = sbr.rel (0) target = $region9
  $region8: #{servonet_forward.1} parent=0 // pred_region
    _
  $region9: #{servonet_forward.1} parent=0 // pred_fallthru
    _
  // Predicated region
  $region10: #{servonet_forward.1} parent=0 // pred_check
    _
  $region11: #{servonet_forward.1} parent=0 // pred_check_branch
    %27 = sbr.rel (0) target = $region13
  $region12: #{servonet_forward.1} parent=0 // pred_region
    _
  $region13: #{servonet_forward.1} parent=0 // pred_fallthru
    _
  // Predicated region
  $region14: #{servonet_forward.1} parent=0 // pred_check
    _
  $region15: #{servonet_forward.1} parent=0 // pred_check_branch
    %29 = sbr.rel (0) target = $region17
  $region16: #{servonet_forward.1} parent=0 // pred_region
    _
  $region17: #{servonet_forward.1} parent=0 // pred_fallthru
    _
  // Predicated region
  $region18: #{servonet_forward.1} parent=0 // pred_check
    _
  $region19: #{servonet_forward.1} parent=0 // pred_check_branch
    %31 = sbr.rel (0) target = $region21
  $region20: #{servonet_forward.1} parent=0 // pred_region
    _
  $region21: #{servonet_forward.1} parent=0 // pred_fallthru
    _
  // Predicated region
  $region22: #{servonet_forward.1} parent=0 // pred_check
    _
  $region23: #{servonet_forward.1} parent=0 // pred_check_branch
    %33 = sbr.rel (0) target = $region25
  $region24: #{servonet_forward.1} parent=0 // pred_region
    _
  $region25: #{servonet_forward.1} parent=0 // pred_fallthru
    _
  // Predicated region
  $region26: #{servonet_forward.1} parent=0 // pred_check
    _
  $region27: #{servonet_forward.1} parent=0 // pred_check_branch
    %35 = sbr.rel (0) target = $region29
  $region28: #{servonet_forward.1} parent=0 // pred_region
    _
  $region29: #{servonet_forward.1} parent=0 // pred_fallthru
    _
  // Predicated region
  $region30: #{servonet_forward.1} parent=0 // pred_check
    _
  $region31: #{servonet_forward.1} parent=0 // pred_check_branch
    %37 = sbr.rel (0) target = $region33
  $region32: #{servonet_forward.1} parent=0 // pred_region
    _
  $region33: #{servonet_forward.1} parent=0 // pred_fallthru
    _
  // Predicated region
  $region34: #{servonet_forward.1} parent=0 // pred_check
    _
  $region35: #{servonet_forward.1} parent=0 // pred_check_branch
    %39 = sbr.rel (0) target = $region37
  $region36: #{servonet_forward.1} parent=0 // pred_region
    _
  $region37: #{servonet_forward.1} parent=0 // pred_fallthru
    _
  // Predicated region
  $region38: #{servonet_forward.1} parent=0 // pred_check
    _
  $region39: #{servonet_forward.1} parent=0 // pred_check_branch
    %41 = sbr.rel (0) target = $region41
  $region40: #{servonet_forward.1} parent=0 // pred_region
    _
  $region41: #{servonet_forward.1} parent=0 // pred_fallthru
    _
  // Predicated region
  $region42: #{servonet_forward.1} parent=0 // pred_check
    _
  $region43: #{servonet_forward.1} parent=0 // pred_check_branch
    %43 = sbr.rel (0) target = $region45
  $region44: #{servonet_forward.1} parent=0 // pred_region
    _
  $region45: #{servonet_forward.1} parent=0 // pred_fallthru
    _
  // Predicated region
  $region46: #{servonet_forward.1} parent=0 // pred_check
    _
  $region47: #{servonet_forward.1} parent=0 // pred_check_branch
    %45 = sbr.rel (0) target = $region49
  $region48: #{servonet_forward.1} parent=0 // pred_region
    _
  $region49: #{servonet_forward.1} parent=0 // pred_fallthru
    _
  // Predicated region
  $region50: #{servonet_forward.1} parent=0 // pred_check
    _
  $region51: #{servonet_forward.1} parent=0 // pred_check_branch
    %47 = sbr.rel (0) target = $region53
  $region52: #{servonet_forward.1} parent=0 // pred_region
    _
  $region53: #{servonet_forward.1} parent=0 // pred_fallthru
    _
  // Predicated region
  $region54: #{servonet_forward.1} parent=0 // pred_check
    _
  $region55: #{servonet_forward.1} parent=0 // pred_check_branch
    %49 = sbr.rel (0) target = $region57
  $region56: #{servonet_forward.1} parent=0 // pred_region
    _
  $region57: #{servonet_forward.1} parent=0 // pred_fallthru
    _
  // Predicated region
  $region58: #{servonet_forward.1} parent=0 // pred_check
    _
  $region59: #{servonet_forward.1} parent=0 // pred_check_branch
    %51 = sbr.rel (0) target = $region61
  $region60: #{servonet_forward.1} parent=0 // pred_region
    _
  $region61: #{servonet_forward.1} parent=0 // pred_fallthru
    _
  %v53 = vld [vmem:[%s0] sm:$0xf]
  %v54 = vld [vmem:[%s0 + $0x8] sm:$0xf]
  %v55 = vld [vmem:[%s0 + $0x10] sm:$0xf]
  %v56 = vld [vmem:[%s0 + $0x18] sm:$0xf]
  %v57 = vld [vmem:[%s0 + $0x20] sm:$0xf]
  %v58 = vld [vmem:[%s0 + $0x28] sm:$0xf]
  %v59 = vld [vmem:[%s0 + $0x30] sm:$0xf]
  %v60 = vld [vmem:[%s0 + $0x38] sm:$0xf]
  %v61 = vld [vmem:[%s0 + $0x48] sm:$0xf]
  %v62 = vld [vmem:[%s0 + $0x50] sm:$0xf]
  %v63 = vld [vmem:[%s0 + $0x58] sm:$0xf]
  %v64 = vld [vmem:[%s0 + $0x60] sm:$0xf]
  %v65 = vld [vmem:[%s0 + $0x68] sm:$0xf]
  %v66 = vld [vmem:[%s0 + $0x70] sm:$0xf]
  %v67 = vld [vmem:[%s0 + $0x78] sm:$0xf]
  %v68 = vld [vmem:[%s0 + $0x80] sm:$0xf]
  %s69 = scalar_lea.vmem %s0, 144
  %v70 = vld [vmem:[%s69] sm:$0xf]
  %v71 = vld [vmem:[%s69 + $0x8] sm:$0xf]
  %v72 = vld [vmem:[%s69 + $0x10] sm:$0xf]
  %v73 = vld [vmem:[%s69 + $0x18] sm:$0xf]
  %v74 = vld [vmem:[%s69 + $0x20] sm:$0xf]
  %v75 = vld [vmem:[%s69 + $0x28] sm:$0xf]
  %v76 = vld [vmem:[%s69 + $0x30] sm:$0xf]
  %v77 = vld [vmem:[%s69 + $0x38] sm:$0xf]
  %v78 = vld [vmem:[%s69 + $0x48] sm:$0xf]
  %v79 = vld [vmem:[%s69 + $0x50] sm:$0xf]
  %v80 = vld [vmem:[%s69 + $0x58] sm:$0xf]
  %v81 = vld [vmem:[%s69 + $0x60] sm:$0xf]
  %v82 = vld [vmem:[%s69 + $0x68] sm:$0xf]
  %v83 = vld [vmem:[%s69 + $0x70] sm:$0xf]
  %v84 = vld [vmem:[%s69 + $0x78] sm:$0xf]
  %v85 = vld [vmem:[%s69 + $0x80] sm:$0xf]
  %s86 = scalar_lea.vmem %s0, 288
  %v87 = vld [vmem:[%s86] sm:$0xf]
  %v88 = vld [vmem:[%s86 + $0x8] sm:$0xf]
  %v89 = vld [vmem:[%s86 + $0x10] sm:$0xf]
  %v90 = vld [vmem:[%s86 + $0x18] sm:$0xf]
  %v91 = vld [vmem:[%s86 + $0x20] sm:$0xf]
  %v92 = vld [vmem:[%s86 + $0x28] sm:$0xf]
  %v93 = vld [vmem:[%s86 + $0x30] sm:$0xf]
  %v94 = vld [vmem:[%s86 + $0x38] sm:$0xf]
  %v95 = vld [vmem:[%s86 + $0x48] sm:$0xf]
  %v96 = vld [vmem:[%s86 + $0x50] sm:$0xf]
  %v97 = vld [vmem:[%s86 + $0x58] sm:$0xf]
  %v98 = vld [vmem:[%s86 + $0x60] sm:$0xf]
  %v99 = vld [vmem:[%s86 + $0x68] sm:$0xf]
  %v100 = vld [vmem:[%s86 + $0x70] sm:$0xf]
  %v101 = vld [vmem:[%s86 + $0x78] sm:$0xf]
  %v102 = vld [vmem:[%s86 + $0x80] sm:$0xf]
  %s103 = scalar_lea.vmem %s0, 576
  %v104 = vld [vmem:[%s103] sm:$0xf]
  %v105 = vld [vmem:[%s103 + $0x8] sm:$0xf]
  %v106 = vld [vmem:[%s103 + $0x10] sm:$0xf]
  %v107 = vld [vmem:[%s103 + $0x18] sm:$0xf]
  %v108 = vld [vmem:[%s103 + $0x20] sm:$0xf]
  %v109 = vld [vmem:[%s103 + $0x28] sm:$0xf]
  %v110 = vld [vmem:[%s103 + $0x30] sm:$0xf]
  %v111 = vld [vmem:[%s103 + $0x38] sm:$0xf]
  %v112 = vld [vmem:[%s103 + $0x48] sm:$0xf]
  %v113 = vld [vmem:[%s103 + $0x50] sm:$0xf]
  %v114 = vld [vmem:[%s103 + $0x58] sm:$0xf]
  %v115 = vld [vmem:[%s103 + $0x60] sm:$0xf]
  %v116 = vld [vmem:[%s103 + $0x68] sm:$0xf]
  %v117 = vld [vmem:[%s103 + $0x70] sm:$0xf]
  %v118 = vld [vmem:[%s103 + $0x78] sm:$0xf]
  %v119 = vld [vmem:[%s103 + $0x80] sm:$0xf]
  %s120 = scalar_lea.vmem %s0, 720
  %v121 = vld [vmem:[%s120] sm:$0xf]
  %v122 = vld [vmem:[%s120 + $0x8] sm:$0xf]
  %v123 = vld [vmem:[%s120 + $0x10] sm:$0xf]
  %v124 = vld [vmem:[%s120 + $0x18] sm:$0xf]
  %v125 = vld [vmem:[%s120 + $0x20] sm:$0xf]
  %v126 = vld [vmem:[%s120 + $0x28] sm:$0xf]
  %v127 = vld [vmem:[%s120 + $0x30] sm:$0xf]
  %v128 = vld [vmem:[%s120 + $0x38] sm:$0xf]
  %v129 = vld [vmem:[%s120 + $0x48] sm:$0xf]
  %v130 = vld [vmem:[%s120 + $0x50] sm:$0xf]
  %v131 = vld [vmem:[%s120 + $0x58] sm:$0xf]
  %v132 = vld [vmem:[%s120 + $0x60] sm:$0xf]
  %v133 = vld [vmem:[%s120 + $0x68] sm:$0xf]
  %v134 = vld [vmem:[%s120 + $0x70] sm:$0xf]
  %v135 = vld [vmem:[%s120 + $0x78] sm:$0xf]
  %v136 = vld [vmem:[%s120 + $0x80] sm:$0xf]
  %s137 = scalar_lea.vmem %s0, 864
  %v138 = vld [vmem:[%s137] sm:$0xf]
  %v139 = vld [vmem:[%s137 + $0x8] sm:$0xf]
  %v140 = vld [vmem:[%s137 + $0x10] sm:$0xf]
  %v141 = vld [vmem:[%s137 + $0x18] sm:$0xf]
  %v142 = vld [vmem:[%s137 + $0x20] sm:$0xf]
  %v143 = vld [vmem:[%s137 + $0x28] sm:$0xf]
  %v144 = vld [vmem:[%s137 + $0x30] sm:$0xf]
  %v145 = vld [vmem:[%s137 + $0x38] sm:$0xf]
  %v146 = vld [vmem:[%s137 + $0x48] sm:$0xf]
  %v147 = vld [vmem:[%s137 + $0x50] sm:$0xf]
  %v148 = vld [vmem:[%s137 + $0x58] sm:$0xf]
  %v149 = vld [vmem:[%s137 + $0x60] sm:$0xf]
  %v150 = vld [vmem:[%s137 + $0x68] sm:$0xf]
  %v151 = vld [vmem:[%s137 + $0x70] sm:$0xf]
  %v152 = vld [vmem:[%s137 + $0x78] sm:$0xf]
  %v153 = vld [vmem:[%s137 + $0x80] sm:$0xf]
  %s154 = scalar_lea.vmem %s0, 1152
  %v155 = vld [vmem:[%s154] sm:$0xf]
  %v156 = vld [vmem:[%s154 + $0x8] sm:$0xf]
  %v157 = vld [vmem:[%s154 + $0x10] sm:$0xf]
  %v158 = vld [vmem:[%s154 + $0x18] sm:$0xf]
  %v159 = vld [vmem:[%s154 + $0x20] sm:$0xf]
  %v160 = vld [vmem:[%s154 + $0x28] sm:$0xf]
  %v161 = vld [vmem:[%s154 + $0x30] sm:$0xf]
  %v162 = vld [vmem:[%s154 + $0x38] sm:$0xf]
  %v163 = vld [vmem:[%s154 + $0x48] sm:$0xf]
  %v164 = vld [vmem:[%s154 + $0x50] sm:$0xf]
  %v165 = vld [vmem:[%s154 + $0x58] sm:$0xf]
  %v166 = vld [vmem:[%s154 + $0x60] sm:$0xf]
  %v167 = vld [vmem:[%s154 + $0x68] sm:$0xf]
  %v168 = vld [vmem:[%s154 + $0x70] sm:$0xf]
  %v169 = vld [vmem:[%s154 + $0x78] sm:$0xf]
  %v170 = vld [vmem:[%s154 + $0x80] sm:$0xf]
  %s171 = scalar_lea.vmem %s0, 1296
  %v172 = vld [vmem:[%s171] sm:$0xf]
  %v173 = vld [vmem:[%s171 + $0x8] sm:$0xf]
  %v174 = vld [vmem:[%s171 + $0x10] sm:$0xf]
  %v175 = vld [vmem:[%s171 + $0x18] sm:$0xf]
  %v176 = vld [vmem:[%s171 + $0x20] sm:$0xf]
  %v177 = vld [vmem:[%s171 + $0x28] sm:$0xf]
  %v178 = vld [vmem:[%s171 + $0x30] sm:$0xf]
  %v179 = vld [vmem:[%s171 + $0x38] sm:$0xf]
  %v180 = vld [vmem:[%s171 + $0x48] sm:$0xf]
  %v181 = vld [vmem:[%s171 + $0x50] sm:$0xf]
  %v182 = vld [vmem:[%s171 + $0x58] sm:$0xf]
  %v183 = vld [vmem:[%s171 + $0x60] sm:$0xf]
  %v184 = vld [vmem:[%s171 + $0x68] sm:$0xf]
  %v185 = vld [vmem:[%s171 + $0x70] sm:$0xf]
  %v186 = vld [vmem:[%s171 + $0x78] sm:$0xf]
  %v187 = vld [vmem:[%s171 + $0x80] sm:$0xf]
  %s188 = scalar_lea.vmem %s0, 1440
  %v189 = vld [vmem:[%s188] sm:$0xf]
  %v190 = vld [vmem:[%s188 + $0x8] sm:$0xf]
  %v191 = vld [vmem:[%s188 + $0x10] sm:$0xf]
  %v192 = vld [vmem:[%s188 + $0x18] sm:$0xf]
  %v193 = vld [vmem:[%s188 + $0x20] sm:$0xf]
  %v194 = vld [vmem:[%s188 + $0x28] sm:$0xf]
  %v195 = vld [vmem:[%s188 + $0x30] sm:$0xf]
  %v196 = vld [vmem:[%s188 + $0x38] sm:$0xf]
  %v197 = vld [vmem:[%s188 + $0x48] sm:$0xf]
  %v198 = vld [vmem:[%s188 + $0x50] sm:$0xf]
  %v199 = vld [vmem:[%s188 + $0x58] sm:$0xf]
  %v200 = vld [vmem:[%s188 + $0x60] sm:$0xf]
  %v201 = vld [vmem:[%s188 + $0x68] sm:$0xf]
  %v202 = vld [vmem:[%s188 + $0x70] sm:$0xf]
  %v203 = vld [vmem:[%s188 + $0x78] sm:$0xf]
  %v204 = vld [vmem:[%s188 + $0x80] sm:$0xf]
  %v205 = vld [vmem:[%s1] sm:$0x3]
  %s206 = scalar_lea.vmem %s1, 2
  %v207 = vld [vmem:[%s206] sm:$0x3]
  %v224 = vunpack.c.l.b16 %v70
  %v225 = vunpack.c.l.b16 %v71
  %v226 = vunpack.c.l.b16 %v72
  %v227 = vunpack.c.l.b16 %v73
  %v228 = vunpack.c.l.b16 %v74
  %v229 = vunpack.c.l.b16 %v75
  %v230 = vunpack.c.l.b16 %v76
  %v231 = vunpack.c.l.b16 %v77
  %v232 = vunpack.c.l.b16 %v78
  %v233 = vunpack.c.l.b16 %v79
  %v234 = vunpack.c.l.b16 %v80
  %v235 = vunpack.c.l.b16 %v81
  %v236 = vunpack.c.l.b16 %v82
  %v237 = vunpack.c.l.b16 %v83
  %v238 = vunpack.c.l.b16 %v84
  %v239 = vunpack.c.l.b16 %v85
  %v240 = vpack.c.b16 %v225, %v224
  %v241 = vpack.c.b16 %v227, %v226
  %v242 = vpack.c.b16 %v229, %v228
  %v243 = vpack.c.b16 %v231, %v230
  %v244 = vpack.c.b16 %v233, %v232
  %v245 = vpack.c.b16 %v235, %v234
  %v246 = vpack.c.b16 %v237, %v236
  %v247 = vpack.c.b16 %v239, %v238
  %vm248 = vcmask 23552
  %v250 = vsel %vm248, %v240, 0
  %v253 = vsel %vm248, %v241, 0
  %v256 = vsel %vm248, %v242, 0
  %v259 = vsel %vm248, %v243, 0
  %v262 = vsel %vm248, %v244, 0
  %v265 = vsel %vm248, %v245, 0
  %v268 = vsel %vm248, %v246, 0
  %v271 = vsel %vm248, %v247, 0
  %vm273 = vcmask 1040384
  %vm274 = vcmask 1041408
  %v275 = vsel %vm273, 4294967295, 65535
  %v276 = vsel %vm274, %v275, 0
  %v278 = vand.u32 %v207, %v276
  %280 = vmatpush.bf16.msra.mxu0 0
  %281 = vmatpush.bf16.msra.mxu0 0
  %282 = vmatpush.bf16.msra.mxu0 0
  %283 = vmatpush.bf16.msra.mxu0 0
  %284 = vmatpush.bf16.msra.mxu0 0
  %285 = vmatpush.bf16.msra.mxu0 0
  %286 = vmatpush.bf16.msra.mxu0 0
  %287 = vmatpush.bf16.msra.mxu0 %v278
  %288 = vmatmul.bf16.gmra.mxu0 %v250
  %v289 = vpop.f32.mrf.mxu0
  %v290 = vadd.f32 0.0, %v289
  %v291 = vpop.f32.mrf.mxu0
  %v292 = vadd.f32 0.0, %v291
  %293 = vmatmul.bf16.gmra.mxu0 %v253
  %v294 = vpop.f32.mrf.mxu0
  %v295 = vadd.f32 0.0, %v294
  %v296 = vpop.f32.mrf.mxu0
  %v297 = vadd.f32 0.0, %v296
  %298 = vmatmul.bf16.gmra.mxu0 %v256
  %v299 = vpop.f32.mrf.mxu0
  %v300 = vadd.f32 0.0, %v299
  %v301 = vpop.f32.mrf.mxu0
  %v302 = vadd.f32 0.0, %v301
  %303 = vmatmul.bf16.gmra.mxu0 %v259
  %v304 = vpop.f32.mrf.mxu0
  %v305 = vadd.f32 0.0, %v304
  %v306 = vpop.f32.mrf.mxu0
  %v307 = vadd.f32 0.0, %v306
  %308 = vmatmul.bf16.gmra.mxu0 %v262
  %v309 = vpop.f32.mrf.mxu0
  %v310 = vadd.f32 0.0, %v309
  %v311 = vpop.f32.mrf.mxu0
  %v312 = vadd.f32 0.0, %v311
  %313 = vmatmul.bf16.gmra.mxu0 %v265
  %v314 = vpop.f32.mrf.mxu0
  %v315 = vadd.f32 0.0, %v314
  %v316 = vpop.f32.mrf.mxu0
  %v317 = vadd.f32 0.0, %v316
  %318 = vmatmul.bf16.gmra.mxu0 %v268
  %v319 = vpop.f32.mrf.mxu0
  %v320 = vadd.f32 0.0, %v319
  %v321 = vpop.f32.mrf.mxu0
  %v322 = vadd.f32 0.0, %v321
  %323 = vmatmul.bf16.gmra.mxu0 %v271
  %v324 = vpop.f32.mrf.mxu0
  %v325 = vadd.f32 0.0, %v324
  %v326 = vpop.f32.mrf.mxu0
  %v327 = vadd.f32 0.0, %v326
  %328 = vdwg.mxu0
  %v345 = vunpack.c.l.b16 %v53
  %v346 = vunpack.c.l.b16 %v54
  %v347 = vunpack.c.l.b16 %v55
  %v348 = vunpack.c.l.b16 %v56
  %v349 = vunpack.c.l.b16 %v57
  %v350 = vunpack.c.l.b16 %v58
  %v351 = vunpack.c.l.b16 %v59
  %v352 = vunpack.c.l.b16 %v60
  %v353 = vunpack.c.l.b16 %v61
  %v354 = vunpack.c.l.b16 %v62
  %v355 = vunpack.c.l.b16 %v63
  %v356 = vunpack.c.l.b16 %v64
  %v357 = vunpack.c.l.b16 %v65
  %v358 = vunpack.c.l.b16 %v66
  %v359 = vunpack.c.l.b16 %v67
  %v360 = vunpack.c.l.b16 %v68
  %v361 = vpack.c.b16 %v346, %v345
  %v362 = vpack.c.b16 %v348, %v347
  %v363 = vpack.c.b16 %v350, %v349
  %v364 = vpack.c.b16 %v352, %v351
  %v365 = vpack.c.b16 %v354, %v353
  %v366 = vpack.c.b16 %v356, %v355
  %v367 = vpack.c.b16 %v358, %v357
  %v368 = vpack.c.b16 %v360, %v359
  %v370 = vsel %vm248, %v361, 0
  %v373 = vsel %vm248, %v362, 0
  %v376 = vsel %vm248, %v363, 0
  %v379 = vsel %vm248, %v364, 0
  %v382 = vsel %vm248, %v365, 0
  %v385 = vsel %vm248, %v366, 0
  %v388 = vsel %vm248, %v367, 0
  %v391 = vsel %vm248, %v368, 0
  %v394 = vand.u32 %v205, %v276
  %396 = vmatpush.bf16.msra.mxu0 0
  %397 = vmatpush.bf16.msra.mxu0 0
  %398 = vmatpush.bf16.msra.mxu0 0
  %399 = vmatpush.bf16.msra.mxu0 0
  %400 = vmatpush.bf16.msra.mxu0 0
  %401 = vmatpush.bf16.msra.mxu0 0
  %402 = vmatpush.bf16.msra.mxu0 0
  %403 = vmatpush.bf16.msra.mxu0 %v394
  %404 = vmatmul.bf16.gmra.mxu0 %v370
  %v405 = vpop.f32.mrf.mxu0
  %v406 = vadd.f32 %v290, %v405
  %v407 = vpop.f32.mrf.mxu0
  %v408 = vadd.f32 %v292, %v407
  %409 = vmatmul.bf16.gmra.mxu0 %v373
  %v410 = vpop.f32.mrf.mxu0
  %v411 = vadd.f32 %v295, %v410
  %v412 = vpop.f32.mrf.mxu0
  %v413 = vadd.f32 %v297, %v412
  %414 = vmatmul.bf16.gmra.mxu0 %v376
  %v415 = vpop.f32.mrf.mxu0
  %v416 = vadd.f32 %v300, %v415
  %v417 = vpop.f32.mrf.mxu0
  %v418 = vadd.f32 %v302, %v417
  %419 = vmatmul.bf16.gmra.mxu0 %v379
  %v420 = vpop.f32.mrf.mxu0
  %v421 = vadd.f32 %v305, %v420
  %v422 = vpop.f32.mrf.mxu0
  %v423 = vadd.f32 %v307, %v422
  %424 = vmatmul.bf16.gmra.mxu0 %v382
  %v425 = vpop.f32.mrf.mxu0
  %v426 = vadd.f32 %v310, %v425
  %v427 = vpop.f32.mrf.mxu0
  %v428 = vadd.f32 %v312, %v427
  %429 = vmatmul.bf16.gmra.mxu0 %v385
  %v430 = vpop.f32.mrf.mxu0
  %v431 = vadd.f32 %v315, %v430
  %v432 = vpop.f32.mrf.mxu0
  %v433 = vadd.f32 %v317, %v432
  %434 = vmatmul.bf16.gmra.mxu0 %v388
  %v435 = vpop.f32.mrf.mxu0
  %v436 = vadd.f32 %v320, %v435
  %v437 = vpop.f32.mrf.mxu0
  %v438 = vadd.f32 %v322, %v437
  %439 = vmatmul.bf16.gmra.mxu0 %v391
  %v440 = vpop.f32.mrf.mxu0
  %v441 = vadd.f32 %v325, %v440
  %v442 = vpop.f32.mrf.mxu0
  %v443 = vadd.f32 %v327, %v442
  %444 = vdwg.mxu0
  %s445 = scalar_lea.vmem %s1, 4
  %v446 = vld [vmem:[%s445] sm:$0x3]
  %v463 = vunpack.c.l.b16 %v87
  %v464 = vunpack.c.l.b16 %v88
  %v465 = vunpack.c.l.b16 %v89
  %v466 = vunpack.c.l.b16 %v90
  %v467 = vunpack.c.l.b16 %v91
  %v468 = vunpack.c.l.b16 %v92
  %v469 = vunpack.c.l.b16 %v93
  %v470 = vunpack.c.l.b16 %v94
  %v471 = vunpack.c.l.b16 %v95
  %v472 = vunpack.c.l.b16 %v96
  %v473 = vunpack.c.l.b16 %v97
  %v474 = vunpack.c.l.b16 %v98
  %v475 = vunpack.c.l.b16 %v99
  %v476 = vunpack.c.l.b16 %v100
  %v477 = vunpack.c.l.b16 %v101
  %v478 = vunpack.c.l.b16 %v102
  %v479 = vpack.c.b16 %v464, %v463
  %v480 = vpack.c.b16 %v466, %v465
  %v481 = vpack.c.b16 %v468, %v467
  %v482 = vpack.c.b16 %v470, %v469
  %v483 = vpack.c.b16 %v472, %v471
  %v484 = vpack.c.b16 %v474, %v473
  %v485 = vpack.c.b16 %v476, %v475
  %v486 = vpack.c.b16 %v478, %v477
  %v488 = vsel %vm248, %v479, 0
  %v491 = vsel %vm248, %v480, 0
  %v494 = vsel %vm248, %v481, 0
  %v497 = vsel %vm248, %v482, 0
  %v500 = vsel %vm248, %v483, 0
  %v503 = vsel %vm248, %v484, 0
  %v506 = vsel %vm248, %v485, 0
  %v509 = vsel %vm248, %v486, 0
  %v512 = vand.u32 %v446, %v276
  %514 = vmatpush.bf16.msra.mxu0 0
  %515 = vmatpush.bf16.msra.mxu0 0
  %516 = vmatpush.bf16.msra.mxu0 0
  %517 = vmatpush.bf16.msra.mxu0 0
  %518 = vmatpush.bf16.msra.mxu0 0
  %519 = vmatpush.bf16.msra.mxu0 0
  %520 = vmatpush.bf16.msra.mxu0 0
  %521 = vmatpush.bf16.msra.mxu0 %v512
  %522 = vmatmul.bf16.gmra.mxu0 %v488
  %v523 = vpop.f32.mrf.mxu0
  %v524 = vadd.f32 0.0, %v523
  %v525 = vpop.f32.mrf.mxu0
  %v526 = vadd.f32 0.0, %v525
  %527 = vmatmul.bf16.gmra.mxu0 %v491
  %v528 = vpop.f32.mrf.mxu0
  %v529 = vadd.f32 0.0, %v528
  %v530 = vpop.f32.mrf.mxu0
  %v531 = vadd.f32 0.0, %v530
  %532 = vmatmul.bf16.gmra.mxu0 %v494
  %v533 = vpop.f32.mrf.mxu0
  %v534 = vadd.f32 0.0, %v533
  %v535 = vpop.f32.mrf.mxu0
  %v536 = vadd.f32 0.0, %v535
  %537 = vmatmul.bf16.gmra.mxu0 %v497
  %v538 = vpop.f32.mrf.mxu0
  %v539 = vadd.f32 0.0, %v538
  %v540 = vpop.f32.mrf.mxu0
  %v541 = vadd.f32 0.0, %v540
  %542 = vmatmul.bf16.gmra.mxu0 %v500
  %v543 = vpop.f32.mrf.mxu0
  %v544 = vadd.f32 0.0, %v543
  %v545 = vpop.f32.mrf.mxu0
  %v546 = vadd.f32 0.0, %v545
  %547 = vmatmul.bf16.gmra.mxu0 %v503
  %v548 = vpop.f32.mrf.mxu0
  %v549 = vadd.f32 0.0, %v548
  %v550 = vpop.f32.mrf.mxu0
  %v551 = vadd.f32 0.0, %v550
  %552 = vmatmul.bf16.gmra.mxu0 %v506
  %v553 = vpop.f32.mrf.mxu0
  %v554 = vadd.f32 0.0, %v553
  %v555 = vpop.f32.mrf.mxu0
  %v556 = vadd.f32 0.0, %v555
  %557 = vmatmul.bf16.gmra.mxu0 %v509
  %v558 = vpop.f32.mrf.mxu0
  %v559 = vadd.f32 0.0, %v558
  %v560 = vpop.f32.mrf.mxu0
  %v561 = vadd.f32 0.0, %v560
  %562 = vdwg.mxu0
  %v563 = vadd.f32 %v406, %v524
  %v564 = vadd.f32 %v408, %v526
  %v565 = vadd.f32 %v411, %v529
  %v566 = vadd.f32 %v413, %v531
  %v567 = vadd.f32 %v416, %v534
  %v568 = vadd.f32 %v418, %v536
  %v569 = vadd.f32 %v421, %v539
  %v570 = vadd.f32 %v423, %v541
  %v571 = vadd.f32 %v426, %v544
  %v572 = vadd.f32 %v428, %v546
  %v573 = vadd.f32 %v431, %v549
  %v574 = vadd.f32 %v433, %v551
  %v575 = vadd.f32 %v436, %v554
  %v576 = vadd.f32 %v438, %v556
  %v577 = vadd.f32 %v441, %v559
  %v578 = vadd.f32 %v443, %v561
  %s579 = scalar_lea.vmem %s1, 6
  %v580 = vld [vmem:[%s579] sm:$0x3]
  %v597 = vunpack.c.l.b16 %v104
  %v598 = vunpack.c.l.b16 %v105
  %v599 = vunpack.c.l.b16 %v106
  %v600 = vunpack.c.l.b16 %v107
  %v601 = vunpack.c.l.b16 %v108
  %v602 = vunpack.c.l.b16 %v109
  %v603 = vunpack.c.l.b16 %v110
  %v604 = vunpack.c.l.b16 %v111
  %v605 = vunpack.c.l.b16 %v112
  %v606 = vunpack.c.l.b16 %v113
  %v607 = vunpack.c.l.b16 %v114
  %v608 = vunpack.c.l.b16 %v115
  %v609 = vunpack.c.l.b16 %v116
  %v610 = vunpack.c.l.b16 %v117
  %v611 = vunpack.c.l.b16 %v118
  %v612 = vunpack.c.l.b16 %v119
  %v613 = vpack.c.b16 %v598, %v597
  %v614 = vpack.c.b16 %v600, %v599
  %v615 = vpack.c.b16 %v602, %v601
  %v616 = vpack.c.b16 %v604, %v603
  %v617 = vpack.c.b16 %v606, %v605
  %v618 = vpack.c.b16 %v608, %v607
  %v619 = vpack.c.b16 %v610, %v609
  %v620 = vpack.c.b16 %v612, %v611
  %v622 = vsel %vm248, %v613, 0
  %v625 = vsel %vm248, %v614, 0
  %v628 = vsel %vm248, %v615, 0
  %v631 = vsel %vm248, %v616, 0
  %v634 = vsel %vm248, %v617, 0
  %v637 = vsel %vm248, %v618, 0
  %v640 = vsel %vm248, %v619, 0
  %v643 = vsel %vm248, %v620, 0
  %v646 = vand.u32 %v580, %v276
  %648 = vmatpush.bf16.msra.mxu0 0
  %649 = vmatpush.bf16.msra.mxu0 0
  %650 = vmatpush.bf16.msra.mxu0 0
  %651 = vmatpush.bf16.msra.mxu0 0
  %652 = vmatpush.bf16.msra.mxu0 0
  %653 = vmatpush.bf16.msra.mxu0 0
  %654 = vmatpush.bf16.msra.mxu0 0
  %655 = vmatpush.bf16.msra.mxu0 %v646
  %656 = vmatmul.bf16.gmra.mxu0 %v622
  %v657 = vpop.f32.mrf.mxu0
  %v658 = vadd.f32 0.0, %v657
  %v659 = vpop.f32.mrf.mxu0
  %v660 = vadd.f32 0.0, %v659
  %661 = vmatmul.bf16.gmra.mxu0 %v625
  %v662 = vpop.f32.mrf.mxu0
  %v663 = vadd.f32 0.0, %v662
  %v664 = vpop.f32.mrf.mxu0
  %v665 = vadd.f32 0.0, %v664
  %666 = vmatmul.bf16.gmra.mxu0 %v628
  %v667 = vpop.f32.mrf.mxu0
  %v668 = vadd.f32 0.0, %v667
  %v669 = vpop.f32.mrf.mxu0
  %v670 = vadd.f32 0.0, %v669
  %671 = vmatmul.bf16.gmra.mxu0 %v631
  %v672 = vpop.f32.mrf.mxu0
  %v673 = vadd.f32 0.0, %v672
  %v674 = vpop.f32.mrf.mxu0
  %v675 = vadd.f32 0.0, %v674
  %676 = vmatmul.bf16.gmra.mxu0 %v634
  %v677 = vpop.f32.mrf.mxu0
  %v678 = vadd.f32 0.0, %v677
  %v679 = vpop.f32.mrf.mxu0
  %v680 = vadd.f32 0.0, %v679
  %681 = vmatmul.bf16.gmra.mxu0 %v637
  %v682 = vpop.f32.mrf.mxu0
  %v683 = vadd.f32 0.0, %v682
  %v684 = vpop.f32.mrf.mxu0
  %v685 = vadd.f32 0.0, %v684
  %686 = vmatmul.bf16.gmra.mxu0 %v640
  %v687 = vpop.f32.mrf.mxu0
  %v688 = vadd.f32 0.0, %v687
  %v689 = vpop.f32.mrf.mxu0
  %v690 = vadd.f32 0.0, %v689
  %691 = vmatmul.bf16.gmra.mxu0 %v643
  %v692 = vpop.f32.mrf.mxu0
  %v693 = vadd.f32 0.0, %v692
  %v694 = vpop.f32.mrf.mxu0
  %v695 = vadd.f32 0.0, %v694
  %696 = vdwg.mxu0
  %v697 = vadd.f32 %v563, %v658
  %v698 = vadd.f32 %v564, %v660
  %v699 = vadd.f32 %v565, %v663
  %v700 = vadd.f32 %v566, %v665
  %v701 = vadd.f32 %v567, %v668
  %v702 = vadd.f32 %v568, %v670
  %v703 = vadd.f32 %v569, %v673
  %v704 = vadd.f32 %v570, %v675
  %v705 = vadd.f32 %v571, %v678
  %v706 = vadd.f32 %v572, %v680
  %v707 = vadd.f32 %v573, %v683
  %v708 = vadd.f32 %v574, %v685
  %v709 = vadd.f32 %v575, %v688
  %v710 = vadd.f32 %v576, %v690
  %v711 = vadd.f32 %v577, %v693
  %v712 = vadd.f32 %v578, %v695
  %s713 = scalar_lea.vmem %s1, 8
  %v714 = vld [vmem:[%s713] sm:$0x3]
  %v731 = vunpack.c.l.b16 %v121
  %v732 = vunpack.c.l.b16 %v122
  %v733 = vunpack.c.l.b16 %v123
  %v734 = vunpack.c.l.b16 %v124
  %v735 = vunpack.c.l.b16 %v125
  %v736 = vunpack.c.l.b16 %v126
  %v737 = vunpack.c.l.b16 %v127
  %v738 = vunpack.c.l.b16 %v128
  %v739 = vunpack.c.l.b16 %v129
  %v740 = vunpack.c.l.b16 %v130
  %v741 = vunpack.c.l.b16 %v131
  %v742 = vunpack.c.l.b16 %v132
  %v743 = vunpack.c.l.b16 %v133
  %v744 = vunpack.c.l.b16 %v134
  %v745 = vunpack.c.l.b16 %v135
  %v746 = vunpack.c.l.b16 %v136
  %v747 = vpack.c.b16 %v732, %v731
  %v748 = vpack.c.b16 %v734, %v733
  %v749 = vpack.c.b16 %v736, %v735
  %v750 = vpack.c.b16 %v738, %v737
  %v751 = vpack.c.b16 %v740, %v739
  %v752 = vpack.c.b16 %v742, %v741
  %v753 = vpack.c.b16 %v744, %v743
  %v754 = vpack.c.b16 %v746, %v745
  %v756 = vsel %vm248, %v747, 0
  %v759 = vsel %vm248, %v748, 0
  %v762 = vsel %vm248, %v749, 0
  %v765 = vsel %vm248, %v750, 0
  %v768 = vsel %vm248, %v751, 0
  %v771 = vsel %vm248, %v752, 0
  %v774 = vsel %vm248, %v753, 0
  %v777 = vsel %vm248, %v754, 0
  %v780 = vand.u32 %v714, %v276
  %782 = vmatpush.bf16.msra.mxu0 0
  %783 = vmatpush.bf16.msra.mxu0 0
  %784 = vmatpush.bf16.msra.mxu0 0
  %785 = vmatpush.bf16.msra.mxu0 0
  %786 = vmatpush.bf16.msra.mxu0 0
  %787 = vmatpush.bf16.msra.mxu0 0
  %788 = vmatpush.bf16.msra.mxu0 0
  %789 = vmatpush.bf16.msra.mxu0 %v780
  %790 = vmatmul.bf16.gmra.mxu0 %v756
  %v791 = vpop.f32.mrf.mxu0
  %v792 = vadd.f32 0.0, %v791
  %v793 = vpop.f32.mrf.mxu0
  %v794 = vadd.f32 0.0, %v793
  %795 = vmatmul.bf16.gmra.mxu0 %v759
  %v796 = vpop.f32.mrf.mxu0
  %v797 = vadd.f32 0.0, %v796
  %v798 = vpop.f32.mrf.mxu0
  %v799 = vadd.f32 0.0, %v798
  %800 = vmatmul.bf16.gmra.mxu0 %v762
  %v801 = vpop.f32.mrf.mxu0
  %v802 = vadd.f32 0.0, %v801
  %v803 = vpop.f32.mrf.mxu0
  %v804 = vadd.f32 0.0, %v803
  %805 = vmatmul.bf16.gmra.mxu0 %v765
  %v806 = vpop.f32.mrf.mxu0
  %v807 = vadd.f32 0.0, %v806
  %v808 = vpop.f32.mrf.mxu0
  %v809 = vadd.f32 0.0, %v808
  %810 = vmatmul.bf16.gmra.mxu0 %v768
  %v811 = vpop.f32.mrf.mxu0
  %v812 = vadd.f32 0.0, %v811
  %v813 = vpop.f32.mrf.mxu0
  %v814 = vadd.f32 0.0, %v813
  %815 = vmatmul.bf16.gmra.mxu0 %v771
  %v816 = vpop.f32.mrf.mxu0
  %v817 = vadd.f32 0.0, %v816
  %v818 = vpop.f32.mrf.mxu0
  %v819 = vadd.f32 0.0, %v818
  %820 = vmatmul.bf16.gmra.mxu0 %v774
  %v821 = vpop.f32.mrf.mxu0
  %v822 = vadd.f32 0.0, %v821
  %v823 = vpop.f32.mrf.mxu0
  %v824 = vadd.f32 0.0, %v823
  %825 = vmatmul.bf16.gmra.mxu0 %v777
  %v826 = vpop.f32.mrf.mxu0
  %v827 = vadd.f32 0.0, %v826
  %v828 = vpop.f32.mrf.mxu0
  %v829 = vadd.f32 0.0, %v828
  %830 = vdwg.mxu0
  %v831 = vadd.f32 %v697, %v792
  %v832 = vadd.f32 %v698, %v794
  %v833 = vadd.f32 %v699, %v797
  %v834 = vadd.f32 %v700, %v799
  %v835 = vadd.f32 %v701, %v802
  %v836 = vadd.f32 %v702, %v804
  %v837 = vadd.f32 %v703, %v807
  %v838 = vadd.f32 %v704, %v809
  %v839 = vadd.f32 %v705, %v812
  %v840 = vadd.f32 %v706, %v814
  %v841 = vadd.f32 %v707, %v817
  %v842 = vadd.f32 %v708, %v819
  %v843 = vadd.f32 %v709, %v822
  %v844 = vadd.f32 %v710, %v824
  %v845 = vadd.f32 %v711, %v827
  %v846 = vadd.f32 %v712, %v829
  %s847 = scalar_lea.vmem %s1, 10
  %v848 = vld [vmem:[%s847] sm:$0x3]
  %v865 = vunpack.c.l.b16 %v138
  %v866 = vunpack.c.l.b16 %v139
  %v867 = vunpack.c.l.b16 %v140
  %v868 = vunpack.c.l.b16 %v141
  %v869 = vunpack.c.l.b16 %v142
  %v870 = vunpack.c.l.b16 %v143
  %v871 = vunpack.c.l.b16 %v144
  %v872 = vunpack.c.l.b16 %v145
  %v873 = vunpack.c.l.b16 %v146
  %v874 = vunpack.c.l.b16 %v147
  %v875 = vunpack.c.l.b16 %v148
  %v876 = vunpack.c.l.b16 %v149
  %v877 = vunpack.c.l.b16 %v150
  %v878 = vunpack.c.l.b16 %v151
  %v879 = vunpack.c.l.b16 %v152
  %v880 = vunpack.c.l.b16 %v153
  %v881 = vpack.c.b16 %v866, %v865
  %v882 = vpack.c.b16 %v868, %v867
  %v883 = vpack.c.b16 %v870, %v869
  %v884 = vpack.c.b16 %v872, %v871
  %v885 = vpack.c.b16 %v874, %v873
  %v886 = vpack.c.b16 %v876, %v875
  %v887 = vpack.c.b16 %v878, %v877
  %v888 = vpack.c.b16 %v880, %v879
  %v890 = vsel %vm248, %v881, 0
  %v893 = vsel %vm248, %v882, 0
  %v896 = vsel %vm248, %v883, 0
  %v899 = vsel %vm248, %v884, 0
  %v902 = vsel %vm248, %v885, 0
  %v905 = vsel %vm248, %v886, 0
  %v908 = vsel %vm248, %v887, 0
  %v911 = vsel %vm248, %v888, 0
  %v914 = vand.u32 %v848, %v276
  %916 = vmatpush.bf16.msra.mxu0 0
  %917 = vmatpush.bf16.msra.mxu0 0
  %918 = vmatpush.bf16.msra.mxu0 0
  %919 = vmatpush.bf16.msra.mxu0 0
  %920 = vmatpush.bf16.msra.mxu0 0
  %921 = vmatpush.bf16.msra.mxu0 0
  %922 = vmatpush.bf16.msra.mxu0 0
  %923 = vmatpush.bf16.msra.mxu0 %v914
  %924 = vmatmul.bf16.gmra.mxu0 %v890
  %v925 = vpop.f32.mrf.mxu0
  %v926 = vadd.f32 0.0, %v925
  %v927 = vpop.f32.mrf.mxu0
  %v928 = vadd.f32 0.0, %v927
  %929 = vmatmul.bf16.gmra.mxu0 %v893
  %v930 = vpop.f32.mrf.mxu0
  %v931 = vadd.f32 0.0, %v930
  %v932 = vpop.f32.mrf.mxu0
  %v933 = vadd.f32 0.0, %v932
  %934 = vmatmul.bf16.gmra.mxu0 %v896
  %v935 = vpop.f32.mrf.mxu0
  %v936 = vadd.f32 0.0, %v935
  %v937 = vpop.f32.mrf.mxu0
  %v938 = vadd.f32 0.0, %v937
  %939 = vmatmul.bf16.gmra.mxu0 %v899
  %v940 = vpop.f32.mrf.mxu0
  %v941 = vadd.f32 0.0, %v940
  %v942 = vpop.f32.mrf.mxu0
  %v943 = vadd.f32 0.0, %v942
  %944 = vmatmul.bf16.gmra.mxu0 %v902
  %v945 = vpop.f32.mrf.mxu0
  %v946 = vadd.f32 0.0, %v945
  %v947 = vpop.f32.mrf.mxu0
  %v948 = vadd.f32 0.0, %v947
  %949 = vmatmul.bf16.gmra.mxu0 %v905
  %v950 = vpop.f32.mrf.mxu0
  %v951 = vadd.f32 0.0, %v950
  %v952 = vpop.f32.mrf.mxu0
  %v953 = vadd.f32 0.0, %v952
  %954 = vmatmul.bf16.gmra.mxu0 %v908
  %v955 = vpop.f32.mrf.mxu0
  %v956 = vadd.f32 0.0, %v955
  %v957 = vpop.f32.mrf.mxu0
  %v958 = vadd.f32 0.0, %v957
  %959 = vmatmul.bf16.gmra.mxu0 %v911
  %v960 = vpop.f32.mrf.mxu0
  %v961 = vadd.f32 0.0, %v960
  %v962 = vpop.f32.mrf.mxu0
  %v963 = vadd.f32 0.0, %v962
  %964 = vdwg.mxu0
  %v965 = vadd.f32 %v831, %v926
  %v966 = vadd.f32 %v832, %v928
  %v967 = vadd.f32 %v833, %v931
  %v968 = vadd.f32 %v834, %v933
  %v969 = vadd.f32 %v835, %v936
  %v970 = vadd.f32 %v836, %v938
  %v971 = vadd.f32 %v837, %v941
  %v972 = vadd.f32 %v838, %v943
  %v973 = vadd.f32 %v839, %v946
  %v974 = vadd.f32 %v840, %v948
  %v975 = vadd.f32 %v841, %v951
  %v976 = vadd.f32 %v842, %v953
  %v977 = vadd.f32 %v843, %v956
  %v978 = vadd.f32 %v844, %v958
  %v979 = vadd.f32 %v845, %v961
  %v980 = vadd.f32 %v846, %v963
  %s981 = scalar_lea.vmem %s1, 12
  %v982 = vld [vmem:[%s981] sm:$0x3]
  %v999 = vunpack.c.l.b16 %v155
  %v1000 = vunpack.c.l.b16 %v156
  %v1001 = vunpack.c.l.b16 %v157
  %v1002 = vunpack.c.l.b16 %v158
  %v1003 = vunpack.c.l.b16 %v159
  %v1004 = vunpack.c.l.b16 %v160
  %v1005 = vunpack.c.l.b16 %v161
  %v1006 = vunpack.c.l.b16 %v162
  %v1007 = vunpack.c.l.b16 %v163
  %v1008 = vunpack.c.l.b16 %v164
  %v1009 = vunpack.c.l.b16 %v165
  %v1010 = vunpack.c.l.b16 %v166
  %v1011 = vunpack.c.l.b16 %v167
  %v1012 = vunpack.c.l.b16 %v168
  %v1013 = vunpack.c.l.b16 %v169
  %v1014 = vunpack.c.l.b16 %v170
  %v1015 = vpack.c.b16 %v1000, %v999
  %v1016 = vpack.c.b16 %v1002, %v1001
  %v1017 = vpack.c.b16 %v1004, %v1003
  %v1018 = vpack.c.b16 %v1006, %v1005
  %v1019 = vpack.c.b16 %v1008, %v1007
  %v1020 = vpack.c.b16 %v1010, %v1009
  %v1021 = vpack.c.b16 %v1012, %v1011
  %v1022 = vpack.c.b16 %v1014, %v1013
  %v1024 = vsel %vm248, %v1015, 0
  %v1027 = vsel %vm248, %v1016, 0
  %v1030 = vsel %vm248, %v1017, 0
  %v1033 = vsel %vm248, %v1018, 0
  %v1036 = vsel %vm248, %v1019, 0
  %v1039 = vsel %vm248, %v1020, 0
  %v1042 = vsel %vm248, %v1021, 0
  %v1045 = vsel %vm248, %v1022, 0
  %v1048 = vand.u32 %v982, %v276
  %1050 = vmatpush.bf16.msra.mxu0 0
  %1051 = vmatpush.bf16.msra.mxu0 0
  %1052 = vmatpush.bf16.msra.mxu0 0
  %1053 = vmatpush.bf16.msra.mxu0 0
  %1054 = vmatpush.bf16.msra.mxu0 0
  %1055 = vmatpush.bf16.msra.mxu0 0
  %1056 = vmatpush.bf16.msra.mxu0 0
  %1057 = vmatpush.bf16.msra.mxu0 %v1048
  %1058 = vmatmul.bf16.gmra.mxu0 %v1024
  %v1059 = vpop.f32.mrf.mxu0
  %v1060 = vadd.f32 0.0, %v1059
  %v1061 = vpop.f32.mrf.mxu0
  %v1062 = vadd.f32 0.0, %v1061
  %1063 = vmatmul.bf16.gmra.mxu0 %v1027
  %v1064 = vpop.f32.mrf.mxu0
  %v1065 = vadd.f32 0.0, %v1064
  %v1066 = vpop.f32.mrf.mxu0
  %v1067 = vadd.f32 0.0, %v1066
  %1068 = vmatmul.bf16.gmra.mxu0 %v1030
  %v1069 = vpop.f32.mrf.mxu0
  %v1070 = vadd.f32 0.0, %v1069
  %v1071 = vpop.f32.mrf.mxu0
  %v1072 = vadd.f32 0.0, %v1071
  %1073 = vmatmul.bf16.gmra.mxu0 %v1033
  %v1074 = vpop.f32.mrf.mxu0
  %v1075 = vadd.f32 0.0, %v1074
  %v1076 = vpop.f32.mrf.mxu0
  %v1077 = vadd.f32 0.0, %v1076
  %1078 = vmatmul.bf16.gmra.mxu0 %v1036
  %v1079 = vpop.f32.mrf.mxu0
  %v1080 = vadd.f32 0.0, %v1079
  %v1081 = vpop.f32.mrf.mxu0
  %v1082 = vadd.f32 0.0, %v1081
  %1083 = vmatmul.bf16.gmra.mxu0 %v1039
  %v1084 = vpop.f32.mrf.mxu0
  %v1085 = vadd.f32 0.0, %v1084
  %v1086 = vpop.f32.mrf.mxu0
  %v1087 = vadd.f32 0.0, %v1086
  %1088 = vmatmul.bf16.gmra.mxu0 %v1042
  %v1089 = vpop.f32.mrf.mxu0
  %v1090 = vadd.f32 0.0, %v1089
  %v1091 = vpop.f32.mrf.mxu0
  %v1092 = vadd.f32 0.0, %v1091
  %1093 = vmatmul.bf16.gmra.mxu0 %v1045
  %v1094 = vpop.f32.mrf.mxu0
  %v1095 = vadd.f32 0.0, %v1094
  %v1096 = vpop.f32.mrf.mxu0
  %v1097 = vadd.f32 0.0, %v1096
  %1098 = vdwg.mxu0
  %v1099 = vadd.f32 %v965, %v1060
  %v1100 = vadd.f32 %v966, %v1062
  %v1101 = vadd.f32 %v967, %v1065
  %v1102 = vadd.f32 %v968, %v1067
  %v1103 = vadd.f32 %v969, %v1070
  %v1104 = vadd.f32 %v970, %v1072
  %v1105 = vadd.f32 %v971, %v1075
  %v1106 = vadd.f32 %v972, %v1077
  %v1107 = vadd.f32 %v973, %v1080
  %v1108 = vadd.f32 %v974, %v1082
  %v1109 = vadd.f32 %v975, %v1085
  %v1110 = vadd.f32 %v976, %v1087
  %v1111 = vadd.f32 %v977, %v1090
  %v1112 = vadd.f32 %v978, %v1092
  %v1113 = vadd.f32 %v979, %v1095
  %v1114 = vadd.f32 %v980, %v1097
  %s1115 = scalar_lea.vmem %s1, 14
  %v1116 = vld [vmem:[%s1115] sm:$0x3]
  %v1133 = vunpack.c.l.b16 %v172
  %v1134 = vunpack.c.l.b16 %v173
  %v1135 = vunpack.c.l.b16 %v174
  %v1136 = vunpack.c.l.b16 %v175
  %v1137 = vunpack.c.l.b16 %v176
  %v1138 = vunpack.c.l.b16 %v177
  %v1139 = vunpack.c.l.b16 %v178
  %v1140 = vunpack.c.l.b16 %v179
  %v1141 = vunpack.c.l.b16 %v180
  %v1142 = vunpack.c.l.b16 %v181
  %v1143 = vunpack.c.l.b16 %v182
  %v1144 = vunpack.c.l.b16 %v183
  %v1145 = vunpack.c.l.b16 %v184
  %v1146 = vunpack.c.l.b16 %v185
  %v1147 = vunpack.c.l.b16 %v186
  %v1148 = vunpack.c.l.b16 %v187
  %v1149 = vpack.c.b16 %v1134, %v1133
  %v1150 = vpack.c.b16 %v1136, %v1135
  %v1151 = vpack.c.b16 %v1138, %v1137
  %v1152 = vpack.c.b16 %v1140, %v1139
  %v1153 = vpack.c.b16 %v1142, %v1141
  %v1154 = vpack.c.b16 %v1144, %v1143
  %v1155 = vpack.c.b16 %v1146, %v1145
  %v1156 = vpack.c.b16 %v1148, %v1147
  %v1158 = vsel %vm248, %v1149, 0
  %v1161 = vsel %vm248, %v1150, 0
  %v1164 = vsel %vm248, %v1151, 0
  %v1167 = vsel %vm248, %v1152, 0
  %v1170 = vsel %vm248, %v1153, 0
  %v1173 = vsel %vm248, %v1154, 0
  %v1176 = vsel %vm248, %v1155, 0
  %v1179 = vsel %vm248, %v1156, 0
  %v1182 = vand.u32 %v1116, %v276
  %1184 = vmatpush.bf16.msra.mxu0 0
  %1185 = vmatpush.bf16.msra.mxu0 0
  %1186 = vmatpush.bf16.msra.mxu0 0
  %1187 = vmatpush.bf16.msra.mxu0 0
  %1188 = vmatpush.bf16.msra.mxu0 0
  %1189 = vmatpush.bf16.msra.mxu0 0
  %1190 = vmatpush.bf16.msra.mxu0 0
  %1191 = vmatpush.bf16.msra.mxu0 %v1182
  %1192 = vmatmul.bf16.gmra.mxu0 %v1158
  %v1193 = vpop.f32.mrf.mxu0
  %v1194 = vadd.f32 0.0, %v1193
  %v1195 = vpop.f32.mrf.mxu0
  %v1196 = vadd.f32 0.0, %v1195
  %1197 = vmatmul.bf16.gmra.mxu0 %v1161
  %v1198 = vpop.f32.mrf.mxu0
  %v1199 = vadd.f32 0.0, %v1198
  %v1200 = vpop.f32.mrf.mxu0
  %v1201 = vadd.f32 0.0, %v1200
  %1202 = vmatmul.bf16.gmra.mxu0 %v1164
  %v1203 = vpop.f32.mrf.mxu0
  %v1204 = vadd.f32 0.0, %v1203
  %v1205 = vpop.f32.mrf.mxu0
  %v1206 = vadd.f32 0.0, %v1205
  %1207 = vmatmul.bf16.gmra.mxu0 %v1167
  %v1208 = vpop.f32.mrf.mxu0
  %v1209 = vadd.f32 0.0, %v1208
  %v1210 = vpop.f32.mrf.mxu0
  %v1211 = vadd.f32 0.0, %v1210
  %1212 = vmatmul.bf16.gmra.mxu0 %v1170
  %v1213 = vpop.f32.mrf.mxu0
  %v1214 = vadd.f32 0.0, %v1213
  %v1215 = vpop.f32.mrf.mxu0
  %v1216 = vadd.f32 0.0, %v1215
  %1217 = vmatmul.bf16.gmra.mxu0 %v1173
  %v1218 = vpop.f32.mrf.mxu0
  %v1219 = vadd.f32 0.0, %v1218
  %v1220 = vpop.f32.mrf.mxu0
  %v1221 = vadd.f32 0.0, %v1220
  %1222 = vmatmul.bf16.gmra.mxu0 %v1176
  %v1223 = vpop.f32.mrf.mxu0
  %v1224 = vadd.f32 0.0, %v1223
  %v1225 = vpop.f32.mrf.mxu0
  %v1226 = vadd.f32 0.0, %v1225
  %1227 = vmatmul.bf16.gmra.mxu0 %v1179
  %v1228 = vpop.f32.mrf.mxu0
  %v1229 = vadd.f32 0.0, %v1228
  %v1230 = vpop.f32.mrf.mxu0
  %v1231 = vadd.f32 0.0, %v1230
  %1232 = vdwg.mxu0
  %v1233 = vadd.f32 %v1099, %v1194
  %v1234 = vadd.f32 %v1100, %v1196
  %v1235 = vadd.f32 %v1101, %v1199
  %v1236 = vadd.f32 %v1102, %v1201
  %v1237 = vadd.f32 %v1103, %v1204
  %v1238 = vadd.f32 %v1104, %v1206
  %v1239 = vadd.f32 %v1105, %v1209
  %v1240 = vadd.f32 %v1106, %v1211
  %v1241 = vadd.f32 %v1107, %v1214
  %v1242 = vadd.f32 %v1108, %v1216
  %v1243 = vadd.f32 %v1109, %v1219
  %v1244 = vadd.f32 %v1110, %v1221
  %v1245 = vadd.f32 %v1111, %v1224
  %v1246 = vadd.f32 %v1112, %v1226
  %v1247 = vadd.f32 %v1113, %v1229
  %v1248 = vadd.f32 %v1114, %v1231
  %s1249 = scalar_lea.vmem %s1, 16
  %v1250 = vld [vmem:[%s1249] sm:$0x3]
  %v1267 = vunpack.c.l.b16 %v189
  %v1268 = vunpack.c.l.b16 %v190
  %v1269 = vunpack.c.l.b16 %v191
  %v1270 = vunpack.c.l.b16 %v192
  %v1271 = vunpack.c.l.b16 %v193
  %v1272 = vunpack.c.l.b16 %v194
  %v1273 = vunpack.c.l.b16 %v195
  %v1274 = vunpack.c.l.b16 %v196
  %v1275 = vunpack.c.l.b16 %v197
  %v1276 = vunpack.c.l.b16 %v198
  %v1277 = vunpack.c.l.b16 %v199
  %v1278 = vunpack.c.l.b16 %v200
  %v1279 = vunpack.c.l.b16 %v201
  %v1280 = vunpack.c.l.b16 %v202
  %v1281 = vunpack.c.l.b16 %v203
  %v1282 = vunpack.c.l.b16 %v204
  %v1283 = vpack.c.b16 %v1268, %v1267
  %v1284 = vpack.c.b16 %v1270, %v1269
  %v1285 = vpack.c.b16 %v1272, %v1271
  %v1286 = vpack.c.b16 %v1274, %v1273
  %v1287 = vpack.c.b16 %v1276, %v1275
  %v1288 = vpack.c.b16 %v1278, %v1277
  %v1289 = vpack.c.b16 %v1280, %v1279
  %v1290 = vpack.c.b16 %v1282, %v1281
  %v1292 = vsel %vm248, %v1283, 0
  %v1295 = vsel %vm248, %v1284, 0
  %v1298 = vsel %vm248, %v1285, 0
  %v1301 = vsel %vm248, %v1286, 0
  %v1304 = vsel %vm248, %v1287, 0
  %v1307 = vsel %vm248, %v1288, 0
  %v1310 = vsel %vm248, %v1289, 0
  %v1313 = vsel %vm248, %v1290, 0
  %v1316 = vand.u32 %v1250, %v276
  %1318 = vmatpush.bf16.msra.mxu0 0
  %1319 = vmatpush.bf16.msra.mxu0 0
  %1320 = vmatpush.bf16.msra.mxu0 0
  %1321 = vmatpush.bf16.msra.mxu0 0
  %1322 = vmatpush.bf16.msra.mxu0 0
  %1323 = vmatpush.bf16.msra.mxu0 0
  %1324 = vmatpush.bf16.msra.mxu0 0
  %1325 = vmatpush.bf16.msra.mxu0 %v1316
  %1326 = vmatmul.bf16.gmra.mxu0 %v1292
  %v1327 = vpop.f32.mrf.mxu0
  %v1328 = vadd.f32 0.0, %v1327
  %v1329 = vpop.f32.mrf.mxu0
  %v1330 = vadd.f32 0.0, %v1329
  %1331 = vmatmul.bf16.gmra.mxu0 %v1295
  %v1332 = vpop.f32.mrf.mxu0
  %v1333 = vadd.f32 0.0, %v1332
  %v1334 = vpop.f32.mrf.mxu0
  %v1335 = vadd.f32 0.0, %v1334
  %1336 = vmatmul.bf16.gmra.mxu0 %v1298
  %v1337 = vpop.f32.mrf.mxu0
  %v1338 = vadd.f32 0.0, %v1337
  %v1339 = vpop.f32.mrf.mxu0
  %v1340 = vadd.f32 0.0, %v1339
  %1341 = vmatmul.bf16.gmra.mxu0 %v1301
  %v1342 = vpop.f32.mrf.mxu0
  %v1343 = vadd.f32 0.0, %v1342
  %v1344 = vpop.f32.mrf.mxu0
  %v1345 = vadd.f32 0.0, %v1344
  %1346 = vmatmul.bf16.gmra.mxu0 %v1304
  %v1347 = vpop.f32.mrf.mxu0
  %v1348 = vadd.f32 0.0, %v1347
  %v1349 = vpop.f32.mrf.mxu0
  %v1350 = vadd.f32 0.0, %v1349
  %1351 = vmatmul.bf16.gmra.mxu0 %v1307
  %v1352 = vpop.f32.mrf.mxu0
  %v1353 = vadd.f32 0.0, %v1352
  %v1354 = vpop.f32.mrf.mxu0
  %v1355 = vadd.f32 0.0, %v1354
  %1356 = vmatmul.bf16.gmra.mxu0 %v1310
  %v1357 = vpop.f32.mrf.mxu0
  %v1358 = vadd.f32 0.0, %v1357
  %v1359 = vpop.f32.mrf.mxu0
  %v1360 = vadd.f32 0.0, %v1359
  %1361 = vmatmul.bf16.gmra.mxu0 %v1313
  %v1362 = vpop.f32.mrf.mxu0
  %v1363 = vadd.f32 0.0, %v1362
  %v1364 = vpop.f32.mrf.mxu0
  %v1365 = vadd.f32 0.0, %v1364
  %1366 = vdwg.mxu0
  %v1367 = vadd.f32 %v1233, %v1328
  %v1368 = vadd.f32 %v1234, %v1330
  %v1369 = vadd.f32 %v1235, %v1333
  %v1370 = vadd.f32 %v1236, %v1335
  %v1371 = vadd.f32 %v1237, %v1338
  %v1372 = vadd.f32 %v1238, %v1340
  %v1373 = vadd.f32 %v1239, %v1343
  %v1374 = vadd.f32 %v1240, %v1345
  %v1375 = vadd.f32 %v1241, %v1348
  %v1376 = vadd.f32 %v1242, %v1350
  %v1377 = vadd.f32 %v1243, %v1353
  %v1378 = vadd.f32 %v1244, %v1355
  %v1379 = vadd.f32 %v1245, %v1358
  %v1380 = vadd.f32 %v1246, %v1360
  %v1381 = vadd.f32 %v1247, %v1363
  %v1382 = vadd.f32 %v1248, %v1365
  %v1383 = vld [vmem:[%s2] sm:$0x1]
  %v1385 = vperm.slane %v1383, 0
  %v1387 = vadd.f32 %v1367, %v1385
  %v1388 = vadd.f32 %v1368, %v1385
  %v1389 = vadd.f32 %v1369, %v1385
  %v1390 = vadd.f32 %v1370, %v1385
  %v1391 = vadd.f32 %v1371, %v1385
  %v1392 = vadd.f32 %v1372, %v1385
  %v1393 = vadd.f32 %v1373, %v1385
  %v1394 = vadd.f32 %v1374, %v1385
  %v1395 = vadd.f32 %v1375, %v1385
  %v1396 = vadd.f32 %v1376, %v1385
  %v1397 = vadd.f32 %v1377, %v1385
  %v1398 = vadd.f32 %v1378, %v1385
  %v1399 = vadd.f32 %v1379, %v1385
  %v1400 = vadd.f32 %v1380, %v1385
  %v1401 = vadd.f32 %v1381, %v1385
  %v1402 = vadd.f32 %v1382, %v1385
  %v1403 = vpack.c.bf16 %v1387, %v1387
  %v1404 = vpack.c.bf16 %v1388, %v1388
  %v1405 = vpack.c.bf16 %v1389, %v1389
  %v1406 = vpack.c.bf16 %v1390, %v1390
  %v1407 = vpack.c.bf16 %v1391, %v1391
  %v1408 = vpack.c.bf16 %v1392, %v1392
  %v1409 = vpack.c.bf16 %v1393, %v1393
  %v1410 = vpack.c.bf16 %v1394, %v1394
  %v1411 = vpack.c.bf16 %v1395, %v1395
  %v1412 = vpack.c.bf16 %v1396, %v1396
  %v1413 = vpack.c.bf16 %v1397, %v1397
  %v1414 = vpack.c.bf16 %v1398, %v1398
  %v1415 = vpack.c.bf16 %v1399, %v1399
  %v1416 = vpack.c.bf16 %v1400, %v1400
  %v1417 = vpack.c.bf16 %v1401, %v1401
  %v1418 = vpack.c.bf16 %v1402, %v1402
  %s1419 = scalar_lea.vmem %s0, 432
  %v1420 = vld [vmem:[%s1419] sm:$0xf]
  %v1421 = vld [vmem:[%s1419 + $0x8] sm:$0xf]
  %v1422 = vld [vmem:[%s1419 + $0x10] sm:$0xf]
  %v1423 = vld [vmem:[%s1419 + $0x18] sm:$0xf]
  %v1424 = vld [vmem:[%s1419 + $0x20] sm:$0xf]
  %v1425 = vld [vmem:[%s1419 + $0x28] sm:$0xf]
  %v1426 = vld [vmem:[%s1419 + $0x30] sm:$0xf]
  %v1427 = vld [vmem:[%s1419 + $0x38] sm:$0xf]
  %v1428 = vld [vmem:[%s1419 + $0x48] sm:$0xf]
  %v1429 = vld [vmem:[%s1419 + $0x50] sm:$0xf]
  %v1430 = vld [vmem:[%s1419 + $0x58] sm:$0xf]
  %v1431 = vld [vmem:[%s1419 + $0x60] sm:$0xf]
  %v1432 = vld [vmem:[%s1419 + $0x68] sm:$0xf]
  %v1433 = vld [vmem:[%s1419 + $0x70] sm:$0xf]
  %v1434 = vld [vmem:[%s1419 + $0x78] sm:$0xf]
  %v1435 = vld [vmem:[%s1419 + $0x80] sm:$0xf]
  %v1436 = vld [vmem:[%s0] sm:$0xf]
  %v1437 = vld [vmem:[%s0 + $0x4] sm:$0x1]
  %v1438 = vld [vmem:[%s0 + $0x8] sm:$0xf]
  %v1439 = vld [vmem:[%s0 + $0xc] sm:$0x1]
  %v1440 = vld [vmem:[%s0 + $0x10] sm:$0xf]
  %v1441 = vld [vmem:[%s0 + $0x14] sm:$0x1]
  %v1442 = vld [vmem:[%s0 + $0x18] sm:$0xf]
  %v1443 = vld [vmem:[%s0 + $0x1c] sm:$0x1]
  %v1444 = vld [vmem:[%s0 + $0x20] sm:$0xf]
  %v1445 = vld [vmem:[%s0 + $0x24] sm:$0x1]
  %v1446 = vld [vmem:[%s0 + $0x28] sm:$0xf]
  %v1447 = vld [vmem:[%s0 + $0x2c] sm:$0x1]
  %v1448 = vld [vmem:[%s0 + $0x30] sm:$0xf]
  %v1449 = vld [vmem:[%s0 + $0x34] sm:$0x1]
  %v1450 = vld [vmem:[%s0 + $0x38] sm:$0xf]
  %v1451 = vld [vmem:[%s0 + $0x3c] sm:$0x1]
  %v1452 = vld [vmem:[%s0 + $0x48] sm:$0xf]
  %v1453 = vld [vmem:[%s0 + $0x4c] sm:$0x1]
  %v1454 = vld [vmem:[%s0 + $0x50] sm:$0xf]
  %v1455 = vld [vmem:[%s0 + $0x54] sm:$0x1]
  %v1456 = vld [vmem:[%s0 + $0x58] sm:$0xf]
  %v1457 = vld [vmem:[%s0 + $0x5c] sm:$0x1]
  %v1458 = vld [vmem:[%s0 + $0x60] sm:$0xf]
  %v1459 = vld [vmem:[%s0 + $0x64] sm:$0x1]
  %v1460 = vld [vmem:[%s0 + $0x68] sm:$0xf]
  %v1461 = vld [vmem:[%s0 + $0x6c] sm:$0x1]
  %v1462 = vld [vmem:[%s0 + $0x70] sm:$0xf]
  %v1463 = vld [vmem:[%s0 + $0x74] sm:$0x1]
  %v1464 = vld [vmem:[%s0 + $0x78] sm:$0xf]
  %v1465 = vld [vmem:[%s0 + $0x7c] sm:$0x1]
  %v1466 = vld [vmem:[%s0 + $0x80] sm:$0xf]
  %v1467 = vld [vmem:[%s0 + $0x84] sm:$0x1]
  %s1468 = scalar_lea.vmem %s0, 1008
  %v1469 = vld [vmem:[%s1468] sm:$0xf]
  %v1470 = vld [vmem:[%s1468 + $0x8] sm:$0xf]
  %v1471 = vld [vmem:[%s1468 + $0x10] sm:$0xf]
  %v1472 = vld [vmem:[%s1468 + $0x18] sm:$0xf]
  %v1473 = vld [vmem:[%s1468 + $0x20] sm:$0xf]
  %v1474 = vld [vmem:[%s1468 + $0x28] sm:$0xf]
  %v1475 = vld [vmem:[%s1468 + $0x30] sm:$0xf]
  %v1476 = vld [vmem:[%s1468 + $0x38] sm:$0xf]
  %v1477 = vld [vmem:[%s1468 + $0x48] sm:$0xf]
  %v1478 = vld [vmem:[%s1468 + $0x50] sm:$0xf]
  %v1479 = vld [vmem:[%s1468 + $0x58] sm:$0xf]
  %v1480 = vld [vmem:[%s1468 + $0x60] sm:$0xf]
  %v1481 = vld [vmem:[%s1468 + $0x68] sm:$0xf]
  %v1482 = vld [vmem:[%s1468 + $0x70] sm:$0xf]
  %v1483 = vld [vmem:[%s1468 + $0x78] sm:$0xf]
  %v1484 = vld [vmem:[%s1468 + $0x80] sm:$0xf]
  %v1485 = vld [vmem:[%s103] sm:$0xf]
  %v1486 = vld [vmem:[%s103 + $0x4] sm:$0x1]
  %v1487 = vld [vmem:[%s103 + $0x8] sm:$0xf]
  %v1488 = vld [vmem:[%s103 + $0xc] sm:$0x1]
  %v1489 = vld [vmem:[%s103 + $0x10] sm:$0xf]
  %v1490 = vld [vmem:[%s103 + $0x14] sm:$0x1]
  %v1491 = vld [vmem:[%s103 + $0x18] sm:$0xf]
  %v1492 = vld [vmem:[%s103 + $0x1c] sm:$0x1]
  %v1493 = vld [vmem:[%s103 + $0x20] sm:$0xf]
  %v1494 = vld [vmem:[%s103 + $0x24] sm:$0x1]
  %v1495 = vld [vmem:[%s103 + $0x28] sm:$0xf]
  %v1496 = vld [vmem:[%s103 + $0x2c] sm:$0x1]
  %v1497 = vld [vmem:[%s103 + $0x30] sm:$0xf]
  %v1498 = vld [vmem:[%s103 + $0x34] sm:$0x1]
  %v1499 = vld [vmem:[%s103 + $0x38] sm:$0xf]
  %v1500 = vld [vmem:[%s103 + $0x3c] sm:$0x1]
  %v1501 = vld [vmem:[%s103 + $0x48] sm:$0xf]
  %v1502 = vld [vmem:[%s103 + $0x4c] sm:$0x1]
  %v1503 = vld [vmem:[%s103 + $0x50] sm:$0xf]
  %v1504 = vld [vmem:[%s103 + $0x54] sm:$0x1]
  %v1505 = vld [vmem:[%s103 + $0x58] sm:$0xf]
  %v1506 = vld [vmem:[%s103 + $0x5c] sm:$0x1]
  %v1507 = vld [vmem:[%s103 + $0x60] sm:$0xf]
  %v1508 = vld [vmem:[%s103 + $0x64] sm:$0x1]
  %v1509 = vld [vmem:[%s103 + $0x68] sm:$0xf]
  %v1510 = vld [vmem:[%s103 + $0x6c] sm:$0x1]
  %v1511 = vld [vmem:[%s103 + $0x70] sm:$0xf]
  %v1512 = vld [vmem:[%s103 + $0x74] sm:$0x1]
  %v1513 = vld [vmem:[%s103 + $0x78] sm:$0xf]
  %v1514 = vld [vmem:[%s103 + $0x7c] sm:$0x1]
  %v1515 = vld [vmem:[%s103 + $0x80] sm:$0xf]
  %v1516 = vld [vmem:[%s103 + $0x84] sm:$0x1]
  %s1517 = scalar_lea.vmem %s0, 1584
  %v1518 = vld [vmem:[%s1517] sm:$0xf]
  %v1519 = vld [vmem:[%s1517 + $0x8] sm:$0xf]
  %v1520 = vld [vmem:[%s1517 + $0x10] sm:$0xf]
  %v1521 = vld [vmem:[%s1517 + $0x18] sm:$0xf]
  %v1522 = vld [vmem:[%s1517 + $0x20] sm:$0xf]
  %v1523 = vld [vmem:[%s1517 + $0x28] sm:$0xf]
  %v1524 = vld [vmem:[%s1517 + $0x30] sm:$0xf]
  %v1525 = vld [vmem:[%s1517 + $0x38] sm:$0xf]
  %v1526 = vld [vmem:[%s1517 + $0x48] sm:$0xf]
  %v1527 = vld [vmem:[%s1517 + $0x50] sm:$0xf]
  %v1528 = vld [vmem:[%s1517 + $0x58] sm:$0xf]
  %v1529 = vld [vmem:[%s1517 + $0x60] sm:$0xf]
  %v1530 = vld [vmem:[%s1517 + $0x68] sm:$0xf]
  %v1531 = vld [vmem:[%s1517 + $0x70] sm:$0xf]
  %v1532 = vld [vmem:[%s1517 + $0x78] sm:$0xf]
  %v1533 = vld [vmem:[%s1517 + $0x80] sm:$0xf]
  %v1534 = vld [vmem:[%s154] sm:$0xf]
  %v1535 = vld [vmem:[%s154 + $0x4] sm:$0x1]
  %v1536 = vld [vmem:[%s154 + $0x8] sm:$0xf]
  %v1537 = vld [vmem:[%s154 + $0xc] sm:$0x1]
  %v1538 = vld [vmem:[%s154 + $0x10] sm:$0xf]
  %v1539 = vld [vmem:[%s154 + $0x14] sm:$0x1]
  %v1540 = vld [vmem:[%s154 + $0x18] sm:$0xf]
  %v1541 = vld [vmem:[%s154 + $0x1c] sm:$0x1]
  %v1542 = vld [vmem:[%s154 + $0x20] sm:$0xf]
  %v1543 = vld [vmem:[%s154 + $0x24] sm:$0x1]
  %v1544 = vld [vmem:[%s154 + $0x28] sm:$0xf]
  %v1545 = vld [vmem:[%s154 + $0x2c] sm:$0x1]
  %v1546 = vld [vmem:[%s154 + $0x30] sm:$0xf]
  %v1547 = vld [vmem:[%s154 + $0x34] sm:$0x1]
  %v1548 = vld [vmem:[%s154 + $0x38] sm:$0xf]
  %v1549 = vld [vmem:[%s154 + $0x3c] sm:$0x1]
  %v1550 = vld [vmem:[%s154 + $0x48] sm:$0xf]
  %v1551 = vld [vmem:[%s154 + $0x4c] sm:$0x1]
  %v1552 = vld [vmem:[%s154 + $0x50] sm:$0xf]
  %v1553 = vld [vmem:[%s154 + $0x54] sm:$0x1]
  %v1554 = vld [vmem:[%s154 + $0x58] sm:$0xf]
  %v1555 = vld [vmem:[%s154 + $0x5c] sm:$0x1]
  %v1556 = vld [vmem:[%s154 + $0x60] sm:$0xf]
  %v1557 = vld [vmem:[%s154 + $0x64] sm:$0x1]
  %v1558 = vld [vmem:[%s154 + $0x68] sm:$0xf]
  %v1559 = vld [vmem:[%s154 + $0x6c] sm:$0x1]
  %v1560 = vld [vmem:[%s154 + $0x70] sm:$0xf]
  %v1561 = vld [vmem:[%s154 + $0x74] sm:$0x1]
  %v1562 = vld [vmem:[%s154 + $0x78] sm:$0xf]
  %v1563 = vld [vmem:[%s154 + $0x7c] sm:$0x1]
  %v1564 = vld [vmem:[%s154 + $0x80] sm:$0xf]
  %v1565 = vld [vmem:[%s154 + $0x84] sm:$0x1]
  %v1582 = vunpack.c.l.b16 %v1420
  %v1583 = vunpack.c.l.b16 %v1421
  %v1584 = vunpack.c.l.b16 %v1422
  %v1585 = vunpack.c.l.b16 %v1423
  %v1586 = vunpack.c.l.b16 %v1424
  %v1587 = vunpack.c.l.b16 %v1425
  %v1588 = vunpack.c.l.b16 %v1426
  %v1589 = vunpack.c.l.b16 %v1427
  %v1590 = vunpack.c.l.b16 %v1428
  %v1591 = vunpack.c.l.b16 %v1429
  %v1592 = vunpack.c.l.b16 %v1430
  %v1593 = vunpack.c.l.b16 %v1431
  %v1594 = vunpack.c.l.b16 %v1432
  %v1595 = vunpack.c.l.b16 %v1433
  %v1596 = vunpack.c.l.b16 %v1434
  %v1597 = vunpack.c.l.b16 %v1435
  %v1598 = vpack.c.b16 %v1583, %v1582
  %v1599 = vpack.c.b16 %v1585, %v1584
  %v1600 = vpack.c.b16 %v1587, %v1586
  %v1601 = vpack.c.b16 %v1589, %v1588
  %v1602 = vpack.c.b16 %v1591, %v1590
  %v1603 = vpack.c.b16 %v1593, %v1592
  %v1604 = vpack.c.b16 %v1595, %v1594
  %v1605 = vpack.c.b16 %v1597, %v1596
  %v1607 = vsel %vm248, %v1598, 0
  %v1610 = vsel %vm248, %v1599, 0
  %v1613 = vsel %vm248, %v1600, 0
  %v1616 = vsel %vm248, %v1601, 0
  %v1619 = vsel %vm248, %v1602, 0
  %v1622 = vsel %vm248, %v1603, 0
  %v1625 = vsel %vm248, %v1604, 0
  %v1628 = vsel %vm248, %v1605, 0
  %1630 = vmatpush.bf16.msra.mxu0 0
  %1631 = vmatpush.bf16.msra.mxu0 0
  %1632 = vmatpush.bf16.msra.mxu0 0
  %1633 = vmatpush.bf16.msra.mxu0 0
  %1634 = vmatpush.bf16.msra.mxu0 0
  %1635 = vmatpush.bf16.msra.mxu0 0
  %1636 = vmatpush.bf16.msra.mxu0 0
  %1637 = vmatpush.bf16.msra.mxu0 %v278
  %1638 = vmatmul.bf16.gmra.mxu0 %v1607
  %v1639 = vpop.f32.mrf.mxu0
  %v1640 = vadd.f32 0.0, %v1639
  %v1641 = vpop.f32.mrf.mxu0
  %v1642 = vadd.f32 0.0, %v1641
  %1643 = vmatmul.bf16.gmra.mxu0 %v1610
  %v1644 = vpop.f32.mrf.mxu0
  %v1645 = vadd.f32 0.0, %v1644
  %v1646 = vpop.f32.mrf.mxu0
  %v1647 = vadd.f32 0.0, %v1646
  %1648 = vmatmul.bf16.gmra.mxu0 %v1613
  %v1649 = vpop.f32.mrf.mxu0
  %v1650 = vadd.f32 0.0, %v1649
  %v1651 = vpop.f32.mrf.mxu0
  %v1652 = vadd.f32 0.0, %v1651
  %1653 = vmatmul.bf16.gmra.mxu0 %v1616
  %v1654 = vpop.f32.mrf.mxu0
  %v1655 = vadd.f32 0.0, %v1654
  %v1656 = vpop.f32.mrf.mxu0
  %v1657 = vadd.f32 0.0, %v1656
  %1658 = vmatmul.bf16.gmra.mxu0 %v1619
  %v1659 = vpop.f32.mrf.mxu0
  %v1660 = vadd.f32 0.0, %v1659
  %v1661 = vpop.f32.mrf.mxu0
  %v1662 = vadd.f32 0.0, %v1661
  %1663 = vmatmul.bf16.gmra.mxu0 %v1622
  %v1664 = vpop.f32.mrf.mxu0
  %v1665 = vadd.f32 0.0, %v1664
  %v1666 = vpop.f32.mrf.mxu0
  %v1667 = vadd.f32 0.0, %v1666
  %1668 = vmatmul.bf16.gmra.mxu0 %v1625
  %v1669 = vpop.f32.mrf.mxu0
  %v1670 = vadd.f32 0.0, %v1669
  %v1671 = vpop.f32.mrf.mxu0
  %v1672 = vadd.f32 0.0, %v1671
  %1673 = vmatmul.bf16.gmra.mxu0 %v1628
  %v1674 = vpop.f32.mrf.mxu0
  %v1675 = vadd.f32 0.0, %v1674
  %v1676 = vpop.f32.mrf.mxu0
  %v1677 = vadd.f32 0.0, %v1676
  %1678 = vdwg.mxu0
  %1679 = vmatpush.bf16.msra.mxu0 0
  %1680 = vmatpush.bf16.msra.mxu0 0
  %1681 = vmatpush.bf16.msra.mxu0 0
  %1682 = vmatpush.bf16.msra.mxu0 0
  %1683 = vmatpush.bf16.msra.mxu0 0
  %1684 = vmatpush.bf16.msra.mxu0 0
  %1685 = vmatpush.bf16.msra.mxu0 0
  %1686 = vmatpush.bf16.msra.mxu0 %v394
  %1687 = vmatmul.bf16.gmra.mxu0 %v488
  %v1688 = vpop.f32.mrf.mxu0
  %v1689 = vadd.f32 %v1640, %v1688
  %v1690 = vpop.f32.mrf.mxu0
  %v1691 = vadd.f32 %v1642, %v1690
  %1692 = vmatmul.bf16.gmra.mxu0 %v491
  %v1693 = vpop.f32.mrf.mxu0
  %v1694 = vadd.f32 %v1645, %v1693
  %v1695 = vpop.f32.mrf.mxu0
  %v1696 = vadd.f32 %v1647, %v1695
  %1697 = vmatmul.bf16.gmra.mxu0 %v494
  %v1698 = vpop.f32.mrf.mxu0
  %v1699 = vadd.f32 %v1650, %v1698
  %v1700 = vpop.f32.mrf.mxu0
  %v1701 = vadd.f32 %v1652, %v1700
  %1702 = vmatmul.bf16.gmra.mxu0 %v497
  %v1703 = vpop.f32.mrf.mxu0
  %v1704 = vadd.f32 %v1655, %v1703
  %v1705 = vpop.f32.mrf.mxu0
  %v1706 = vadd.f32 %v1657, %v1705
  %1707 = vmatmul.bf16.gmra.mxu0 %v500
  %v1708 = vpop.f32.mrf.mxu0
  %v1709 = vadd.f32 %v1660, %v1708
  %v1710 = vpop.f32.mrf.mxu0
  %v1711 = vadd.f32 %v1662, %v1710
  %1712 = vmatmul.bf16.gmra.mxu0 %v503
  %v1713 = vpop.f32.mrf.mxu0
  %v1714 = vadd.f32 %v1665, %v1713
  %v1715 = vpop.f32.mrf.mxu0
  %v1716 = vadd.f32 %v1667, %v1715
  %1717 = vmatmul.bf16.gmra.mxu0 %v506
  %v1718 = vpop.f32.mrf.mxu0
  %v1719 = vadd.f32 %v1670, %v1718
  %v1720 = vpop.f32.mrf.mxu0
  %v1721 = vadd.f32 %v1672, %v1720
  %1722 = vmatmul.bf16.gmra.mxu0 %v509
  %v1723 = vpop.f32.mrf.mxu0
  %v1724 = vadd.f32 %v1675, %v1723
  %v1725 = vpop.f32.mrf.mxu0
  %v1726 = vadd.f32 %v1677, %v1725
  %1727 = vdwg.mxu0
  %vm1728 = vsmask.f32 3328
  %vm1729 = vsmask.f32 7440
  %vm1730 = vmor %vm1728, %vm1729
  %v1732 = vshrl.u32 %v1436, 16
  %v1734 = vrot.slane %v1732, 4
  %v1735 = vshll.u32 %v1436, 16
  %v1737 = vrot.slane %v1735, 5
  %v1738 = vor.u32 %v1734, %v1737
  %v1739 = vrot.slane %v1738, 4
  %v1741 = vshll.u32 %v1437, 16
  %v1743 = vrot.slane %v1741, 5
  %v1744 = vsel %vm1730, %v1739, %v1743
  %v1746 = vshrl.u32 %v1438, 16
  %v1748 = vrot.slane %v1746, 4
  %v1749 = vshll.u32 %v1438, 16
  %v1751 = vrot.slane %v1749, 5
  %v1752 = vor.u32 %v1748, %v1751
  %v1753 = vrot.slane %v1752, 4
  %v1755 = vshll.u32 %v1439, 16
  %v1757 = vrot.slane %v1755, 5
  %v1758 = vsel %vm1730, %v1753, %v1757
  %v1760 = vshrl.u32 %v1440, 16
  %v1762 = vrot.slane %v1760, 4
  %v1763 = vshll.u32 %v1440, 16
  %v1765 = vrot.slane %v1763, 5
  %v1766 = vor.u32 %v1762, %v1765
  %v1767 = vrot.slane %v1766, 4
  %v1769 = vshll.u32 %v1441, 16
  %v1771 = vrot.slane %v1769, 5
  %v1772 = vsel %vm1730, %v1767, %v1771
  %v1774 = vshrl.u32 %v1442, 16
  %v1776 = vrot.slane %v1774, 4
  %v1777 = vshll.u32 %v1442, 16
  %v1779 = vrot.slane %v1777, 5
  %v1780 = vor.u32 %v1776, %v1779
  %v1781 = vrot.slane %v1780, 4
  %v1783 = vshll.u32 %v1443, 16
  %v1785 = vrot.slane %v1783, 5
  %v1786 = vsel %vm1730, %v1781, %v1785
  %v1788 = vshrl.u32 %v1444, 16
  %v1790 = vrot.slane %v1788, 4
  %v1791 = vshll.u32 %v1444, 16
  %v1793 = vrot.slane %v1791, 5
  %v1794 = vor.u32 %v1790, %v1793
  %v1795 = vrot.slane %v1794, 4
  %v1797 = vshll.u32 %v1445, 16
  %v1799 = vrot.slane %v1797, 5
  %v1800 = vsel %vm1730, %v1795, %v1799
  %v1802 = vshrl.u32 %v1446, 16
  %v1804 = vrot.slane %v1802, 4
  %v1805 = vshll.u32 %v1446, 16
  %v1807 = vrot.slane %v1805, 5
  %v1808 = vor.u32 %v1804, %v1807
  %v1809 = vrot.slane %v1808, 4
  %v1811 = vshll.u32 %v1447, 16
  %v1813 = vrot.slane %v1811, 5
  %v1814 = vsel %vm1730, %v1809, %v1813
  %v1816 = vshrl.u32 %v1448, 16
  %v1818 = vrot.slane %v1816, 4
  %v1819 = vshll.u32 %v1448, 16
  %v1821 = vrot.slane %v1819, 5
  %v1822 = vor.u32 %v1818, %v1821
  %v1823 = vrot.slane %v1822, 4
  %v1825 = vshll.u32 %v1449, 16
  %v1827 = vrot.slane %v1825, 5
  %v1828 = vsel %vm1730, %v1823, %v1827
  %v1830 = vshrl.u32 %v1450, 16
  %v1832 = vrot.slane %v1830, 4
  %v1833 = vshll.u32 %v1450, 16
  %v1835 = vrot.slane %v1833, 5
  %v1836 = vor.u32 %v1832, %v1835
  %v1837 = vrot.slane %v1836, 4
  %v1839 = vshll.u32 %v1451, 16
  %v1841 = vrot.slane %v1839, 5
  %v1842 = vsel %vm1730, %v1837, %v1841
  %v1844 = vshrl.u32 %v1452, 16
  %v1846 = vrot.slane %v1844, 4
  %v1847 = vshll.u32 %v1452, 16
  %v1849 = vrot.slane %v1847, 5
  %v1850 = vor.u32 %v1846, %v1849
  %v1851 = vrot.slane %v1850, 4
  %v1853 = vshll.u32 %v1453, 16
  %v1855 = vrot.slane %v1853, 5
  %v1856 = vsel %vm1730, %v1851, %v1855
  %v1858 = vshrl.u32 %v1454, 16
  %v1860 = vrot.slane %v1858, 4
  %v1861 = vshll.u32 %v1454, 16
  %v1863 = vrot.slane %v1861, 5
  %v1864 = vor.u32 %v1860, %v1863
  %v1865 = vrot.slane %v1864, 4
  %v1867 = vshll.u32 %v1455, 16
  %v1869 = vrot.slane %v1867, 5
  %v1870 = vsel %vm1730, %v1865, %v1869
  %v1872 = vshrl.u32 %v1456, 16
  %v1874 = vrot.slane %v1872, 4
  %v1875 = vshll.u32 %v1456, 16
  %v1877 = vrot.slane %v1875, 5
  %v1878 = vor.u32 %v1874, %v1877
  %v1879 = vrot.slane %v1878, 4
  %v1881 = vshll.u32 %v1457, 16
  %v1883 = vrot.slane %v1881, 5
  %v1884 = vsel %vm1730, %v1879, %v1883
  %v1886 = vshrl.u32 %v1458, 16
  %v1888 = vrot.slane %v1886, 4
  %v1889 = vshll.u32 %v1458, 16
  %v1891 = vrot.slane %v1889, 5
  %v1892 = vor.u32 %v1888, %v1891
  %v1893 = vrot.slane %v1892, 4
  %v1895 = vshll.u32 %v1459, 16
  %v1897 = vrot.slane %v1895, 5
  %v1898 = vsel %vm1730, %v1893, %v1897
  %v1900 = vshrl.u32 %v1460, 16
  %v1902 = vrot.slane %v1900, 4
  %v1903 = vshll.u32 %v1460, 16
  %v1905 = vrot.slane %v1903, 5
  %v1906 = vor.u32 %v1902, %v1905
  %v1907 = vrot.slane %v1906, 4
  %v1909 = vshll.u32 %v1461, 16
  %v1911 = vrot.slane %v1909, 5
  %v1912 = vsel %vm1730, %v1907, %v1911
  %v1914 = vshrl.u32 %v1462, 16
  %v1916 = vrot.slane %v1914, 4
  %v1917 = vshll.u32 %v1462, 16
  %v1919 = vrot.slane %v1917, 5
  %v1920 = vor.u32 %v1916, %v1919
  %v1921 = vrot.slane %v1920, 4
  %v1923 = vshll.u32 %v1463, 16
  %v1925 = vrot.slane %v1923, 5
  %v1926 = vsel %vm1730, %v1921, %v1925
  %v1928 = vshrl.u32 %v1464, 16
  %v1930 = vrot.slane %v1928, 4
  %v1931 = vshll.u32 %v1464, 16
  %v1933 = vrot.slane %v1931, 5
  %v1934 = vor.u32 %v1930, %v1933
  %v1935 = vrot.slane %v1934, 4
  %v1937 = vshll.u32 %v1465, 16
  %v1939 = vrot.slane %v1937, 5
  %v1940 = vsel %vm1730, %v1935, %v1939
  %v1942 = vshrl.u32 %v1466, 16
  %v1944 = vrot.slane %v1942, 4
  %v1945 = vshll.u32 %v1466, 16
  %v1947 = vrot.slane %v1945, 5
  %v1948 = vor.u32 %v1944, %v1947
  %v1949 = vrot.slane %v1948, 4
  %v1951 = vshll.u32 %v1467, 16
  %v1953 = vrot.slane %v1951, 5
  %v1954 = vsel %vm1730, %v1949, %v1953
  %v1955 = vunpack.c.l.b16 %v1744
  %v1956 = vunpack.c.l.b16 %v1758
  %v1957 = vunpack.c.l.b16 %v1772
  %v1958 = vunpack.c.l.b16 %v1786
  %v1959 = vunpack.c.l.b16 %v1800
  %v1960 = vunpack.c.l.b16 %v1814
  %v1961 = vunpack.c.l.b16 %v1828
  %v1962 = vunpack.c.l.b16 %v1842
  %v1963 = vunpack.c.l.b16 %v1856
  %v1964 = vunpack.c.l.b16 %v1870
  %v1965 = vunpack.c.l.b16 %v1884
  %v1966 = vunpack.c.l.b16 %v1898
  %v1967 = vunpack.c.l.b16 %v1912
  %v1968 = vunpack.c.l.b16 %v1926
  %v1969 = vunpack.c.l.b16 %v1940
  %v1970 = vunpack.c.l.b16 %v1954
  %v1971 = vpack.c.b16 %v1956, %v1955
  %v1972 = vpack.c.b16 %v1958, %v1957
  %v1973 = vpack.c.b16 %v1960, %v1959
  %v1974 = vpack.c.b16 %v1962, %v1961
  %v1975 = vpack.c.b16 %v1964, %v1963
  %v1976 = vpack.c.b16 %v1966, %v1965
  %v1977 = vpack.c.b16 %v1968, %v1967
  %v1978 = vpack.c.b16 %v1970, %v1969
  %v1980 = vsel %vm248, %v1971, 0
  %v1983 = vsel %vm248, %v1972, 0
  %v1986 = vsel %vm248, %v1973, 0
  %v1989 = vsel %vm248, %v1974, 0
  %v1992 = vsel %vm248, %v1975, 0
  %v1995 = vsel %vm248, %v1976, 0
  %v1998 = vsel %vm248, %v1977, 0
  %v2001 = vsel %vm248, %v1978, 0
  %2003 = vmatpush.bf16.msra.mxu0 0
  %2004 = vmatpush.bf16.msra.mxu0 0
  %2005 = vmatpush.bf16.msra.mxu0 0
  %2006 = vmatpush.bf16.msra.mxu0 0
  %2007 = vmatpush.bf16.msra.mxu0 0
  %2008 = vmatpush.bf16.msra.mxu0 0
  %2009 = vmatpush.bf16.msra.mxu0 0
  %2010 = vmatpush.bf16.msra.mxu0 %v512
  %2011 = vmatmul.bf16.gmra.mxu0 %v1980
  %v2012 = vpop.f32.mrf.mxu0
  %v2013 = vadd.f32 0.0, %v2012
  %v2014 = vpop.f32.mrf.mxu0
  %v2015 = vadd.f32 0.0, %v2014
  %2016 = vmatmul.bf16.gmra.mxu0 %v1983
  %v2017 = vpop.f32.mrf.mxu0
  %v2018 = vadd.f32 0.0, %v2017
  %v2019 = vpop.f32.mrf.mxu0
  %v2020 = vadd.f32 0.0, %v2019
  %2021 = vmatmul.bf16.gmra.mxu0 %v1986
  %v2022 = vpop.f32.mrf.mxu0
  %v2023 = vadd.f32 0.0, %v2022
  %v2024 = vpop.f32.mrf.mxu0
  %v2025 = vadd.f32 0.0, %v2024
  %2026 = vmatmul.bf16.gmra.mxu0 %v1989
  %v2027 = vpop.f32.mrf.mxu0
  %v2028 = vadd.f32 0.0, %v2027
  %v2029 = vpop.f32.mrf.mxu0
  %v2030 = vadd.f32 0.0, %v2029
  %2031 = vmatmul.bf16.gmra.mxu0 %v1992
  %v2032 = vpop.f32.mrf.mxu0
  %v2033 = vadd.f32 0.0, %v2032
  %v2034 = vpop.f32.mrf.mxu0
  %v2035 = vadd.f32 0.0, %v2034
  %2036 = vmatmul.bf16.gmra.mxu0 %v1995
  %v2037 = vpop.f32.mrf.mxu0
  %v2038 = vadd.f32 0.0, %v2037
  %v2039 = vpop.f32.mrf.mxu0
  %v2040 = vadd.f32 0.0, %v2039
  %2041 = vmatmul.bf16.gmra.mxu0 %v1998
  %v2042 = vpop.f32.mrf.mxu0
  %v2043 = vadd.f32 0.0, %v2042
  %v2044 = vpop.f32.mrf.mxu0
  %v2045 = vadd.f32 0.0, %v2044
  %2046 = vmatmul.bf16.gmra.mxu0 %v2001
  %v2047 = vpop.f32.mrf.mxu0
  %v2048 = vadd.f32 0.0, %v2047
  %v2049 = vpop.f32.mrf.mxu0
  %v2050 = vadd.f32 0.0, %v2049
  %2051 = vdwg.mxu0
  %v2052 = vadd.f32 %v1689, %v2013
  %v2053 = vadd.f32 %v1691, %v2015
  %v2054 = vadd.f32 %v1694, %v2018
  %v2055 = vadd.f32 %v1696, %v2020
  %v2056 = vadd.f32 %v1699, %v2023
  %v2057 = vadd.f32 %v1701, %v2025
  %v2058 = vadd.f32 %v1704, %v2028
  %v2059 = vadd.f32 %v1706, %v2030
  %v2060 = vadd.f32 %v1709, %v2033
  %v2061 = vadd.f32 %v1711, %v2035
  %v2062 = vadd.f32 %v1714, %v2038
  %v2063 = vadd.f32 %v1716, %v2040
  %v2064 = vadd.f32 %v1719, %v2043
  %v2065 = vadd.f32 %v1721, %v2045
  %v2066 = vadd.f32 %v1724, %v2048
  %v2067 = vadd.f32 %v1726, %v2050
  %2068 = vmatpush.bf16.msra.mxu0 0
  %2069 = vmatpush.bf16.msra.mxu0 0
  %2070 = vmatpush.bf16.msra.mxu0 0
  %2071 = vmatpush.bf16.msra.mxu0 0
  %2072 = vmatpush.bf16.msra.mxu0 0
  %2073 = vmatpush.bf16.msra.mxu0 0
  %2074 = vmatpush.bf16.msra.mxu0 0
  %2075 = vmatpush.bf16.msra.mxu0 %v646
  %2076 = vmatmul.bf16.gmra.mxu0 %v890
  %v2077 = vpop.f32.mrf.mxu0
  %v2078 = vadd.f32 0.0, %v2077
  %v2079 = vpop.f32.mrf.mxu0
  %v2080 = vadd.f32 0.0, %v2079
  %2081 = vmatmul.bf16.gmra.mxu0 %v893
  %v2082 = vpop.f32.mrf.mxu0
  %v2083 = vadd.f32 0.0, %v2082
  %v2084 = vpop.f32.mrf.mxu0
  %v2085 = vadd.f32 0.0, %v2084
  %2086 = vmatmul.bf16.gmra.mxu0 %v896
  %v2087 = vpop.f32.mrf.mxu0
  %v2088 = vadd.f32 0.0, %v2087
  %v2089 = vpop.f32.mrf.mxu0
  %v2090 = vadd.f32 0.0, %v2089
  %2091 = vmatmul.bf16.gmra.mxu0 %v899
  %v2092 = vpop.f32.mrf.mxu0
  %v2093 = vadd.f32 0.0, %v2092
  %v2094 = vpop.f32.mrf.mxu0
  %v2095 = vadd.f32 0.0, %v2094
  %2096 = vmatmul.bf16.gmra.mxu0 %v902
  %v2097 = vpop.f32.mrf.mxu0
  %v2098 = vadd.f32 0.0, %v2097
  %v2099 = vpop.f32.mrf.mxu0
  %v2100 = vadd.f32 0.0, %v2099
  %2101 = vmatmul.bf16.gmra.mxu0 %v905
  %v2102 = vpop.f32.mrf.mxu0
  %v2103 = vadd.f32 0.0, %v2102
  %v2104 = vpop.f32.mrf.mxu0
  %v2105 = vadd.f32 0.0, %v2104
  %2106 = vmatmul.bf16.gmra.mxu0 %v908
  %v2107 = vpop.f32.mrf.mxu0
  %v2108 = vadd.f32 0.0, %v2107
  %v2109 = vpop.f32.mrf.mxu0
  %v2110 = vadd.f32 0.0, %v2109
  %2111 = vmatmul.bf16.gmra.mxu0 %v911
  %v2112 = vpop.f32.mrf.mxu0
  %v2113 = vadd.f32 0.0, %v2112
  %v2114 = vpop.f32.mrf.mxu0
  %v2115 = vadd.f32 0.0, %v2114
  %2116 = vdwg.mxu0
  %v2117 = vadd.f32 %v2052, %v2078
  %v2118 = vadd.f32 %v2053, %v2080
  %v2119 = vadd.f32 %v2054, %v2083
  %v2120 = vadd.f32 %v2055, %v2085
  %v2121 = vadd.f32 %v2056, %v2088
  %v2122 = vadd.f32 %v2057, %v2090
  %v2123 = vadd.f32 %v2058, %v2093
  %v2124 = vadd.f32 %v2059, %v2095
  %v2125 = vadd.f32 %v2060, %v2098
  %v2126 = vadd.f32 %v2061, %v2100
  %v2127 = vadd.f32 %v2062, %v2103
  %v2128 = vadd.f32 %v2063, %v2105
  %v2129 = vadd.f32 %v2064, %v2108
  %v2130 = vadd.f32 %v2065, %v2110
  %v2131 = vadd.f32 %v2066, %v2113
  %v2132 = vadd.f32 %v2067, %v2115
  %v2149 = vunpack.c.l.b16 %v1469
  %v2150 = vunpack.c.l.b16 %v1470
  %v2151 = vunpack.c.l.b16 %v1471
  %v2152 = vunpack.c.l.b16 %v1472
  %v2153 = vunpack.c.l.b16 %v1473
  %v2154 = vunpack.c.l.b16 %v1474
  %v2155 = vunpack.c.l.b16 %v1475
  %v2156 = vunpack.c.l.b16 %v1476
  %v2157 = vunpack.c.l.b16 %v1477
  %v2158 = vunpack.c.l.b16 %v1478
  %v2159 = vunpack.c.l.b16 %v1479
  %v2160 = vunpack.c.l.b16 %v1480
  %v2161 = vunpack.c.l.b16 %v1481
  %v2162 = vunpack.c.l.b16 %v1482
  %v2163 = vunpack.c.l.b16 %v1483
  %v2164 = vunpack.c.l.b16 %v1484
  %v2165 = vpack.c.b16 %v2150, %v2149
  %v2166 = vpack.c.b16 %v2152, %v2151
  %v2167 = vpack.c.b16 %v2154, %v2153
  %v2168 = vpack.c.b16 %v2156, %v2155
  %v2169 = vpack.c.b16 %v2158, %v2157
  %v2170 = vpack.c.b16 %v2160, %v2159
  %v2171 = vpack.c.b16 %v2162, %v2161
  %v2172 = vpack.c.b16 %v2164, %v2163
  %v2174 = vsel %vm248, %v2165, 0
  %v2177 = vsel %vm248, %v2166, 0
  %v2180 = vsel %vm248, %v2167, 0
  %v2183 = vsel %vm248, %v2168, 0
  %v2186 = vsel %vm248, %v2169, 0
  %v2189 = vsel %vm248, %v2170, 0
  %v2192 = vsel %vm248, %v2171, 0
  %v2195 = vsel %vm248, %v2172, 0
  %2197 = vmatpush.bf16.msra.mxu0 0
  %2198 = vmatpush.bf16.msra.mxu0 0
  %2199 = vmatpush.bf16.msra.mxu0 0
  %2200 = vmatpush.bf16.msra.mxu0 0
  %2201 = vmatpush.bf16.msra.mxu0 0
  %2202 = vmatpush.bf16.msra.mxu0 0
  %2203 = vmatpush.bf16.msra.mxu0 0
  %2204 = vmatpush.bf16.msra.mxu0 %v780
  %2205 = vmatmul.bf16.gmra.mxu0 %v2174
  %v2206 = vpop.f32.mrf.mxu0
  %v2207 = vadd.f32 0.0, %v2206
  %v2208 = vpop.f32.mrf.mxu0
  %v2209 = vadd.f32 0.0, %v2208
  %2210 = vmatmul.bf16.gmra.mxu0 %v2177
  %v2211 = vpop.f32.mrf.mxu0
  %v2212 = vadd.f32 0.0, %v2211
  %v2213 = vpop.f32.mrf.mxu0
  %v2214 = vadd.f32 0.0, %v2213
  %2215 = vmatmul.bf16.gmra.mxu0 %v2180
  %v2216 = vpop.f32.mrf.mxu0
  %v2217 = vadd.f32 0.0, %v2216
  %v2218 = vpop.f32.mrf.mxu0
  %v2219 = vadd.f32 0.0, %v2218
  %2220 = vmatmul.bf16.gmra.mxu0 %v2183
  %v2221 = vpop.f32.mrf.mxu0
  %v2222 = vadd.f32 0.0, %v2221
  %v2223 = vpop.f32.mrf.mxu0
  %v2224 = vadd.f32 0.0, %v2223
  %2225 = vmatmul.bf16.gmra.mxu0 %v2186
  %v2226 = vpop.f32.mrf.mxu0
  %v2227 = vadd.f32 0.0, %v2226
  %v2228 = vpop.f32.mrf.mxu0
  %v2229 = vadd.f32 0.0, %v2228
  %2230 = vmatmul.bf16.gmra.mxu0 %v2189
  %v2231 = vpop.f32.mrf.mxu0
  %v2232 = vadd.f32 0.0, %v2231
  %v2233 = vpop.f32.mrf.mxu0
  %v2234 = vadd.f32 0.0, %v2233
  %2235 = vmatmul.bf16.gmra.mxu0 %v2192
  %v2236 = vpop.f32.mrf.mxu0
  %v2237 = vadd.f32 0.0, %v2236
  %v2238 = vpop.f32.mrf.mxu0
  %v2239 = vadd.f32 0.0, %v2238
  %2240 = vmatmul.bf16.gmra.mxu0 %v2195
  %v2241 = vpop.f32.mrf.mxu0
  %v2242 = vadd.f32 0.0, %v2241
  %v2243 = vpop.f32.mrf.mxu0
  %v2244 = vadd.f32 0.0, %v2243
  %2245 = vdwg.mxu0
  %v2246 = vadd.f32 %v2117, %v2207
  %v2247 = vadd.f32 %v2118, %v2209
  %v2248 = vadd.f32 %v2119, %v2212
  %v2249 = vadd.f32 %v2120, %v2214
  %v2250 = vadd.f32 %v2121, %v2217
  %v2251 = vadd.f32 %v2122, %v2219
  %v2252 = vadd.f32 %v2123, %v2222
  %v2253 = vadd.f32 %v2124, %v2224
  %v2254 = vadd.f32 %v2125, %v2227
  %v2255 = vadd.f32 %v2126, %v2229
  %v2256 = vadd.f32 %v2127, %v2232
  %v2257 = vadd.f32 %v2128, %v2234
  %v2258 = vadd.f32 %v2129, %v2237
  %v2259 = vadd.f32 %v2130, %v2239
  %v2260 = vadd.f32 %v2131, %v2242
  %v2261 = vadd.f32 %v2132, %v2244
  %v2263 = vshrl.u32 %v1485, 16
  %v2265 = vrot.slane %v2263, 4
  %v2266 = vshll.u32 %v1485, 16
  %v2268 = vrot.slane %v2266, 5
  %v2269 = vor.u32 %v2265, %v2268
  %v2270 = vrot.slane %v2269, 4
  %v2272 = vshll.u32 %v1486, 16
  %v2274 = vrot.slane %v2272, 5
  %v2275 = vsel %vm1730, %v2270, %v2274
  %v2277 = vshrl.u32 %v1487, 16
  %v2279 = vrot.slane %v2277, 4
  %v2280 = vshll.u32 %v1487, 16
  %v2282 = vrot.slane %v2280, 5
  %v2283 = vor.u32 %v2279, %v2282
  %v2284 = vrot.slane %v2283, 4
  %v2286 = vshll.u32 %v1488, 16
  %v2288 = vrot.slane %v2286, 5
  %v2289 = vsel %vm1730, %v2284, %v2288
  %v2291 = vshrl.u32 %v1489, 16
  %v2293 = vrot.slane %v2291, 4
  %v2294 = vshll.u32 %v1489, 16
  %v2296 = vrot.slane %v2294, 5
  %v2297 = vor.u32 %v2293, %v2296
  %v2298 = vrot.slane %v2297, 4
  %v2300 = vshll.u32 %v1490, 16
  %v2302 = vrot.slane %v2300, 5
  %v2303 = vsel %vm1730, %v2298, %v2302
  %v2305 = vshrl.u32 %v1491, 16
  %v2307 = vrot.slane %v2305, 4
  %v2308 = vshll.u32 %v1491, 16
  %v2310 = vrot.slane %v2308, 5
  %v2311 = vor.u32 %v2307, %v2310
  %v2312 = vrot.slane %v2311, 4
  %v2314 = vshll.u32 %v1492, 16
  %v2316 = vrot.slane %v2314, 5
  %v2317 = vsel %vm1730, %v2312, %v2316
  %v2319 = vshrl.u32 %v1493, 16
  %v2321 = vrot.slane %v2319, 4
  %v2322 = vshll.u32 %v1493, 16
  %v2324 = vrot.slane %v2322, 5
  %v2325 = vor.u32 %v2321, %v2324
  %v2326 = vrot.slane %v2325, 4
  %v2328 = vshll.u32 %v1494, 16
  %v2330 = vrot.slane %v2328, 5
  %v2331 = vsel %vm1730, %v2326, %v2330
  %v2333 = vshrl.u32 %v1495, 16
  %v2335 = vrot.slane %v2333, 4
  %v2336 = vshll.u32 %v1495, 16
  %v2338 = vrot.slane %v2336, 5
  %v2339 = vor.u32 %v2335, %v2338
  %v2340 = vrot.slane %v2339, 4
  %v2342 = vshll.u32 %v1496, 16
  %v2344 = vrot.slane %v2342, 5
  %v2345 = vsel %vm1730, %v2340, %v2344
  %v2347 = vshrl.u32 %v1497, 16
  %v2349 = vrot.slane %v2347, 4
  %v2350 = vshll.u32 %v1497, 16
  %v2352 = vrot.slane %v2350, 5
  %v2353 = vor.u32 %v2349, %v2352
  %v2354 = vrot.slane %v2353, 4
  %v2356 = vshll.u32 %v1498, 16
  %v2358 = vrot.slane %v2356, 5
  %v2359 = vsel %vm1730, %v2354, %v2358
  %v2361 = vshrl.u32 %v1499, 16
  %v2363 = vrot.slane %v2361, 4
  %v2364 = vshll.u32 %v1499, 16
  %v2366 = vrot.slane %v2364, 5
  %v2367 = vor.u32 %v2363, %v2366
  %v2368 = vrot.slane %v2367, 4
  %v2370 = vshll.u32 %v1500, 16
  %v2372 = vrot.slane %v2370, 5
  %v2373 = vsel %vm1730, %v2368, %v2372
  %v2375 = vshrl.u32 %v1501, 16
  %v2377 = vrot.slane %v2375, 4
  %v2378 = vshll.u32 %v1501, 16
  %v2380 = vrot.slane %v2378, 5
  %v2381 = vor.u32 %v2377, %v2380
  %v2382 = vrot.slane %v2381, 4
  %v2384 = vshll.u32 %v1502, 16
  %v2386 = vrot.slane %v2384, 5
  %v2387 = vsel %vm1730, %v2382, %v2386
  %v2389 = vshrl.u32 %v1503, 16
  %v2391 = vrot.slane %v2389, 4
  %v2392 = vshll.u32 %v1503, 16
  %v2394 = vrot.slane %v2392, 5
  %v2395 = vor.u32 %v2391, %v2394
  %v2396 = vrot.slane %v2395, 4
  %v2398 = vshll.u32 %v1504, 16
  %v2400 = vrot.slane %v2398, 5
  %v2401 = vsel %vm1730, %v2396, %v2400
  %v2403 = vshrl.u32 %v1505, 16
  %v2405 = vrot.slane %v2403, 4
  %v2406 = vshll.u32 %v1505, 16
  %v2408 = vrot.slane %v2406, 5
  %v2409 = vor.u32 %v2405, %v2408
  %v2410 = vrot.slane %v2409, 4
  %v2412 = vshll.u32 %v1506, 16
  %v2414 = vrot.slane %v2412, 5
  %v2415 = vsel %vm1730, %v2410, %v2414
  %v2417 = vshrl.u32 %v1507, 16
  %v2419 = vrot.slane %v2417, 4
  %v2420 = vshll.u32 %v1507, 16
  %v2422 = vrot.slane %v2420, 5
  %v2423 = vor.u32 %v2419, %v2422
  %v2424 = vrot.slane %v2423, 4
  %v2426 = vshll.u32 %v1508, 16
  %v2428 = vrot.slane %v2426, 5
  %v2429 = vsel %vm1730, %v2424, %v2428
  %v2431 = vshrl.u32 %v1509, 16
  %v2433 = vrot.slane %v2431, 4
  %v2434 = vshll.u32 %v1509, 16
  %v2436 = vrot.slane %v2434, 5
  %v2437 = vor.u32 %v2433, %v2436
  %v2438 = vrot.slane %v2437, 4
  %v2440 = vshll.u32 %v1510, 16
  %v2442 = vrot.slane %v2440, 5
  %v2443 = vsel %vm1730, %v2438, %v2442
  %v2445 = vshrl.u32 %v1511, 16
  %v2447 = vrot.slane %v2445, 4
  %v2448 = vshll.u32 %v1511, 16
  %v2450 = vrot.slane %v2448, 5
  %v2451 = vor.u32 %v2447, %v2450
  %v2452 = vrot.slane %v2451, 4
  %v2454 = vshll.u32 %v1512, 16
  %v2456 = vrot.slane %v2454, 5
  %v2457 = vsel %vm1730, %v2452, %v2456
  %v2459 = vshrl.u32 %v1513, 16
  %v2461 = vrot.slane %v2459, 4
  %v2462 = vshll.u32 %v1513, 16
  %v2464 = vrot.slane %v2462, 5
  %v2465 = vor.u32 %v2461, %v2464
  %v2466 = vrot.slane %v2465, 4
  %v2468 = vshll.u32 %v1514, 16
  %v2470 = vrot.slane %v2468, 5
  %v2471 = vsel %vm1730, %v2466, %v2470
  %v2473 = vshrl.u32 %v1515, 16
  %v2475 = vrot.slane %v2473, 4
  %v2476 = vshll.u32 %v1515, 16
  %v2478 = vrot.slane %v2476, 5
  %v2479 = vor.u32 %v2475, %v2478
  %v2480 = vrot.slane %v2479, 4
  %v2482 = vshll.u32 %v1516, 16
  %v2484 = vrot.slane %v2482, 5
  %v2485 = vsel %vm1730, %v2480, %v2484
  %v2486 = vunpack.c.l.b16 %v2275
  %v2487 = vunpack.c.l.b16 %v2289
  %v2488 = vunpack.c.l.b16 %v2303
  %v2489 = vunpack.c.l.b16 %v2317
  %v2490 = vunpack.c.l.b16 %v2331
  %v2491 = vunpack.c.l.b16 %v2345
  %v2492 = vunpack.c.l.b16 %v2359
  %v2493 = vunpack.c.l.b16 %v2373
  %v2494 = vunpack.c.l.b16 %v2387
  %v2495 = vunpack.c.l.b16 %v2401
  %v2496 = vunpack.c.l.b16 %v2415
  %v2497 = vunpack.c.l.b16 %v2429
  %v2498 = vunpack.c.l.b16 %v2443
  %v2499 = vunpack.c.l.b16 %v2457
  %v2500 = vunpack.c.l.b16 %v2471
  %v2501 = vunpack.c.l.b16 %v2485
  %v2502 = vpack.c.b16 %v2487, %v2486
  %v2503 = vpack.c.b16 %v2489, %v2488
  %v2504 = vpack.c.b16 %v2491, %v2490
  %v2505 = vpack.c.b16 %v2493, %v2492
  %v2506 = vpack.c.b16 %v2495, %v2494
  %v2507 = vpack.c.b16 %v2497, %v2496
  %v2508 = vpack.c.b16 %v2499, %v2498
  %v2509 = vpack.c.b16 %v2501, %v2500
  %v2511 = vsel %vm248, %v2502, 0
  %v2514 = vsel %vm248, %v2503, 0
  %v2517 = vsel %vm248, %v2504, 0
  %v2520 = vsel %vm248, %v2505, 0
  %v2523 = vsel %vm248, %v2506, 0
  %v2526 = vsel %vm248, %v2507, 0
  %v2529 = vsel %vm248, %v2508, 0
  %v2532 = vsel %vm248, %v2509, 0
  %2534 = vmatpush.bf16.msra.mxu0 0
  %2535 = vmatpush.bf16.msra.mxu0 0
  %2536 = vmatpush.bf16.msra.mxu0 0
  %2537 = vmatpush.bf16.msra.mxu0 0
  %2538 = vmatpush.bf16.msra.mxu0 0
  %2539 = vmatpush.bf16.msra.mxu0 0
  %2540 = vmatpush.bf16.msra.mxu0 0
  %2541 = vmatpush.bf16.msra.mxu0 %v914
  %2542 = vmatmul.bf16.gmra.mxu0 %v2511
  %v2543 = vpop.f32.mrf.mxu0
  %v2544 = vadd.f32 0.0, %v2543
  %v2545 = vpop.f32.mrf.mxu0
  %v2546 = vadd.f32 0.0, %v2545
  %2547 = vmatmul.bf16.gmra.mxu0 %v2514
  %v2548 = vpop.f32.mrf.mxu0
  %v2549 = vadd.f32 0.0, %v2548
  %v2550 = vpop.f32.mrf.mxu0
  %v2551 = vadd.f32 0.0, %v2550
  %2552 = vmatmul.bf16.gmra.mxu0 %v2517
  %v2553 = vpop.f32.mrf.mxu0
  %v2554 = vadd.f32 0.0, %v2553
  %v2555 = vpop.f32.mrf.mxu0
  %v2556 = vadd.f32 0.0, %v2555
  %2557 = vmatmul.bf16.gmra.mxu0 %v2520
  %v2558 = vpop.f32.mrf.mxu0
  %v2559 = vadd.f32 0.0, %v2558
  %v2560 = vpop.f32.mrf.mxu0
  %v2561 = vadd.f32 0.0, %v2560
  %2562 = vmatmul.bf16.gmra.mxu0 %v2523
  %v2563 = vpop.f32.mrf.mxu0
  %v2564 = vadd.f32 0.0, %v2563
  %v2565 = vpop.f32.mrf.mxu0
  %v2566 = vadd.f32 0.0, %v2565
  %2567 = vmatmul.bf16.gmra.mxu0 %v2526
  %v2568 = vpop.f32.mrf.mxu0
  %v2569 = vadd.f32 0.0, %v2568
  %v2570 = vpop.f32.mrf.mxu0
  %v2571 = vadd.f32 0.0, %v2570
  %2572 = vmatmul.bf16.gmra.mxu0 %v2529
  %v2573 = vpop.f32.mrf.mxu0
  %v2574 = vadd.f32 0.0, %v2573
  %v2575 = vpop.f32.mrf.mxu0
  %v2576 = vadd.f32 0.0, %v2575
  %2577 = vmatmul.bf16.gmra.mxu0 %v2532
  %v2578 = vpop.f32.mrf.mxu0
  %v2579 = vadd.f32 0.0, %v2578
  %v2580 = vpop.f32.mrf.mxu0
  %v2581 = vadd.f32 0.0, %v2580
  %2582 = vdwg.mxu0
  %v2583 = vadd.f32 %v2246, %v2544
  %v2584 = vadd.f32 %v2247, %v2546
  %v2585 = vadd.f32 %v2248, %v2549
  %v2586 = vadd.f32 %v2249, %v2551
  %v2587 = vadd.f32 %v2250, %v2554
  %v2588 = vadd.f32 %v2251, %v2556
  %v2589 = vadd.f32 %v2252, %v2559
  %v2590 = vadd.f32 %v2253, %v2561
  %v2591 = vadd.f32 %v2254, %v2564
  %v2592 = vadd.f32 %v2255, %v2566
  %v2593 = vadd.f32 %v2256, %v2569
  %v2594 = vadd.f32 %v2257, %v2571
  %v2595 = vadd.f32 %v2258, %v2574
  %v2596 = vadd.f32 %v2259, %v2576
  %v2597 = vadd.f32 %v2260, %v2579
  %v2598 = vadd.f32 %v2261, %v2581
  %2599 = vmatpush.bf16.msra.mxu0 0
  %2600 = vmatpush.bf16.msra.mxu0 0
  %2601 = vmatpush.bf16.msra.mxu0 0
  %2602 = vmatpush.bf16.msra.mxu0 0
  %2603 = vmatpush.bf16.msra.mxu0 0
  %2604 = vmatpush.bf16.msra.mxu0 0
  %2605 = vmatpush.bf16.msra.mxu0 0
  %2606 = vmatpush.bf16.msra.mxu0 %v1048
  %2607 = vmatmul.bf16.gmra.mxu0 %v1292
  %v2608 = vpop.f32.mrf.mxu0
  %v2609 = vadd.f32 0.0, %v2608
  %v2610 = vpop.f32.mrf.mxu0
  %v2611 = vadd.f32 0.0, %v2610
  %2612 = vmatmul.bf16.gmra.mxu0 %v1295
  %v2613 = vpop.f32.mrf.mxu0
  %v2614 = vadd.f32 0.0, %v2613
  %v2615 = vpop.f32.mrf.mxu0
  %v2616 = vadd.f32 0.0, %v2615
  %2617 = vmatmul.bf16.gmra.mxu0 %v1298
  %v2618 = vpop.f32.mrf.mxu0
  %v2619 = vadd.f32 0.0, %v2618
  %v2620 = vpop.f32.mrf.mxu0
  %v2621 = vadd.f32 0.0, %v2620
  %2622 = vmatmul.bf16.gmra.mxu0 %v1301
  %v2623 = vpop.f32.mrf.mxu0
  %v2624 = vadd.f32 0.0, %v2623
  %v2625 = vpop.f32.mrf.mxu0
  %v2626 = vadd.f32 0.0, %v2625
  %2627 = vmatmul.bf16.gmra.mxu0 %v1304
  %v2628 = vpop.f32.mrf.mxu0
  %v2629 = vadd.f32 0.0, %v2628
  %v2630 = vpop.f32.mrf.mxu0
  %v2631 = vadd.f32 0.0, %v2630
  %2632 = vmatmul.bf16.gmra.mxu0 %v1307
  %v2633 = vpop.f32.mrf.mxu0
  %v2634 = vadd.f32 0.0, %v2633
  %v2635 = vpop.f32.mrf.mxu0
  %v2636 = vadd.f32 0.0, %v2635
  %2637 = vmatmul.bf16.gmra.mxu0 %v1310
  %v2638 = vpop.f32.mrf.mxu0
  %v2639 = vadd.f32 0.0, %v2638
  %v2640 = vpop.f32.mrf.mxu0
  %v2641 = vadd.f32 0.0, %v2640
  %2642 = vmatmul.bf16.gmra.mxu0 %v1313
  %v2643 = vpop.f32.mrf.mxu0
  %v2644 = vadd.f32 0.0, %v2643
  %v2645 = vpop.f32.mrf.mxu0
  %v2646 = vadd.f32 0.0, %v2645
  %2647 = vdwg.mxu0
  %v2648 = vadd.f32 %v2583, %v2609
  %v2649 = vadd.f32 %v2584, %v2611
  %v2650 = vadd.f32 %v2585, %v2614
  %v2651 = vadd.f32 %v2586, %v2616
  %v2652 = vadd.f32 %v2587, %v2619
  %v2653 = vadd.f32 %v2588, %v2621
  %v2654 = vadd.f32 %v2589, %v2624
  %v2655 = vadd.f32 %v2590, %v2626
  %v2656 = vadd.f32 %v2591, %v2629
  %v2657 = vadd.f32 %v2592, %v2631
  %v2658 = vadd.f32 %v2593, %v2634
  %v2659 = vadd.f32 %v2594, %v2636
  %v2660 = vadd.f32 %v2595, %v2639
  %v2661 = vadd.f32 %v2596, %v2641
  %v2662 = vadd.f32 %v2597, %v2644
  %v2663 = vadd.f32 %v2598, %v2646
  %v2680 = vunpack.c.l.b16 %v1518
  %v2681 = vunpack.c.l.b16 %v1519
  %v2682 = vunpack.c.l.b16 %v1520
  %v2683 = vunpack.c.l.b16 %v1521
  %v2684 = vunpack.c.l.b16 %v1522
  %v2685 = vunpack.c.l.b16 %v1523
  %v2686 = vunpack.c.l.b16 %v1524
  %v2687 = vunpack.c.l.b16 %v1525
  %v2688 = vunpack.c.l.b16 %v1526
  %v2689 = vunpack.c.l.b16 %v1527
  %v2690 = vunpack.c.l.b16 %v1528
  %v2691 = vunpack.c.l.b16 %v1529
  %v2692 = vunpack.c.l.b16 %v1530
  %v2693 = vunpack.c.l.b16 %v1531
  %v2694 = vunpack.c.l.b16 %v1532
  %v2695 = vunpack.c.l.b16 %v1533
  %v2696 = vpack.c.b16 %v2681, %v2680
  %v2697 = vpack.c.b16 %v2683, %v2682
  %v2698 = vpack.c.b16 %v2685, %v2684
  %v2699 = vpack.c.b16 %v2687, %v2686
  %v2700 = vpack.c.b16 %v2689, %v2688
  %v2701 = vpack.c.b16 %v2691, %v2690
  %v2702 = vpack.c.b16 %v2693, %v2692
  %v2703 = vpack.c.b16 %v2695, %v2694
  %v2705 = vsel %vm248, %v2696, 0
  %v2708 = vsel %vm248, %v2697, 0
  %v2711 = vsel %vm248, %v2698, 0
  %v2714 = vsel %vm248, %v2699, 0
  %v2717 = vsel %vm248, %v2700, 0
  %v2720 = vsel %vm248, %v2701, 0
  %v2723 = vsel %vm248, %v2702, 0
  %v2726 = vsel %vm248, %v2703, 0
  %2728 = vmatpush.bf16.msra.mxu0 0
  %2729 = vmatpush.bf16.msra.mxu0 0
  %2730 = vmatpush.bf16.msra.mxu0 0
  %2731 = vmatpush.bf16.msra.mxu0 0
  %2732 = vmatpush.bf16.msra.mxu0 0
  %2733 = vmatpush.bf16.msra.mxu0 0
  %2734 = vmatpush.bf16.msra.mxu0 0
  %2735 = vmatpush.bf16.msra.mxu0 %v1182
  %2736 = vmatmul.bf16.gmra.mxu0 %v2705
  %v2737 = vpop.f32.mrf.mxu0
  %v2738 = vadd.f32 0.0, %v2737
  %v2739 = vpop.f32.mrf.mxu0
  %v2740 = vadd.f32 0.0, %v2739
  %2741 = vmatmul.bf16.gmra.mxu0 %v2708
  %v2742 = vpop.f32.mrf.mxu0
  %v2743 = vadd.f32 0.0, %v2742
  %v2744 = vpop.f32.mrf.mxu0
  %v2745 = vadd.f32 0.0, %v2744
  %2746 = vmatmul.bf16.gmra.mxu0 %v2711
  %v2747 = vpop.f32.mrf.mxu0
  %v2748 = vadd.f32 0.0, %v2747
  %v2749 = vpop.f32.mrf.mxu0
  %v2750 = vadd.f32 0.0, %v2749
  %2751 = vmatmul.bf16.gmra.mxu0 %v2714
  %v2752 = vpop.f32.mrf.mxu0
  %v2753 = vadd.f32 0.0, %v2752
  %v2754 = vpop.f32.mrf.mxu0
  %v2755 = vadd.f32 0.0, %v2754
  %2756 = vmatmul.bf16.gmra.mxu0 %v2717
  %v2757 = vpop.f32.mrf.mxu0
  %v2758 = vadd.f32 0.0, %v2757
  %v2759 = vpop.f32.mrf.mxu0
  %v2760 = vadd.f32 0.0, %v2759
  %2761 = vmatmul.bf16.gmra.mxu0 %v2720
  %v2762 = vpop.f32.mrf.mxu0
  %v2763 = vadd.f32 0.0, %v2762
  %v2764 = vpop.f32.mrf.mxu0
  %v2765 = vadd.f32 0.0, %v2764
  %2766 = vmatmul.bf16.gmra.mxu0 %v2723
  %v2767 = vpop.f32.mrf.mxu0
  %v2768 = vadd.f32 0.0, %v2767
  %v2769 = vpop.f32.mrf.mxu0
  %v2770 = vadd.f32 0.0, %v2769
  %2771 = vmatmul.bf16.gmra.mxu0 %v2726
  %v2772 = vpop.f32.mrf.mxu0
  %v2773 = vadd.f32 0.0, %v2772
  %v2774 = vpop.f32.mrf.mxu0
  %v2775 = vadd.f32 0.0, %v2774
  %2776 = vdwg.mxu0
  %v2777 = vadd.f32 %v2648, %v2738
  %v2778 = vadd.f32 %v2649, %v2740
  %v2779 = vadd.f32 %v2650, %v2743
  %v2780 = vadd.f32 %v2651, %v2745
  %v2781 = vadd.f32 %v2652, %v2748
  %v2782 = vadd.f32 %v2653, %v2750
  %v2783 = vadd.f32 %v2654, %v2753
  %v2784 = vadd.f32 %v2655, %v2755
  %v2785 = vadd.f32 %v2656, %v2758
  %v2786 = vadd.f32 %v2657, %v2760
  %v2787 = vadd.f32 %v2658, %v2763
  %v2788 = vadd.f32 %v2659, %v2765
  %v2789 = vadd.f32 %v2660, %v2768
  %v2790 = vadd.f32 %v2661, %v2770
  %v2791 = vadd.f32 %v2662, %v2773
  %v2792 = vadd.f32 %v2663, %v2775
  %v2794 = vshrl.u32 %v1534, 16
  %v2796 = vrot.slane %v2794, 4
  %v2797 = vshll.u32 %v1534, 16
  %v2799 = vrot.slane %v2797, 5
  %v2800 = vor.u32 %v2796, %v2799
  %v2801 = vrot.slane %v2800, 4
  %v2803 = vshll.u32 %v1535, 16
  %v2805 = vrot.slane %v2803, 5
  %v2806 = vsel %vm1730, %v2801, %v2805
  %v2808 = vshrl.u32 %v1536, 16
  %v2810 = vrot.slane %v2808, 4
  %v2811 = vshll.u32 %v1536, 16
  %v2813 = vrot.slane %v2811, 5
  %v2814 = vor.u32 %v2810, %v2813
  %v2815 = vrot.slane %v2814, 4
  %v2817 = vshll.u32 %v1537, 16
  %v2819 = vrot.slane %v2817, 5
  %v2820 = vsel %vm1730, %v2815, %v2819
  %v2822 = vshrl.u32 %v1538, 16
  %v2824 = vrot.slane %v2822, 4
  %v2825 = vshll.u32 %v1538, 16
  %v2827 = vrot.slane %v2825, 5
  %v2828 = vor.u32 %v2824, %v2827
  %v2829 = vrot.slane %v2828, 4
  %v2831 = vshll.u32 %v1539, 16
  %v2833 = vrot.slane %v2831, 5
  %v2834 = vsel %vm1730, %v2829, %v2833
  %v2836 = vshrl.u32 %v1540, 16
  %v2838 = vrot.slane %v2836, 4
  %v2839 = vshll.u32 %v1540, 16
  %v2841 = vrot.slane %v2839, 5
  %v2842 = vor.u32 %v2838, %v2841
  %v2843 = vrot.slane %v2842, 4
  %v2845 = vshll.u32 %v1541, 16
  %v2847 = vrot.slane %v2845, 5
  %v2848 = vsel %vm1730, %v2843, %v2847
  %v2850 = vshrl.u32 %v1542, 16
  %v2852 = vrot.slane %v2850, 4
  %v2853 = vshll.u32 %v1542, 16
  %v2855 = vrot.slane %v2853, 5
  %v2856 = vor.u32 %v2852, %v2855
  %v2857 = vrot.slane %v2856, 4
  %v2859 = vshll.u32 %v1543, 16
  %v2861 = vrot.slane %v2859, 5
  %v2862 = vsel %vm1730, %v2857, %v2861
  %v2864 = vshrl.u32 %v1544, 16
  %v2866 = vrot.slane %v2864, 4
  %v2867 = vshll.u32 %v1544, 16
  %v2869 = vrot.slane %v2867, 5
  %v2870 = vor.u32 %v2866, %v2869
  %v2871 = vrot.slane %v2870, 4
  %v2873 = vshll.u32 %v1545, 16
  %v2875 = vrot.slane %v2873, 5
  %v2876 = vsel %vm1730, %v2871, %v2875
  %v2878 = vshrl.u32 %v1546, 16
  %v2880 = vrot.slane %v2878, 4
  %v2881 = vshll.u32 %v1546, 16
  %v2883 = vrot.slane %v2881, 5
  %v2884 = vor.u32 %v2880, %v2883
  %v2885 = vrot.slane %v2884, 4
  %v2887 = vshll.u32 %v1547, 16
  %v2889 = vrot.slane %v2887, 5
  %v2890 = vsel %vm1730, %v2885, %v2889
  %v2892 = vshrl.u32 %v1548, 16
  %v2894 = vrot.slane %v2892, 4
  %v2895 = vshll.u32 %v1548, 16
  %v2897 = vrot.slane %v2895, 5
  %v2898 = vor.u32 %v2894, %v2897
  %v2899 = vrot.slane %v2898, 4
  %v2901 = vshll.u32 %v1549, 16
  %v2903 = vrot.slane %v2901, 5
  %v2904 = vsel %vm1730, %v2899, %v2903
  %v2906 = vshrl.u32 %v1550, 16
  %v2908 = vrot.slane %v2906, 4
  %v2909 = vshll.u32 %v1550, 16
  %v2911 = vrot.slane %v2909, 5
  %v2912 = vor.u32 %v2908, %v2911
  %v2913 = vrot.slane %v2912, 4
  %v2915 = vshll.u32 %v1551, 16
  %v2917 = vrot.slane %v2915, 5
  %v2918 = vsel %vm1730, %v2913, %v2917
  %v2920 = vshrl.u32 %v1552, 16
  %v2922 = vrot.slane %v2920, 4
  %v2923 = vshll.u32 %v1552, 16
  %v2925 = vrot.slane %v2923, 5
  %v2926 = vor.u32 %v2922, %v2925
  %v2927 = vrot.slane %v2926, 4
  %v2929 = vshll.u32 %v1553, 16
  %v2931 = vrot.slane %v2929, 5
  %v2932 = vsel %vm1730, %v2927, %v2931
  %v2934 = vshrl.u32 %v1554, 16
  %v2936 = vrot.slane %v2934, 4
  %v2937 = vshll.u32 %v1554, 16
  %v2939 = vrot.slane %v2937, 5
  %v2940 = vor.u32 %v2936, %v2939
  %v2941 = vrot.slane %v2940, 4
  %v2943 = vshll.u32 %v1555, 16
  %v2945 = vrot.slane %v2943, 5
  %v2946 = vsel %vm1730, %v2941, %v2945
  %v2948 = vshrl.u32 %v1556, 16
  %v2950 = vrot.slane %v2948, 4
  %v2951 = vshll.u32 %v1556, 16
  %v2953 = vrot.slane %v2951, 5
  %v2954 = vor.u32 %v2950, %v2953
  %v2955 = vrot.slane %v2954, 4
  %v2957 = vshll.u32 %v1557, 16
  %v2959 = vrot.slane %v2957, 5
  %v2960 = vsel %vm1730, %v2955, %v2959
  %v2962 = vshrl.u32 %v1558, 16
  %v2964 = vrot.slane %v2962, 4
  %v2965 = vshll.u32 %v1558, 16
  %v2967 = vrot.slane %v2965, 5
  %v2968 = vor.u32 %v2964, %v2967
  %v2969 = vrot.slane %v2968, 4
  %v2971 = vshll.u32 %v1559, 16
  %v2973 = vrot.slane %v2971, 5
  %v2974 = vsel %vm1730, %v2969, %v2973
  %v2976 = vshrl.u32 %v1560, 16
  %v2978 = vrot.slane %v2976, 4
  %v2979 = vshll.u32 %v1560, 16
  %v2981 = vrot.slane %v2979, 5
  %v2982 = vor.u32 %v2978, %v2981
  %v2983 = vrot.slane %v2982, 4
  %v2985 = vshll.u32 %v1561, 16
  %v2987 = vrot.slane %v2985, 5
  %v2988 = vsel %vm1730, %v2983, %v2987
  %v2990 = vshrl.u32 %v1562, 16
  %v2992 = vrot.slane %v2990, 4
  %v2993 = vshll.u32 %v1562, 16
  %v2995 = vrot.slane %v2993, 5
  %v2996 = vor.u32 %v2992, %v2995
  %v2997 = vrot.slane %v2996, 4
  %v2999 = vshll.u32 %v1563, 16
  %v3001 = vrot.slane %v2999, 5
  %v3002 = vsel %vm1730, %v2997, %v3001
  %v3004 = vshrl.u32 %v1564, 16
  %v3006 = vrot.slane %v3004, 4
  %v3007 = vshll.u32 %v1564, 16
  %v3009 = vrot.slane %v3007, 5
  %v3010 = vor.u32 %v3006, %v3009
  %v3011 = vrot.slane %v3010, 4
  %v3013 = vshll.u32 %v1565, 16
  %v3015 = vrot.slane %v3013, 5
  %v3016 = vsel %vm1730, %v3011, %v3015
  %v3017 = vunpack.c.l.b16 %v2806
  %v3018 = vunpack.c.l.b16 %v2820
  %v3019 = vunpack.c.l.b16 %v2834
  %v3020 = vunpack.c.l.b16 %v2848
  %v3021 = vunpack.c.l.b16 %v2862
  %v3022 = vunpack.c.l.b16 %v2876
  %v3023 = vunpack.c.l.b16 %v2890
  %v3024 = vunpack.c.l.b16 %v2904
  %v3025 = vunpack.c.l.b16 %v2918
  %v3026 = vunpack.c.l.b16 %v2932
  %v3027 = vunpack.c.l.b16 %v2946
  %v3028 = vunpack.c.l.b16 %v2960
  %v3029 = vunpack.c.l.b16 %v2974
  %v3030 = vunpack.c.l.b16 %v2988
  %v3031 = vunpack.c.l.b16 %v3002
  %v3032 = vunpack.c.l.b16 %v3016
  %v3033 = vpack.c.b16 %v3018, %v3017
  %v3034 = vpack.c.b16 %v3020, %v3019
  %v3035 = vpack.c.b16 %v3022, %v3021
  %v3036 = vpack.c.b16 %v3024, %v3023
  %v3037 = vpack.c.b16 %v3026, %v3025
  %v3038 = vpack.c.b16 %v3028, %v3027
  %v3039 = vpack.c.b16 %v3030, %v3029
  %v3040 = vpack.c.b16 %v3032, %v3031
  %v3042 = vsel %vm248, %v3033, 0
  %v3045 = vsel %vm248, %v3034, 0
  %v3048 = vsel %vm248, %v3035, 0
  %v3051 = vsel %vm248, %v3036, 0
  %v3054 = vsel %vm248, %v3037, 0
  %v3057 = vsel %vm248, %v3038, 0
  %v3060 = vsel %vm248, %v3039, 0
  %v3063 = vsel %vm248, %v3040, 0
  %3065 = vmatpush.bf16.msra.mxu0 0
  %3066 = vmatpush.bf16.msra.mxu0 0
  %3067 = vmatpush.bf16.msra.mxu0 0
  %3068 = vmatpush.bf16.msra.mxu0 0
  %3069 = vmatpush.bf16.msra.mxu0 0
  %3070 = vmatpush.bf16.msra.mxu0 0
  %3071 = vmatpush.bf16.msra.mxu0 0
  %3072 = vmatpush.bf16.msra.mxu0 %v1316
  %3073 = vmatmul.bf16.gmra.mxu0 %v3042
  %v3074 = vpop.f32.mrf.mxu0
  %v3075 = vadd.f32 0.0, %v3074
  %v3076 = vpop.f32.mrf.mxu0
  %v3077 = vadd.f32 0.0, %v3076
  %3078 = vmatmul.bf16.gmra.mxu0 %v3045
  %v3079 = vpop.f32.mrf.mxu0
  %v3080 = vadd.f32 0.0, %v3079
  %v3081 = vpop.f32.mrf.mxu0
  %v3082 = vadd.f32 0.0, %v3081
  %3083 = vmatmul.bf16.gmra.mxu0 %v3048
  %v3084 = vpop.f32.mrf.mxu0
  %v3085 = vadd.f32 0.0, %v3084
  %v3086 = vpop.f32.mrf.mxu0
  %v3087 = vadd.f32 0.0, %v3086
  %3088 = vmatmul.bf16.gmra.mxu0 %v3051
  %v3089 = vpop.f32.mrf.mxu0
  %v3090 = vadd.f32 0.0, %v3089
  %v3091 = vpop.f32.mrf.mxu0
  %v3092 = vadd.f32 0.0, %v3091
  %3093 = vmatmul.bf16.gmra.mxu0 %v3054
  %v3094 = vpop.f32.mrf.mxu0
  %v3095 = vadd.f32 0.0, %v3094
  %v3096 = vpop.f32.mrf.mxu0
  %v3097 = vadd.f32 0.0, %v3096
  %3098 = vmatmul.bf16.gmra.mxu0 %v3057
  %v3099 = vpop.f32.mrf.mxu0
  %v3100 = vadd.f32 0.0, %v3099
  %v3101 = vpop.f32.mrf.mxu0
  %v3102 = vadd.f32 0.0, %v3101
  %3103 = vmatmul.bf16.gmra.mxu0 %v3060
  %v3104 = vpop.f32.mrf.mxu0
  %v3105 = vadd.f32 0.0, %v3104
  %v3106 = vpop.f32.mrf.mxu0
  %v3107 = vadd.f32 0.0, %v3106
  %3108 = vmatmul.bf16.gmra.mxu0 %v3063
  %v3109 = vpop.f32.mrf.mxu0
  %v3110 = vadd.f32 0.0, %v3109
  %v3111 = vpop.f32.mrf.mxu0
  %v3112 = vadd.f32 0.0, %v3111
  %3113 = vdwg.mxu0
  %v3114 = vadd.f32 %v2777, %v3075
  %v3115 = vadd.f32 %v2778, %v3077
  %v3116 = vadd.f32 %v2779, %v3080
  %v3117 = vadd.f32 %v2780, %v3082
  %v3118 = vadd.f32 %v2781, %v3085
  %v3119 = vadd.f32 %v2782, %v3087
  %v3120 = vadd.f32 %v2783, %v3090
  %v3121 = vadd.f32 %v2784, %v3092
  %v3122 = vadd.f32 %v2785, %v3095
  %v3123 = vadd.f32 %v2786, %v3097
  %v3124 = vadd.f32 %v2787, %v3100
  %v3125 = vadd.f32 %v2788, %v3102
  %v3126 = vadd.f32 %v2789, %v3105
  %v3127 = vadd.f32 %v2790, %v3107
  %v3128 = vadd.f32 %v2791, %v3110
  %v3129 = vadd.f32 %v2792, %v3112
  %v3130 = vadd.f32 %v3114, %v1385
  %v3131 = vadd.f32 %v3115, %v1385
  %v3132 = vadd.f32 %v3116, %v1385
  %v3133 = vadd.f32 %v3117, %v1385
  %v3134 = vadd.f32 %v3118, %v1385
  %v3135 = vadd.f32 %v3119, %v1385
  %v3136 = vadd.f32 %v3120, %v1385
  %v3137 = vadd.f32 %v3121, %v1385
  %v3138 = vadd.f32 %v3122, %v1385
  %v3139 = vadd.f32 %v3123, %v1385
  %v3140 = vadd.f32 %v3124, %v1385
  %v3141 = vadd.f32 %v3125, %v1385
  %v3142 = vadd.f32 %v3126, %v1385
  %v3143 = vadd.f32 %v3127, %v1385
  %v3144 = vadd.f32 %v3128, %v1385
  %v3145 = vadd.f32 %v3129, %v1385
  %v3146 = vpack.c.bf16 %v3130, %v3130
  %v3147 = vpack.c.bf16 %v3131, %v3131
  %v3148 = vpack.c.bf16 %v3132, %v3132
  %v3149 = vpack.c.bf16 %v3133, %v3133
  %v3150 = vpack.c.bf16 %v3134, %v3134
  %v3151 = vpack.c.bf16 %v3135, %v3135
  %v3152 = vpack.c.bf16 %v3136, %v3136
  %v3153 = vpack.c.bf16 %v3137, %v3137
  %v3154 = vpack.c.bf16 %v3138, %v3138
  %v3155 = vpack.c.bf16 %v3139, %v3139
  %v3156 = vpack.c.bf16 %v3140, %v3140
  %v3157 = vpack.c.bf16 %v3141, %v3141
  %v3158 = vpack.c.bf16 %v3142, %v3142
  %v3159 = vpack.c.bf16 %v3143, %v3143
  %v3160 = vpack.c.bf16 %v3144, %v3144
  %v3161 = vpack.c.bf16 %v3145, %v3145
  %s3162 = scalar_lea.vmem %s0, 1728
  %v3163 = vld [vmem:[%s3162] sm:$0xf]
  %v3164 = vld [vmem:[%s3162 + $0x8] sm:$0xf]
  %v3165 = vld [vmem:[%s3162 + $0x10] sm:$0xf]
  %v3166 = vld [vmem:[%s3162 + $0x18] sm:$0xf]
  %v3167 = vld [vmem:[%s3162 + $0x20] sm:$0xf]
  %v3168 = vld [vmem:[%s3162 + $0x28] sm:$0xf]
  %v3169 = vld [vmem:[%s3162 + $0x30] sm:$0xf]
  %v3170 = vld [vmem:[%s3162 + $0x38] sm:$0xf]
  %v3171 = vld [vmem:[%s3162 + $0x48] sm:$0xf]
  %v3172 = vld [vmem:[%s3162 + $0x50] sm:$0xf]
  %v3173 = vld [vmem:[%s3162 + $0x58] sm:$0xf]
  %v3174 = vld [vmem:[%s3162 + $0x60] sm:$0xf]
  %v3175 = vld [vmem:[%s3162 + $0x68] sm:$0xf]
  %v3176 = vld [vmem:[%s3162 + $0x70] sm:$0xf]
  %v3177 = vld [vmem:[%s3162 + $0x78] sm:$0xf]
  %v3178 = vld [vmem:[%s3162 + $0x80] sm:$0xf]
  %s3179 = scalar_lea.vmem %s0, 1872
  %v3180 = vld [vmem:[%s3179] sm:$0xf]
  %v3181 = vld [vmem:[%s3179 + $0x8] sm:$0xf]
  %v3182 = vld [vmem:[%s3179 + $0x10] sm:$0xf]
  %v3183 = vld [vmem:[%s3179 + $0x18] sm:$0xf]
  %v3184 = vld [vmem:[%s3179 + $0x20] sm:$0xf]
  %v3185 = vld [vmem:[%s3179 + $0x28] sm:$0xf]
  %v3186 = vld [vmem:[%s3179 + $0x30] sm:$0xf]
  %v3187 = vld [vmem:[%s3179 + $0x38] sm:$0xf]
  %v3188 = vld [vmem:[%s3179 + $0x48] sm:$0xf]
  %v3189 = vld [vmem:[%s3179 + $0x50] sm:$0xf]
  %v3190 = vld [vmem:[%s3179 + $0x58] sm:$0xf]
  %v3191 = vld [vmem:[%s3179 + $0x60] sm:$0xf]
  %v3192 = vld [vmem:[%s3179 + $0x68] sm:$0xf]
  %v3193 = vld [vmem:[%s3179 + $0x70] sm:$0xf]
  %v3194 = vld [vmem:[%s3179 + $0x78] sm:$0xf]
  %v3195 = vld [vmem:[%s3179 + $0x80] sm:$0xf]
  %s3196 = scalar_lea.vmem %s0, 2016
  %v3197 = vld [vmem:[%s3196] sm:$0xf]
  %v3198 = vld [vmem:[%s3196 + $0x8] sm:$0xf]
  %v3199 = vld [vmem:[%s3196 + $0x10] sm:$0xf]
  %v3200 = vld [vmem:[%s3196 + $0x18] sm:$0xf]
  %v3201 = vld [vmem:[%s3196 + $0x20] sm:$0xf]
  %v3202 = vld [vmem:[%s3196 + $0x28] sm:$0xf]
  %v3203 = vld [vmem:[%s3196 + $0x30] sm:$0xf]
  %v3204 = vld [vmem:[%s3196 + $0x38] sm:$0xf]
  %v3205 = vld [vmem:[%s3196 + $0x48] sm:$0xf]
  %v3206 = vld [vmem:[%s3196 + $0x50] sm:$0xf]
  %v3207 = vld [vmem:[%s3196 + $0x58] sm:$0xf]
  %v3208 = vld [vmem:[%s3196 + $0x60] sm:$0xf]
  %v3209 = vld [vmem:[%s3196 + $0x68] sm:$0xf]
  %v3210 = vld [vmem:[%s3196 + $0x70] sm:$0xf]
  %v3211 = vld [vmem:[%s3196 + $0x78] sm:$0xf]
  %v3212 = vld [vmem:[%s3196 + $0x80] sm:$0xf]
  %s3213 = scalar_lea.vmem %s0, 8
  %v3214 = vld [vmem:[%s3213] sm:$0xf]
  %v3215 = vld [vmem:[%s3213 + $0x8] sm:$0xf]
  %v3216 = vld [vmem:[%s3213 + $0x10] sm:$0xf]
  %v3217 = vld [vmem:[%s3213 + $0x18] sm:$0xf]
  %v3218 = vld [vmem:[%s3213 + $0x20] sm:$0xf]
  %v3219 = vld [vmem:[%s3213 + $0x28] sm:$0xf]
  %v3220 = vld [vmem:[%s3213 + $0x30] sm:$0xf]
  %v3221 = vld [vmem:[%s3213 + $0x38] sm:$0xf]
  %v3222 = vld [vmem:[%s3213 + $0x48] sm:$0xf]
  %v3223 = vld [vmem:[%s3213 + $0x50] sm:$0xf]
  %v3224 = vld [vmem:[%s3213 + $0x58] sm:$0xf]
  %v3225 = vld [vmem:[%s3213 + $0x60] sm:$0xf]
  %v3226 = vld [vmem:[%s3213 + $0x68] sm:$0xf]
  %v3227 = vld [vmem:[%s3213 + $0x70] sm:$0xf]
  %v3228 = vld [vmem:[%s3213 + $0x78] sm:$0xf]
  %v3229 = vld [vmem:[%s3213 + $0x80] sm:$0xf]
  %s3230 = scalar_lea.vmem %s0, 152
  %v3231 = vld [vmem:[%s3230] sm:$0xf]
  %v3232 = vld [vmem:[%s3230 + $0x8] sm:$0xf]
  %v3233 = vld [vmem:[%s3230 + $0x10] sm:$0xf]
  %v3234 = vld [vmem:[%s3230 + $0x18] sm:$0xf]
  %v3235 = vld [vmem:[%s3230 + $0x20] sm:$0xf]
  %v3236 = vld [vmem:[%s3230 + $0x28] sm:$0xf]
  %v3237 = vld [vmem:[%s3230 + $0x30] sm:$0xf]
  %v3238 = vld [vmem:[%s3230 + $0x38] sm:$0xf]
  %v3239 = vld [vmem:[%s3230 + $0x48] sm:$0xf]
  %v3240 = vld [vmem:[%s3230 + $0x50] sm:$0xf]
  %v3241 = vld [vmem:[%s3230 + $0x58] sm:$0xf]
  %v3242 = vld [vmem:[%s3230 + $0x60] sm:$0xf]
  %v3243 = vld [vmem:[%s3230 + $0x68] sm:$0xf]
  %v3244 = vld [vmem:[%s3230 + $0x70] sm:$0xf]
  %v3245 = vld [vmem:[%s3230 + $0x78] sm:$0xf]
  %v3246 = vld [vmem:[%s3230 + $0x80] sm:$0xf]
  %s3247 = scalar_lea.vmem %s0, 296
  %v3248 = vld [vmem:[%s3247] sm:$0xf]
  %v3249 = vld [vmem:[%s3247 + $0x8] sm:$0xf]
  %v3250 = vld [vmem:[%s3247 + $0x10] sm:$0xf]
  %v3251 = vld [vmem:[%s3247 + $0x18] sm:$0xf]
  %v3252 = vld [vmem:[%s3247 + $0x20] sm:$0xf]
  %v3253 = vld [vmem:[%s3247 + $0x28] sm:$0xf]
  %v3254 = vld [vmem:[%s3247 + $0x30] sm:$0xf]
  %v3255 = vld [vmem:[%s3247 + $0x38] sm:$0xf]
  %v3256 = vld [vmem:[%s3247 + $0x48] sm:$0xf]
  %v3257 = vld [vmem:[%s3247 + $0x50] sm:$0xf]
  %v3258 = vld [vmem:[%s3247 + $0x58] sm:$0xf]
  %v3259 = vld [vmem:[%s3247 + $0x60] sm:$0xf]
  %v3260 = vld [vmem:[%s3247 + $0x68] sm:$0xf]
  %v3261 = vld [vmem:[%s3247 + $0x70] sm:$0xf]
  %v3262 = vld [vmem:[%s3247 + $0x78] sm:$0xf]
  %v3263 = vld [vmem:[%s3247 + $0x80] sm:$0xf]
  %3264 = vmatpush.bf16.msra.mxu0 0
  %3265 = vmatpush.bf16.msra.mxu0 0
  %3266 = vmatpush.bf16.msra.mxu0 0
  %3267 = vmatpush.bf16.msra.mxu0 0
  %3268 = vmatpush.bf16.msra.mxu0 0
  %3269 = vmatpush.bf16.msra.mxu0 0
  %3270 = vmatpush.bf16.msra.mxu0 0
  %3271 = vmatpush.bf16.msra.mxu0 %v278
  %3272 = vmatmul.bf16.gmra.mxu0 %v1158
  %v3273 = vpop.f32.mrf.mxu0
  %v3274 = vadd.f32 0.0, %v3273
  %v3275 = vpop.f32.mrf.mxu0
  %v3276 = vadd.f32 0.0, %v3275
  %3277 = vmatmul.bf16.gmra.mxu0 %v1161
  %v3278 = vpop.f32.mrf.mxu0
  %v3279 = vadd.f32 0.0, %v3278
  %v3280 = vpop.f32.mrf.mxu0
  %v3281 = vadd.f32 0.0, %v3280
  %3282 = vmatmul.bf16.gmra.mxu0 %v1164
  %v3283 = vpop.f32.mrf.mxu0
  %v3284 = vadd.f32 0.0, %v3283
  %v3285 = vpop.f32.mrf.mxu0
  %v3286 = vadd.f32 0.0, %v3285
  %3287 = vmatmul.bf16.gmra.mxu0 %v1167
  %v3288 = vpop.f32.mrf.mxu0
  %v3289 = vadd.f32 0.0, %v3288
  %v3290 = vpop.f32.mrf.mxu0
  %3291 = vmatmul.bf16.gmra.mxu0 %v1170
  %v3292 = vpop.f32.mrf.mxu0
  %v3293 = vadd.f32 0.0, %v3292
  %v3294 = vpop.f32.mrf.mxu0
  %v3295 = vadd.f32 0.0, %v3294
  %3296 = vmatmul.bf16.gmra.mxu0 %v1173
  %v3297 = vpop.f32.mrf.mxu0
  %v3298 = vadd.f32 0.0, %v3297
  %v3299 = vpop.f32.mrf.mxu0
  %v3300 = vadd.f32 0.0, %v3299
  %3301 = vmatmul.bf16.gmra.mxu0 %v1176
  %v3302 = vpop.f32.mrf.mxu0
  %v3303 = vadd.f32 0.0, %v3302
  %v3304 = vpop.f32.mrf.mxu0
  %v3305 = vadd.f32 0.0, %v3304
  %3306 = vmatmul.bf16.gmra.mxu0 %v1179
  %v3307 = vpop.f32.mrf.mxu0
  %v3308 = vadd.f32 0.0, %v3307
  %v3309 = vpop.f32.mrf.mxu0
  %3310 = vdwg.mxu0
  %3311 = vmatpush.bf16.msra.mxu0 0
  %3312 = vmatpush.bf16.msra.mxu0 0
  %3313 = vmatpush.bf16.msra.mxu0 0
  %3314 = vmatpush.bf16.msra.mxu0 0
  %3315 = vmatpush.bf16.msra.mxu0 0
  %3316 = vmatpush.bf16.msra.mxu0 0
  %3317 = vmatpush.bf16.msra.mxu0 0
  %3318 = vmatpush.bf16.msra.mxu0 %v394
  %3319 = vmatmul.bf16.gmra.mxu0 %v1024
  %v3320 = vpop.f32.mrf.mxu0
  %v3321 = vadd.f32 %v3274, %v3320
  %v3322 = vpop.f32.mrf.mxu0
  %v3323 = vadd.f32 %v3276, %v3322
  %3324 = vmatmul.bf16.gmra.mxu0 %v1027
  %v3325 = vpop.f32.mrf.mxu0
  %v3326 = vadd.f32 %v3279, %v3325
  %v3327 = vpop.f32.mrf.mxu0
  %v3328 = vadd.f32 %v3281, %v3327
  %3329 = vmatmul.bf16.gmra.mxu0 %v1030
  %v3330 = vpop.f32.mrf.mxu0
  %v3331 = vadd.f32 %v3284, %v3330
  %v3332 = vpop.f32.mrf.mxu0
  %v3333 = vadd.f32 %v3286, %v3332
  %3334 = vmatmul.bf16.gmra.mxu0 %v1033
  %v3335 = vpop.f32.mrf.mxu0
  %v3336 = vadd.f32 %v3289, %v3335
  %v3337 = vpop.f32.mrf.mxu0
  %3338 = vmatmul.bf16.gmra.mxu0 %v1036
  %v3339 = vpop.f32.mrf.mxu0
  %v3340 = vadd.f32 %v3293, %v3339
  %v3341 = vpop.f32.mrf.mxu0
  %v3342 = vadd.f32 %v3295, %v3341
  %3343 = vmatmul.bf16.gmra.mxu0 %v1039
  %v3344 = vpop.f32.mrf.mxu0
  %v3345 = vadd.f32 %v3298, %v3344
  %v3346 = vpop.f32.mrf.mxu0
  %v3347 = vadd.f32 %v3300, %v3346
  %3348 = vmatmul.bf16.gmra.mxu0 %v1042
  %v3349 = vpop.f32.mrf.mxu0
  %v3350 = vadd.f32 %v3303, %v3349
  %v3351 = vpop.f32.mrf.mxu0
  %v3352 = vadd.f32 %v3305, %v3351
  %3353 = vmatmul.bf16.gmra.mxu0 %v1045
  %v3354 = vpop.f32.mrf.mxu0
  %v3355 = vadd.f32 %v3308, %v3354
  %v3356 = vpop.f32.mrf.mxu0
  %3357 = vdwg.mxu0
  %3358 = vmatpush.bf16.msra.mxu0 0
  %3359 = vmatpush.bf16.msra.mxu0 0
  %3360 = vmatpush.bf16.msra.mxu0 0
  %3361 = vmatpush.bf16.msra.mxu0 0
  %3362 = vmatpush.bf16.msra.mxu0 0
  %3363 = vmatpush.bf16.msra.mxu0 0
  %3364 = vmatpush.bf16.msra.mxu0 0
  %3365 = vmatpush.bf16.msra.mxu0 %v512
  %3366 = vmatmul.bf16.gmra.mxu0 %v1292
  %v3367 = vpop.f32.mrf.mxu0
  %v3368 = vadd.f32 0.0, %v3367
  %v3369 = vpop.f32.mrf.mxu0
  %v3370 = vadd.f32 0.0, %v3369
  %3371 = vmatmul.bf16.gmra.mxu0 %v1295
  %v3372 = vpop.f32.mrf.mxu0
  %v3373 = vadd.f32 0.0, %v3372
  %v3374 = vpop.f32.mrf.mxu0
  %v3375 = vadd.f32 0.0, %v3374
  %3376 = vmatmul.bf16.gmra.mxu0 %v1298
  %v3377 = vpop.f32.mrf.mxu0
  %v3378 = vadd.f32 0.0, %v3377
  %v3379 = vpop.f32.mrf.mxu0
  %v3380 = vadd.f32 0.0, %v3379
  %3381 = vmatmul.bf16.gmra.mxu0 %v1301
  %v3382 = vpop.f32.mrf.mxu0
  %v3383 = vadd.f32 0.0, %v3382
  %v3384 = vpop.f32.mrf.mxu0
  %3385 = vmatmul.bf16.gmra.mxu0 %v1304
  %v3386 = vpop.f32.mrf.mxu0
  %v3387 = vadd.f32 0.0, %v3386
  %v3388 = vpop.f32.mrf.mxu0
  %v3389 = vadd.f32 0.0, %v3388
  %3390 = vmatmul.bf16.gmra.mxu0 %v1307
  %v3391 = vpop.f32.mrf.mxu0
  %v3392 = vadd.f32 0.0, %v3391
  %v3393 = vpop.f32.mrf.mxu0
  %v3394 = vadd.f32 0.0, %v3393
  %3395 = vmatmul.bf16.gmra.mxu0 %v1310
  %v3396 = vpop.f32.mrf.mxu0
  %v3397 = vadd.f32 0.0, %v3396
  %v3398 = vpop.f32.mrf.mxu0
  %v3399 = vadd.f32 0.0, %v3398
  %3400 = vmatmul.bf16.gmra.mxu0 %v1313
  %v3401 = vpop.f32.mrf.mxu0
  %v3402 = vadd.f32 0.0, %v3401
  %v3403 = vpop.f32.mrf.mxu0
  %3404 = vdwg.mxu0
  %v3405 = vadd.f32 %v3321, %v3368
  %v3406 = vadd.f32 %v3323, %v3370
  %v3407 = vadd.f32 %v3326, %v3373
  %v3408 = vadd.f32 %v3328, %v3375
  %v3409 = vadd.f32 %v3331, %v3378
  %v3410 = vadd.f32 %v3333, %v3380
  %v3411 = vadd.f32 %v3336, %v3383
  %v3412 = vadd.f32 %v3340, %v3387
  %v3413 = vadd.f32 %v3342, %v3389
  %v3414 = vadd.f32 %v3345, %v3392
  %v3415 = vadd.f32 %v3347, %v3394
  %v3416 = vadd.f32 %v3350, %v3397
  %v3417 = vadd.f32 %v3352, %v3399
  %v3418 = vadd.f32 %v3355, %v3402
  %v3435 = vunpack.c.l.b16 %v3163
  %v3436 = vunpack.c.l.b16 %v3164
  %v3437 = vunpack.c.l.b16 %v3165
  %v3438 = vunpack.c.l.b16 %v3166
  %v3439 = vunpack.c.l.b16 %v3167
  %v3440 = vunpack.c.l.b16 %v3168
  %v3441 = vunpack.c.l.b16 %v3169
  %v3442 = vunpack.c.l.b16 %v3170
  %v3443 = vunpack.c.l.b16 %v3171
  %v3444 = vunpack.c.l.b16 %v3172
  %v3445 = vunpack.c.l.b16 %v3173
  %v3446 = vunpack.c.l.b16 %v3174
  %v3447 = vunpack.c.l.b16 %v3175
  %v3448 = vunpack.c.l.b16 %v3176
  %v3449 = vunpack.c.l.b16 %v3177
  %v3450 = vunpack.c.l.b16 %v3178
  %v3451 = vpack.c.b16 %v3436, %v3435
  %v3452 = vpack.c.b16 %v3438, %v3437
  %v3453 = vpack.c.b16 %v3440, %v3439
  %v3454 = vpack.c.b16 %v3442, %v3441
  %v3455 = vpack.c.b16 %v3444, %v3443
  %v3456 = vpack.c.b16 %v3446, %v3445
  %v3457 = vpack.c.b16 %v3448, %v3447
  %v3458 = vpack.c.b16 %v3450, %v3449
  %v3460 = vsel %vm248, %v3451, 0
  %v3463 = vsel %vm248, %v3452, 0
  %v3466 = vsel %vm248, %v3453, 0
  %v3469 = vsel %vm248, %v3454, 0
  %v3472 = vsel %vm248, %v3455, 0
  %v3475 = vsel %vm248, %v3456, 0
  %v3478 = vsel %vm248, %v3457, 0
  %v3481 = vsel %vm248, %v3458, 0
  %3483 = vmatpush.bf16.msra.mxu0 0
  %3484 = vmatpush.bf16.msra.mxu0 0
  %3485 = vmatpush.bf16.msra.mxu0 0
  %3486 = vmatpush.bf16.msra.mxu0 0
  %3487 = vmatpush.bf16.msra.mxu0 0
  %3488 = vmatpush.bf16.msra.mxu0 0
  %3489 = vmatpush.bf16.msra.mxu0 0
  %3490 = vmatpush.bf16.msra.mxu0 %v646
  %3491 = vmatmul.bf16.gmra.mxu0 %v3460
  %v3492 = vpop.f32.mrf.mxu0
  %v3493 = vadd.f32 0.0, %v3492
  %v3494 = vpop.f32.mrf.mxu0
  %v3495 = vadd.f32 0.0, %v3494
  %3496 = vmatmul.bf16.gmra.mxu0 %v3463
  %v3497 = vpop.f32.mrf.mxu0
  %v3498 = vadd.f32 0.0, %v3497
  %v3499 = vpop.f32.mrf.mxu0
  %v3500 = vadd.f32 0.0, %v3499
  %3501 = vmatmul.bf16.gmra.mxu0 %v3466
  %v3502 = vpop.f32.mrf.mxu0
  %v3503 = vadd.f32 0.0, %v3502
  %v3504 = vpop.f32.mrf.mxu0
  %v3505 = vadd.f32 0.0, %v3504
  %3506 = vmatmul.bf16.gmra.mxu0 %v3469
  %v3507 = vpop.f32.mrf.mxu0
  %v3508 = vadd.f32 0.0, %v3507
  %v3509 = vpop.f32.mrf.mxu0
  %3510 = vmatmul.bf16.gmra.mxu0 %v3472
  %v3511 = vpop.f32.mrf.mxu0
  %v3512 = vadd.f32 0.0, %v3511
  %v3513 = vpop.f32.mrf.mxu0
  %v3514 = vadd.f32 0.0, %v3513
  %3515 = vmatmul.bf16.gmra.mxu0 %v3475
  %v3516 = vpop.f32.mrf.mxu0
  %v3517 = vadd.f32 0.0, %v3516
  %v3518 = vpop.f32.mrf.mxu0
  %v3519 = vadd.f32 0.0, %v3518
  %3520 = vmatmul.bf16.gmra.mxu0 %v3478
  %v3521 = vpop.f32.mrf.mxu0
  %v3522 = vadd.f32 0.0, %v3521
  %v3523 = vpop.f32.mrf.mxu0
  %v3524 = vadd.f32 0.0, %v3523
  %3525 = vmatmul.bf16.gmra.mxu0 %v3481
  %v3526 = vpop.f32.mrf.mxu0
  %v3527 = vadd.f32 0.0, %v3526
  %v3528 = vpop.f32.mrf.mxu0
  %3529 = vdwg.mxu0
  %v3530 = vadd.f32 %v3405, %v3493
  %v3531 = vadd.f32 %v3406, %v3495
  %v3532 = vadd.f32 %v3407, %v3498
  %v3533 = vadd.f32 %v3408, %v3500
  %v3534 = vadd.f32 %v3409, %v3503
  %v3535 = vadd.f32 %v3410, %v3505
  %v3536 = vadd.f32 %v3411, %v3508
  %v3537 = vadd.f32 %v3412, %v3512
  %v3538 = vadd.f32 %v3413, %v3514
  %v3539 = vadd.f32 %v3414, %v3517
  %v3540 = vadd.f32 %v3415, %v3519
  %v3541 = vadd.f32 %v3416, %v3522
  %v3542 = vadd.f32 %v3417, %v3524
  %v3543 = vadd.f32 %v3418, %v3527
  %v3560 = vunpack.c.l.b16 %v3180
  %v3561 = vunpack.c.l.b16 %v3181
  %v3562 = vunpack.c.l.b16 %v3182
  %v3563 = vunpack.c.l.b16 %v3183
  %v3564 = vunpack.c.l.b16 %v3184
  %v3565 = vunpack.c.l.b16 %v3185
  %v3566 = vunpack.c.l.b16 %v3186
  %v3567 = vunpack.c.l.b16 %v3187
  %v3568 = vunpack.c.l.b16 %v3188
  %v3569 = vunpack.c.l.b16 %v3189
  %v3570 = vunpack.c.l.b16 %v3190
  %v3571 = vunpack.c.l.b16 %v3191
  %v3572 = vunpack.c.l.b16 %v3192
  %v3573 = vunpack.c.l.b16 %v3193
  %v3574 = vunpack.c.l.b16 %v3194
  %v3575 = vunpack.c.l.b16 %v3195
  %v3576 = vpack.c.b16 %v3561, %v3560
  %v3577 = vpack.c.b16 %v3563, %v3562
  %v3578 = vpack.c.b16 %v3565, %v3564
  %v3579 = vpack.c.b16 %v3567, %v3566
  %v3580 = vpack.c.b16 %v3569, %v3568
  %v3581 = vpack.c.b16 %v3571, %v3570
  %v3582 = vpack.c.b16 %v3573, %v3572
  %v3583 = vpack.c.b16 %v3575, %v3574
  %v3585 = vsel %vm248, %v3576, 0
  %v3588 = vsel %vm248, %v3577, 0
  %v3591 = vsel %vm248, %v3578, 0
  %v3594 = vsel %vm248, %v3579, 0
  %v3597 = vsel %vm248, %v3580, 0
  %v3600 = vsel %vm248, %v3581, 0
  %v3603 = vsel %vm248, %v3582, 0
  %v3606 = vsel %vm248, %v3583, 0
  %3608 = vmatpush.bf16.msra.mxu0 0
  %3609 = vmatpush.bf16.msra.mxu0 0
  %3610 = vmatpush.bf16.msra.mxu0 0
  %3611 = vmatpush.bf16.msra.mxu0 0
  %3612 = vmatpush.bf16.msra.mxu0 0
  %3613 = vmatpush.bf16.msra.mxu0 0
  %3614 = vmatpush.bf16.msra.mxu0 0
  %3615 = vmatpush.bf16.msra.mxu0 %v780
  %3616 = vmatmul.bf16.gmra.mxu0 %v3585
  %v3617 = vpop.f32.mrf.mxu0
  %v3618 = vadd.f32 0.0, %v3617
  %v3619 = vpop.f32.mrf.mxu0
  %v3620 = vadd.f32 0.0, %v3619
  %3621 = vmatmul.bf16.gmra.mxu0 %v3588
  %v3622 = vpop.f32.mrf.mxu0
  %v3623 = vadd.f32 0.0, %v3622
  %v3624 = vpop.f32.mrf.mxu0
  %v3625 = vadd.f32 0.0, %v3624
  %3626 = vmatmul.bf16.gmra.mxu0 %v3591
  %v3627 = vpop.f32.mrf.mxu0
  %v3628 = vadd.f32 0.0, %v3627
  %v3629 = vpop.f32.mrf.mxu0
  %v3630 = vadd.f32 0.0, %v3629
  %3631 = vmatmul.bf16.gmra.mxu0 %v3594
  %v3632 = vpop.f32.mrf.mxu0
  %v3633 = vadd.f32 0.0, %v3632
  %v3634 = vpop.f32.mrf.mxu0
  %3635 = vmatmul.bf16.gmra.mxu0 %v3597
  %v3636 = vpop.f32.mrf.mxu0
  %v3637 = vadd.f32 0.0, %v3636
  %v3638 = vpop.f32.mrf.mxu0
  %v3639 = vadd.f32 0.0, %v3638
  %3640 = vmatmul.bf16.gmra.mxu0 %v3600
  %v3641 = vpop.f32.mrf.mxu0
  %v3642 = vadd.f32 0.0, %v3641
  %v3643 = vpop.f32.mrf.mxu0
  %v3644 = vadd.f32 0.0, %v3643
  %3645 = vmatmul.bf16.gmra.mxu0 %v3603
  %v3646 = vpop.f32.mrf.mxu0
  %v3647 = vadd.f32 0.0, %v3646
  %v3648 = vpop.f32.mrf.mxu0
  %v3649 = vadd.f32 0.0, %v3648
  %3650 = vmatmul.bf16.gmra.mxu0 %v3606
  %v3651 = vpop.f32.mrf.mxu0
  %v3652 = vadd.f32 0.0, %v3651
  %v3653 = vpop.f32.mrf.mxu0
  %3654 = vdwg.mxu0
  %v3655 = vadd.f32 %v3530, %v3618
  %v3656 = vadd.f32 %v3531, %v3620
  %v3657 = vadd.f32 %v3532, %v3623
  %v3658 = vadd.f32 %v3533, %v3625
  %v3659 = vadd.f32 %v3534, %v3628
  %v3660 = vadd.f32 %v3535, %v3630
  %v3661 = vadd.f32 %v3536, %v3633
  %v3662 = vadd.f32 %v3537, %v3637
  %v3663 = vadd.f32 %v3538, %v3639
  %v3664 = vadd.f32 %v3539, %v3642
  %v3665 = vadd.f32 %v3540, %v3644
  %v3666 = vadd.f32 %v3541, %v3647
  %v3667 = vadd.f32 %v3542, %v3649
  %v3668 = vadd.f32 %v3543, %v3652
  %v3685 = vunpack.c.l.b16 %v3197
  %v3686 = vunpack.c.l.b16 %v3198
  %v3687 = vunpack.c.l.b16 %v3199
  %v3688 = vunpack.c.l.b16 %v3200
  %v3689 = vunpack.c.l.b16 %v3201
  %v3690 = vunpack.c.l.b16 %v3202
  %v3691 = vunpack.c.l.b16 %v3203
  %v3692 = vunpack.c.l.b16 %v3204
  %v3693 = vunpack.c.l.b16 %v3205
  %v3694 = vunpack.c.l.b16 %v3206
  %v3695 = vunpack.c.l.b16 %v3207
  %v3696 = vunpack.c.l.b16 %v3208
  %v3697 = vunpack.c.l.b16 %v3209
  %v3698 = vunpack.c.l.b16 %v3210
  %v3699 = vunpack.c.l.b16 %v3211
  %v3700 = vunpack.c.l.b16 %v3212
  %v3701 = vpack.c.b16 %v3686, %v3685
  %v3702 = vpack.c.b16 %v3688, %v3687
  %v3703 = vpack.c.b16 %v3690, %v3689
  %v3704 = vpack.c.b16 %v3692, %v3691
  %v3705 = vpack.c.b16 %v3694, %v3693
  %v3706 = vpack.c.b16 %v3696, %v3695
  %v3707 = vpack.c.b16 %v3698, %v3697
  %v3708 = vpack.c.b16 %v3700, %v3699
  %v3710 = vsel %vm248, %v3701, 0
  %v3713 = vsel %vm248, %v3702, 0
  %v3716 = vsel %vm248, %v3703, 0
  %v3719 = vsel %vm248, %v3704, 0
  %v3722 = vsel %vm248, %v3705, 0
  %v3725 = vsel %vm248, %v3706, 0
  %v3728 = vsel %vm248, %v3707, 0
  %v3731 = vsel %vm248, %v3708, 0
  %3733 = vmatpush.bf16.msra.mxu0 0
  %3734 = vmatpush.bf16.msra.mxu0 0
  %3735 = vmatpush.bf16.msra.mxu0 0
  %3736 = vmatpush.bf16.msra.mxu0 0
  %3737 = vmatpush.bf16.msra.mxu0 0
  %3738 = vmatpush.bf16.msra.mxu0 0
  %3739 = vmatpush.bf16.msra.mxu0 0
  %3740 = vmatpush.bf16.msra.mxu0 %v914
  %3741 = vmatmul.bf16.gmra.mxu0 %v3710
  %v3742 = vpop.f32.mrf.mxu0
  %v3743 = vadd.f32 0.0, %v3742
  %v3744 = vpop.f32.mrf.mxu0
  %v3745 = vadd.f32 0.0, %v3744
  %3746 = vmatmul.bf16.gmra.mxu0 %v3713
  %v3747 = vpop.f32.mrf.mxu0
  %v3748 = vadd.f32 0.0, %v3747
  %v3749 = vpop.f32.mrf.mxu0
  %v3750 = vadd.f32 0.0, %v3749
  %3751 = vmatmul.bf16.gmra.mxu0 %v3716
  %v3752 = vpop.f32.mrf.mxu0
  %v3753 = vadd.f32 0.0, %v3752
  %v3754 = vpop.f32.mrf.mxu0
  %v3755 = vadd.f32 0.0, %v3754
  %3756 = vmatmul.bf16.gmra.mxu0 %v3719
  %v3757 = vpop.f32.mrf.mxu0
  %v3758 = vadd.f32 0.0, %v3757
  %v3759 = vpop.f32.mrf.mxu0
  %3760 = vmatmul.bf16.gmra.mxu0 %v3722
  %v3761 = vpop.f32.mrf.mxu0
  %v3762 = vadd.f32 0.0, %v3761
  %v3763 = vpop.f32.mrf.mxu0
  %v3764 = vadd.f32 0.0, %v3763
  %3765 = vmatmul.bf16.gmra.mxu0 %v3725
  %v3766 = vpop.f32.mrf.mxu0
  %v3767 = vadd.f32 0.0, %v3766
  %v3768 = vpop.f32.mrf.mxu0
  %v3769 = vadd.f32 0.0, %v3768
  %3770 = vmatmul.bf16.gmra.mxu0 %v3728
  %v3771 = vpop.f32.mrf.mxu0
  %v3772 = vadd.f32 0.0, %v3771
  %v3773 = vpop.f32.mrf.mxu0
  %v3774 = vadd.f32 0.0, %v3773
  %3775 = vmatmul.bf16.gmra.mxu0 %v3731
  %v3776 = vpop.f32.mrf.mxu0
  %v3777 = vadd.f32 0.0, %v3776
  %v3778 = vpop.f32.mrf.mxu0
  %3779 = vdwg.mxu0
  %v3780 = vadd.f32 %v3655, %v3743
  %v3781 = vadd.f32 %v3656, %v3745
  %v3782 = vadd.f32 %v3657, %v3748
  %v3783 = vadd.f32 %v3658, %v3750
  %v3784 = vadd.f32 %v3659, %v3753
  %v3785 = vadd.f32 %v3660, %v3755
  %v3786 = vadd.f32 %v3661, %v3758
  %v3787 = vadd.f32 %v3662, %v3762
  %v3788 = vadd.f32 %v3663, %v3764
  %v3789 = vadd.f32 %v3664, %v3767
  %v3790 = vadd.f32 %v3665, %v3769
  %v3791 = vadd.f32 %v3666, %v3772
  %v3792 = vadd.f32 %v3667, %v3774
  %v3793 = vadd.f32 %v3668, %v3777
  %v3810 = vunpack.c.l.b16 %v3214
  %v3811 = vunpack.c.l.b16 %v3215
  %v3812 = vunpack.c.l.b16 %v3216
  %v3813 = vunpack.c.l.b16 %v3217
  %v3814 = vunpack.c.l.b16 %v3218
  %v3815 = vunpack.c.l.b16 %v3219
  %v3816 = vunpack.c.l.b16 %v3220
  %v3817 = vunpack.c.l.b16 %v3221
  %v3818 = vunpack.c.l.b16 %v3222
  %v3819 = vunpack.c.l.b16 %v3223
  %v3820 = vunpack.c.l.b16 %v3224
  %v3821 = vunpack.c.l.b16 %v3225
  %v3822 = vunpack.c.l.b16 %v3226
  %v3823 = vunpack.c.l.b16 %v3227
  %v3824 = vunpack.c.l.b16 %v3228
  %v3825 = vunpack.c.l.b16 %v3229
  %v3826 = vpack.c.b16 %v3811, %v3810
  %v3827 = vpack.c.b16 %v3813, %v3812
  %v3828 = vpack.c.b16 %v3815, %v3814
  %v3829 = vpack.c.b16 %v3817, %v3816
  %v3830 = vpack.c.b16 %v3819, %v3818
  %v3831 = vpack.c.b16 %v3821, %v3820
  %v3832 = vpack.c.b16 %v3823, %v3822
  %v3833 = vpack.c.b16 %v3825, %v3824
  %v3835 = vsel %vm248, %v3826, 0
  %v3838 = vsel %vm248, %v3827, 0
  %v3841 = vsel %vm248, %v3828, 0
  %v3844 = vsel %vm248, %v3829, 0
  %v3847 = vsel %vm248, %v3830, 0
  %v3850 = vsel %vm248, %v3831, 0
  %v3853 = vsel %vm248, %v3832, 0
  %v3856 = vsel %vm248, %v3833, 0
  %3858 = vmatpush.bf16.msra.mxu0 0
  %3859 = vmatpush.bf16.msra.mxu0 0
  %3860 = vmatpush.bf16.msra.mxu0 0
  %3861 = vmatpush.bf16.msra.mxu0 0
  %3862 = vmatpush.bf16.msra.mxu0 0
  %3863 = vmatpush.bf16.msra.mxu0 0
  %3864 = vmatpush.bf16.msra.mxu0 0
  %3865 = vmatpush.bf16.msra.mxu0 %v1048
  %3866 = vmatmul.bf16.gmra.mxu0 %v3835
  %v3867 = vpop.f32.mrf.mxu0
  %v3868 = vadd.f32 0.0, %v3867
  %v3869 = vpop.f32.mrf.mxu0
  %v3870 = vadd.f32 0.0, %v3869
  %3871 = vmatmul.bf16.gmra.mxu0 %v3838
  %v3872 = vpop.f32.mrf.mxu0
  %v3873 = vadd.f32 0.0, %v3872
  %v3874 = vpop.f32.mrf.mxu0
  %v3875 = vadd.f32 0.0, %v3874
  %3876 = vmatmul.bf16.gmra.mxu0 %v3841
  %v3877 = vpop.f32.mrf.mxu0
  %v3878 = vadd.f32 0.0, %v3877
  %v3879 = vpop.f32.mrf.mxu0
  %v3880 = vadd.f32 0.0, %v3879
  %3881 = vmatmul.bf16.gmra.mxu0 %v3844
  %v3882 = vpop.f32.mrf.mxu0
  %v3883 = vadd.f32 0.0, %v3882
  %v3884 = vpop.f32.mrf.mxu0
  %3885 = vmatmul.bf16.gmra.mxu0 %v3847
  %v3886 = vpop.f32.mrf.mxu0
  %v3887 = vadd.f32 0.0, %v3886
  %v3888 = vpop.f32.mrf.mxu0
  %v3889 = vadd.f32 0.0, %v3888
  %3890 = vmatmul.bf16.gmra.mxu0 %v3850
  %v3891 = vpop.f32.mrf.mxu0
  %v3892 = vadd.f32 0.0, %v3891
  %v3893 = vpop.f32.mrf.mxu0
  %v3894 = vadd.f32 0.0, %v3893
  %3895 = vmatmul.bf16.gmra.mxu0 %v3853
  %v3896 = vpop.f32.mrf.mxu0
  %v3897 = vadd.f32 0.0, %v3896
  %v3898 = vpop.f32.mrf.mxu0
  %v3899 = vadd.f32 0.0, %v3898
  %3900 = vmatmul.bf16.gmra.mxu0 %v3856
  %v3901 = vpop.f32.mrf.mxu0
  %v3902 = vadd.f32 0.0, %v3901
  %v3903 = vpop.f32.mrf.mxu0
  %3904 = vdwg.mxu0
  %v3905 = vadd.f32 %v3780, %v3868
  %v3906 = vadd.f32 %v3781, %v3870
  %v3907 = vadd.f32 %v3782, %v3873
  %v3908 = vadd.f32 %v3783, %v3875
  %v3909 = vadd.f32 %v3784, %v3878
  %v3910 = vadd.f32 %v3785, %v3880
  %v3911 = vadd.f32 %v3786, %v3883
  %v3912 = vadd.f32 %v3787, %v3887
  %v3913 = vadd.f32 %v3788, %v3889
  %v3914 = vadd.f32 %v3789, %v3892
  %v3915 = vadd.f32 %v3790, %v3894
  %v3916 = vadd.f32 %v3791, %v3897
  %v3917 = vadd.f32 %v3792, %v3899
  %v3918 = vadd.f32 %v3793, %v3902
  %v3935 = vunpack.c.l.b16 %v3231
  %v3936 = vunpack.c.l.b16 %v3232
  %v3937 = vunpack.c.l.b16 %v3233
  %v3938 = vunpack.c.l.b16 %v3234
  %v3939 = vunpack.c.l.b16 %v3235
  %v3940 = vunpack.c.l.b16 %v3236
  %v3941 = vunpack.c.l.b16 %v3237
  %v3942 = vunpack.c.l.b16 %v3238
  %v3943 = vunpack.c.l.b16 %v3239
  %v3944 = vunpack.c.l.b16 %v3240
  %v3945 = vunpack.c.l.b16 %v3241
  %v3946 = vunpack.c.l.b16 %v3242
  %v3947 = vunpack.c.l.b16 %v3243
  %v3948 = vunpack.c.l.b16 %v3244
  %v3949 = vunpack.c.l.b16 %v3245
  %v3950 = vunpack.c.l.b16 %v3246
  %v3951 = vpack.c.b16 %v3936, %v3935
  %v3952 = vpack.c.b16 %v3938, %v3937
  %v3953 = vpack.c.b16 %v3940, %v3939
  %v3954 = vpack.c.b16 %v3942, %v3941
  %v3955 = vpack.c.b16 %v3944, %v3943
  %v3956 = vpack.c.b16 %v3946, %v3945
  %v3957 = vpack.c.b16 %v3948, %v3947
  %v3958 = vpack.c.b16 %v3950, %v3949
  %v3960 = vsel %vm248, %v3951, 0
  %v3963 = vsel %vm248, %v3952, 0
  %v3966 = vsel %vm248, %v3953, 0
  %v3969 = vsel %vm248, %v3954, 0
  %v3972 = vsel %vm248, %v3955, 0
  %v3975 = vsel %vm248, %v3956, 0
  %v3978 = vsel %vm248, %v3957, 0
  %v3981 = vsel %vm248, %v3958, 0
  %3983 = vmatpush.bf16.msra.mxu0 0
  %3984 = vmatpush.bf16.msra.mxu0 0
  %3985 = vmatpush.bf16.msra.mxu0 0
  %3986 = vmatpush.bf16.msra.mxu0 0
  %3987 = vmatpush.bf16.msra.mxu0 0
  %3988 = vmatpush.bf16.msra.mxu0 0
  %3989 = vmatpush.bf16.msra.mxu0 0
  %3990 = vmatpush.bf16.msra.mxu0 %v1182
  %3991 = vmatmul.bf16.gmra.mxu0 %v3960
  %v3992 = vpop.f32.mrf.mxu0
  %v3993 = vadd.f32 0.0, %v3992
  %v3994 = vpop.f32.mrf.mxu0
  %v3995 = vadd.f32 0.0, %v3994
  %3996 = vmatmul.bf16.gmra.mxu0 %v3963
  %v3997 = vpop.f32.mrf.mxu0
  %v3998 = vadd.f32 0.0, %v3997
  %v3999 = vpop.f32.mrf.mxu0
  %v4000 = vadd.f32 0.0, %v3999
  %4001 = vmatmul.bf16.gmra.mxu0 %v3966
  %v4002 = vpop.f32.mrf.mxu0
  %v4003 = vadd.f32 0.0, %v4002
  %v4004 = vpop.f32.mrf.mxu0
  %v4005 = vadd.f32 0.0, %v4004
  %4006 = vmatmul.bf16.gmra.mxu0 %v3969
  %v4007 = vpop.f32.mrf.mxu0
  %v4008 = vadd.f32 0.0, %v4007
  %v4009 = vpop.f32.mrf.mxu0
  %4010 = vmatmul.bf16.gmra.mxu0 %v3972
  %v4011 = vpop.f32.mrf.mxu0
  %v4012 = vadd.f32 0.0, %v4011
  %v4013 = vpop.f32.mrf.mxu0
  %v4014 = vadd.f32 0.0, %v4013
  %4015 = vmatmul.bf16.gmra.mxu0 %v3975
  %v4016 = vpop.f32.mrf.mxu0
  %v4017 = vadd.f32 0.0, %v4016
  %v4018 = vpop.f32.mrf.mxu0
  %v4019 = vadd.f32 0.0, %v4018
  %4020 = vmatmul.bf16.gmra.mxu0 %v3978
  %v4021 = vpop.f32.mrf.mxu0
  %v4022 = vadd.f32 0.0, %v4021
  %v4023 = vpop.f32.mrf.mxu0
  %v4024 = vadd.f32 0.0, %v4023
  %4025 = vmatmul.bf16.gmra.mxu0 %v3981
  %v4026 = vpop.f32.mrf.mxu0
  %v4027 = vadd.f32 0.0, %v4026
  %v4028 = vpop.f32.mrf.mxu0
  %4029 = vdwg.mxu0
  %v4030 = vadd.f32 %v3905, %v3993
  %v4031 = vadd.f32 %v3906, %v3995
  %v4032 = vadd.f32 %v3907, %v3998
  %v4033 = vadd.f32 %v3908, %v4000
  %v4034 = vadd.f32 %v3909, %v4003
  %v4035 = vadd.f32 %v3910, %v4005
  %v4036 = vadd.f32 %v3911, %v4008
  %v4037 = vadd.f32 %v3912, %v4012
  %v4038 = vadd.f32 %v3913, %v4014
  %v4039 = vadd.f32 %v3914, %v4017
  %v4040 = vadd.f32 %v3915, %v4019
  %v4041 = vadd.f32 %v3916, %v4022
  %v4042 = vadd.f32 %v3917, %v4024
  %v4043 = vadd.f32 %v3918, %v4027
  %v4060 = vunpack.c.l.b16 %v3248
  %v4061 = vunpack.c.l.b16 %v3249
  %v4062 = vunpack.c.l.b16 %v3250
  %v4063 = vunpack.c.l.b16 %v3251
  %v4064 = vunpack.c.l.b16 %v3252
  %v4065 = vunpack.c.l.b16 %v3253
  %v4066 = vunpack.c.l.b16 %v3254
  %v4067 = vunpack.c.l.b16 %v3255
  %v4068 = vunpack.c.l.b16 %v3256
  %v4069 = vunpack.c.l.b16 %v3257
  %v4070 = vunpack.c.l.b16 %v3258
  %v4071 = vunpack.c.l.b16 %v3259
  %v4072 = vunpack.c.l.b16 %v3260
  %v4073 = vunpack.c.l.b16 %v3261
  %v4074 = vunpack.c.l.b16 %v3262
  %v4075 = vunpack.c.l.b16 %v3263
  %v4076 = vpack.c.b16 %v4061, %v4060
  %v4077 = vpack.c.b16 %v4063, %v4062
  %v4078 = vpack.c.b16 %v4065, %v4064
  %v4079 = vpack.c.b16 %v4067, %v4066
  %v4080 = vpack.c.b16 %v4069, %v4068
  %v4081 = vpack.c.b16 %v4071, %v4070
  %v4082 = vpack.c.b16 %v4073, %v4072
  %v4083 = vpack.c.b16 %v4075, %v4074
  %v4085 = vsel %vm248, %v4076, 0
  %v4088 = vsel %vm248, %v4077, 0
  %v4091 = vsel %vm248, %v4078, 0
  %v4094 = vsel %vm248, %v4079, 0
  %v4097 = vsel %vm248, %v4080, 0
  %v4100 = vsel %vm248, %v4081, 0
  %v4103 = vsel %vm248, %v4082, 0
  %v4106 = vsel %vm248, %v4083, 0
  %4108 = vmatpush.bf16.msra.mxu0 0
  %4109 = vmatpush.bf16.msra.mxu0 0
  %4110 = vmatpush.bf16.msra.mxu0 0
  %4111 = vmatpush.bf16.msra.mxu0 0
  %4112 = vmatpush.bf16.msra.mxu0 0
  %4113 = vmatpush.bf16.msra.mxu0 0
  %4114 = vmatpush.bf16.msra.mxu0 0
  %4115 = vmatpush.bf16.msra.mxu0 %v1316
  %4116 = vmatmul.bf16.gmra.mxu0 %v4085
  %v4117 = vpop.f32.mrf.mxu0
  %v4118 = vadd.f32 0.0, %v4117
  %v4119 = vpop.f32.mrf.mxu0
  %v4120 = vadd.f32 0.0, %v4119
  %4121 = vmatmul.bf16.gmra.mxu0 %v4088
  %v4122 = vpop.f32.mrf.mxu0
  %v4123 = vadd.f32 0.0, %v4122
  %v4124 = vpop.f32.mrf.mxu0
  %v4125 = vadd.f32 0.0, %v4124
  %4126 = vmatmul.bf16.gmra.mxu0 %v4091
  %v4127 = vpop.f32.mrf.mxu0
  %v4128 = vadd.f32 0.0, %v4127
  %v4129 = vpop.f32.mrf.mxu0
  %v4130 = vadd.f32 0.0, %v4129
  %4131 = vmatmul.bf16.gmra.mxu0 %v4094
  %v4132 = vpop.f32.mrf.mxu0
  %v4133 = vadd.f32 0.0, %v4132
  %v4134 = vpop.f32.mrf.mxu0
  %4135 = vmatmul.bf16.gmra.mxu0 %v4097
  %v4136 = vpop.f32.mrf.mxu0
  %v4137 = vadd.f32 0.0, %v4136
  %v4138 = vpop.f32.mrf.mxu0
  %v4139 = vadd.f32 0.0, %v4138
  %4140 = vmatmul.bf16.gmra.mxu0 %v4100
  %v4141 = vpop.f32.mrf.mxu0
  %v4142 = vadd.f32 0.0, %v4141
  %v4143 = vpop.f32.mrf.mxu0
  %v4144 = vadd.f32 0.0, %v4143
  %4145 = vmatmul.bf16.gmra.mxu0 %v4103
  %v4146 = vpop.f32.mrf.mxu0
  %v4147 = vadd.f32 0.0, %v4146
  %v4148 = vpop.f32.mrf.mxu0
  %v4149 = vadd.f32 0.0, %v4148
  %4150 = vmatmul.bf16.gmra.mxu0 %v4106
  %v4151 = vpop.f32.mrf.mxu0
  %v4152 = vadd.f32 0.0, %v4151
  %v4153 = vpop.f32.mrf.mxu0
  %4154 = vdwg.mxu0
  %v4155 = vadd.f32 %v4030, %v4118
  %v4156 = vadd.f32 %v4031, %v4120
  %v4157 = vadd.f32 %v4032, %v4123
  %v4158 = vadd.f32 %v4033, %v4125
  %v4159 = vadd.f32 %v4034, %v4128
  %v4160 = vadd.f32 %v4035, %v4130
  %v4161 = vadd.f32 %v4036, %v4133
  %v4162 = vadd.f32 %v4037, %v4137
  %v4163 = vadd.f32 %v4038, %v4139
  %v4164 = vadd.f32 %v4039, %v4142
  %v4165 = vadd.f32 %v4040, %v4144
  %v4166 = vadd.f32 %v4041, %v4147
  %v4167 = vadd.f32 %v4042, %v4149
  %v4168 = vadd.f32 %v4043, %v4152
  %v4169 = vadd.f32 %v4155, %v1385
  %v4170 = vadd.f32 %v4156, %v1385
  %v4171 = vadd.f32 %v4157, %v1385
  %v4172 = vadd.f32 %v4158, %v1385
  %v4173 = vadd.f32 %v4159, %v1385
  %v4174 = vadd.f32 %v4160, %v1385
  %v4175 = vadd.f32 %v4161, %v1385
  %v4176 = vadd.f32 %v4162, %v1385
  %v4177 = vadd.f32 %v4163, %v1385
  %v4178 = vadd.f32 %v4164, %v1385
  %v4179 = vadd.f32 %v4165, %v1385
  %v4180 = vadd.f32 %v4166, %v1385
  %v4181 = vadd.f32 %v4167, %v1385
  %v4182 = vadd.f32 %v4168, %v1385
  %v4183 = vpack.c.bf16 %v4169, %v4169
  %v4184 = vpack.c.bf16 %v4170, %v4170
  %v4185 = vpack.c.bf16 %v4171, %v4171
  %v4186 = vpack.c.bf16 %v4172, %v4172
  %v4187 = vpack.c.bf16 %v4173, %v4173
  %v4188 = vpack.c.bf16 %v4174, %v4174
  %v4189 = vpack.c.bf16 %v4175, %v4175
  %v4190 = vpack.c.bf16 %v4176, %v4176
  %v4191 = vpack.c.bf16 %v4177, %v4177
  %v4192 = vpack.c.bf16 %v4178, %v4178
  %v4193 = vpack.c.bf16 %v4179, %v4179
  %v4194 = vpack.c.bf16 %v4180, %v4180
  %v4195 = vpack.c.bf16 %v4181, %v4181
  %v4196 = vpack.c.bf16 %v4182, %v4182
  %s4197 = scalar_lea.vmem %s0, 2160
  %v4198 = vld [vmem:[%s4197] sm:$0xf]
  %v4199 = vld [vmem:[%s4197 + $0x8] sm:$0xf]
  %v4200 = vld [vmem:[%s4197 + $0x10] sm:$0xf]
  %v4201 = vld [vmem:[%s4197 + $0x18] sm:$0xf]
  %v4202 = vld [vmem:[%s4197 + $0x20] sm:$0xf]
  %v4203 = vld [vmem:[%s4197 + $0x28] sm:$0xf]
  %v4204 = vld [vmem:[%s4197 + $0x30] sm:$0xf]
  %v4205 = vld [vmem:[%s4197 + $0x38] sm:$0xf]
  %v4206 = vld [vmem:[%s4197 + $0x48] sm:$0xf]
  %v4207 = vld [vmem:[%s4197 + $0x50] sm:$0xf]
  %v4208 = vld [vmem:[%s4197 + $0x58] sm:$0xf]
  %v4209 = vld [vmem:[%s4197 + $0x60] sm:$0xf]
  %v4210 = vld [vmem:[%s4197 + $0x68] sm:$0xf]
  %v4211 = vld [vmem:[%s4197 + $0x70] sm:$0xf]
  %v4212 = vld [vmem:[%s4197 + $0x78] sm:$0xf]
  %v4213 = vld [vmem:[%s4197 + $0x80] sm:$0xf]
  %v4214 = vld [vmem:[%s3162] sm:$0xf]
  %v4215 = vld [vmem:[%s3162 + $0x4] sm:$0x1]
  %v4216 = vld [vmem:[%s3162 + $0x8] sm:$0xf]
  %v4217 = vld [vmem:[%s3162 + $0xc] sm:$0x1]
  %v4218 = vld [vmem:[%s3162 + $0x10] sm:$0xf]
  %v4219 = vld [vmem:[%s3162 + $0x14] sm:$0x1]
  %v4220 = vld [vmem:[%s3162 + $0x18] sm:$0xf]
  %v4221 = vld [vmem:[%s3162 + $0x1c] sm:$0x1]
  %v4222 = vld [vmem:[%s3162 + $0x20] sm:$0xf]
  %v4223 = vld [vmem:[%s3162 + $0x24] sm:$0x1]
  %v4224 = vld [vmem:[%s3162 + $0x28] sm:$0xf]
  %v4225 = vld [vmem:[%s3162 + $0x2c] sm:$0x1]
  %v4226 = vld [vmem:[%s3162 + $0x30] sm:$0xf]
  %v4227 = vld [vmem:[%s3162 + $0x34] sm:$0x1]
  %v4228 = vld [vmem:[%s3162 + $0x38] sm:$0xf]
  %v4229 = vld [vmem:[%s3162 + $0x3c] sm:$0x1]
  %v4230 = vld [vmem:[%s3162 + $0x48] sm:$0xf]
  %v4231 = vld [vmem:[%s3162 + $0x4c] sm:$0x1]
  %v4232 = vld [vmem:[%s3162 + $0x50] sm:$0xf]
  %v4233 = vld [vmem:[%s3162 + $0x54] sm:$0x1]
  %v4234 = vld [vmem:[%s3162 + $0x58] sm:$0xf]
  %v4235 = vld [vmem:[%s3162 + $0x5c] sm:$0x1]
  %v4236 = vld [vmem:[%s3162 + $0x60] sm:$0xf]
  %v4237 = vld [vmem:[%s3162 + $0x64] sm:$0x1]
  %v4238 = vld [vmem:[%s3162 + $0x68] sm:$0xf]
  %v4239 = vld [vmem:[%s3162 + $0x6c] sm:$0x1]
  %v4240 = vld [vmem:[%s3162 + $0x70] sm:$0xf]
  %v4241 = vld [vmem:[%s3162 + $0x74] sm:$0x1]
  %v4242 = vld [vmem:[%s3162 + $0x78] sm:$0xf]
  %v4243 = vld [vmem:[%s3162 + $0x7c] sm:$0x1]
  %v4244 = vld [vmem:[%s3162 + $0x80] sm:$0xf]
  %v4245 = vld [vmem:[%s3162 + $0x84] sm:$0x1]
  %s4246 = scalar_lea.vmem %s0, 440
  %v4247 = vld [vmem:[%s4246] sm:$0xf]
  %v4248 = vld [vmem:[%s4246 + $0x8] sm:$0xf]
  %v4249 = vld [vmem:[%s4246 + $0x10] sm:$0xf]
  %v4250 = vld [vmem:[%s4246 + $0x18] sm:$0xf]
  %v4251 = vld [vmem:[%s4246 + $0x20] sm:$0xf]
  %v4252 = vld [vmem:[%s4246 + $0x28] sm:$0xf]
  %v4253 = vld [vmem:[%s4246 + $0x30] sm:$0xf]
  %v4254 = vld [vmem:[%s4246 + $0x38] sm:$0xf]
  %v4255 = vld [vmem:[%s4246 + $0x48] sm:$0xf]
  %v4256 = vld [vmem:[%s4246 + $0x50] sm:$0xf]
  %v4257 = vld [vmem:[%s4246 + $0x58] sm:$0xf]
  %v4258 = vld [vmem:[%s4246 + $0x60] sm:$0xf]
  %v4259 = vld [vmem:[%s4246 + $0x68] sm:$0xf]
  %v4260 = vld [vmem:[%s4246 + $0x70] sm:$0xf]
  %v4261 = vld [vmem:[%s4246 + $0x78] sm:$0xf]
  %v4262 = vld [vmem:[%s4246 + $0x80] sm:$0xf]
  %v4263 = vld [vmem:[%s3213] sm:$0xf]
  %v4264 = vld [vmem:[%s3213 + $0x4] sm:$0x1]
  %v4265 = vld [vmem:[%s3213 + $0x8] sm:$0xf]
  %v4266 = vld [vmem:[%s3213 + $0xc] sm:$0x1]
  %v4267 = vld [vmem:[%s3213 + $0x10] sm:$0xf]
  %v4268 = vld [vmem:[%s3213 + $0x14] sm:$0x1]
  %v4269 = vld [vmem:[%s3213 + $0x18] sm:$0xf]
  %v4270 = vld [vmem:[%s3213 + $0x1c] sm:$0x1]
  %v4271 = vld [vmem:[%s3213 + $0x20] sm:$0xf]
  %v4272 = vld [vmem:[%s3213 + $0x24] sm:$0x1]
  %v4273 = vld [vmem:[%s3213 + $0x28] sm:$0xf]
  %v4274 = vld [vmem:[%s3213 + $0x2c] sm:$0x1]
  %v4275 = vld [vmem:[%s3213 + $0x30] sm:$0xf]
  %v4276 = vld [vmem:[%s3213 + $0x34] sm:$0x1]
  %v4277 = vld [vmem:[%s3213 + $0x38] sm:$0xf]
  %v4278 = vld [vmem:[%s3213 + $0x3c] sm:$0x1]
  %v4279 = vld [vmem:[%s3213 + $0x48] sm:$0xf]
  %v4280 = vld [vmem:[%s3213 + $0x4c] sm:$0x1]
  %v4281 = vld [vmem:[%s3213 + $0x50] sm:$0xf]
  %v4282 = vld [vmem:[%s3213 + $0x54] sm:$0x1]
  %v4283 = vld [vmem:[%s3213 + $0x58] sm:$0xf]
  %v4284 = vld [vmem:[%s3213 + $0x5c] sm:$0x1]
  %v4285 = vld [vmem:[%s3213 + $0x60] sm:$0xf]
  %v4286 = vld [vmem:[%s3213 + $0x64] sm:$0x1]
  %v4287 = vld [vmem:[%s3213 + $0x68] sm:$0xf]
  %v4288 = vld [vmem:[%s3213 + $0x6c] sm:$0x1]
  %v4289 = vld [vmem:[%s3213 + $0x70] sm:$0xf]
  %v4290 = vld [vmem:[%s3213 + $0x74] sm:$0x1]
  %v4291 = vld [vmem:[%s3213 + $0x78] sm:$0xf]
  %v4292 = vld [vmem:[%s3213 + $0x7c] sm:$0x1]
  %v4293 = vld [vmem:[%s3213 + $0x80] sm:$0xf]
  %v4294 = vld [vmem:[%s3213 + $0x84] sm:$0x1]
  %4295 = vmatpush.bf16.msra.mxu0 0
  %4296 = vmatpush.bf16.msra.mxu0 0
  %4297 = vmatpush.bf16.msra.mxu0 0
  %4298 = vmatpush.bf16.msra.mxu0 0
  %4299 = vmatpush.bf16.msra.mxu0 0
  %4300 = vmatpush.bf16.msra.mxu0 0
  %4301 = vmatpush.bf16.msra.mxu0 0
  %4302 = vmatpush.bf16.msra.mxu0 %v278
  %4303 = vmatmul.bf16.gmra.mxu0 %v2705
  %v4304 = vpop.f32.mrf.mxu0
  %v4305 = vadd.f32 0.0, %v4304
  %v4306 = vpop.f32.mrf.mxu0
  %v4307 = vadd.f32 0.0, %v4306
  %4308 = vmatmul.bf16.gmra.mxu0 %v2708
  %v4309 = vpop.f32.mrf.mxu0
  %v4310 = vadd.f32 0.0, %v4309
  %v4311 = vpop.f32.mrf.mxu0
  %v4312 = vadd.f32 0.0, %v4311
  %4313 = vmatmul.bf16.gmra.mxu0 %v2711
  %v4314 = vpop.f32.mrf.mxu0
  %v4315 = vadd.f32 0.0, %v4314
  %v4316 = vpop.f32.mrf.mxu0
  %v4317 = vadd.f32 0.0, %v4316
  %4318 = vmatmul.bf16.gmra.mxu0 %v2714
  %v4319 = vpop.f32.mrf.mxu0
  %v4320 = vadd.f32 0.0, %v4319
  %v4321 = vpop.f32.mrf.mxu0
  %4322 = vmatmul.bf16.gmra.mxu0 %v2717
  %v4323 = vpop.f32.mrf.mxu0
  %v4324 = vadd.f32 0.0, %v4323
  %v4325 = vpop.f32.mrf.mxu0
  %v4326 = vadd.f32 0.0, %v4325
  %4327 = vmatmul.bf16.gmra.mxu0 %v2720
  %v4328 = vpop.f32.mrf.mxu0
  %v4329 = vadd.f32 0.0, %v4328
  %v4330 = vpop.f32.mrf.mxu0
  %v4331 = vadd.f32 0.0, %v4330
  %4332 = vmatmul.bf16.gmra.mxu0 %v2723
  %v4333 = vpop.f32.mrf.mxu0
  %v4334 = vadd.f32 0.0, %v4333
  %v4335 = vpop.f32.mrf.mxu0
  %v4336 = vadd.f32 0.0, %v4335
  %4337 = vmatmul.bf16.gmra.mxu0 %v2726
  %v4338 = vpop.f32.mrf.mxu0
  %v4339 = vadd.f32 0.0, %v4338
  %v4340 = vpop.f32.mrf.mxu0
  %4341 = vdwg.mxu0
  %4342 = vmatpush.bf16.msra.mxu0 0
  %4343 = vmatpush.bf16.msra.mxu0 0
  %4344 = vmatpush.bf16.msra.mxu0 0
  %4345 = vmatpush.bf16.msra.mxu0 0
  %4346 = vmatpush.bf16.msra.mxu0 0
  %4347 = vmatpush.bf16.msra.mxu0 0
  %4348 = vmatpush.bf16.msra.mxu0 0
  %4349 = vmatpush.bf16.msra.mxu0 %v394
  %4350 = vmatmul.bf16.gmra.mxu0 %v1292
  %v4351 = vpop.f32.mrf.mxu0
  %v4352 = vadd.f32 %v4305, %v4351
  %v4353 = vpop.f32.mrf.mxu0
  %v4354 = vadd.f32 %v4307, %v4353
  %4355 = vmatmul.bf16.gmra.mxu0 %v1295
  %v4356 = vpop.f32.mrf.mxu0
  %v4357 = vadd.f32 %v4310, %v4356
  %v4358 = vpop.f32.mrf.mxu0
  %v4359 = vadd.f32 %v4312, %v4358
  %4360 = vmatmul.bf16.gmra.mxu0 %v1298
  %v4361 = vpop.f32.mrf.mxu0
  %v4362 = vadd.f32 %v4315, %v4361
  %v4363 = vpop.f32.mrf.mxu0
  %v4364 = vadd.f32 %v4317, %v4363
  %4365 = vmatmul.bf16.gmra.mxu0 %v1301
  %v4366 = vpop.f32.mrf.mxu0
  %v4367 = vadd.f32 %v4320, %v4366
  %v4368 = vpop.f32.mrf.mxu0
  %4369 = vmatmul.bf16.gmra.mxu0 %v1304
  %v4370 = vpop.f32.mrf.mxu0
  %v4371 = vadd.f32 %v4324, %v4370
  %v4372 = vpop.f32.mrf.mxu0
  %v4373 = vadd.f32 %v4326, %v4372
  %4374 = vmatmul.bf16.gmra.mxu0 %v1307
  %v4375 = vpop.f32.mrf.mxu0
  %v4376 = vadd.f32 %v4329, %v4375
  %v4377 = vpop.f32.mrf.mxu0
  %v4378 = vadd.f32 %v4331, %v4377
  %4379 = vmatmul.bf16.gmra.mxu0 %v1310
  %v4380 = vpop.f32.mrf.mxu0
  %v4381 = vadd.f32 %v4334, %v4380
  %v4382 = vpop.f32.mrf.mxu0
  %v4383 = vadd.f32 %v4336, %v4382
  %4384 = vmatmul.bf16.gmra.mxu0 %v1313
  %v4385 = vpop.f32.mrf.mxu0
  %v4386 = vadd.f32 %v4339, %v4385
  %v4387 = vpop.f32.mrf.mxu0
  %4388 = vdwg.mxu0
  %4389 = vmatpush.bf16.msra.mxu0 0
  %4390 = vmatpush.bf16.msra.mxu0 0
  %4391 = vmatpush.bf16.msra.mxu0 0
  %4392 = vmatpush.bf16.msra.mxu0 0
  %4393 = vmatpush.bf16.msra.mxu0 0
  %4394 = vmatpush.bf16.msra.mxu0 0
  %4395 = vmatpush.bf16.msra.mxu0 0
  %4396 = vmatpush.bf16.msra.mxu0 %v512
  %4397 = vmatmul.bf16.gmra.mxu0 %v3042
  %v4398 = vpop.f32.mrf.mxu0
  %v4399 = vadd.f32 0.0, %v4398
  %v4400 = vpop.f32.mrf.mxu0
  %v4401 = vadd.f32 0.0, %v4400
  %4402 = vmatmul.bf16.gmra.mxu0 %v3045
  %v4403 = vpop.f32.mrf.mxu0
  %v4404 = vadd.f32 0.0, %v4403
  %v4405 = vpop.f32.mrf.mxu0
  %v4406 = vadd.f32 0.0, %v4405
  %4407 = vmatmul.bf16.gmra.mxu0 %v3048
  %v4408 = vpop.f32.mrf.mxu0
  %v4409 = vadd.f32 0.0, %v4408
  %v4410 = vpop.f32.mrf.mxu0
  %v4411 = vadd.f32 0.0, %v4410
  %4412 = vmatmul.bf16.gmra.mxu0 %v3051
  %v4413 = vpop.f32.mrf.mxu0
  %v4414 = vadd.f32 0.0, %v4413
  %v4415 = vpop.f32.mrf.mxu0
  %4416 = vmatmul.bf16.gmra.mxu0 %v3054
  %v4417 = vpop.f32.mrf.mxu0
  %v4418 = vadd.f32 0.0, %v4417
  %v4419 = vpop.f32.mrf.mxu0
  %v4420 = vadd.f32 0.0, %v4419
  %4421 = vmatmul.bf16.gmra.mxu0 %v3057
  %v4422 = vpop.f32.mrf.mxu0
  %v4423 = vadd.f32 0.0, %v4422
  %v4424 = vpop.f32.mrf.mxu0
  %v4425 = vadd.f32 0.0, %v4424
  %4426 = vmatmul.bf16.gmra.mxu0 %v3060
  %v4427 = vpop.f32.mrf.mxu0
  %v4428 = vadd.f32 0.0, %v4427
  %v4429 = vpop.f32.mrf.mxu0
  %v4430 = vadd.f32 0.0, %v4429
  %4431 = vmatmul.bf16.gmra.mxu0 %v3063
  %v4432 = vpop.f32.mrf.mxu0
  %v4433 = vadd.f32 0.0, %v4432
  %v4434 = vpop.f32.mrf.mxu0
  %4435 = vdwg.mxu0
  %v4436 = vadd.f32 %v4352, %v4399
  %v4437 = vadd.f32 %v4354, %v4401
  %v4438 = vadd.f32 %v4357, %v4404
  %v4439 = vadd.f32 %v4359, %v4406
  %v4440 = vadd.f32 %v4362, %v4409
  %v4441 = vadd.f32 %v4364, %v4411
  %v4442 = vadd.f32 %v4367, %v4414
  %v4443 = vadd.f32 %v4371, %v4418
  %v4444 = vadd.f32 %v4373, %v4420
  %v4445 = vadd.f32 %v4376, %v4423
  %v4446 = vadd.f32 %v4378, %v4425
  %v4447 = vadd.f32 %v4381, %v4428
  %v4448 = vadd.f32 %v4383, %v4430
  %v4449 = vadd.f32 %v4386, %v4433
  %4450 = vmatpush.bf16.msra.mxu0 0
  %4451 = vmatpush.bf16.msra.mxu0 0
  %4452 = vmatpush.bf16.msra.mxu0 0
  %4453 = vmatpush.bf16.msra.mxu0 0
  %4454 = vmatpush.bf16.msra.mxu0 0
  %4455 = vmatpush.bf16.msra.mxu0 0
  %4456 = vmatpush.bf16.msra.mxu0 0
  %4457 = vmatpush.bf16.msra.mxu0 %v646
  %4458 = vmatmul.bf16.gmra.mxu0 %v3710
  %v4459 = vpop.f32.mrf.mxu0
  %v4460 = vadd.f32 0.0, %v4459
  %v4461 = vpop.f32.mrf.mxu0
  %v4462 = vadd.f32 0.0, %v4461
  %4463 = vmatmul.bf16.gmra.mxu0 %v3713
  %v4464 = vpop.f32.mrf.mxu0
  %v4465 = vadd.f32 0.0, %v4464
  %v4466 = vpop.f32.mrf.mxu0
  %v4467 = vadd.f32 0.0, %v4466
  %4468 = vmatmul.bf16.gmra.mxu0 %v3716
  %v4469 = vpop.f32.mrf.mxu0
  %v4470 = vadd.f32 0.0, %v4469
  %v4471 = vpop.f32.mrf.mxu0
  %v4472 = vadd.f32 0.0, %v4471
  %4473 = vmatmul.bf16.gmra.mxu0 %v3719
  %v4474 = vpop.f32.mrf.mxu0
  %v4475 = vadd.f32 0.0, %v4474
  %v4476 = vpop.f32.mrf.mxu0
  %4477 = vmatmul.bf16.gmra.mxu0 %v3722
  %v4478 = vpop.f32.mrf.mxu0
  %v4479 = vadd.f32 0.0, %v4478
  %v4480 = vpop.f32.mrf.mxu0
  %v4481 = vadd.f32 0.0, %v4480
  %4482 = vmatmul.bf16.gmra.mxu0 %v3725
  %v4483 = vpop.f32.mrf.mxu0
  %v4484 = vadd.f32 0.0, %v4483
  %v4485 = vpop.f32.mrf.mxu0
  %v4486 = vadd.f32 0.0, %v4485
  %4487 = vmatmul.bf16.gmra.mxu0 %v3728
  %v4488 = vpop.f32.mrf.mxu0
  %v4489 = vadd.f32 0.0, %v4488
  %v4490 = vpop.f32.mrf.mxu0
  %v4491 = vadd.f32 0.0, %v4490
  %4492 = vmatmul.bf16.gmra.mxu0 %v3731
  %v4493 = vpop.f32.mrf.mxu0
  %v4494 = vadd.f32 0.0, %v4493
  %v4495 = vpop.f32.mrf.mxu0
  %4496 = vdwg.mxu0
  %v4497 = vadd.f32 %v4436, %v4460
  %v4498 = vadd.f32 %v4437, %v4462
  %v4499 = vadd.f32 %v4438, %v4465
  %v4500 = vadd.f32 %v4439, %v4467
  %v4501 = vadd.f32 %v4440, %v4470
  %v4502 = vadd.f32 %v4441, %v4472
  %v4503 = vadd.f32 %v4442, %v4475
  %v4504 = vadd.f32 %v4443, %v4479
  %v4505 = vadd.f32 %v4444, %v4481
  %v4506 = vadd.f32 %v4445, %v4484
  %v4507 = vadd.f32 %v4446, %v4486
  %v4508 = vadd.f32 %v4447, %v4489
  %v4509 = vadd.f32 %v4448, %v4491
  %v4510 = vadd.f32 %v4449, %v4494
  %v4527 = vunpack.c.l.b16 %v4198
  %v4528 = vunpack.c.l.b16 %v4199
  %v4529 = vunpack.c.l.b16 %v4200
  %v4530 = vunpack.c.l.b16 %v4201
  %v4531 = vunpack.c.l.b16 %v4202
  %v4532 = vunpack.c.l.b16 %v4203
  %v4533 = vunpack.c.l.b16 %v4204
  %v4534 = vunpack.c.l.b16 %v4205
  %v4535 = vunpack.c.l.b16 %v4206
  %v4536 = vunpack.c.l.b16 %v4207
  %v4537 = vunpack.c.l.b16 %v4208
  %v4538 = vunpack.c.l.b16 %v4209
  %v4539 = vunpack.c.l.b16 %v4210
  %v4540 = vunpack.c.l.b16 %v4211
  %v4541 = vunpack.c.l.b16 %v4212
  %v4542 = vunpack.c.l.b16 %v4213
  %v4543 = vpack.c.b16 %v4528, %v4527
  %v4544 = vpack.c.b16 %v4530, %v4529
  %v4545 = vpack.c.b16 %v4532, %v4531
  %v4546 = vpack.c.b16 %v4534, %v4533
  %v4547 = vpack.c.b16 %v4536, %v4535
  %v4548 = vpack.c.b16 %v4538, %v4537
  %v4549 = vpack.c.b16 %v4540, %v4539
  %v4550 = vpack.c.b16 %v4542, %v4541
  %v4552 = vsel %vm248, %v4543, 0
  %v4555 = vsel %vm248, %v4544, 0
  %v4558 = vsel %vm248, %v4545, 0
  %v4561 = vsel %vm248, %v4546, 0
  %v4564 = vsel %vm248, %v4547, 0
  %v4567 = vsel %vm248, %v4548, 0
  %v4570 = vsel %vm248, %v4549, 0
  %v4573 = vsel %vm248, %v4550, 0
  %4575 = vmatpush.bf16.msra.mxu0 0
  %4576 = vmatpush.bf16.msra.mxu0 0
  %4577 = vmatpush.bf16.msra.mxu0 0
  %4578 = vmatpush.bf16.msra.mxu0 0
  %4579 = vmatpush.bf16.msra.mxu0 0
  %4580 = vmatpush.bf16.msra.mxu0 0
  %4581 = vmatpush.bf16.msra.mxu0 0
  %4582 = vmatpush.bf16.msra.mxu0 %v780
  %4583 = vmatmul.bf16.gmra.mxu0 %v4552
  %v4584 = vpop.f32.mrf.mxu0
  %v4585 = vadd.f32 0.0, %v4584
  %v4586 = vpop.f32.mrf.mxu0
  %v4587 = vadd.f32 0.0, %v4586
  %4588 = vmatmul.bf16.gmra.mxu0 %v4555
  %v4589 = vpop.f32.mrf.mxu0
  %v4590 = vadd.f32 0.0, %v4589
  %v4591 = vpop.f32.mrf.mxu0
  %v4592 = vadd.f32 0.0, %v4591
  %4593 = vmatmul.bf16.gmra.mxu0 %v4558
  %v4594 = vpop.f32.mrf.mxu0
  %v4595 = vadd.f32 0.0, %v4594
  %v4596 = vpop.f32.mrf.mxu0
  %v4597 = vadd.f32 0.0, %v4596
  %4598 = vmatmul.bf16.gmra.mxu0 %v4561
  %v4599 = vpop.f32.mrf.mxu0
  %v4600 = vadd.f32 0.0, %v4599
  %v4601 = vpop.f32.mrf.mxu0
  %4602 = vmatmul.bf16.gmra.mxu0 %v4564
  %v4603 = vpop.f32.mrf.mxu0
  %v4604 = vadd.f32 0.0, %v4603
  %v4605 = vpop.f32.mrf.mxu0
  %v4606 = vadd.f32 0.0, %v4605
  %4607 = vmatmul.bf16.gmra.mxu0 %v4567
  %v4608 = vpop.f32.mrf.mxu0
  %v4609 = vadd.f32 0.0, %v4608
  %v4610 = vpop.f32.mrf.mxu0
  %v4611 = vadd.f32 0.0, %v4610
  %4612 = vmatmul.bf16.gmra.mxu0 %v4570
  %v4613 = vpop.f32.mrf.mxu0
  %v4614 = vadd.f32 0.0, %v4613
  %v4615 = vpop.f32.mrf.mxu0
  %v4616 = vadd.f32 0.0, %v4615
  %4617 = vmatmul.bf16.gmra.mxu0 %v4573
  %v4618 = vpop.f32.mrf.mxu0
  %v4619 = vadd.f32 0.0, %v4618
  %v4620 = vpop.f32.mrf.mxu0
  %4621 = vdwg.mxu0
  %v4622 = vadd.f32 %v4497, %v4585
  %v4623 = vadd.f32 %v4498, %v4587
  %v4624 = vadd.f32 %v4499, %v4590
  %v4625 = vadd.f32 %v4500, %v4592
  %v4626 = vadd.f32 %v4501, %v4595
  %v4627 = vadd.f32 %v4502, %v4597
  %v4628 = vadd.f32 %v4503, %v4600
  %v4629 = vadd.f32 %v4504, %v4604
  %v4630 = vadd.f32 %v4505, %v4606
  %v4631 = vadd.f32 %v4506, %v4609
  %v4632 = vadd.f32 %v4507, %v4611
  %v4633 = vadd.f32 %v4508, %v4614
  %v4634 = vadd.f32 %v4509, %v4616
  %v4635 = vadd.f32 %v4510, %v4619
  %v4637 = vshrl.u32 %v4214, 16
  %v4639 = vrot.slane %v4637, 4
  %v4640 = vshll.u32 %v4214, 16
  %v4642 = vrot.slane %v4640, 5
  %v4643 = vor.u32 %v4639, %v4642
  %v4644 = vrot.slane %v4643, 4
  %v4646 = vshll.u32 %v4215, 16
  %v4648 = vrot.slane %v4646, 5
  %v4649 = vsel %vm1730, %v4644, %v4648
  %v4651 = vshrl.u32 %v4216, 16
  %v4653 = vrot.slane %v4651, 4
  %v4654 = vshll.u32 %v4216, 16
  %v4656 = vrot.slane %v4654, 5
  %v4657 = vor.u32 %v4653, %v4656
  %v4658 = vrot.slane %v4657, 4
  %v4660 = vshll.u32 %v4217, 16
  %v4662 = vrot.slane %v4660, 5
  %v4663 = vsel %vm1730, %v4658, %v4662
  %v4665 = vshrl.u32 %v4218, 16
  %v4667 = vrot.slane %v4665, 4
  %v4668 = vshll.u32 %v4218, 16
  %v4670 = vrot.slane %v4668, 5
  %v4671 = vor.u32 %v4667, %v4670
  %v4672 = vrot.slane %v4671, 4
  %v4674 = vshll.u32 %v4219, 16
  %v4676 = vrot.slane %v4674, 5
  %v4677 = vsel %vm1730, %v4672, %v4676
  %v4679 = vshrl.u32 %v4220, 16
  %v4681 = vrot.slane %v4679, 4
  %v4682 = vshll.u32 %v4220, 16
  %v4684 = vrot.slane %v4682, 5
  %v4685 = vor.u32 %v4681, %v4684
  %v4686 = vrot.slane %v4685, 4
  %v4688 = vshll.u32 %v4221, 16
  %v4690 = vrot.slane %v4688, 5
  %v4691 = vsel %vm1730, %v4686, %v4690
  %v4693 = vshrl.u32 %v4222, 16
  %v4695 = vrot.slane %v4693, 4
  %v4696 = vshll.u32 %v4222, 16
  %v4698 = vrot.slane %v4696, 5
  %v4699 = vor.u32 %v4695, %v4698
  %v4700 = vrot.slane %v4699, 4
  %v4702 = vshll.u32 %v4223, 16
  %v4704 = vrot.slane %v4702, 5
  %v4705 = vsel %vm1730, %v4700, %v4704
  %v4707 = vshrl.u32 %v4224, 16
  %v4709 = vrot.slane %v4707, 4
  %v4710 = vshll.u32 %v4224, 16
  %v4712 = vrot.slane %v4710, 5
  %v4713 = vor.u32 %v4709, %v4712
  %v4714 = vrot.slane %v4713, 4
  %v4716 = vshll.u32 %v4225, 16
  %v4718 = vrot.slane %v4716, 5
  %v4719 = vsel %vm1730, %v4714, %v4718
  %v4721 = vshrl.u32 %v4226, 16
  %v4723 = vrot.slane %v4721, 4
  %v4724 = vshll.u32 %v4226, 16
  %v4726 = vrot.slane %v4724, 5
  %v4727 = vor.u32 %v4723, %v4726
  %v4728 = vrot.slane %v4727, 4
  %v4730 = vshll.u32 %v4227, 16
  %v4732 = vrot.slane %v4730, 5
  %v4733 = vsel %vm1730, %v4728, %v4732
  %v4735 = vshrl.u32 %v4228, 16
  %v4737 = vrot.slane %v4735, 4
  %v4738 = vshll.u32 %v4228, 16
  %v4740 = vrot.slane %v4738, 5
  %v4741 = vor.u32 %v4737, %v4740
  %v4742 = vrot.slane %v4741, 4
  %v4744 = vshll.u32 %v4229, 16
  %v4746 = vrot.slane %v4744, 5
  %v4747 = vsel %vm1730, %v4742, %v4746
  %v4749 = vshrl.u32 %v4230, 16
  %v4751 = vrot.slane %v4749, 4
  %v4752 = vshll.u32 %v4230, 16
  %v4754 = vrot.slane %v4752, 5
  %v4755 = vor.u32 %v4751, %v4754
  %v4756 = vrot.slane %v4755, 4
  %v4758 = vshll.u32 %v4231, 16
  %v4760 = vrot.slane %v4758, 5
  %v4761 = vsel %vm1730, %v4756, %v4760
  %v4763 = vshrl.u32 %v4232, 16
  %v4765 = vrot.slane %v4763, 4
  %v4766 = vshll.u32 %v4232, 16
  %v4768 = vrot.slane %v4766, 5
  %v4769 = vor.u32 %v4765, %v4768
  %v4770 = vrot.slane %v4769, 4
  %v4772 = vshll.u32 %v4233, 16
  %v4774 = vrot.slane %v4772, 5
  %v4775 = vsel %vm1730, %v4770, %v4774
  %v4777 = vshrl.u32 %v4234, 16
  %v4779 = vrot.slane %v4777, 4
  %v4780 = vshll.u32 %v4234, 16
  %v4782 = vrot.slane %v4780, 5
  %v4783 = vor.u32 %v4779, %v4782
  %v4784 = vrot.slane %v4783, 4
  %v4786 = vshll.u32 %v4235, 16
  %v4788 = vrot.slane %v4786, 5
  %v4789 = vsel %vm1730, %v4784, %v4788
  %v4791 = vshrl.u32 %v4236, 16
  %v4793 = vrot.slane %v4791, 4
  %v4794 = vshll.u32 %v4236, 16
  %v4796 = vrot.slane %v4794, 5
  %v4797 = vor.u32 %v4793, %v4796
  %v4798 = vrot.slane %v4797, 4
  %v4800 = vshll.u32 %v4237, 16
  %v4802 = vrot.slane %v4800, 5
  %v4803 = vsel %vm1730, %v4798, %v4802
  %v4805 = vshrl.u32 %v4238, 16
  %v4807 = vrot.slane %v4805, 4
  %v4808 = vshll.u32 %v4238, 16
  %v4810 = vrot.slane %v4808, 5
  %v4811 = vor.u32 %v4807, %v4810
  %v4812 = vrot.slane %v4811, 4
  %v4814 = vshll.u32 %v4239, 16
  %v4816 = vrot.slane %v4814, 5
  %v4817 = vsel %vm1730, %v4812, %v4816
  %v4819 = vshrl.u32 %v4240, 16
  %v4821 = vrot.slane %v4819, 4
  %v4822 = vshll.u32 %v4240, 16
  %v4824 = vrot.slane %v4822, 5
  %v4825 = vor.u32 %v4821, %v4824
  %v4826 = vrot.slane %v4825, 4
  %v4828 = vshll.u32 %v4241, 16
  %v4830 = vrot.slane %v4828, 5
  %v4831 = vsel %vm1730, %v4826, %v4830
  %v4833 = vshrl.u32 %v4242, 16
  %v4835 = vrot.slane %v4833, 4
  %v4836 = vshll.u32 %v4242, 16
  %v4838 = vrot.slane %v4836, 5
  %v4839 = vor.u32 %v4835, %v4838
  %v4840 = vrot.slane %v4839, 4
  %v4842 = vshll.u32 %v4243, 16
  %v4844 = vrot.slane %v4842, 5
  %v4845 = vsel %vm1730, %v4840, %v4844
  %v4847 = vshrl.u32 %v4244, 16
  %v4849 = vrot.slane %v4847, 4
  %v4850 = vshll.u32 %v4244, 16
  %v4852 = vrot.slane %v4850, 5
  %v4853 = vor.u32 %v4849, %v4852
  %v4854 = vrot.slane %v4853, 4
  %v4856 = vshll.u32 %v4245, 16
  %v4858 = vrot.slane %v4856, 5
  %v4859 = vsel %vm1730, %v4854, %v4858
  %v4860 = vunpack.c.l.b16 %v4649
  %v4861 = vunpack.c.l.b16 %v4663
  %v4862 = vunpack.c.l.b16 %v4677
  %v4863 = vunpack.c.l.b16 %v4691
  %v4864 = vunpack.c.l.b16 %v4705
  %v4865 = vunpack.c.l.b16 %v4719
  %v4866 = vunpack.c.l.b16 %v4733
  %v4867 = vunpack.c.l.b16 %v4747
  %v4868 = vunpack.c.l.b16 %v4761
  %v4869 = vunpack.c.l.b16 %v4775
  %v4870 = vunpack.c.l.b16 %v4789
  %v4871 = vunpack.c.l.b16 %v4803
  %v4872 = vunpack.c.l.b16 %v4817
  %v4873 = vunpack.c.l.b16 %v4831
  %v4874 = vunpack.c.l.b16 %v4845
  %v4875 = vunpack.c.l.b16 %v4859
  %v4876 = vpack.c.b16 %v4861, %v4860
  %v4877 = vpack.c.b16 %v4863, %v4862
  %v4878 = vpack.c.b16 %v4865, %v4864
  %v4879 = vpack.c.b16 %v4867, %v4866
  %v4880 = vpack.c.b16 %v4869, %v4868
  %v4881 = vpack.c.b16 %v4871, %v4870
  %v4882 = vpack.c.b16 %v4873, %v4872
  %v4883 = vpack.c.b16 %v4875, %v4874
  %v4885 = vsel %vm248, %v4876, 0
  %v4888 = vsel %vm248, %v4877, 0
  %v4891 = vsel %vm248, %v4878, 0
  %v4894 = vsel %vm248, %v4879, 0
  %v4897 = vsel %vm248, %v4880, 0
  %v4900 = vsel %vm248, %v4881, 0
  %v4903 = vsel %vm248, %v4882, 0
  %v4906 = vsel %vm248, %v4883, 0
  %4908 = vmatpush.bf16.msra.mxu0 0
  %4909 = vmatpush.bf16.msra.mxu0 0
  %4910 = vmatpush.bf16.msra.mxu0 0
  %4911 = vmatpush.bf16.msra.mxu0 0
  %4912 = vmatpush.bf16.msra.mxu0 0
  %4913 = vmatpush.bf16.msra.mxu0 0
  %4914 = vmatpush.bf16.msra.mxu0 0
  %4915 = vmatpush.bf16.msra.mxu0 %v914
  %4916 = vmatmul.bf16.gmra.mxu0 %v4885
  %v4917 = vpop.f32.mrf.mxu0
  %v4918 = vadd.f32 0.0, %v4917
  %v4919 = vpop.f32.mrf.mxu0
  %v4920 = vadd.f32 0.0, %v4919
  %4921 = vmatmul.bf16.gmra.mxu0 %v4888
  %v4922 = vpop.f32.mrf.mxu0
  %v4923 = vadd.f32 0.0, %v4922
  %v4924 = vpop.f32.mrf.mxu0
  %v4925 = vadd.f32 0.0, %v4924
  %4926 = vmatmul.bf16.gmra.mxu0 %v4891
  %v4927 = vpop.f32.mrf.mxu0
  %v4928 = vadd.f32 0.0, %v4927
  %v4929 = vpop.f32.mrf.mxu0
  %v4930 = vadd.f32 0.0, %v4929
  %4931 = vmatmul.bf16.gmra.mxu0 %v4894
  %v4932 = vpop.f32.mrf.mxu0
  %v4933 = vadd.f32 0.0, %v4932
  %v4934 = vpop.f32.mrf.mxu0
  %4935 = vmatmul.bf16.gmra.mxu0 %v4897
  %v4936 = vpop.f32.mrf.mxu0
  %v4937 = vadd.f32 0.0, %v4936
  %v4938 = vpop.f32.mrf.mxu0
  %v4939 = vadd.f32 0.0, %v4938
  %4940 = vmatmul.bf16.gmra.mxu0 %v4900
  %v4941 = vpop.f32.mrf.mxu0
  %v4942 = vadd.f32 0.0, %v4941
  %v4943 = vpop.f32.mrf.mxu0
  %v4944 = vadd.f32 0.0, %v4943
  %4945 = vmatmul.bf16.gmra.mxu0 %v4903
  %v4946 = vpop.f32.mrf.mxu0
  %v4947 = vadd.f32 0.0, %v4946
  %v4948 = vpop.f32.mrf.mxu0
  %v4949 = vadd.f32 0.0, %v4948
  %4950 = vmatmul.bf16.gmra.mxu0 %v4906
  %v4951 = vpop.f32.mrf.mxu0
  %v4952 = vadd.f32 0.0, %v4951
  %v4953 = vpop.f32.mrf.mxu0
  %4954 = vdwg.mxu0
  %v4955 = vadd.f32 %v4622, %v4918
  %v4956 = vadd.f32 %v4623, %v4920
  %v4957 = vadd.f32 %v4624, %v4923
  %v4958 = vadd.f32 %v4625, %v4925
  %v4959 = vadd.f32 %v4626, %v4928
  %v4960 = vadd.f32 %v4627, %v4930
  %v4961 = vadd.f32 %v4628, %v4933
  %v4962 = vadd.f32 %v4629, %v4937
  %v4963 = vadd.f32 %v4630, %v4939
  %v4964 = vadd.f32 %v4631, %v4942
  %v4965 = vadd.f32 %v4632, %v4944
  %v4966 = vadd.f32 %v4633, %v4947
  %v4967 = vadd.f32 %v4634, %v4949
  %v4968 = vadd.f32 %v4635, %v4952
  %4969 = vmatpush.bf16.msra.mxu0 0
  %4970 = vmatpush.bf16.msra.mxu0 0
  %4971 = vmatpush.bf16.msra.mxu0 0
  %4972 = vmatpush.bf16.msra.mxu0 0
  %4973 = vmatpush.bf16.msra.mxu0 0
  %4974 = vmatpush.bf16.msra.mxu0 0
  %4975 = vmatpush.bf16.msra.mxu0 0
  %4976 = vmatpush.bf16.msra.mxu0 %v1048
  %4977 = vmatmul.bf16.gmra.mxu0 %v4085
  %v4978 = vpop.f32.mrf.mxu0
  %v4979 = vadd.f32 0.0, %v4978
  %v4980 = vpop.f32.mrf.mxu0
  %v4981 = vadd.f32 0.0, %v4980
  %4982 = vmatmul.bf16.gmra.mxu0 %v4088
  %v4983 = vpop.f32.mrf.mxu0
  %v4984 = vadd.f32 0.0, %v4983
  %v4985 = vpop.f32.mrf.mxu0
  %v4986 = vadd.f32 0.0, %v4985
  %4987 = vmatmul.bf16.gmra.mxu0 %v4091
  %v4988 = vpop.f32.mrf.mxu0
  %v4989 = vadd.f32 0.0, %v4988
  %v4990 = vpop.f32.mrf.mxu0
  %v4991 = vadd.f32 0.0, %v4990
  %4992 = vmatmul.bf16.gmra.mxu0 %v4094
  %v4993 = vpop.f32.mrf.mxu0
  %v4994 = vadd.f32 0.0, %v4993
  %v4995 = vpop.f32.mrf.mxu0
  %4996 = vmatmul.bf16.gmra.mxu0 %v4097
  %v4997 = vpop.f32.mrf.mxu0
  %v4998 = vadd.f32 0.0, %v4997
  %v4999 = vpop.f32.mrf.mxu0
  %v5000 = vadd.f32 0.0, %v4999
  %5001 = vmatmul.bf16.gmra.mxu0 %v4100
  %v5002 = vpop.f32.mrf.mxu0
  %v5003 = vadd.f32 0.0, %v5002
  %v5004 = vpop.f32.mrf.mxu0
  %v5005 = vadd.f32 0.0, %v5004
  %5006 = vmatmul.bf16.gmra.mxu0 %v4103
  %v5007 = vpop.f32.mrf.mxu0
  %v5008 = vadd.f32 0.0, %v5007
  %v5009 = vpop.f32.mrf.mxu0
  %v5010 = vadd.f32 0.0, %v5009
  %5011 = vmatmul.bf16.gmra.mxu0 %v4106
  %v5012 = vpop.f32.mrf.mxu0
  %v5013 = vadd.f32 0.0, %v5012
  %v5014 = vpop.f32.mrf.mxu0
  %5015 = vdwg.mxu0
  %v5016 = vadd.f32 %v4955, %v4979
  %v5017 = vadd.f32 %v4956, %v4981
  %v5018 = vadd.f32 %v4957, %v4984
  %v5019 = vadd.f32 %v4958, %v4986
  %v5020 = vadd.f32 %v4959, %v4989
  %v5021 = vadd.f32 %v4960, %v4991
  %v5022 = vadd.f32 %v4961, %v4994
  %v5023 = vadd.f32 %v4962, %v4998
  %v5024 = vadd.f32 %v4963, %v5000
  %v5025 = vadd.f32 %v4964, %v5003
  %v5026 = vadd.f32 %v4965, %v5005
  %v5027 = vadd.f32 %v4966, %v5008
  %v5028 = vadd.f32 %v4967, %v5010
  %v5029 = vadd.f32 %v4968, %v5013
  %v5046 = vunpack.c.l.b16 %v4247
  %v5047 = vunpack.c.l.b16 %v4248
  %v5048 = vunpack.c.l.b16 %v4249
  %v5049 = vunpack.c.l.b16 %v4250
  %v5050 = vunpack.c.l.b16 %v4251
  %v5051 = vunpack.c.l.b16 %v4252
  %v5052 = vunpack.c.l.b16 %v4253
  %v5053 = vunpack.c.l.b16 %v4254
  %v5054 = vunpack.c.l.b16 %v4255
  %v5055 = vunpack.c.l.b16 %v4256
  %v5056 = vunpack.c.l.b16 %v4257
  %v5057 = vunpack.c.l.b16 %v4258
  %v5058 = vunpack.c.l.b16 %v4259
  %v5059 = vunpack.c.l.b16 %v4260
  %v5060 = vunpack.c.l.b16 %v4261
  %v5061 = vunpack.c.l.b16 %v4262
  %v5062 = vpack.c.b16 %v5047, %v5046
  %v5063 = vpack.c.b16 %v5049, %v5048
  %v5064 = vpack.c.b16 %v5051, %v5050
  %v5065 = vpack.c.b16 %v5053, %v5052
  %v5066 = vpack.c.b16 %v5055, %v5054
  %v5067 = vpack.c.b16 %v5057, %v5056
  %v5068 = vpack.c.b16 %v5059, %v5058
  %v5069 = vpack.c.b16 %v5061, %v5060
  %v5071 = vsel %vm248, %v5062, 0
  %v5074 = vsel %vm248, %v5063, 0
  %v5077 = vsel %vm248, %v5064, 0
  %v5080 = vsel %vm248, %v5065, 0
  %v5083 = vsel %vm248, %v5066, 0
  %v5086 = vsel %vm248, %v5067, 0
  %v5089 = vsel %vm248, %v5068, 0
  %v5092 = vsel %vm248, %v5069, 0
  %5094 = vmatpush.bf16.msra.mxu0 0
  %5095 = vmatpush.bf16.msra.mxu0 0
  %5096 = vmatpush.bf16.msra.mxu0 0
  %5097 = vmatpush.bf16.msra.mxu0 0
  %5098 = vmatpush.bf16.msra.mxu0 0
  %5099 = vmatpush.bf16.msra.mxu0 0
  %5100 = vmatpush.bf16.msra.mxu0 0
  %5101 = vmatpush.bf16.msra.mxu0 %v1182
  %5102 = vmatmul.bf16.gmra.mxu0 %v5071
  %v5103 = vpop.f32.mrf.mxu0
  %v5104 = vadd.f32 0.0, %v5103
  %v5105 = vpop.f32.mrf.mxu0
  %v5106 = vadd.f32 0.0, %v5105
  %5107 = vmatmul.bf16.gmra.mxu0 %v5074
  %v5108 = vpop.f32.mrf.mxu0
  %v5109 = vadd.f32 0.0, %v5108
  %v5110 = vpop.f32.mrf.mxu0
  %v5111 = vadd.f32 0.0, %v5110
  %5112 = vmatmul.bf16.gmra.mxu0 %v5077
  %v5113 = vpop.f32.mrf.mxu0
  %v5114 = vadd.f32 0.0, %v5113
  %v5115 = vpop.f32.mrf.mxu0
  %v5116 = vadd.f32 0.0, %v5115
  %5117 = vmatmul.bf16.gmra.mxu0 %v5080
  %v5118 = vpop.f32.mrf.mxu0
  %v5119 = vadd.f32 0.0, %v5118
  %v5120 = vpop.f32.mrf.mxu0
  %5121 = vmatmul.bf16.gmra.mxu0 %v5083
  %v5122 = vpop.f32.mrf.mxu0
  %v5123 = vadd.f32 0.0, %v5122
  %v5124 = vpop.f32.mrf.mxu0
  %v5125 = vadd.f32 0.0, %v5124
  %5126 = vmatmul.bf16.gmra.mxu0 %v5086
  %v5127 = vpop.f32.mrf.mxu0
  %v5128 = vadd.f32 0.0, %v5127
  %v5129 = vpop.f32.mrf.mxu0
  %v5130 = vadd.f32 0.0, %v5129
  %5131 = vmatmul.bf16.gmra.mxu0 %v5089
  %v5132 = vpop.f32.mrf.mxu0
  %v5133 = vadd.f32 0.0, %v5132
  %v5134 = vpop.f32.mrf.mxu0
  %v5135 = vadd.f32 0.0, %v5134
  %5136 = vmatmul.bf16.gmra.mxu0 %v5092
  %v5137 = vpop.f32.mrf.mxu0
  %v5138 = vadd.f32 0.0, %v5137
  %v5139 = vpop.f32.mrf.mxu0
  %5140 = vdwg.mxu0
  %v5141 = vadd.f32 %v5016, %v5104
  %v5142 = vadd.f32 %v5017, %v5106
  %v5143 = vadd.f32 %v5018, %v5109
  %v5144 = vadd.f32 %v5019, %v5111
  %v5145 = vadd.f32 %v5020, %v5114
  %v5146 = vadd.f32 %v5021, %v5116
  %v5147 = vadd.f32 %v5022, %v5119
  %v5148 = vadd.f32 %v5023, %v5123
  %v5149 = vadd.f32 %v5024, %v5125
  %v5150 = vadd.f32 %v5025, %v5128
  %v5151 = vadd.f32 %v5026, %v5130
  %v5152 = vadd.f32 %v5027, %v5133
  %v5153 = vadd.f32 %v5028, %v5135
  %v5154 = vadd.f32 %v5029, %v5138
  %v5156 = vshrl.u32 %v4263, 16
  %v5158 = vrot.slane %v5156, 4
  %v5159 = vshll.u32 %v4263, 16
  %v5161 = vrot.slane %v5159, 5
  %v5162 = vor.u32 %v5158, %v5161
  %v5163 = vrot.slane %v5162, 4
  %v5165 = vshll.u32 %v4264, 16
  %v5167 = vrot.slane %v5165, 5
  %v5168 = vsel %vm1730, %v5163, %v5167
  %v5170 = vshrl.u32 %v4265, 16
  %v5172 = vrot.slane %v5170, 4
  %v5173 = vshll.u32 %v4265, 16
  %v5175 = vrot.slane %v5173, 5
  %v5176 = vor.u32 %v5172, %v5175
  %v5177 = vrot.slane %v5176, 4
  %v5179 = vshll.u32 %v4266, 16
  %v5181 = vrot.slane %v5179, 5
  %v5182 = vsel %vm1730, %v5177, %v5181
  %v5184 = vshrl.u32 %v4267, 16
  %v5186 = vrot.slane %v5184, 4
  %v5187 = vshll.u32 %v4267, 16
  %v5189 = vrot.slane %v5187, 5
  %v5190 = vor.u32 %v5186, %v5189
  %v5191 = vrot.slane %v5190, 4
  %v5193 = vshll.u32 %v4268, 16
  %v5195 = vrot.slane %v5193, 5
  %v5196 = vsel %vm1730, %v5191, %v5195
  %v5198 = vshrl.u32 %v4269, 16
  %v5200 = vrot.slane %v5198, 4
  %v5201 = vshll.u32 %v4269, 16
  %v5203 = vrot.slane %v5201, 5
  %v5204 = vor.u32 %v5200, %v5203
  %v5205 = vrot.slane %v5204, 4
  %v5207 = vshll.u32 %v4270, 16
  %v5209 = vrot.slane %v5207, 5
  %v5210 = vsel %vm1730, %v5205, %v5209
  %v5212 = vshrl.u32 %v4271, 16
  %v5214 = vrot.slane %v5212, 4
  %v5215 = vshll.u32 %v4271, 16
  %v5217 = vrot.slane %v5215, 5
  %v5218 = vor.u32 %v5214, %v5217
  %v5219 = vrot.slane %v5218, 4
  %v5221 = vshll.u32 %v4272, 16
  %v5223 = vrot.slane %v5221, 5
  %v5224 = vsel %vm1730, %v5219, %v5223
  %v5226 = vshrl.u32 %v4273, 16
  %v5228 = vrot.slane %v5226, 4
  %v5229 = vshll.u32 %v4273, 16
  %v5231 = vrot.slane %v5229, 5
  %v5232 = vor.u32 %v5228, %v5231
  %v5233 = vrot.slane %v5232, 4
  %v5235 = vshll.u32 %v4274, 16
  %v5237 = vrot.slane %v5235, 5
  %v5238 = vsel %vm1730, %v5233, %v5237
  %v5240 = vshrl.u32 %v4275, 16
  %v5242 = vrot.slane %v5240, 4
  %v5243 = vshll.u32 %v4275, 16
  %v5245 = vrot.slane %v5243, 5
  %v5246 = vor.u32 %v5242, %v5245
  %v5247 = vrot.slane %v5246, 4
  %v5249 = vshll.u32 %v4276, 16
  %v5251 = vrot.slane %v5249, 5
  %v5252 = vsel %vm1730, %v5247, %v5251
  %v5254 = vshrl.u32 %v4277, 16
  %v5256 = vrot.slane %v5254, 4
  %v5257 = vshll.u32 %v4277, 16
  %v5259 = vrot.slane %v5257, 5
  %v5260 = vor.u32 %v5256, %v5259
  %v5261 = vrot.slane %v5260, 4
  %v5263 = vshll.u32 %v4278, 16
  %v5265 = vrot.slane %v5263, 5
  %v5266 = vsel %vm1730, %v5261, %v5265
  %v5268 = vshrl.u32 %v4279, 16
  %v5270 = vrot.slane %v5268, 4
  %v5271 = vshll.u32 %v4279, 16
  %v5273 = vrot.slane %v5271, 5
  %v5274 = vor.u32 %v5270, %v5273
  %v5275 = vrot.slane %v5274, 4
  %v5277 = vshll.u32 %v4280, 16
  %v5279 = vrot.slane %v5277, 5
  %v5280 = vsel %vm1730, %v5275, %v5279
  %v5282 = vshrl.u32 %v4281, 16
  %v5284 = vrot.slane %v5282, 4
  %v5285 = vshll.u32 %v4281, 16
  %v5287 = vrot.slane %v5285, 5
  %v5288 = vor.u32 %v5284, %v5287
  %v5289 = vrot.slane %v5288, 4
  %v5291 = vshll.u32 %v4282, 16
  %v5293 = vrot.slane %v5291, 5
  %v5294 = vsel %vm1730, %v5289, %v5293
  %v5296 = vshrl.u32 %v4283, 16
  %v5298 = vrot.slane %v5296, 4
  %v5299 = vshll.u32 %v4283, 16
  %v5301 = vrot.slane %v5299, 5
  %v5302 = vor.u32 %v5298, %v5301
  %v5303 = vrot.slane %v5302, 4
  %v5305 = vshll.u32 %v4284, 16
  %v5307 = vrot.slane %v5305, 5
  %v5308 = vsel %vm1730, %v5303, %v5307
  %v5310 = vshrl.u32 %v4285, 16
  %v5312 = vrot.slane %v5310, 4
  %v5313 = vshll.u32 %v4285, 16
  %v5315 = vrot.slane %v5313, 5
  %v5316 = vor.u32 %v5312, %v5315
  %v5317 = vrot.slane %v5316, 4
  %v5319 = vshll.u32 %v4286, 16
  %v5321 = vrot.slane %v5319, 5
  %v5322 = vsel %vm1730, %v5317, %v5321
  %v5324 = vshrl.u32 %v4287, 16
  %v5326 = vrot.slane %v5324, 4
  %v5327 = vshll.u32 %v4287, 16
  %v5329 = vrot.slane %v5327, 5
  %v5330 = vor.u32 %v5326, %v5329
  %v5331 = vrot.slane %v5330, 4
  %v5333 = vshll.u32 %v4288, 16
  %v5335 = vrot.slane %v5333, 5
  %v5336 = vsel %vm1730, %v5331, %v5335
  %v5338 = vshrl.u32 %v4289, 16
  %v5340 = vrot.slane %v5338, 4
  %v5341 = vshll.u32 %v4289, 16
  %v5343 = vrot.slane %v5341, 5
  %v5344 = vor.u32 %v5340, %v5343
  %v5345 = vrot.slane %v5344, 4
  %v5347 = vshll.u32 %v4290, 16
  %v5349 = vrot.slane %v5347, 5
  %v5350 = vsel %vm1730, %v5345, %v5349
  %v5352 = vshrl.u32 %v4291, 16
  %v5354 = vrot.slane %v5352, 4
  %v5355 = vshll.u32 %v4291, 16
  %v5357 = vrot.slane %v5355, 5
  %v5358 = vor.u32 %v5354, %v5357
  %v5359 = vrot.slane %v5358, 4
  %v5361 = vshll.u32 %v4292, 16
  %v5363 = vrot.slane %v5361, 5
  %v5364 = vsel %vm1730, %v5359, %v5363
  %v5366 = vshrl.u32 %v4293, 16
  %v5368 = vrot.slane %v5366, 4
  %v5369 = vshll.u32 %v4293, 16
  %v5371 = vrot.slane %v5369, 5
  %v5372 = vor.u32 %v5368, %v5371
  %v5373 = vrot.slane %v5372, 4
  %v5375 = vshll.u32 %v4294, 16
  %v5377 = vrot.slane %v5375, 5
  %v5378 = vsel %vm1730, %v5373, %v5377
  %v5379 = vunpack.c.l.b16 %v5168
  %v5380 = vunpack.c.l.b16 %v5182
  %v5381 = vunpack.c.l.b16 %v5196
  %v5382 = vunpack.c.l.b16 %v5210
  %v5383 = vunpack.c.l.b16 %v5224
  %v5384 = vunpack.c.l.b16 %v5238
  %v5385 = vunpack.c.l.b16 %v5252
  %v5386 = vunpack.c.l.b16 %v5266
  %v5387 = vunpack.c.l.b16 %v5280
  %v5388 = vunpack.c.l.b16 %v5294
  %v5389 = vunpack.c.l.b16 %v5308
  %v5390 = vunpack.c.l.b16 %v5322
  %v5391 = vunpack.c.l.b16 %v5336
  %v5392 = vunpack.c.l.b16 %v5350
  %v5393 = vunpack.c.l.b16 %v5364
  %v5394 = vunpack.c.l.b16 %v5378
  %v5395 = vpack.c.b16 %v5380, %v5379
  %v5396 = vpack.c.b16 %v5382, %v5381
  %v5397 = vpack.c.b16 %v5384, %v5383
  %v5398 = vpack.c.b16 %v5386, %v5385
  %v5399 = vpack.c.b16 %v5388, %v5387
  %v5400 = vpack.c.b16 %v5390, %v5389
  %v5401 = vpack.c.b16 %v5392, %v5391
  %v5402 = vpack.c.b16 %v5394, %v5393
  %v5404 = vsel %vm248, %v5395, 0
  %v5407 = vsel %vm248, %v5396, 0
  %v5410 = vsel %vm248, %v5397, 0
  %v5413 = vsel %vm248, %v5398, 0
  %v5416 = vsel %vm248, %v5399, 0
  %v5419 = vsel %vm248, %v5400, 0
  %v5422 = vsel %vm248, %v5401, 0
  %v5425 = vsel %vm248, %v5402, 0
  %5427 = vmatpush.bf16.msra.mxu0 0
  %5428 = vmatpush.bf16.msra.mxu0 0
  %5429 = vmatpush.bf16.msra.mxu0 0
  %5430 = vmatpush.bf16.msra.mxu0 0
  %5431 = vmatpush.bf16.msra.mxu0 0
  %5432 = vmatpush.bf16.msra.mxu0 0
  %5433 = vmatpush.bf16.msra.mxu0 0
  %5434 = vmatpush.bf16.msra.mxu0 %v1316
  %5435 = vmatmul.bf16.gmra.mxu0 %v5404
  %v5436 = vpop.f32.mrf.mxu0
  %v5437 = vadd.f32 0.0, %v5436
  %v5438 = vpop.f32.mrf.mxu0
  %v5439 = vadd.f32 0.0, %v5438
  %5440 = vmatmul.bf16.gmra.mxu0 %v5407
  %v5441 = vpop.f32.mrf.mxu0
  %v5442 = vadd.f32 0.0, %v5441
  %v5443 = vpop.f32.mrf.mxu0
  %v5444 = vadd.f32 0.0, %v5443
  %5445 = vmatmul.bf16.gmra.mxu0 %v5410
  %v5446 = vpop.f32.mrf.mxu0
  %v5447 = vadd.f32 0.0, %v5446
  %v5448 = vpop.f32.mrf.mxu0
  %v5449 = vadd.f32 0.0, %v5448
  %5450 = vmatmul.bf16.gmra.mxu0 %v5413
  %v5451 = vpop.f32.mrf.mxu0
  %v5452 = vadd.f32 0.0, %v5451
  %v5453 = vpop.f32.mrf.mxu0
  %5454 = vmatmul.bf16.gmra.mxu0 %v5416
  %v5455 = vpop.f32.mrf.mxu0
  %v5456 = vadd.f32 0.0, %v5455
  %v5457 = vpop.f32.mrf.mxu0
  %v5458 = vadd.f32 0.0, %v5457
  %5459 = vmatmul.bf16.gmra.mxu0 %v5419
  %v5460 = vpop.f32.mrf.mxu0
  %v5461 = vadd.f32 0.0, %v5460
  %v5462 = vpop.f32.mrf.mxu0
  %v5463 = vadd.f32 0.0, %v5462
  %5464 = vmatmul.bf16.gmra.mxu0 %v5422
  %v5465 = vpop.f32.mrf.mxu0
  %v5466 = vadd.f32 0.0, %v5465
  %v5467 = vpop.f32.mrf.mxu0
  %v5468 = vadd.f32 0.0, %v5467
  %5469 = vmatmul.bf16.gmra.mxu0 %v5425
  %v5470 = vpop.f32.mrf.mxu0
  %v5471 = vadd.f32 0.0, %v5470
  %v5472 = vpop.f32.mrf.mxu0
  %5473 = vdwg.mxu0
  %v5474 = vadd.f32 %v5141, %v5437
  %v5475 = vadd.f32 %v5142, %v5439
  %v5476 = vadd.f32 %v5143, %v5442
  %v5477 = vadd.f32 %v5144, %v5444
  %v5478 = vadd.f32 %v5145, %v5447
  %v5479 = vadd.f32 %v5146, %v5449
  %v5480 = vadd.f32 %v5147, %v5452
  %v5481 = vadd.f32 %v5148, %v5456
  %v5482 = vadd.f32 %v5149, %v5458
  %v5483 = vadd.f32 %v5150, %v5461
  %v5484 = vadd.f32 %v5151, %v5463
  %v5485 = vadd.f32 %v5152, %v5466
  %v5486 = vadd.f32 %v5153, %v5468
  %v5487 = vadd.f32 %v5154, %v5471
  %v5488 = vadd.f32 %v5474, %v1385
  %v5489 = vadd.f32 %v5475, %v1385
  %v5490 = vadd.f32 %v5476, %v1385
  %v5491 = vadd.f32 %v5477, %v1385
  %v5492 = vadd.f32 %v5478, %v1385
  %v5493 = vadd.f32 %v5479, %v1385
  %v5494 = vadd.f32 %v5480, %v1385
  %v5495 = vadd.f32 %v5481, %v1385
  %v5496 = vadd.f32 %v5482, %v1385
  %v5497 = vadd.f32 %v5483, %v1385
  %v5498 = vadd.f32 %v5484, %v1385
  %v5499 = vadd.f32 %v5485, %v1385
  %v5500 = vadd.f32 %v5486, %v1385
  %v5501 = vadd.f32 %v5487, %v1385
  %v5502 = vpack.c.bf16 %v5488, %v5488
  %v5503 = vpack.c.bf16 %v5489, %v5489
  %v5504 = vpack.c.bf16 %v5490, %v5490
  %v5505 = vpack.c.bf16 %v5491, %v5491
  %v5506 = vpack.c.bf16 %v5492, %v5492
  %v5507 = vpack.c.bf16 %v5493, %v5493
  %v5508 = vpack.c.bf16 %v5494, %v5494
  %v5509 = vpack.c.bf16 %v5495, %v5495
  %v5510 = vpack.c.bf16 %v5496, %v5496
  %v5511 = vpack.c.bf16 %v5497, %v5497
  %v5512 = vpack.c.bf16 %v5498, %v5498
  %v5513 = vpack.c.bf16 %v5499, %v5499
  %v5514 = vpack.c.bf16 %v5500, %v5500
  %v5515 = vpack.c.bf16 %v5501, %v5501
  %v5530 = vrot.slane %v1403, 3
  %v5531 = vrot.slane %v1404, 3
  %v5532 = vrot.slane %v1405, 3
  %v5533 = vrot.slane %v1406, 3
  %v5534 = vrot.slane %v1407, 3
  %v5535 = vrot.slane %v1408, 3
  %v5536 = vrot.slane %v1409, 3
  %v5537 = vrot.slane %v1411, 3
  %v5538 = vrot.slane %v1412, 3
  %v5539 = vrot.slane %v1413, 3
  %v5540 = vrot.slane %v1414, 3
  %v5541 = vrot.slane %v1415, 3
  %v5542 = vrot.slane %v1416, 3
  %v5543 = vrot.slane %v1417, 3
  %v5546 = vsel %vm273, %v1403, %v5530
  %vm5548 = vcmask 1041409
  %v5549 = vsel %vm5548, %v1403, %v5530
  %v5551 = vrot.slane %v5549, 1
  %vm5552 = vcmask 1042434
  %v5553 = vsel %vm5552, %v1403, %v5530
  %v5555 = vrot.slane %v5553, 2
  %vm5556 = vcmask 1043459
  %v5557 = vsel %vm5556, %v1403, %v5530
  %v5559 = vrot.slane %v5557, 3
  %v5562 = vsel %vm273, %v1404, %v5531
  %v5564 = vsel %vm5548, %v1404, %v5531
  %v5566 = vrot.slane %v5564, 1
  %v5567 = vsel %vm5552, %v1404, %v5531
  %v5569 = vrot.slane %v5567, 2
  %v5570 = vsel %vm5556, %v1404, %v5531
  %v5572 = vrot.slane %v5570, 3
  %v5575 = vsel %vm273, %v1405, %v5532
  %v5577 = vsel %vm5548, %v1405, %v5532
  %v5579 = vrot.slane %v5577, 1
  %v5580 = vsel %vm5552, %v1405, %v5532
  %v5582 = vrot.slane %v5580, 2
  %v5583 = vsel %vm5556, %v1405, %v5532
  %v5585 = vrot.slane %v5583, 3
  %v5588 = vsel %vm273, %v1406, %v5533
  %v5590 = vsel %vm5548, %v1406, %v5533
  %v5592 = vrot.slane %v5590, 1
  %v5593 = vsel %vm5552, %v1406, %v5533
  %v5595 = vrot.slane %v5593, 2
  %v5596 = vsel %vm5556, %v1406, %v5533
  %v5598 = vrot.slane %v5596, 3
  %v5601 = vsel %vm273, %v1407, %v5534
  %v5603 = vsel %vm5548, %v1407, %v5534
  %v5605 = vrot.slane %v5603, 1
  %v5606 = vsel %vm5552, %v1407, %v5534
  %v5608 = vrot.slane %v5606, 2
  %v5609 = vsel %vm5556, %v1407, %v5534
  %v5611 = vrot.slane %v5609, 3
  %v5614 = vsel %vm273, %v1408, %v5535
  %v5616 = vsel %vm5548, %v1408, %v5535
  %v5618 = vrot.slane %v5616, 1
  %v5619 = vsel %vm5552, %v1408, %v5535
  %v5621 = vrot.slane %v5619, 2
  %v5622 = vsel %vm5556, %v1408, %v5535
  %v5624 = vrot.slane %v5622, 3
  %v5627 = vsel %vm273, %v1409, %v5536
  %v5629 = vsel %vm5548, %v1409, %v5536
  %v5631 = vrot.slane %v5629, 1
  %v5632 = vsel %vm5552, %v1409, %v5536
  %v5634 = vrot.slane %v5632, 2
  %v5635 = vsel %vm5556, %v1409, %v5536
  %v5637 = vrot.slane %v5635, 3
  %v5640 = vsel %vm273, %v1411, %v5537
  %v5642 = vsel %vm5548, %v1411, %v5537
  %v5644 = vrot.slane %v5642, 1
  %v5645 = vsel %vm5552, %v1411, %v5537
  %v5647 = vrot.slane %v5645, 2
  %v5648 = vsel %vm5556, %v1411, %v5537
  %v5650 = vrot.slane %v5648, 3
  %v5653 = vsel %vm273, %v1412, %v5538
  %v5655 = vsel %vm5548, %v1412, %v5538
  %v5657 = vrot.slane %v5655, 1
  %v5658 = vsel %vm5552, %v1412, %v5538
  %v5660 = vrot.slane %v5658, 2
  %v5661 = vsel %vm5556, %v1412, %v5538
  %v5663 = vrot.slane %v5661, 3
  %v5666 = vsel %vm273, %v1413, %v5539
  %v5668 = vsel %vm5548, %v1413, %v5539
  %v5670 = vrot.slane %v5668, 1
  %v5671 = vsel %vm5552, %v1413, %v5539
  %v5673 = vrot.slane %v5671, 2
  %v5674 = vsel %vm5556, %v1413, %v5539
  %v5676 = vrot.slane %v5674, 3
  %v5679 = vsel %vm273, %v1414, %v5540
  %v5681 = vsel %vm5548, %v1414, %v5540
  %v5683 = vrot.slane %v5681, 1
  %v5684 = vsel %vm5552, %v1414, %v5540
  %v5686 = vrot.slane %v5684, 2
  %v5687 = vsel %vm5556, %v1414, %v5540
  %v5689 = vrot.slane %v5687, 3
  %v5692 = vsel %vm273, %v1415, %v5541
  %v5694 = vsel %vm5548, %v1415, %v5541
  %v5696 = vrot.slane %v5694, 1
  %v5697 = vsel %vm5552, %v1415, %v5541
  %v5699 = vrot.slane %v5697, 2
  %v5700 = vsel %vm5556, %v1415, %v5541
  %v5702 = vrot.slane %v5700, 3
  %v5705 = vsel %vm273, %v1416, %v5542
  %v5707 = vsel %vm5548, %v1416, %v5542
  %v5709 = vrot.slane %v5707, 1
  %v5710 = vsel %vm5552, %v1416, %v5542
  %v5712 = vrot.slane %v5710, 2
  %v5713 = vsel %vm5556, %v1416, %v5542
  %v5715 = vrot.slane %v5713, 3
  %v5718 = vsel %vm273, %v1417, %v5543
  %v5720 = vsel %vm5548, %v1417, %v5543
  %v5722 = vrot.slane %v5720, 1
  %v5723 = vsel %vm5552, %v1417, %v5543
  %v5725 = vrot.slane %v5723, 2
  %v5726 = vsel %vm5556, %v1417, %v5543
  %v5728 = vrot.slane %v5726, 3
  %v5729 = vunpack.i.l.s16 %v5546
  %v5730 = vunpack.i.h.s16 %v5546
  %v5731 = vunpack.i.l.s16 %v5551
  %v5732 = vunpack.i.h.s16 %v5551
  %v5733 = vunpack.i.l.s16 %v5555
  %v5734 = vunpack.i.h.s16 %v5555
  %v5735 = vunpack.i.l.s16 %v5559
  %v5736 = vunpack.i.l.s16 %v5562
  %v5737 = vunpack.i.h.s16 %v5562
  %v5738 = vunpack.i.l.s16 %v5566
  %v5739 = vunpack.i.h.s16 %v5566
  %v5740 = vunpack.i.l.s16 %v5569
  %v5741 = vunpack.i.h.s16 %v5569
  %v5742 = vunpack.i.l.s16 %v5572
  %v5743 = vunpack.i.l.s16 %v5575
  %v5744 = vunpack.i.h.s16 %v5575
  %v5745 = vunpack.i.l.s16 %v5579
  %v5746 = vunpack.i.h.s16 %v5579
  %v5747 = vunpack.i.l.s16 %v5582
  %v5748 = vunpack.i.h.s16 %v5582
  %v5749 = vunpack.i.l.s16 %v5585
  %v5750 = vunpack.i.l.s16 %v5588
  %v5751 = vunpack.i.h.s16 %v5588
  %v5752 = vunpack.i.l.s16 %v5592
  %v5753 = vunpack.i.h.s16 %v5592
  %v5754 = vunpack.i.l.s16 %v5595
  %v5755 = vunpack.i.h.s16 %v5595
  %v5756 = vunpack.i.l.s16 %v5598
  %v5757 = vunpack.i.l.s16 %v5601
  %v5758 = vunpack.i.h.s16 %v5601
  %v5759 = vunpack.i.l.s16 %v5605
  %v5760 = vunpack.i.h.s16 %v5605
  %v5761 = vunpack.i.l.s16 %v5608
  %v5762 = vunpack.i.h.s16 %v5608
  %v5763 = vunpack.i.l.s16 %v5611
  %v5764 = vunpack.i.l.s16 %v5614
  %v5765 = vunpack.i.h.s16 %v5614
  %v5766 = vunpack.i.l.s16 %v5618
  %v5767 = vunpack.i.h.s16 %v5618
  %v5768 = vunpack.i.l.s16 %v5621
  %v5769 = vunpack.i.h.s16 %v5621
  %v5770 = vunpack.i.l.s16 %v5624
  %v5771 = vunpack.i.l.s16 %v5627
  %v5772 = vunpack.i.h.s16 %v5627
  %v5773 = vunpack.i.l.s16 %v5631
  %v5774 = vunpack.i.h.s16 %v5631
  %v5775 = vunpack.i.l.s16 %v5634
  %v5776 = vunpack.i.h.s16 %v5634
  %v5777 = vunpack.i.l.s16 %v5637
  %v5778 = vunpack.i.l.s16 %v5640
  %v5779 = vunpack.i.h.s16 %v5640
  %v5780 = vunpack.i.l.s16 %v5644
  %v5781 = vunpack.i.h.s16 %v5644
  %v5782 = vunpack.i.l.s16 %v5647
  %v5783 = vunpack.i.h.s16 %v5647
  %v5784 = vunpack.i.l.s16 %v5650
  %v5785 = vunpack.i.l.s16 %v5653
  %v5786 = vunpack.i.h.s16 %v5653
  %v5787 = vunpack.i.l.s16 %v5657
  %v5788 = vunpack.i.h.s16 %v5657
  %v5789 = vunpack.i.l.s16 %v5660
  %v5790 = vunpack.i.h.s16 %v5660
  %v5791 = vunpack.i.l.s16 %v5663
  %v5792 = vunpack.i.l.s16 %v5666
  %v5793 = vunpack.i.h.s16 %v5666
  %v5794 = vunpack.i.l.s16 %v5670
  %v5795 = vunpack.i.h.s16 %v5670
  %v5796 = vunpack.i.l.s16 %v5673
  %v5797 = vunpack.i.h.s16 %v5673
  %v5798 = vunpack.i.l.s16 %v5676
  %v5799 = vunpack.i.l.s16 %v5679
  %v5800 = vunpack.i.h.s16 %v5679
  %v5801 = vunpack.i.l.s16 %v5683
  %v5802 = vunpack.i.h.s16 %v5683
  %v5803 = vunpack.i.l.s16 %v5686
  %v5804 = vunpack.i.h.s16 %v5686
  %v5805 = vunpack.i.l.s16 %v5689
  %v5806 = vunpack.i.l.s16 %v5692
  %v5807 = vunpack.i.h.s16 %v5692
  %v5808 = vunpack.i.l.s16 %v5696
  %v5809 = vunpack.i.h.s16 %v5696
  %v5810 = vunpack.i.l.s16 %v5699
  %v5811 = vunpack.i.h.s16 %v5699
  %v5812 = vunpack.i.l.s16 %v5702
  %v5813 = vunpack.i.l.s16 %v5705
  %v5814 = vunpack.i.h.s16 %v5705
  %v5815 = vunpack.i.l.s16 %v5709
  %v5816 = vunpack.i.h.s16 %v5709
  %v5817 = vunpack.i.l.s16 %v5712
  %v5818 = vunpack.i.h.s16 %v5712
  %v5819 = vunpack.i.l.s16 %v5715
  %v5820 = vunpack.i.l.s16 %v5718
  %v5821 = vunpack.i.h.s16 %v5718
  %v5822 = vunpack.i.l.s16 %v5722
  %v5823 = vunpack.i.h.s16 %v5722
  %v5824 = vunpack.i.l.s16 %v5725
  %v5825 = vunpack.i.h.s16 %v5725
  %v5826 = vunpack.i.l.s16 %v5728
  %v5827 = vld [vmem:[%s3] sm:$0xf]
  %v5828 = vld [vmem:[%s3 + $0x4] sm:$0xf]
  %v5829 = vld [vmem:[%s3 + $0x8] sm:$0xf]
  %v5844 = vrot.slane %v3146, 3
  %v5845 = vrot.slane %v3147, 3
  %v5846 = vrot.slane %v3148, 3
  %v5847 = vrot.slane %v3149, 3
  %v5848 = vrot.slane %v3150, 3
  %v5849 = vrot.slane %v3151, 3
  %v5850 = vrot.slane %v3152, 3
  %v5851 = vrot.slane %v3154, 3
  %v5852 = vrot.slane %v3155, 3
  %v5853 = vrot.slane %v3156, 3
  %v5854 = vrot.slane %v3157, 3
  %v5855 = vrot.slane %v3158, 3
  %v5856 = vrot.slane %v3159, 3
  %v5857 = vrot.slane %v3160, 3
  %v5860 = vsel %vm273, %v3146, %v5844
  %v5862 = vsel %vm5548, %v3146, %v5844
  %v5864 = vrot.slane %v5862, 1
  %v5865 = vsel %vm5552, %v3146, %v5844
  %v5867 = vrot.slane %v5865, 2
  %v5868 = vsel %vm5556, %v3146, %v5844
  %v5870 = vrot.slane %v5868, 3
  %v5873 = vsel %vm273, %v3147, %v5845
  %v5875 = vsel %vm5548, %v3147, %v5845
  %v5877 = vrot.slane %v5875, 1
  %v5878 = vsel %vm5552, %v3147, %v5845
  %v5880 = vrot.slane %v5878, 2
  %v5881 = vsel %vm5556, %v3147, %v5845
  %v5883 = vrot.slane %v5881, 3
  %v5886 = vsel %vm273, %v3148, %v5846
  %v5888 = vsel %vm5548, %v3148, %v5846
  %v5890 = vrot.slane %v5888, 1
  %v5891 = vsel %vm5552, %v3148, %v5846
  %v5893 = vrot.slane %v5891, 2
  %v5894 = vsel %vm5556, %v3148, %v5846
  %v5896 = vrot.slane %v5894, 3
  %v5899 = vsel %vm273, %v3149, %v5847
  %v5901 = vsel %vm5548, %v3149, %v5847
  %v5903 = vrot.slane %v5901, 1
  %v5904 = vsel %vm5552, %v3149, %v5847
  %v5906 = vrot.slane %v5904, 2
  %v5907 = vsel %vm5556, %v3149, %v5847
  %v5909 = vrot.slane %v5907, 3
  %v5912 = vsel %vm273, %v3150, %v5848
  %v5914 = vsel %vm5548, %v3150, %v5848
  %v5916 = vrot.slane %v5914, 1
  %v5917 = vsel %vm5552, %v3150, %v5848
  %v5919 = vrot.slane %v5917, 2
  %v5920 = vsel %vm5556, %v3150, %v5848
  %v5922 = vrot.slane %v5920, 3
  %v5925 = vsel %vm273, %v3151, %v5849
  %v5927 = vsel %vm5548, %v3151, %v5849
  %v5929 = vrot.slane %v5927, 1
  %v5930 = vsel %vm5552, %v3151, %v5849
  %v5932 = vrot.slane %v5930, 2
  %v5933 = vsel %vm5556, %v3151, %v5849
  %v5935 = vrot.slane %v5933, 3
  %v5938 = vsel %vm273, %v3152, %v5850
  %v5940 = vsel %vm5548, %v3152, %v5850
  %v5942 = vrot.slane %v5940, 1
  %v5943 = vsel %vm5552, %v3152, %v5850
  %v5945 = vrot.slane %v5943, 2
  %v5946 = vsel %vm5556, %v3152, %v5850
  %v5948 = vrot.slane %v5946, 3
  %v5951 = vsel %vm273, %v3154, %v5851
  %v5953 = vsel %vm5548, %v3154, %v5851
  %v5955 = vrot.slane %v5953, 1
  %v5956 = vsel %vm5552, %v3154, %v5851
  %v5958 = vrot.slane %v5956, 2
  %v5959 = vsel %vm5556, %v3154, %v5851
  %v5961 = vrot.slane %v5959, 3
  %v5964 = vsel %vm273, %v3155, %v5852
  %v5966 = vsel %vm5548, %v3155, %v5852
  %v5968 = vrot.slane %v5966, 1
  %v5969 = vsel %vm5552, %v3155, %v5852
  %v5971 = vrot.slane %v5969, 2
  %v5972 = vsel %vm5556, %v3155, %v5852
  %v5974 = vrot.slane %v5972, 3
  %v5977 = vsel %vm273, %v3156, %v5853
  %v5979 = vsel %vm5548, %v3156, %v5853
  %v5981 = vrot.slane %v5979, 1
  %v5982 = vsel %vm5552, %v3156, %v5853
  %v5984 = vrot.slane %v5982, 2
  %v5985 = vsel %vm5556, %v3156, %v5853
  %v5987 = vrot.slane %v5985, 3
  %v5990 = vsel %vm273, %v3157, %v5854
  %v5992 = vsel %vm5548, %v3157, %v5854
  %v5994 = vrot.slane %v5992, 1
  %v5995 = vsel %vm5552, %v3157, %v5854
  %v5997 = vrot.slane %v5995, 2
  %v5998 = vsel %vm5556, %v3157, %v5854
  %v6000 = vrot.slane %v5998, 3
  %v6003 = vsel %vm273, %v3158, %v5855
  %v6005 = vsel %vm5548, %v3158, %v5855
  %v6007 = vrot.slane %v6005, 1
  %v6008 = vsel %vm5552, %v3158, %v5855
  %v6010 = vrot.slane %v6008, 2
  %v6011 = vsel %vm5556, %v3158, %v5855
  %v6013 = vrot.slane %v6011, 3
  %v6016 = vsel %vm273, %v3159, %v5856
  %v6018 = vsel %vm5548, %v3159, %v5856
  %v6020 = vrot.slane %v6018, 1
  %v6021 = vsel %vm5552, %v3159, %v5856
  %v6023 = vrot.slane %v6021, 2
  %v6024 = vsel %vm5556, %v3159, %v5856
  %v6026 = vrot.slane %v6024, 3
  %v6029 = vsel %vm273, %v3160, %v5857
  %v6031 = vsel %vm5548, %v3160, %v5857
  %v6033 = vrot.slane %v6031, 1
  %v6034 = vsel %vm5552, %v3160, %v5857
  %v6036 = vrot.slane %v6034, 2
  %v6037 = vsel %vm5556, %v3160, %v5857
  %v6039 = vrot.slane %v6037, 3
  %v6040 = vunpack.i.l.s16 %v5860
  %v6041 = vunpack.i.h.s16 %v5860
  %v6042 = vunpack.i.l.s16 %v5864
  %v6043 = vunpack.i.h.s16 %v5864
  %v6044 = vunpack.i.l.s16 %v5867
  %v6045 = vunpack.i.h.s16 %v5867
  %v6046 = vunpack.i.l.s16 %v5870
  %v6047 = vunpack.i.l.s16 %v5873
  %v6048 = vunpack.i.h.s16 %v5873
  %v6049 = vunpack.i.l.s16 %v5877
  %v6050 = vunpack.i.h.s16 %v5877
  %v6051 = vunpack.i.l.s16 %v5880
  %v6052 = vunpack.i.h.s16 %v5880
  %v6053 = vunpack.i.l.s16 %v5883
  %v6054 = vunpack.i.l.s16 %v5886
  %v6055 = vunpack.i.h.s16 %v5886
  %v6056 = vunpack.i.l.s16 %v5890
  %v6057 = vunpack.i.h.s16 %v5890
  %v6058 = vunpack.i.l.s16 %v5893
  %v6059 = vunpack.i.h.s16 %v5893
  %v6060 = vunpack.i.l.s16 %v5896
  %v6061 = vunpack.i.l.s16 %v5899
  %v6062 = vunpack.i.h.s16 %v5899
  %v6063 = vunpack.i.l.s16 %v5903
  %v6064 = vunpack.i.h.s16 %v5903
  %v6065 = vunpack.i.l.s16 %v5906
  %v6066 = vunpack.i.h.s16 %v5906
  %v6067 = vunpack.i.l.s16 %v5909
  %v6068 = vunpack.i.l.s16 %v5912
  %v6069 = vunpack.i.h.s16 %v5912
  %v6070 = vunpack.i.l.s16 %v5916
  %v6071 = vunpack.i.h.s16 %v5916
  %v6072 = vunpack.i.l.s16 %v5919
  %v6073 = vunpack.i.h.s16 %v5919
  %v6074 = vunpack.i.l.s16 %v5922
  %v6075 = vunpack.i.l.s16 %v5925
  %v6076 = vunpack.i.h.s16 %v5925
  %v6077 = vunpack.i.l.s16 %v5929
  %v6078 = vunpack.i.h.s16 %v5929
  %v6079 = vunpack.i.l.s16 %v5932
  %v6080 = vunpack.i.h.s16 %v5932
  %v6081 = vunpack.i.l.s16 %v5935
  %v6082 = vunpack.i.l.s16 %v5938
  %v6083 = vunpack.i.h.s16 %v5938
  %v6084 = vunpack.i.l.s16 %v5942
  %v6085 = vunpack.i.h.s16 %v5942
  %v6086 = vunpack.i.l.s16 %v5945
  %v6087 = vunpack.i.h.s16 %v5945
  %v6088 = vunpack.i.l.s16 %v5948
  %v6089 = vunpack.i.l.s16 %v5951
  %v6090 = vunpack.i.h.s16 %v5951
  %v6091 = vunpack.i.l.s16 %v5955
  %v6092 = vunpack.i.h.s16 %v5955
  %v6093 = vunpack.i.l.s16 %v5958
  %v6094 = vunpack.i.h.s16 %v5958
  %v6095 = vunpack.i.l.s16 %v5961
  %v6096 = vunpack.i.l.s16 %v5964
  %v6097 = vunpack.i.h.s16 %v5964
  %v6098 = vunpack.i.l.s16 %v5968
  %v6099 = vunpack.i.h.s16 %v5968
  %v6100 = vunpack.i.l.s16 %v5971
  %v6101 = vunpack.i.h.s16 %v5971
  %v6102 = vunpack.i.l.s16 %v5974
  %v6103 = vunpack.i.l.s16 %v5977
  %v6104 = vunpack.i.h.s16 %v5977
  %v6105 = vunpack.i.l.s16 %v5981
  %v6106 = vunpack.i.h.s16 %v5981
  %v6107 = vunpack.i.l.s16 %v5984
  %v6108 = vunpack.i.h.s16 %v5984
  %v6109 = vunpack.i.l.s16 %v5987
  %v6110 = vunpack.i.l.s16 %v5990
  %v6111 = vunpack.i.h.s16 %v5990
  %v6112 = vunpack.i.l.s16 %v5994
  %v6113 = vunpack.i.h.s16 %v5994
  %v6114 = vunpack.i.l.s16 %v5997
  %v6115 = vunpack.i.h.s16 %v5997
  %v6116 = vunpack.i.l.s16 %v6000
  %v6117 = vunpack.i.l.s16 %v6003
  %v6118 = vunpack.i.h.s16 %v6003
  %v6119 = vunpack.i.l.s16 %v6007
  %v6120 = vunpack.i.h.s16 %v6007
  %v6121 = vunpack.i.l.s16 %v6010
  %v6122 = vunpack.i.h.s16 %v6010
  %v6123 = vunpack.i.l.s16 %v6013
  %v6124 = vunpack.i.l.s16 %v6016
  %v6125 = vunpack.i.h.s16 %v6016
  %v6126 = vunpack.i.l.s16 %v6020
  %v6127 = vunpack.i.h.s16 %v6020
  %v6128 = vunpack.i.l.s16 %v6023
  %v6129 = vunpack.i.h.s16 %v6023
  %v6130 = vunpack.i.l.s16 %v6026
  %v6131 = vunpack.i.l.s16 %v6029
  %v6132 = vunpack.i.h.s16 %v6029
  %v6133 = vunpack.i.l.s16 %v6033
  %v6134 = vunpack.i.h.s16 %v6033
  %v6135 = vunpack.i.l.s16 %v6036
  %v6136 = vunpack.i.h.s16 %v6036
  %v6137 = vunpack.i.l.s16 %v6039
  %s6138 = scalar_lea.vmem %s3, 12
  %v6139 = vld [vmem:[%s6138] sm:$0xf]
  %v6140 = vld [vmem:[%s6138 + $0x4] sm:$0xf]
  %v6141 = vld [vmem:[%s6138 + $0x8] sm:$0xf]
  %v6142 = vpack.i.b16 %v6041, %v6040
  %v6143 = vpack.i.b16 %v6043, %v6042
  %v6144 = vpack.i.b16 %v6045, %v6044
  %v6145 = vpack.i.b16 %v6047, %v6046
  %v6146 = vpack.i.b16 %v6049, %v6048
  %v6147 = vpack.i.b16 %v6051, %v6050
  %v6148 = vpack.i.b16 %v6053, %v6052
  %v6149 = vpack.i.b16 %v6055, %v6054
  %v6150 = vpack.i.b16 %v6057, %v6056
  %v6151 = vpack.i.b16 %v6059, %v6058
  %v6152 = vpack.i.b16 %v6061, %v6060
  %v6153 = vpack.i.b16 %v6063, %v6062
  %v6154 = vpack.i.b16 %v6065, %v6064
  %v6155 = vpack.i.b16 %v6067, %v6066
  %v6156 = vpack.i.b16 %v6069, %v6068
  %v6157 = vpack.i.b16 %v6071, %v6070
  %v6158 = vpack.i.b16 %v6073, %v6072
  %v6159 = vpack.i.b16 %v6075, %v6074
  %v6160 = vpack.i.b16 %v6077, %v6076
  %v6161 = vpack.i.b16 %v6079, %v6078
  %v6162 = vpack.i.b16 %v6081, %v6080
  %v6163 = vpack.i.b16 %v6083, %v6082
  %v6164 = vpack.i.b16 %v6085, %v6084
  %v6165 = vpack.i.b16 %v6087, %v6086
  %v6166 = vpack.i.b16 %v6089, %v6088
  %v6167 = vpack.i.b16 %v6091, %v6090
  %v6168 = vpack.i.b16 %v6093, %v6092
  %v6169 = vpack.i.b16 %v6095, %v6094
  %v6170 = vpack.i.b16 %v6097, %v6096
  %v6171 = vpack.i.b16 %v6099, %v6098
  %v6172 = vpack.i.b16 %v6101, %v6100
  %v6173 = vpack.i.b16 %v6103, %v6102
  %v6174 = vpack.i.b16 %v6105, %v6104
  %v6175 = vpack.i.b16 %v6107, %v6106
  %v6176 = vpack.i.b16 %v6109, %v6108
  %v6177 = vpack.i.b16 %v6111, %v6110
  %v6178 = vpack.i.b16 %v6113, %v6112
  %v6179 = vpack.i.b16 %v6115, %v6114
  %v6180 = vpack.i.b16 %v6117, %v6116
  %v6181 = vpack.i.b16 %v6119, %v6118
  %v6182 = vpack.i.b16 %v6121, %v6120
  %v6183 = vpack.i.b16 %v6123, %v6122
  %v6184 = vpack.i.b16 %v6125, %v6124
  %v6185 = vpack.i.b16 %v6127, %v6126
  %v6186 = vpack.i.b16 %v6129, %v6128
  %v6187 = vpack.i.b16 %v6131, %v6130
  %v6188 = vpack.i.b16 %v6133, %v6132
  %v6189 = vpack.i.b16 %v6135, %v6134
  %v6190 = vpack.i.b16 %v6137, %v6136
  %6192 = vst [vmem:[#allocation1] ss:$9 sm:$0xff] %v6142
  %s6194 = scalar_lea.vmem [#allocation1], 1
  %6195 = vst [vmem:[%s6194] ss:$9 sm:$0xff] %v6143
  %s6197 = scalar_lea.vmem [#allocation1], 2
  %6198 = vst [vmem:[%s6197] ss:$9 sm:$0xff] %v6144
  %s6200 = scalar_lea.vmem [#allocation1], 3
  %6201 = vst [vmem:[%s6200] ss:$9 sm:$0xff] %v6145
  %s6203 = scalar_lea.vmem [#allocation1], 4
  %6204 = vst [vmem:[%s6203] ss:$9 sm:$0xff] %v6146
  %s6206 = scalar_lea.vmem [#allocation1], 5
  %6207 = vst [vmem:[%s6206] ss:$9 sm:$0xff] %v6147
  %s6209 = scalar_lea.vmem [#allocation1], 6
  %6210 = vst [vmem:[%s6209] ss:$9 sm:$0xff] %v6148
  %s6212 = scalar_lea.vmem [#allocation1], 7
  %6213 = vst [vmem:[%s6212] ss:$9 sm:$0xff] %v6149
  %v6214 = vld [vmem:[#allocation1] sm:$0xff]
  %6216 = vst [vmem:[#allocation1] ss:$9 sm:$0xff] %v6150
  %6218 = vst [vmem:[%s6194] ss:$9 sm:$0xff] %v6151
  %6220 = vst [vmem:[%s6197] ss:$9 sm:$0xff] %v6152
  %6222 = vst [vmem:[%s6200] ss:$9 sm:$0xff] %v6153
  %6224 = vst [vmem:[%s6203] ss:$9 sm:$0xff] %v6154
  %6226 = vst [vmem:[%s6206] ss:$9 sm:$0xff] %v6155
  %6228 = vst [vmem:[%s6209] ss:$9 sm:$0xff] %v6156
  %6230 = vst [vmem:[%s6212] ss:$9 sm:$0xff] %v6157
  %v6231 = vld [vmem:[#allocation1] sm:$0xff]
  %6233 = vst [vmem:[#allocation1] ss:$9 sm:$0xff] %v6158
  %6235 = vst [vmem:[%s6194] ss:$9 sm:$0xff] %v6159
  %6237 = vst [vmem:[%s6197] ss:$9 sm:$0xff] %v6160
  %6239 = vst [vmem:[%s6200] ss:$9 sm:$0xff] %v6161
  %6241 = vst [vmem:[%s6203] ss:$9 sm:$0xff] %v6162
  %6243 = vst [vmem:[%s6206] ss:$9 sm:$0xff] %v6163
  %6245 = vst [vmem:[%s6209] ss:$9 sm:$0xff] %v6164
  %6247 = vst [vmem:[%s6212] ss:$9 sm:$0xff] %v6165
  %v6248 = vld [vmem:[#allocation1] sm:$0xff]
  %6250 = vst [vmem:[#allocation1] ss:$9 sm:$0xff] %v6166
  %6252 = vst [vmem:[%s6194] ss:$9 sm:$0xff] %v6167
  %6254 = vst [vmem:[%s6197] ss:$9 sm:$0xff] %v6168
  %6256 = vst [vmem:[%s6200] ss:$9 sm:$0xff] %v6169
  %6258 = vst [vmem:[%s6203] ss:$9 sm:$0xff] %v6170
  %6260 = vst [vmem:[%s6206] ss:$9 sm:$0xff] %v6171
  %6262 = vst [vmem:[%s6209] ss:$9 sm:$0xff] %v6172
  %6264 = vst [vmem:[%s6212] ss:$9 sm:$0xff] %v6173
  %v6265 = vld [vmem:[#allocation1] sm:$0xff]
  %6267 = vst [vmem:[#allocation1] ss:$9 sm:$0xff] %v6174
  %6269 = vst [vmem:[%s6194] ss:$9 sm:$0xff] %v6175
  %6271 = vst [vmem:[%s6197] ss:$9 sm:$0xff] %v6176
  %6273 = vst [vmem:[%s6200] ss:$9 sm:$0xff] %v6177
  %6275 = vst [vmem:[%s6203] ss:$9 sm:$0xff] %v6178
  %6277 = vst [vmem:[%s6206] ss:$9 sm:$0xff] %v6179
  %6279 = vst [vmem:[%s6209] ss:$9 sm:$0xff] %v6180
  %6281 = vst [vmem:[%s6212] ss:$9 sm:$0xff] %v6181
  %v6282 = vld [vmem:[#allocation1] sm:$0xff]
  %6284 = vst [vmem:[#allocation1] ss:$9 sm:$0xff] %v6182
  %6286 = vst [vmem:[%s6194] ss:$9 sm:$0xff] %v6183
  %6288 = vst [vmem:[%s6197] ss:$9 sm:$0xff] %v6184
  %6290 = vst [vmem:[%s6200] ss:$9 sm:$0xff] %v6185
  %6292 = vst [vmem:[%s6203] ss:$9 sm:$0xff] %v6186
  %6294 = vst [vmem:[%s6206] ss:$9 sm:$0xff] %v6187
  %6296 = vst [vmem:[%s6209] ss:$9 sm:$0xff] %v6188
  %6298 = vst [vmem:[%s6212] ss:$9 sm:$0xff] %v6189
  %v6299 = vld [vmem:[#allocation1] sm:$0xff]
  %6301 = vst [vmem:[#allocation1] ss:$9 sm:$0xff] %v6190
  %v6302 = vld [vmem:[#allocation1] sm:$0xff]
  %v6306 = vunpack.c.l.b16 %v6139
  %v6307 = vunpack.c.l.b16 %v6140
  %v6308 = vunpack.c.l.b16 %v6141
  %v6309 = vpack.c.b16 %v6307, %v6306
  %v6310 = vpack.c.b16 %v6308, %v6308
  %vm6312 = vcmask 195584
  %v6313 = vsel %vm6312, %v6214, 0
  %v6315 = vsel %vm6312, %v6231, 0
  %v6317 = vsel %vm6312, %v6248, 0
  %v6319 = vsel %vm6312, %v6265, 0
  %v6321 = vsel %vm6312, %v6282, 0
  %v6323 = vsel %vm6312, %v6299, 0
  %v6325 = vsel %vm6312, %v6302, 0
  %vm6327 = vcmask 1043456
  %v6329 = vsel %vm6327, %v6310, 0
  %6331 = vmatpush.bf16.msra.mxu0 0
  %6332 = vmatpush.bf16.msra.mxu0 0
  %6333 = vmatpush.bf16.msra.mxu0 0
  %6334 = vmatpush.bf16.msra.mxu0 0
  %6335 = vmatpush.bf16.msra.mxu0 0
  %6336 = vmatpush.bf16.msra.mxu0 0
  %6337 = vmatpush.bf16.msra.mxu0 %v6329
  %6338 = vmatpush.bf16.msra.mxu0 %v6309
  %6339 = vmatmul.bf16.gmra.mxu0 %v6313
  %v6340 = vpop.f32.mrf.mxu0
  %v6341 = vadd.f32 0.0, %v6340
  %v6342 = vpop.f32.mrf.mxu0
  %v6343 = vadd.f32 0.0, %v6342
  %6344 = vmatmul.bf16.gmra.mxu0 %v6315
  %v6345 = vpop.f32.mrf.mxu0
  %v6346 = vadd.f32 0.0, %v6345
  %v6347 = vpop.f32.mrf.mxu0
  %v6348 = vadd.f32 0.0, %v6347
  %6349 = vmatmul.bf16.gmra.mxu0 %v6317
  %v6350 = vpop.f32.mrf.mxu0
  %v6351 = vadd.f32 0.0, %v6350
  %v6352 = vpop.f32.mrf.mxu0
  %v6353 = vadd.f32 0.0, %v6352
  %6354 = vmatmul.bf16.gmra.mxu0 %v6319
  %v6355 = vpop.f32.mrf.mxu0
  %v6356 = vadd.f32 0.0, %v6355
  %v6357 = vpop.f32.mrf.mxu0
  %v6358 = vadd.f32 0.0, %v6357
  %6359 = vmatmul.bf16.gmra.mxu0 %v6321
  %v6360 = vpop.f32.mrf.mxu0
  %v6361 = vadd.f32 0.0, %v6360
  %v6362 = vpop.f32.mrf.mxu0
  %v6363 = vadd.f32 0.0, %v6362
  %6364 = vmatmul.bf16.gmra.mxu0 %v6323
  %v6365 = vpop.f32.mrf.mxu0
  %v6366 = vadd.f32 0.0, %v6365
  %v6367 = vpop.f32.mrf.mxu0
  %v6368 = vadd.f32 0.0, %v6367
  %6369 = vmatmul.bf16.gmra.mxu0 %v6325
  %v6370 = vpop.f32.mrf.mxu0
  %v6371 = vadd.f32 0.0, %v6370
  %v6372 = vpop.f32.mrf.mxu0
  %6373 = vdwg.mxu0
  %v6374 = vpack.i.b16 %v5730, %v5729
  %v6375 = vpack.i.b16 %v5732, %v5731
  %v6376 = vpack.i.b16 %v5734, %v5733
  %v6377 = vpack.i.b16 %v5736, %v5735
  %v6378 = vpack.i.b16 %v5738, %v5737
  %v6379 = vpack.i.b16 %v5740, %v5739
  %v6380 = vpack.i.b16 %v5742, %v5741
  %v6381 = vpack.i.b16 %v5744, %v5743
  %v6382 = vpack.i.b16 %v5746, %v5745
  %v6383 = vpack.i.b16 %v5748, %v5747
  %v6384 = vpack.i.b16 %v5750, %v5749
  %v6385 = vpack.i.b16 %v5752, %v5751
  %v6386 = vpack.i.b16 %v5754, %v5753
  %v6387 = vpack.i.b16 %v5756, %v5755
  %v6388 = vpack.i.b16 %v5758, %v5757
  %v6389 = vpack.i.b16 %v5760, %v5759
  %v6390 = vpack.i.b16 %v5762, %v5761
  %v6391 = vpack.i.b16 %v5764, %v5763
  %v6392 = vpack.i.b16 %v5766, %v5765
  %v6393 = vpack.i.b16 %v5768, %v5767
  %v6394 = vpack.i.b16 %v5770, %v5769
  %v6395 = vpack.i.b16 %v5772, %v5771
  %v6396 = vpack.i.b16 %v5774, %v5773
  %v6397 = vpack.i.b16 %v5776, %v5775
  %v6398 = vpack.i.b16 %v5778, %v5777
  %v6399 = vpack.i.b16 %v5780, %v5779
  %v6400 = vpack.i.b16 %v5782, %v5781
  %v6401 = vpack.i.b16 %v5784, %v5783
  %v6402 = vpack.i.b16 %v5786, %v5785
  %v6403 = vpack.i.b16 %v5788, %v5787
  %v6404 = vpack.i.b16 %v5790, %v5789
  %v6405 = vpack.i.b16 %v5792, %v5791
  %v6406 = vpack.i.b16 %v5794, %v5793
  %v6407 = vpack.i.b16 %v5796, %v5795
  %v6408 = vpack.i.b16 %v5798, %v5797
  %v6409 = vpack.i.b16 %v5800, %v5799
  %v6410 = vpack.i.b16 %v5802, %v5801
  %v6411 = vpack.i.b16 %v5804, %v5803
  %v6412 = vpack.i.b16 %v5806, %v5805
  %v6413 = vpack.i.b16 %v5808, %v5807
  %v6414 = vpack.i.b16 %v5810, %v5809
  %v6415 = vpack.i.b16 %v5812, %v5811
  %v6416 = vpack.i.b16 %v5814, %v5813
  %v6417 = vpack.i.b16 %v5816, %v5815
  %v6418 = vpack.i.b16 %v5818, %v5817
  %v6419 = vpack.i.b16 %v5820, %v5819
  %v6420 = vpack.i.b16 %v5822, %v5821
  %v6421 = vpack.i.b16 %v5824, %v5823
  %v6422 = vpack.i.b16 %v5826, %v5825
  %6424 = vst [vmem:[#allocation1] ss:$9 sm:$0xff] %v6374
  %s6426 = scalar_lea.vmem [#allocation1], 1
  %6427 = vst [vmem:[%s6426] ss:$9 sm:$0xff] %v6375
  %s6429 = scalar_lea.vmem [#allocation1], 2
  %6430 = vst [vmem:[%s6429] ss:$9 sm:$0xff] %v6376
  %s6432 = scalar_lea.vmem [#allocation1], 3
  %6433 = vst [vmem:[%s6432] ss:$9 sm:$0xff] %v6377
  %s6435 = scalar_lea.vmem [#allocation1], 4
  %6436 = vst [vmem:[%s6435] ss:$9 sm:$0xff] %v6378
  %s6438 = scalar_lea.vmem [#allocation1], 5
  %6439 = vst [vmem:[%s6438] ss:$9 sm:$0xff] %v6379
  %s6441 = scalar_lea.vmem [#allocation1], 6
  %6442 = vst [vmem:[%s6441] ss:$9 sm:$0xff] %v6380
  %s6444 = scalar_lea.vmem [#allocation1], 7
  %6445 = vst [vmem:[%s6444] ss:$9 sm:$0xff] %v6381
  %v6446 = vld [vmem:[#allocation1] sm:$0xff]
  %6448 = vst [vmem:[#allocation1] ss:$9 sm:$0xff] %v6382
  %6450 = vst [vmem:[%s6426] ss:$9 sm:$0xff] %v6383
  %6452 = vst [vmem:[%s6429] ss:$9 sm:$0xff] %v6384
  %6454 = vst [vmem:[%s6432] ss:$9 sm:$0xff] %v6385
  %6456 = vst [vmem:[%s6435] ss:$9 sm:$0xff] %v6386
  %6458 = vst [vmem:[%s6438] ss:$9 sm:$0xff] %v6387
  %6460 = vst [vmem:[%s6441] ss:$9 sm:$0xff] %v6388
  %6462 = vst [vmem:[%s6444] ss:$9 sm:$0xff] %v6389
  %v6463 = vld [vmem:[#allocation1] sm:$0xff]
  %6465 = vst [vmem:[#allocation1] ss:$9 sm:$0xff] %v6390
  %6467 = vst [vmem:[%s6426] ss:$9 sm:$0xff] %v6391
  %6469 = vst [vmem:[%s6429] ss:$9 sm:$0xff] %v6392
  %6471 = vst [vmem:[%s6432] ss:$9 sm:$0xff] %v6393
  %6473 = vst [vmem:[%s6435] ss:$9 sm:$0xff] %v6394
  %6475 = vst [vmem:[%s6438] ss:$9 sm:$0xff] %v6395
  %6477 = vst [vmem:[%s6441] ss:$9 sm:$0xff] %v6396
  %6479 = vst [vmem:[%s6444] ss:$9 sm:$0xff] %v6397
  %v6480 = vld [vmem:[#allocation1] sm:$0xff]
  %6482 = vst [vmem:[#allocation1] ss:$9 sm:$0xff] %v6398
  %6484 = vst [vmem:[%s6426] ss:$9 sm:$0xff] %v6399
  %6486 = vst [vmem:[%s6429] ss:$9 sm:$0xff] %v6400
  %6488 = vst [vmem:[%s6432] ss:$9 sm:$0xff] %v6401
  %6490 = vst [vmem:[%s6435] ss:$9 sm:$0xff] %v6402
  %6492 = vst [vmem:[%s6438] ss:$9 sm:$0xff] %v6403
  %6494 = vst [vmem:[%s6441] ss:$9 sm:$0xff] %v6404
  %6496 = vst [vmem:[%s6444] ss:$9 sm:$0xff] %v6405
  %v6497 = vld [vmem:[#allocation1] sm:$0xff]
  %6499 = vst [vmem:[#allocation1] ss:$9 sm:$0xff] %v6406
  %6501 = vst [vmem:[%s6426] ss:$9 sm:$0xff] %v6407
  %6503 = vst [vmem:[%s6429] ss:$9 sm:$0xff] %v6408
  %6505 = vst [vmem:[%s6432] ss:$9 sm:$0xff] %v6409
  %6507 = vst [vmem:[%s6435] ss:$9 sm:$0xff] %v6410
  %6509 = vst [vmem:[%s6438] ss:$9 sm:$0xff] %v6411
  %6511 = vst [vmem:[%s6441] ss:$9 sm:$0xff] %v6412
  %6513 = vst [vmem:[%s6444] ss:$9 sm:$0xff] %v6413
  %v6514 = vld [vmem:[#allocation1] sm:$0xff]
  %6516 = vst [vmem:[#allocation1] ss:$9 sm:$0xff] %v6414
  %6518 = vst [vmem:[%s6426] ss:$9 sm:$0xff] %v6415
  %6520 = vst [vmem:[%s6429] ss:$9 sm:$0xff] %v6416
  %6522 = vst [vmem:[%s6432] ss:$9 sm:$0xff] %v6417
  %6524 = vst [vmem:[%s6435] ss:$9 sm:$0xff] %v6418
  %6526 = vst [vmem:[%s6438] ss:$9 sm:$0xff] %v6419
  %6528 = vst [vmem:[%s6441] ss:$9 sm:$0xff] %v6420
  %6530 = vst [vmem:[%s6444] ss:$9 sm:$0xff] %v6421
  %v6531 = vld [vmem:[#allocation1] sm:$0xff]
  %6533 = vst [vmem:[#allocation1] ss:$9 sm:$0xff] %v6422
  %v6534 = vld [vmem:[#allocation1] sm:$0xff]
  %v6538 = vunpack.c.l.b16 %v5827
  %v6539 = vunpack.c.l.b16 %v5828
  %v6540 = vunpack.c.l.b16 %v5829
  %v6541 = vpack.c.b16 %v6539, %v6538
  %v6542 = vpack.c.b16 %v6540, %v6540
  %v6544 = vsel %vm6312, %v6446, 0
  %v6546 = vsel %vm6312, %v6463, 0
  %v6548 = vsel %vm6312, %v6480, 0
  %v6550 = vsel %vm6312, %v6497, 0
  %v6552 = vsel %vm6312, %v6514, 0
  %v6554 = vsel %vm6312, %v6531, 0
  %v6556 = vsel %vm6312, %v6534, 0
  %v6559 = vsel %vm6327, %v6542, 0
  %6561 = vmatpush.bf16.msra.mxu0 0
  %6562 = vmatpush.bf16.msra.mxu0 0
  %6563 = vmatpush.bf16.msra.mxu0 0
  %6564 = vmatpush.bf16.msra.mxu0 0
  %6565 = vmatpush.bf16.msra.mxu0 0
  %6566 = vmatpush.bf16.msra.mxu0 0
  %6567 = vmatpush.bf16.msra.mxu0 %v6559
  %6568 = vmatpush.bf16.msra.mxu0 %v6541
  %6569 = vmatmul.bf16.gmra.mxu0 %v6544
  %v6570 = vpop.f32.mrf.mxu0
  %v6571 = vadd.f32 %v6341, %v6570
  %v6572 = vpop.f32.mrf.mxu0
  %v6573 = vadd.f32 %v6343, %v6572
  %6574 = vmatmul.bf16.gmra.mxu0 %v6546
  %v6575 = vpop.f32.mrf.mxu0
  %v6576 = vadd.f32 %v6346, %v6575
  %v6577 = vpop.f32.mrf.mxu0
  %v6578 = vadd.f32 %v6348, %v6577
  %6579 = vmatmul.bf16.gmra.mxu0 %v6548
  %v6580 = vpop.f32.mrf.mxu0
  %v6581 = vadd.f32 %v6351, %v6580
  %v6582 = vpop.f32.mrf.mxu0
  %v6583 = vadd.f32 %v6353, %v6582
  %6584 = vmatmul.bf16.gmra.mxu0 %v6550
  %v6585 = vpop.f32.mrf.mxu0
  %v6586 = vadd.f32 %v6356, %v6585
  %v6587 = vpop.f32.mrf.mxu0
  %v6588 = vadd.f32 %v6358, %v6587
  %6589 = vmatmul.bf16.gmra.mxu0 %v6552
  %v6590 = vpop.f32.mrf.mxu0
  %v6591 = vadd.f32 %v6361, %v6590
  %v6592 = vpop.f32.mrf.mxu0
  %v6593 = vadd.f32 %v6363, %v6592
  %6594 = vmatmul.bf16.gmra.mxu0 %v6554
  %v6595 = vpop.f32.mrf.mxu0
  %v6596 = vadd.f32 %v6366, %v6595
  %v6597 = vpop.f32.mrf.mxu0
  %v6598 = vadd.f32 %v6368, %v6597
  %6599 = vmatmul.bf16.gmra.mxu0 %v6556
  %v6600 = vpop.f32.mrf.mxu0
  %v6601 = vadd.f32 %v6371, %v6600
  %v6602 = vpop.f32.mrf.mxu0
  %6603 = vdwg.mxu0
  %v6604 = vunpack.i.h.s16 %v5559
  %v6605 = vunpack.i.h.s16 %v5572
  %v6606 = vunpack.i.h.s16 %v5585
  %v6607 = vunpack.i.h.s16 %v5598
  %v6608 = vunpack.i.h.s16 %v5611
  %v6609 = vunpack.i.h.s16 %v5624
  %v6610 = vunpack.i.h.s16 %v5637
  %v6611 = vunpack.i.h.s16 %v5650
  %v6612 = vunpack.i.h.s16 %v5663
  %v6613 = vunpack.i.h.s16 %v5676
  %v6614 = vunpack.i.h.s16 %v5689
  %v6615 = vunpack.i.h.s16 %v5702
  %v6616 = vunpack.i.h.s16 %v5715
  %v6617 = vunpack.i.h.s16 %v5728
  %s6618 = scalar_lea.vmem %s3, 24
  %v6619 = vld [vmem:[%s6618] sm:$0xf]
  %v6620 = vld [vmem:[%s6618 + $0x4] sm:$0xf]
  %v6621 = vld [vmem:[%s6618 + $0x8] sm:$0xf]
  %v6622 = vpack.i.b16 %v5731, %v5730
  %v6623 = vpack.i.b16 %v5733, %v5732
  %v6624 = vpack.i.b16 %v5735, %v5734
  %v6625 = vpack.i.b16 %v5737, %v6604
  %v6626 = vpack.i.b16 %v5739, %v5738
  %v6627 = vpack.i.b16 %v5741, %v5740
  %v6628 = vpack.i.b16 %v6605, %v5742
  %v6629 = vpack.i.b16 %v5745, %v5744
  %v6630 = vpack.i.b16 %v5747, %v5746
  %v6631 = vpack.i.b16 %v5749, %v5748
  %v6632 = vpack.i.b16 %v5751, %v6606
  %v6633 = vpack.i.b16 %v5753, %v5752
  %v6634 = vpack.i.b16 %v5755, %v5754
  %v6635 = vpack.i.b16 %v6607, %v5756
  %v6636 = vpack.i.b16 %v5759, %v5758
  %v6637 = vpack.i.b16 %v5761, %v5760
  %v6638 = vpack.i.b16 %v5763, %v5762
  %v6639 = vpack.i.b16 %v5765, %v6608
  %v6640 = vpack.i.b16 %v5767, %v5766
  %v6641 = vpack.i.b16 %v5769, %v5768
  %v6642 = vpack.i.b16 %v6609, %v5770
  %v6643 = vpack.i.b16 %v5773, %v5772
  %v6644 = vpack.i.b16 %v5775, %v5774
  %v6645 = vpack.i.b16 %v5777, %v5776
  %v6646 = vpack.i.b16 %v5779, %v6610
  %v6647 = vpack.i.b16 %v5781, %v5780
  %v6648 = vpack.i.b16 %v5783, %v5782
  %v6649 = vpack.i.b16 %v6611, %v5784
  %v6650 = vpack.i.b16 %v5787, %v5786
  %v6651 = vpack.i.b16 %v5789, %v5788
  %v6652 = vpack.i.b16 %v5791, %v5790
  %v6653 = vpack.i.b16 %v5793, %v6612
  %v6654 = vpack.i.b16 %v5795, %v5794
  %v6655 = vpack.i.b16 %v5797, %v5796
  %v6656 = vpack.i.b16 %v6613, %v5798
  %v6657 = vpack.i.b16 %v5801, %v5800
  %v6658 = vpack.i.b16 %v5803, %v5802
  %v6659 = vpack.i.b16 %v5805, %v5804
  %v6660 = vpack.i.b16 %v5807, %v6614
  %v6661 = vpack.i.b16 %v5809, %v5808
  %v6662 = vpack.i.b16 %v5811, %v5810
  %v6663 = vpack.i.b16 %v6615, %v5812
  %v6664 = vpack.i.b16 %v5815, %v5814
  %v6665 = vpack.i.b16 %v5817, %v5816
  %v6666 = vpack.i.b16 %v5819, %v5818
  %v6667 = vpack.i.b16 %v5821, %v6616
  %v6668 = vpack.i.b16 %v5823, %v5822
  %v6669 = vpack.i.b16 %v5825, %v5824
  %v6670 = vpack.i.b16 %v6617, %v5826
  %6672 = vst [vmem:[#allocation1] ss:$9 sm:$0xff] %v6622
  %s6674 = scalar_lea.vmem [#allocation1], 1
  %6675 = vst [vmem:[%s6674] ss:$9 sm:$0xff] %v6623
  %s6677 = scalar_lea.vmem [#allocation1], 2
  %6678 = vst [vmem:[%s6677] ss:$9 sm:$0xff] %v6624
  %s6680 = scalar_lea.vmem [#allocation1], 3
  %6681 = vst [vmem:[%s6680] ss:$9 sm:$0xff] %v6625
  %s6683 = scalar_lea.vmem [#allocation1], 4
  %6684 = vst [vmem:[%s6683] ss:$9 sm:$0xff] %v6626
  %s6686 = scalar_lea.vmem [#allocation1], 5
  %6687 = vst [vmem:[%s6686] ss:$9 sm:$0xff] %v6627
  %s6689 = scalar_lea.vmem [#allocation1], 6
  %6690 = vst [vmem:[%s6689] ss:$9 sm:$0xff] %v6628
  %s6692 = scalar_lea.vmem [#allocation1], 7
  %6693 = vst [vmem:[%s6692] ss:$9 sm:$0xff] %v6629
  %v6694 = vld [vmem:[#allocation1] sm:$0xff]
  %6696 = vst [vmem:[#allocation1] ss:$9 sm:$0xff] %v6630
  %6698 = vst [vmem:[%s6674] ss:$9 sm:$0xff] %v6631
  %6700 = vst [vmem:[%s6677] ss:$9 sm:$0xff] %v6632
  %6702 = vst [vmem:[%s6680] ss:$9 sm:$0xff] %v6633
  %6704 = vst [vmem:[%s6683] ss:$9 sm:$0xff] %v6634
  %6706 = vst [vmem:[%s6686] ss:$9 sm:$0xff] %v6635
  %6708 = vst [vmem:[%s6689] ss:$9 sm:$0xff] %v6636
  %6710 = vst [vmem:[%s6692] ss:$9 sm:$0xff] %v6637
  %v6711 = vld [vmem:[#allocation1] sm:$0xff]
  %6713 = vst [vmem:[#allocation1] ss:$9 sm:$0xff] %v6638
  %6715 = vst [vmem:[%s6674] ss:$9 sm:$0xff] %v6639
  %6717 = vst [vmem:[%s6677] ss:$9 sm:$0xff] %v6640
  %6719 = vst [vmem:[%s6680] ss:$9 sm:$0xff] %v6641
  %6721 = vst [vmem:[%s6683] ss:$9 sm:$0xff] %v6642
  %6723 = vst [vmem:[%s6686] ss:$9 sm:$0xff] %v6643
  %6725 = vst [vmem:[%s6689] ss:$9 sm:$0xff] %v6644
  %6727 = vst [vmem:[%s6692] ss:$9 sm:$0xff] %v6645
  %v6728 = vld [vmem:[#allocation1] sm:$0xff]
  %6730 = vst [vmem:[#allocation1] ss:$9 sm:$0xff] %v6646
  %6732 = vst [vmem:[%s6674] ss:$9 sm:$0xff] %v6647
  %6734 = vst [vmem:[%s6677] ss:$9 sm:$0xff] %v6648
  %6736 = vst [vmem:[%s6680] ss:$9 sm:$0xff] %v6649
  %6738 = vst [vmem:[%s6683] ss:$9 sm:$0xff] %v6650
  %6740 = vst [vmem:[%s6686] ss:$9 sm:$0xff] %v6651
  %6742 = vst [vmem:[%s6689] ss:$9 sm:$0xff] %v6652
  %6744 = vst [vmem:[%s6692] ss:$9 sm:$0xff] %v6653
  %v6745 = vld [vmem:[#allocation1] sm:$0xff]
  %6747 = vst [vmem:[#allocation1] ss:$9 sm:$0xff] %v6654
  %6749 = vst [vmem:[%s6674] ss:$9 sm:$0xff] %v6655
  %6751 = vst [vmem:[%s6677] ss:$9 sm:$0xff] %v6656
  %6753 = vst [vmem:[%s6680] ss:$9 sm:$0xff] %v6657
  %6755 = vst [vmem:[%s6683] ss:$9 sm:$0xff] %v6658
  %6757 = vst [vmem:[%s6686] ss:$9 sm:$0xff] %v6659
  %6759 = vst [vmem:[%s6689] ss:$9 sm:$0xff] %v6660
  %6761 = vst [vmem:[%s6692] ss:$9 sm:$0xff] %v6661
  %v6762 = vld [vmem:[#allocation1] sm:$0xff]
  %6764 = vst [vmem:[#allocation1] ss:$9 sm:$0xff] %v6662
  %6766 = vst [vmem:[%s6674] ss:$9 sm:$0xff] %v6663
  %6768 = vst [vmem:[%s6677] ss:$9 sm:$0xff] %v6664
  %6770 = vst [vmem:[%s6680] ss:$9 sm:$0xff] %v6665
  %6772 = vst [vmem:[%s6683] ss:$9 sm:$0xff] %v6666
  %6774 = vst [vmem:[%s6686] ss:$9 sm:$0xff] %v6667
  %6776 = vst [vmem:[%s6689] ss:$9 sm:$0xff] %v6668
  %6778 = vst [vmem:[%s6692] ss:$9 sm:$0xff] %v6669
  %v6779 = vld [vmem:[#allocation1] sm:$0xff]
  %6781 = vst [vmem:[#allocation1] ss:$9 sm:$0xff] %v6670
  %v6782 = vld [vmem:[#allocation1] sm:$0xff]
  %v6786 = vunpack.c.l.b16 %v6619
  %v6787 = vunpack.c.l.b16 %v6620
  %v6788 = vunpack.c.l.b16 %v6621
  %v6789 = vpack.c.b16 %v6787, %v6786
  %v6790 = vpack.c.b16 %v6788, %v6788
  %v6792 = vsel %vm6312, %v6694, 0
  %v6794 = vsel %vm6312, %v6711, 0
  %v6796 = vsel %vm6312, %v6728, 0
  %v6798 = vsel %vm6312, %v6745, 0
  %v6800 = vsel %vm6312, %v6762, 0
  %v6802 = vsel %vm6312, %v6779, 0
  %v6804 = vsel %vm6312, %v6782, 0
  %v6807 = vsel %vm6327, %v6790, 0
  %6809 = vmatpush.bf16.msra.mxu0 0
  %6810 = vmatpush.bf16.msra.mxu0 0
  %6811 = vmatpush.bf16.msra.mxu0 0
  %6812 = vmatpush.bf16.msra.mxu0 0
  %6813 = vmatpush.bf16.msra.mxu0 0
  %6814 = vmatpush.bf16.msra.mxu0 0
  %6815 = vmatpush.bf16.msra.mxu0 %v6807
  %6816 = vmatpush.bf16.msra.mxu0 %v6789
  %6817 = vmatmul.bf16.gmra.mxu0 %v6792
  %v6818 = vpop.f32.mrf.mxu0
  %v6819 = vadd.f32 0.0, %v6818
  %v6820 = vpop.f32.mrf.mxu0
  %v6821 = vadd.f32 0.0, %v6820
  %6822 = vmatmul.bf16.gmra.mxu0 %v6794
  %v6823 = vpop.f32.mrf.mxu0
  %v6824 = vadd.f32 0.0, %v6823
  %v6825 = vpop.f32.mrf.mxu0
  %v6826 = vadd.f32 0.0, %v6825
  %6827 = vmatmul.bf16.gmra.mxu0 %v6796
  %v6828 = vpop.f32.mrf.mxu0
  %v6829 = vadd.f32 0.0, %v6828
  %v6830 = vpop.f32.mrf.mxu0
  %v6831 = vadd.f32 0.0, %v6830
  %6832 = vmatmul.bf16.gmra.mxu0 %v6798
  %v6833 = vpop.f32.mrf.mxu0
  %v6834 = vadd.f32 0.0, %v6833
  %v6835 = vpop.f32.mrf.mxu0
  %v6836 = vadd.f32 0.0, %v6835
  %6837 = vmatmul.bf16.gmra.mxu0 %v6800
  %v6838 = vpop.f32.mrf.mxu0
  %v6839 = vadd.f32 0.0, %v6838
  %v6840 = vpop.f32.mrf.mxu0
  %v6841 = vadd.f32 0.0, %v6840
  %6842 = vmatmul.bf16.gmra.mxu0 %v6802
  %v6843 = vpop.f32.mrf.mxu0
  %v6844 = vadd.f32 0.0, %v6843
  %v6845 = vpop.f32.mrf.mxu0
  %v6846 = vadd.f32 0.0, %v6845
  %6847 = vmatmul.bf16.gmra.mxu0 %v6804
  %v6848 = vpop.f32.mrf.mxu0
  %v6849 = vadd.f32 0.0, %v6848
  %v6850 = vpop.f32.mrf.mxu0
  %6851 = vdwg.mxu0
  %v6852 = vadd.f32 %v6571, %v6819
  %v6853 = vadd.f32 %v6573, %v6821
  %v6854 = vadd.f32 %v6576, %v6824
  %v6855 = vadd.f32 %v6578, %v6826
  %v6856 = vadd.f32 %v6581, %v6829
  %v6857 = vadd.f32 %v6583, %v6831
  %v6858 = vadd.f32 %v6586, %v6834
  %v6859 = vadd.f32 %v6588, %v6836
  %v6860 = vadd.f32 %v6591, %v6839
  %v6861 = vadd.f32 %v6593, %v6841
  %v6862 = vadd.f32 %v6596, %v6844
  %v6863 = vadd.f32 %v6598, %v6846
  %v6864 = vadd.f32 %v6601, %v6849
  %v6879 = vrot.slane %v4183, 3
  %v6880 = vrot.slane %v4184, 3
  %v6881 = vrot.slane %v4185, 3
  %v6882 = vrot.slane %v4186, 3
  %v6883 = vrot.slane %v4187, 3
  %v6884 = vrot.slane %v4188, 3
  %v6885 = vrot.slane %v4189, 3
  %v6886 = vrot.slane %v4190, 3
  %v6887 = vrot.slane %v4191, 3
  %v6888 = vrot.slane %v4192, 3
  %v6889 = vrot.slane %v4193, 3
  %v6890 = vrot.slane %v4194, 3
  %v6891 = vrot.slane %v4195, 3
  %v6892 = vrot.slane %v4196, 3
  %v6895 = vsel %vm273, %v4183, %v6879
  %v6897 = vsel %vm5548, %v4183, %v6879
  %v6899 = vrot.slane %v6897, 1
  %v6900 = vsel %vm5552, %v4183, %v6879
  %v6902 = vrot.slane %v6900, 2
  %v6903 = vsel %vm5556, %v4183, %v6879
  %v6905 = vrot.slane %v6903, 3
  %v6908 = vsel %vm273, %v4184, %v6880
  %v6910 = vsel %vm5548, %v4184, %v6880
  %v6912 = vrot.slane %v6910, 1
  %v6913 = vsel %vm5552, %v4184, %v6880
  %v6915 = vrot.slane %v6913, 2
  %v6916 = vsel %vm5556, %v4184, %v6880
  %v6918 = vrot.slane %v6916, 3
  %v6921 = vsel %vm273, %v4185, %v6881
  %v6923 = vsel %vm5548, %v4185, %v6881
  %v6925 = vrot.slane %v6923, 1
  %v6926 = vsel %vm5552, %v4185, %v6881
  %v6928 = vrot.slane %v6926, 2
  %v6929 = vsel %vm5556, %v4185, %v6881
  %v6931 = vrot.slane %v6929, 3
  %v6934 = vsel %vm273, %v4186, %v6882
  %v6936 = vsel %vm5548, %v4186, %v6882
  %v6938 = vrot.slane %v6936, 1
  %v6939 = vsel %vm5552, %v4186, %v6882
  %v6941 = vrot.slane %v6939, 2
  %v6942 = vsel %vm5556, %v4186, %v6882
  %v6944 = vrot.slane %v6942, 3
  %v6947 = vsel %vm273, %v4187, %v6883
  %v6949 = vsel %vm5548, %v4187, %v6883
  %v6951 = vrot.slane %v6949, 1
  %v6952 = vsel %vm5552, %v4187, %v6883
  %v6954 = vrot.slane %v6952, 2
  %v6955 = vsel %vm5556, %v4187, %v6883
  %v6957 = vrot.slane %v6955, 3
  %v6960 = vsel %vm273, %v4188, %v6884
  %v6962 = vsel %vm5548, %v4188, %v6884
  %v6964 = vrot.slane %v6962, 1
  %v6965 = vsel %vm5552, %v4188, %v6884
  %v6967 = vrot.slane %v6965, 2
  %v6968 = vsel %vm5556, %v4188, %v6884
  %v6970 = vrot.slane %v6968, 3
  %v6973 = vsel %vm273, %v4189, %v6885
  %v6975 = vsel %vm5548, %v4189, %v6885
  %v6977 = vrot.slane %v6975, 1
  %v6978 = vsel %vm5552, %v4189, %v6885
  %v6980 = vrot.slane %v6978, 2
  %v6981 = vsel %vm5556, %v4189, %v6885
  %v6983 = vrot.slane %v6981, 3
  %v6986 = vsel %vm273, %v4190, %v6886
  %v6988 = vsel %vm5548, %v4190, %v6886
  %v6990 = vrot.slane %v6988, 1
  %v6991 = vsel %vm5552, %v4190, %v6886
  %v6993 = vrot.slane %v6991, 2
  %v6994 = vsel %vm5556, %v4190, %v6886
  %v6996 = vrot.slane %v6994, 3
  %v6999 = vsel %vm273, %v4191, %v6887
  %v7001 = vsel %vm5548, %v4191, %v6887
  %v7003 = vrot.slane %v7001, 1
  %v7004 = vsel %vm5552, %v4191, %v6887
  %v7006 = vrot.slane %v7004, 2
  %v7007 = vsel %vm5556, %v4191, %v6887
  %v7009 = vrot.slane %v7007, 3
  %v7012 = vsel %vm273, %v4192, %v6888
  %v7014 = vsel %vm5548, %v4192, %v6888
  %v7016 = vrot.slane %v7014, 1
  %v7017 = vsel %vm5552, %v4192, %v6888
  %v7019 = vrot.slane %v7017, 2
  %v7020 = vsel %vm5556, %v4192, %v6888
  %v7022 = vrot.slane %v7020, 3
  %v7025 = vsel %vm273, %v4193, %v6889
  %v7027 = vsel %vm5548, %v4193, %v6889
  %v7029 = vrot.slane %v7027, 1
  %v7030 = vsel %vm5552, %v4193, %v6889
  %v7032 = vrot.slane %v7030, 2
  %v7033 = vsel %vm5556, %v4193, %v6889
  %v7035 = vrot.slane %v7033, 3
  %v7038 = vsel %vm273, %v4194, %v6890
  %v7040 = vsel %vm5548, %v4194, %v6890
  %v7042 = vrot.slane %v7040, 1
  %v7043 = vsel %vm5552, %v4194, %v6890
  %v7045 = vrot.slane %v7043, 2
  %v7046 = vsel %vm5556, %v4194, %v6890
  %v7048 = vrot.slane %v7046, 3
  %v7051 = vsel %vm273, %v4195, %v6891
  %v7053 = vsel %vm5548, %v4195, %v6891
  %v7055 = vrot.slane %v7053, 1
  %v7056 = vsel %vm5552, %v4195, %v6891
  %v7058 = vrot.slane %v7056, 2
  %v7059 = vsel %vm5556, %v4195, %v6891
  %v7061 = vrot.slane %v7059, 3
  %v7064 = vsel %vm273, %v4196, %v6892
  %v7066 = vsel %vm5548, %v4196, %v6892
  %v7068 = vrot.slane %v7066, 1
  %v7069 = vsel %vm5552, %v4196, %v6892
  %v7071 = vrot.slane %v7069, 2
  %v7072 = vsel %vm5556, %v4196, %v6892
  %v7074 = vrot.slane %v7072, 3
  %v7075 = vunpack.i.l.s16 %v6895
  %v7076 = vunpack.i.h.s16 %v6895
  %v7077 = vunpack.i.l.s16 %v6899
  %v7078 = vunpack.i.h.s16 %v6899
  %v7079 = vunpack.i.l.s16 %v6902
  %v7080 = vunpack.i.h.s16 %v6902
  %v7081 = vunpack.i.l.s16 %v6905
  %v7082 = vunpack.i.l.s16 %v6908
  %v7083 = vunpack.i.h.s16 %v6908
  %v7084 = vunpack.i.l.s16 %v6912
  %v7085 = vunpack.i.h.s16 %v6912
  %v7086 = vunpack.i.l.s16 %v6915
  %v7087 = vunpack.i.h.s16 %v6915
  %v7088 = vunpack.i.l.s16 %v6918
  %v7089 = vunpack.i.l.s16 %v6921
  %v7090 = vunpack.i.h.s16 %v6921
  %v7091 = vunpack.i.l.s16 %v6925
  %v7092 = vunpack.i.h.s16 %v6925
  %v7093 = vunpack.i.l.s16 %v6928
  %v7094 = vunpack.i.h.s16 %v6928
  %v7095 = vunpack.i.l.s16 %v6931
  %v7096 = vunpack.i.l.s16 %v6934
  %v7097 = vunpack.i.h.s16 %v6934
  %v7098 = vunpack.i.l.s16 %v6938
  %v7099 = vunpack.i.h.s16 %v6938
  %v7100 = vunpack.i.l.s16 %v6941
  %v7101 = vunpack.i.h.s16 %v6941
  %v7102 = vunpack.i.l.s16 %v6944
  %v7103 = vunpack.i.l.s16 %v6947
  %v7104 = vunpack.i.h.s16 %v6947
  %v7105 = vunpack.i.l.s16 %v6951
  %v7106 = vunpack.i.h.s16 %v6951
  %v7107 = vunpack.i.l.s16 %v6954
  %v7108 = vunpack.i.h.s16 %v6954
  %v7109 = vunpack.i.l.s16 %v6957
  %v7110 = vunpack.i.l.s16 %v6960
  %v7111 = vunpack.i.h.s16 %v6960
  %v7112 = vunpack.i.l.s16 %v6964
  %v7113 = vunpack.i.h.s16 %v6964
  %v7114 = vunpack.i.l.s16 %v6967
  %v7115 = vunpack.i.h.s16 %v6967
  %v7116 = vunpack.i.l.s16 %v6970
  %v7117 = vunpack.i.l.s16 %v6973
  %v7118 = vunpack.i.h.s16 %v6973
  %v7119 = vunpack.i.l.s16 %v6977
  %v7120 = vunpack.i.h.s16 %v6977
  %v7121 = vunpack.i.l.s16 %v6980
  %v7122 = vunpack.i.h.s16 %v6980
  %v7123 = vunpack.i.l.s16 %v6983
  %v7124 = vunpack.i.l.s16 %v6986
  %v7125 = vunpack.i.h.s16 %v6986
  %v7126 = vunpack.i.l.s16 %v6990
  %v7127 = vunpack.i.h.s16 %v6990
  %v7128 = vunpack.i.l.s16 %v6993
  %v7129 = vunpack.i.h.s16 %v6993
  %v7130 = vunpack.i.l.s16 %v6996
  %v7131 = vunpack.i.l.s16 %v6999
  %v7132 = vunpack.i.h.s16 %v6999
  %v7133 = vunpack.i.l.s16 %v7003
  %v7134 = vunpack.i.h.s16 %v7003
  %v7135 = vunpack.i.l.s16 %v7006
  %v7136 = vunpack.i.h.s16 %v7006
  %v7137 = vunpack.i.l.s16 %v7009
  %v7138 = vunpack.i.l.s16 %v7012
  %v7139 = vunpack.i.h.s16 %v7012
  %v7140 = vunpack.i.l.s16 %v7016
  %v7141 = vunpack.i.h.s16 %v7016
  %v7142 = vunpack.i.l.s16 %v7019
  %v7143 = vunpack.i.h.s16 %v7019
  %v7144 = vunpack.i.l.s16 %v7022
  %v7145 = vunpack.i.l.s16 %v7025
  %v7146 = vunpack.i.h.s16 %v7025
  %v7147 = vunpack.i.l.s16 %v7029
  %v7148 = vunpack.i.h.s16 %v7029
  %v7149 = vunpack.i.l.s16 %v7032
  %v7150 = vunpack.i.h.s16 %v7032
  %v7151 = vunpack.i.l.s16 %v7035
  %v7152 = vunpack.i.l.s16 %v7038
  %v7153 = vunpack.i.h.s16 %v7038
  %v7154 = vunpack.i.l.s16 %v7042
  %v7155 = vunpack.i.h.s16 %v7042
  %v7156 = vunpack.i.l.s16 %v7045
  %v7157 = vunpack.i.h.s16 %v7045
  %v7158 = vunpack.i.l.s16 %v7048
  %v7159 = vunpack.i.l.s16 %v7051
  %v7160 = vunpack.i.h.s16 %v7051
  %v7161 = vunpack.i.l.s16 %v7055
  %v7162 = vunpack.i.h.s16 %v7055
  %v7163 = vunpack.i.l.s16 %v7058
  %v7164 = vunpack.i.h.s16 %v7058
  %v7165 = vunpack.i.l.s16 %v7061
  %v7166 = vunpack.i.l.s16 %v7064
  %v7167 = vunpack.i.h.s16 %v7064
  %v7168 = vunpack.i.l.s16 %v7068
  %v7169 = vunpack.i.h.s16 %v7068
  %v7170 = vunpack.i.l.s16 %v7071
  %v7171 = vunpack.i.h.s16 %v7071
  %v7172 = vunpack.i.l.s16 %v7074
  %s7173 = scalar_lea.vmem %s3, 36
  %v7174 = vld [vmem:[%s7173] sm:$0xf]
  %v7175 = vld [vmem:[%s7173 + $0x4] sm:$0xf]
  %v7176 = vld [vmem:[%s7173 + $0x8] sm:$0xf]
  %v7177 = vpack.i.b16 %v7076, %v7075
  %v7178 = vpack.i.b16 %v7078, %v7077
  %v7179 = vpack.i.b16 %v7080, %v7079
  %v7180 = vpack.i.b16 %v7082, %v7081
  %v7181 = vpack.i.b16 %v7084, %v7083
  %v7182 = vpack.i.b16 %v7086, %v7085
  %v7183 = vpack.i.b16 %v7088, %v7087
  %v7184 = vpack.i.b16 %v7090, %v7089
  %v7185 = vpack.i.b16 %v7092, %v7091
  %v7186 = vpack.i.b16 %v7094, %v7093
  %v7187 = vpack.i.b16 %v7096, %v7095
  %v7188 = vpack.i.b16 %v7098, %v7097
  %v7189 = vpack.i.b16 %v7100, %v7099
  %v7190 = vpack.i.b16 %v7102, %v7101
  %v7191 = vpack.i.b16 %v7104, %v7103
  %v7192 = vpack.i.b16 %v7106, %v7105
  %v7193 = vpack.i.b16 %v7108, %v7107
  %v7194 = vpack.i.b16 %v7110, %v7109
  %v7195 = vpack.i.b16 %v7112, %v7111
  %v7196 = vpack.i.b16 %v7114, %v7113
  %v7197 = vpack.i.b16 %v7116, %v7115
  %v7198 = vpack.i.b16 %v7118, %v7117
  %v7199 = vpack.i.b16 %v7120, %v7119
  %v7200 = vpack.i.b16 %v7122, %v7121
  %v7201 = vpack.i.b16 %v7124, %v7123
  %v7202 = vpack.i.b16 %v7126, %v7125
  %v7203 = vpack.i.b16 %v7128, %v7127
  %v7204 = vpack.i.b16 %v7130, %v7129
  %v7205 = vpack.i.b16 %v7132, %v7131
  %v7206 = vpack.i.b16 %v7134, %v7133
  %v7207 = vpack.i.b16 %v7136, %v7135
  %v7208 = vpack.i.b16 %v7138, %v7137
  %v7209 = vpack.i.b16 %v7140, %v7139
  %v7210 = vpack.i.b16 %v7142, %v7141
  %v7211 = vpack.i.b16 %v7144, %v7143
  %v7212 = vpack.i.b16 %v7146, %v7145
  %v7213 = vpack.i.b16 %v7148, %v7147
  %v7214 = vpack.i.b16 %v7150, %v7149
  %v7215 = vpack.i.b16 %v7152, %v7151
  %v7216 = vpack.i.b16 %v7154, %v7153
  %v7217 = vpack.i.b16 %v7156, %v7155
  %v7218 = vpack.i.b16 %v7158, %v7157
  %v7219 = vpack.i.b16 %v7160, %v7159
  %v7220 = vpack.i.b16 %v7162, %v7161
  %v7221 = vpack.i.b16 %v7164, %v7163
  %v7222 = vpack.i.b16 %v7166, %v7165
  %v7223 = vpack.i.b16 %v7168, %v7167
  %v7224 = vpack.i.b16 %v7170, %v7169
  %v7225 = vpack.i.b16 %v7172, %v7171
  %7227 = vst [vmem:[#allocation1] ss:$9 sm:$0xff] %v7177
  %s7229 = scalar_lea.vmem [#allocation1], 1
  %7230 = vst [vmem:[%s7229] ss:$9 sm:$0xff] %v7178
  %s7232 = scalar_lea.vmem [#allocation1], 2
  %7233 = vst [vmem:[%s7232] ss:$9 sm:$0xff] %v7179
  %s7235 = scalar_lea.vmem [#allocation1], 3
  %7236 = vst [vmem:[%s7235] ss:$9 sm:$0xff] %v7180
  %s7238 = scalar_lea.vmem [#allocation1], 4
  %7239 = vst [vmem:[%s7238] ss:$9 sm:$0xff] %v7181
  %s7241 = scalar_lea.vmem [#allocation1], 5
  %7242 = vst [vmem:[%s7241] ss:$9 sm:$0xff] %v7182
  %s7244 = scalar_lea.vmem [#allocation1], 6
  %7245 = vst [vmem:[%s7244] ss:$9 sm:$0xff] %v7183
  %s7247 = scalar_lea.vmem [#allocation1], 7
  %7248 = vst [vmem:[%s7247] ss:$9 sm:$0xff] %v7184
  %v7249 = vld [vmem:[#allocation1] sm:$0xff]
  %7251 = vst [vmem:[#allocation1] ss:$9 sm:$0xff] %v7185
  %7253 = vst [vmem:[%s7229] ss:$9 sm:$0xff] %v7186
  %7255 = vst [vmem:[%s7232] ss:$9 sm:$0xff] %v7187
  %7257 = vst [vmem:[%s7235] ss:$9 sm:$0xff] %v7188
  %7259 = vst [vmem:[%s7238] ss:$9 sm:$0xff] %v7189
  %7261 = vst [vmem:[%s7241] ss:$9 sm:$0xff] %v7190
  %7263 = vst [vmem:[%s7244] ss:$9 sm:$0xff] %v7191
  %7265 = vst [vmem:[%s7247] ss:$9 sm:$0xff] %v7192
  %v7266 = vld [vmem:[#allocation1] sm:$0xff]
  %7268 = vst [vmem:[#allocation1] ss:$9 sm:$0xff] %v7193
  %7270 = vst [vmem:[%s7229] ss:$9 sm:$0xff] %v7194
  %7272 = vst [vmem:[%s7232] ss:$9 sm:$0xff] %v7195
  %7274 = vst [vmem:[%s7235] ss:$9 sm:$0xff] %v7196
  %7276 = vst [vmem:[%s7238] ss:$9 sm:$0xff] %v7197
  %7278 = vst [vmem:[%s7241] ss:$9 sm:$0xff] %v7198
  %7280 = vst [vmem:[%s7244] ss:$9 sm:$0xff] %v7199
  %7282 = vst [vmem:[%s7247] ss:$9 sm:$0xff] %v7200
  %v7283 = vld [vmem:[#allocation1] sm:$0xff]
  %7285 = vst [vmem:[#allocation1] ss:$9 sm:$0xff] %v7201
  %7287 = vst [vmem:[%s7229] ss:$9 sm:$0xff] %v7202
  %7289 = vst [vmem:[%s7232] ss:$9 sm:$0xff] %v7203
  %7291 = vst [vmem:[%s7235] ss:$9 sm:$0xff] %v7204
  %7293 = vst [vmem:[%s7238] ss:$9 sm:$0xff] %v7205
  %7295 = vst [vmem:[%s7241] ss:$9 sm:$0xff] %v7206
  %7297 = vst [vmem:[%s7244] ss:$9 sm:$0xff] %v7207
  %7299 = vst [vmem:[%s7247] ss:$9 sm:$0xff] %v7208
  %v7300 = vld [vmem:[#allocation1] sm:$0xff]
  %7302 = vst [vmem:[#allocation1] ss:$9 sm:$0xff] %v7209
  %7304 = vst [vmem:[%s7229] ss:$9 sm:$0xff] %v7210
  %7306 = vst [vmem:[%s7232] ss:$9 sm:$0xff] %v7211
  %7308 = vst [vmem:[%s7235] ss:$9 sm:$0xff] %v7212
  %7310 = vst [vmem:[%s7238] ss:$9 sm:$0xff] %v7213
  %7312 = vst [vmem:[%s7241] ss:$9 sm:$0xff] %v7214
  %7314 = vst [vmem:[%s7244] ss:$9 sm:$0xff] %v7215
  %7316 = vst [vmem:[%s7247] ss:$9 sm:$0xff] %v7216
  %v7317 = vld [vmem:[#allocation1] sm:$0xff]
  %7319 = vst [vmem:[#allocation1] ss:$9 sm:$0xff] %v7217
  %7321 = vst [vmem:[%s7229] ss:$9 sm:$0xff] %v7218
  %7323 = vst [vmem:[%s7232] ss:$9 sm:$0xff] %v7219
  %7325 = vst [vmem:[%s7235] ss:$9 sm:$0xff] %v7220
  %7327 = vst [vmem:[%s7238] ss:$9 sm:$0xff] %v7221
  %7329 = vst [vmem:[%s7241] ss:$9 sm:$0xff] %v7222
  %7331 = vst [vmem:[%s7244] ss:$9 sm:$0xff] %v7223
  %7333 = vst [vmem:[%s7247] ss:$9 sm:$0xff] %v7224
  %v7334 = vld [vmem:[#allocation1] sm:$0xff]
  %7336 = vst [vmem:[#allocation1] ss:$9 sm:$0xff] %v7225
  %v7337 = vld [vmem:[#allocation1] sm:$0xff]
  %v7341 = vunpack.c.l.b16 %v7174
  %v7342 = vunpack.c.l.b16 %v7175
  %v7343 = vunpack.c.l.b16 %v7176
  %v7344 = vpack.c.b16 %v7342, %v7341
  %v7345 = vpack.c.b16 %v7343, %v7343
  %v7347 = vsel %vm6312, %v7249, 0
  %v7349 = vsel %vm6312, %v7266, 0
  %v7351 = vsel %vm6312, %v7283, 0
  %v7353 = vsel %vm6312, %v7300, 0
  %v7355 = vsel %vm6312, %v7317, 0
  %v7357 = vsel %vm6312, %v7334, 0
  %v7359 = vsel %vm6312, %v7337, 0
  %v7362 = vsel %vm6327, %v7345, 0
  %7364 = vmatpush.bf16.msra.mxu0 0
  %7365 = vmatpush.bf16.msra.mxu0 0
  %7366 = vmatpush.bf16.msra.mxu0 0
  %7367 = vmatpush.bf16.msra.mxu0 0
  %7368 = vmatpush.bf16.msra.mxu0 0
  %7369 = vmatpush.bf16.msra.mxu0 0
  %7370 = vmatpush.bf16.msra.mxu0 %v7362
  %7371 = vmatpush.bf16.msra.mxu0 %v7344
  %7372 = vmatmul.bf16.gmra.mxu0 %v7347
  %v7373 = vpop.f32.mrf.mxu0
  %v7374 = vadd.f32 0.0, %v7373
  %v7375 = vpop.f32.mrf.mxu0
  %v7376 = vadd.f32 0.0, %v7375
  %7377 = vmatmul.bf16.gmra.mxu0 %v7349
  %v7378 = vpop.f32.mrf.mxu0
  %v7379 = vadd.f32 0.0, %v7378
  %v7380 = vpop.f32.mrf.mxu0
  %v7381 = vadd.f32 0.0, %v7380
  %7382 = vmatmul.bf16.gmra.mxu0 %v7351
  %v7383 = vpop.f32.mrf.mxu0
  %v7384 = vadd.f32 0.0, %v7383
  %v7385 = vpop.f32.mrf.mxu0
  %v7386 = vadd.f32 0.0, %v7385
  %7387 = vmatmul.bf16.gmra.mxu0 %v7353
  %v7388 = vpop.f32.mrf.mxu0
  %v7389 = vadd.f32 0.0, %v7388
  %v7390 = vpop.f32.mrf.mxu0
  %v7391 = vadd.f32 0.0, %v7390
  %7392 = vmatmul.bf16.gmra.mxu0 %v7355
  %v7393 = vpop.f32.mrf.mxu0
  %v7394 = vadd.f32 0.0, %v7393
  %v7395 = vpop.f32.mrf.mxu0
  %v7396 = vadd.f32 0.0, %v7395
  %7397 = vmatmul.bf16.gmra.mxu0 %v7357
  %v7398 = vpop.f32.mrf.mxu0
  %v7399 = vadd.f32 0.0, %v7398
  %v7400 = vpop.f32.mrf.mxu0
  %v7401 = vadd.f32 0.0, %v7400
  %7402 = vmatmul.bf16.gmra.mxu0 %v7359
  %v7403 = vpop.f32.mrf.mxu0
  %v7404 = vadd.f32 0.0, %v7403
  %v7405 = vpop.f32.mrf.mxu0
  %7406 = vdwg.mxu0
  %v7407 = vadd.f32 %v6852, %v7374
  %v7408 = vadd.f32 %v6853, %v7376
  %v7409 = vadd.f32 %v6854, %v7379
  %v7410 = vadd.f32 %v6855, %v7381
  %v7411 = vadd.f32 %v6856, %v7384
  %v7412 = vadd.f32 %v6857, %v7386
  %v7413 = vadd.f32 %v6858, %v7389
  %v7414 = vadd.f32 %v6859, %v7391
  %v7415 = vadd.f32 %v6860, %v7394
  %v7416 = vadd.f32 %v6861, %v7396
  %v7417 = vadd.f32 %v6862, %v7399
  %v7418 = vadd.f32 %v6863, %v7401
  %v7419 = vadd.f32 %v6864, %v7404
  %v7434 = vrot.slane %v5502, 3
  %v7435 = vrot.slane %v5503, 3
  %v7436 = vrot.slane %v5504, 3
  %v7437 = vrot.slane %v5505, 3
  %v7438 = vrot.slane %v5506, 3
  %v7439 = vrot.slane %v5507, 3
  %v7440 = vrot.slane %v5508, 3
  %v7441 = vrot.slane %v5509, 3
  %v7442 = vrot.slane %v5510, 3
  %v7443 = vrot.slane %v5511, 3
  %v7444 = vrot.slane %v5512, 3
  %v7445 = vrot.slane %v5513, 3
  %v7446 = vrot.slane %v5514, 3
  %v7447 = vrot.slane %v5515, 3
  %v7450 = vsel %vm273, %v5502, %v7434
  %v7452 = vsel %vm5548, %v5502, %v7434
  %v7454 = vrot.slane %v7452, 1
  %v7455 = vsel %vm5552, %v5502, %v7434
  %v7457 = vrot.slane %v7455, 2
  %v7458 = vsel %vm5556, %v5502, %v7434
  %v7460 = vrot.slane %v7458, 3
  %v7463 = vsel %vm273, %v5503, %v7435
  %v7465 = vsel %vm5548, %v5503, %v7435
  %v7467 = vrot.slane %v7465, 1
  %v7468 = vsel %vm5552, %v5503, %v7435
  %v7470 = vrot.slane %v7468, 2
  %v7471 = vsel %vm5556, %v5503, %v7435
  %v7473 = vrot.slane %v7471, 3
  %v7476 = vsel %vm273, %v5504, %v7436
  %v7478 = vsel %vm5548, %v5504, %v7436
  %v7480 = vrot.slane %v7478, 1
  %v7481 = vsel %vm5552, %v5504, %v7436
  %v7483 = vrot.slane %v7481, 2
  %v7484 = vsel %vm5556, %v5504, %v7436
  %v7486 = vrot.slane %v7484, 3
  %v7489 = vsel %vm273, %v5505, %v7437
  %v7491 = vsel %vm5548, %v5505, %v7437
  %v7493 = vrot.slane %v7491, 1
  %v7494 = vsel %vm5552, %v5505, %v7437
  %v7496 = vrot.slane %v7494, 2
  %v7497 = vsel %vm5556, %v5505, %v7437
  %v7499 = vrot.slane %v7497, 3
  %v7502 = vsel %vm273, %v5506, %v7438
  %v7504 = vsel %vm5548, %v5506, %v7438
  %v7506 = vrot.slane %v7504, 1
  %v7507 = vsel %vm5552, %v5506, %v7438
  %v7509 = vrot.slane %v7507, 2
  %v7510 = vsel %vm5556, %v5506, %v7438
  %v7512 = vrot.slane %v7510, 3
  %v7515 = vsel %vm273, %v5507, %v7439
  %v7517 = vsel %vm5548, %v5507, %v7439
  %v7519 = vrot.slane %v7517, 1
  %v7520 = vsel %vm5552, %v5507, %v7439
  %v7522 = vrot.slane %v7520, 2
  %v7523 = vsel %vm5556, %v5507, %v7439
  %v7525 = vrot.slane %v7523, 3
  %v7528 = vsel %vm273, %v5508, %v7440
  %v7530 = vsel %vm5548, %v5508, %v7440
  %v7532 = vrot.slane %v7530, 1
  %v7533 = vsel %vm5552, %v5508, %v7440
  %v7535 = vrot.slane %v7533, 2
  %v7536 = vsel %vm5556, %v5508, %v7440
  %v7538 = vrot.slane %v7536, 3
  %v7541 = vsel %vm273, %v5509, %v7441
  %v7543 = vsel %vm5548, %v5509, %v7441
  %v7545 = vrot.slane %v7543, 1
  %v7546 = vsel %vm5552, %v5509, %v7441
  %v7548 = vrot.slane %v7546, 2
  %v7549 = vsel %vm5556, %v5509, %v7441
  %v7551 = vrot.slane %v7549, 3
  %v7554 = vsel %vm273, %v5510, %v7442
  %v7556 = vsel %vm5548, %v5510, %v7442
  %v7558 = vrot.slane %v7556, 1
  %v7559 = vsel %vm5552, %v5510, %v7442
  %v7561 = vrot.slane %v7559, 2
  %v7562 = vsel %vm5556, %v5510, %v7442
  %v7564 = vrot.slane %v7562, 3
  %v7567 = vsel %vm273, %v5511, %v7443
  %v7569 = vsel %vm5548, %v5511, %v7443
  %v7571 = vrot.slane %v7569, 1
  %v7572 = vsel %vm5552, %v5511, %v7443
  %v7574 = vrot.slane %v7572, 2
  %v7575 = vsel %vm5556, %v5511, %v7443
  %v7577 = vrot.slane %v7575, 3
  %v7580 = vsel %vm273, %v5512, %v7444
  %v7582 = vsel %vm5548, %v5512, %v7444
  %v7584 = vrot.slane %v7582, 1
  %v7585 = vsel %vm5552, %v5512, %v7444
  %v7587 = vrot.slane %v7585, 2
  %v7588 = vsel %vm5556, %v5512, %v7444
  %v7590 = vrot.slane %v7588, 3
  %v7593 = vsel %vm273, %v5513, %v7445
  %v7595 = vsel %vm5548, %v5513, %v7445
  %v7597 = vrot.slane %v7595, 1
  %v7598 = vsel %vm5552, %v5513, %v7445
  %v7600 = vrot.slane %v7598, 2
  %v7601 = vsel %vm5556, %v5513, %v7445
  %v7603 = vrot.slane %v7601, 3
  %v7606 = vsel %vm273, %v5514, %v7446
  %v7608 = vsel %vm5548, %v5514, %v7446
  %v7610 = vrot.slane %v7608, 1
  %v7611 = vsel %vm5552, %v5514, %v7446
  %v7613 = vrot.slane %v7611, 2
  %v7614 = vsel %vm5556, %v5514, %v7446
  %v7616 = vrot.slane %v7614, 3
  %v7619 = vsel %vm273, %v5515, %v7447
  %v7621 = vsel %vm5548, %v5515, %v7447
  %v7623 = vrot.slane %v7621, 1
  %v7624 = vsel %vm5552, %v5515, %v7447
  %v7626 = vrot.slane %v7624, 2
  %v7627 = vsel %vm5556, %v5515, %v7447
  %v7629 = vrot.slane %v7627, 3
  %v7630 = vunpack.i.l.s16 %v7450
  %v7631 = vunpack.i.h.s16 %v7450
  %v7632 = vunpack.i.l.s16 %v7454
  %v7633 = vunpack.i.h.s16 %v7454
  %v7634 = vunpack.i.l.s16 %v7457
  %v7635 = vunpack.i.h.s16 %v7457
  %v7636 = vunpack.i.l.s16 %v7460
  %v7637 = vunpack.i.l.s16 %v7463
  %v7638 = vunpack.i.h.s16 %v7463
  %v7639 = vunpack.i.l.s16 %v7467
  %v7640 = vunpack.i.h.s16 %v7467
  %v7641 = vunpack.i.l.s16 %v7470
  %v7642 = vunpack.i.h.s16 %v7470
  %v7643 = vunpack.i.l.s16 %v7473
  %v7644 = vunpack.i.l.s16 %v7476
  %v7645 = vunpack.i.h.s16 %v7476
  %v7646 = vunpack.i.l.s16 %v7480
  %v7647 = vunpack.i.h.s16 %v7480
  %v7648 = vunpack.i.l.s16 %v7483
  %v7649 = vunpack.i.h.s16 %v7483
  %v7650 = vunpack.i.l.s16 %v7486
  %v7651 = vunpack.i.l.s16 %v7489
  %v7652 = vunpack.i.h.s16 %v7489
  %v7653 = vunpack.i.l.s16 %v7493
  %v7654 = vunpack.i.h.s16 %v7493
  %v7655 = vunpack.i.l.s16 %v7496
  %v7656 = vunpack.i.h.s16 %v7496
  %v7657 = vunpack.i.l.s16 %v7499
  %v7658 = vunpack.i.l.s16 %v7502
  %v7659 = vunpack.i.h.s16 %v7502
  %v7660 = vunpack.i.l.s16 %v7506
  %v7661 = vunpack.i.h.s16 %v7506
  %v7662 = vunpack.i.l.s16 %v7509
  %v7663 = vunpack.i.h.s16 %v7509
  %v7664 = vunpack.i.l.s16 %v7512
  %v7665 = vunpack.i.l.s16 %v7515
  %v7666 = vunpack.i.h.s16 %v7515
  %v7667 = vunpack.i.l.s16 %v7519
  %v7668 = vunpack.i.h.s16 %v7519
  %v7669 = vunpack.i.l.s16 %v7522
  %v7670 = vunpack.i.h.s16 %v7522
  %v7671 = vunpack.i.l.s16 %v7525
  %v7672 = vunpack.i.l.s16 %v7528
  %v7673 = vunpack.i.h.s16 %v7528
  %v7674 = vunpack.i.l.s16 %v7532
  %v7675 = vunpack.i.h.s16 %v7532
  %v7676 = vunpack.i.l.s16 %v7535
  %v7677 = vunpack.i.h.s16 %v7535
  %v7678 = vunpack.i.l.s16 %v7538
  %v7679 = vunpack.i.l.s16 %v7541
  %v7680 = vunpack.i.h.s16 %v7541
  %v7681 = vunpack.i.l.s16 %v7545
  %v7682 = vunpack.i.h.s16 %v7545
  %v7683 = vunpack.i.l.s16 %v7548
  %v7684 = vunpack.i.h.s16 %v7548
  %v7685 = vunpack.i.l.s16 %v7551
  %v7686 = vunpack.i.l.s16 %v7554
  %v7687 = vunpack.i.h.s16 %v7554
  %v7688 = vunpack.i.l.s16 %v7558
  %v7689 = vunpack.i.h.s16 %v7558
  %v7690 = vunpack.i.l.s16 %v7561
  %v7691 = vunpack.i.h.s16 %v7561
  %v7692 = vunpack.i.l.s16 %v7564
  %v7693 = vunpack.i.l.s16 %v7567
  %v7694 = vunpack.i.h.s16 %v7567
  %v7695 = vunpack.i.l.s16 %v7571
  %v7696 = vunpack.i.h.s16 %v7571
  %v7697 = vunpack.i.l.s16 %v7574
  %v7698 = vunpack.i.h.s16 %v7574
  %v7699 = vunpack.i.l.s16 %v7577
  %v7700 = vunpack.i.l.s16 %v7580
  %v7701 = vunpack.i.h.s16 %v7580
  %v7702 = vunpack.i.l.s16 %v7584
  %v7703 = vunpack.i.h.s16 %v7584
  %v7704 = vunpack.i.l.s16 %v7587
  %v7705 = vunpack.i.h.s16 %v7587
  %v7706 = vunpack.i.l.s16 %v7590
  %v7707 = vunpack.i.l.s16 %v7593
  %v7708 = vunpack.i.h.s16 %v7593
  %v7709 = vunpack.i.l.s16 %v7597
  %v7710 = vunpack.i.h.s16 %v7597
  %v7711 = vunpack.i.l.s16 %v7600
  %v7712 = vunpack.i.h.s16 %v7600
  %v7713 = vunpack.i.l.s16 %v7603
  %v7714 = vunpack.i.l.s16 %v7606
  %v7715 = vunpack.i.h.s16 %v7606
  %v7716 = vunpack.i.l.s16 %v7610
  %v7717 = vunpack.i.h.s16 %v7610
  %v7718 = vunpack.i.l.s16 %v7613
  %v7719 = vunpack.i.h.s16 %v7613
  %v7720 = vunpack.i.l.s16 %v7616
  %v7721 = vunpack.i.l.s16 %v7619
  %v7722 = vunpack.i.h.s16 %v7619
  %v7723 = vunpack.i.l.s16 %v7623
  %v7724 = vunpack.i.h.s16 %v7623
  %v7725 = vunpack.i.l.s16 %v7626
  %v7726 = vunpack.i.h.s16 %v7626
  %v7727 = vunpack.i.l.s16 %v7629
  %s7728 = scalar_lea.vmem %s3, 48
  %v7729 = vld [vmem:[%s7728] sm:$0xf]
  %v7730 = vld [vmem:[%s7728 + $0x4] sm:$0xf]
  %v7731 = vld [vmem:[%s7728 + $0x8] sm:$0xf]
  %v7732 = vpack.i.b16 %v7631, %v7630
  %v7733 = vpack.i.b16 %v7633, %v7632
  %v7734 = vpack.i.b16 %v7635, %v7634
  %v7735 = vpack.i.b16 %v7637, %v7636
  %v7736 = vpack.i.b16 %v7639, %v7638
  %v7737 = vpack.i.b16 %v7641, %v7640
  %v7738 = vpack.i.b16 %v7643, %v7642
  %v7739 = vpack.i.b16 %v7645, %v7644
  %v7740 = vpack.i.b16 %v7647, %v7646
  %v7741 = vpack.i.b16 %v7649, %v7648
  %v7742 = vpack.i.b16 %v7651, %v7650
  %v7743 = vpack.i.b16 %v7653, %v7652
  %v7744 = vpack.i.b16 %v7655, %v7654
  %v7745 = vpack.i.b16 %v7657, %v7656
  %v7746 = vpack.i.b16 %v7659, %v7658
  %v7747 = vpack.i.b16 %v7661, %v7660
  %v7748 = vpack.i.b16 %v7663, %v7662
  %v7749 = vpack.i.b16 %v7665, %v7664
  %v7750 = vpack.i.b16 %v7667, %v7666
  %v7751 = vpack.i.b16 %v7669, %v7668
  %v7752 = vpack.i.b16 %v7671, %v7670
  %v7753 = vpack.i.b16 %v7673, %v7672
  %v7754 = vpack.i.b16 %v7675, %v7674
  %v7755 = vpack.i.b16 %v7677, %v7676
  %v7756 = vpack.i.b16 %v7679, %v7678
  %v7757 = vpack.i.b16 %v7681, %v7680
  %v7758 = vpack.i.b16 %v7683, %v7682
  %v7759 = vpack.i.b16 %v7685, %v7684
  %v7760 = vpack.i.b16 %v7687, %v7686
  %v7761 = vpack.i.b16 %v7689, %v7688
  %v7762 = vpack.i.b16 %v7691, %v7690
  %v7763 = vpack.i.b16 %v7693, %v7692
  %v7764 = vpack.i.b16 %v7695, %v7694
  %v7765 = vpack.i.b16 %v7697, %v7696
  %v7766 = vpack.i.b16 %v7699, %v7698
  %v7767 = vpack.i.b16 %v7701, %v7700
  %v7768 = vpack.i.b16 %v7703, %v7702
  %v7769 = vpack.i.b16 %v7705, %v7704
  %v7770 = vpack.i.b16 %v7707, %v7706
  %v7771 = vpack.i.b16 %v7709, %v7708
  %v7772 = vpack.i.b16 %v7711, %v7710
  %v7773 = vpack.i.b16 %v7713, %v7712
  %v7774 = vpack.i.b16 %v7715, %v7714
  %v7775 = vpack.i.b16 %v7717, %v7716
  %v7776 = vpack.i.b16 %v7719, %v7718
  %v7777 = vpack.i.b16 %v7721, %v7720
  %v7778 = vpack.i.b16 %v7723, %v7722
  %v7779 = vpack.i.b16 %v7725, %v7724
  %v7780 = vpack.i.b16 %v7727, %v7726
  %7782 = vst [vmem:[#allocation1] ss:$9 sm:$0xff] %v7732
  %s7784 = scalar_lea.vmem [#allocation1], 1
  %7785 = vst [vmem:[%s7784] ss:$9 sm:$0xff] %v7733
  %s7787 = scalar_lea.vmem [#allocation1], 2
  %7788 = vst [vmem:[%s7787] ss:$9 sm:$0xff] %v7734
  %s7790 = scalar_lea.vmem [#allocation1], 3
  %7791 = vst [vmem:[%s7790] ss:$9 sm:$0xff] %v7735
  %s7793 = scalar_lea.vmem [#allocation1], 4
  %7794 = vst [vmem:[%s7793] ss:$9 sm:$0xff] %v7736
  %s7796 = scalar_lea.vmem [#allocation1], 5
  %7797 = vst [vmem:[%s7796] ss:$9 sm:$0xff] %v7737
  %s7799 = scalar_lea.vmem [#allocation1], 6
  %7800 = vst [vmem:[%s7799] ss:$9 sm:$0xff] %v7738
  %s7802 = scalar_lea.vmem [#allocation1], 7
  %7803 = vst [vmem:[%s7802] ss:$9 sm:$0xff] %v7739
  %v7804 = vld [vmem:[#allocation1] sm:$0xff]
  %7806 = vst [vmem:[#allocation1] ss:$9 sm:$0xff] %v7740
  %7808 = vst [vmem:[%s7784] ss:$9 sm:$0xff] %v7741
  %7810 = vst [vmem:[%s7787] ss:$9 sm:$0xff] %v7742
  %7812 = vst [vmem:[%s7790] ss:$9 sm:$0xff] %v7743
  %7814 = vst [vmem:[%s7793] ss:$9 sm:$0xff] %v7744
  %7816 = vst [vmem:[%s7796] ss:$9 sm:$0xff] %v7745
  %7818 = vst [vmem:[%s7799] ss:$9 sm:$0xff] %v7746
  %7820 = vst [vmem:[%s7802] ss:$9 sm:$0xff] %v7747
  %v7821 = vld [vmem:[#allocation1] sm:$0xff]
  %7823 = vst [vmem:[#allocation1] ss:$9 sm:$0xff] %v7748
  %7825 = vst [vmem:[%s7784] ss:$9 sm:$0xff] %v7749
  %7827 = vst [vmem:[%s7787] ss:$9 sm:$0xff] %v7750
  %7829 = vst [vmem:[%s7790] ss:$9 sm:$0xff] %v7751
  %7831 = vst [vmem:[%s7793] ss:$9 sm:$0xff] %v7752
  %7833 = vst [vmem:[%s7796] ss:$9 sm:$0xff] %v7753
  %7835 = vst [vmem:[%s7799] ss:$9 sm:$0xff] %v7754
  %7837 = vst [vmem:[%s7802] ss:$9 sm:$0xff] %v7755
  %v7838 = vld [vmem:[#allocation1] sm:$0xff]
  %7840 = vst [vmem:[#allocation1] ss:$9 sm:$0xff] %v7756
  %7842 = vst [vmem:[%s7784] ss:$9 sm:$0xff] %v7757
  %7844 = vst [vmem:[%s7787] ss:$9 sm:$0xff] %v7758
  %7846 = vst [vmem:[%s7790] ss:$9 sm:$0xff] %v7759
  %7848 = vst [vmem:[%s7793] ss:$9 sm:$0xff] %v7760
  %7850 = vst [vmem:[%s7796] ss:$9 sm:$0xff] %v7761
  %7852 = vst [vmem:[%s7799] ss:$9 sm:$0xff] %v7762
  %7854 = vst [vmem:[%s7802] ss:$9 sm:$0xff] %v7763
  %v7855 = vld [vmem:[#allocation1] sm:$0xff]
  %7857 = vst [vmem:[#allocation1] ss:$9 sm:$0xff] %v7764
  %7859 = vst [vmem:[%s7784] ss:$9 sm:$0xff] %v7765
  %7861 = vst [vmem:[%s7787] ss:$9 sm:$0xff] %v7766
  %7863 = vst [vmem:[%s7790] ss:$9 sm:$0xff] %v7767
  %7865 = vst [vmem:[%s7793] ss:$9 sm:$0xff] %v7768
  %7867 = vst [vmem:[%s7796] ss:$9 sm:$0xff] %v7769
  %7869 = vst [vmem:[%s7799] ss:$9 sm:$0xff] %v7770
  %7871 = vst [vmem:[%s7802] ss:$9 sm:$0xff] %v7771
  %v7872 = vld [vmem:[#allocation1] sm:$0xff]
  %7874 = vst [vmem:[#allocation1] ss:$9 sm:$0xff] %v7772
  %7876 = vst [vmem:[%s7784] ss:$9 sm:$0xff] %v7773
  %7878 = vst [vmem:[%s7787] ss:$9 sm:$0xff] %v7774
  %7880 = vst [vmem:[%s7790] ss:$9 sm:$0xff] %v7775
  %7882 = vst [vmem:[%s7793] ss:$9 sm:$0xff] %v7776
  %7884 = vst [vmem:[%s7796] ss:$9 sm:$0xff] %v7777
  %7886 = vst [vmem:[%s7799] ss:$9 sm:$0xff] %v7778
  %7888 = vst [vmem:[%s7802] ss:$9 sm:$0xff] %v7779
  %v7889 = vld [vmem:[#allocation1] sm:$0xff]
  %7891 = vst [vmem:[#allocation1] ss:$9 sm:$0xff] %v7780
  %v7892 = vld [vmem:[#allocation1] sm:$0xff]
  %v7896 = vunpack.c.l.b16 %v7729
  %v7897 = vunpack.c.l.b16 %v7730
  %v7898 = vunpack.c.l.b16 %v7731
  %v7899 = vpack.c.b16 %v7897, %v7896
  %v7900 = vpack.c.b16 %v7898, %v7898
  %v7902 = vsel %vm6312, %v7804, 0
  %v7904 = vsel %vm6312, %v7821, 0
  %v7906 = vsel %vm6312, %v7838, 0
  %v7908 = vsel %vm6312, %v7855, 0
  %v7910 = vsel %vm6312, %v7872, 0
  %v7912 = vsel %vm6312, %v7889, 0
  %v7914 = vsel %vm6312, %v7892, 0
  %v7917 = vsel %vm6327, %v7900, 0
  %7919 = vmatpush.bf16.msra.mxu0 0
  %7920 = vmatpush.bf16.msra.mxu0 0
  %7921 = vmatpush.bf16.msra.mxu0 0
  %7922 = vmatpush.bf16.msra.mxu0 0
  %7923 = vmatpush.bf16.msra.mxu0 0
  %7924 = vmatpush.bf16.msra.mxu0 0
  %7925 = vmatpush.bf16.msra.mxu0 %v7917
  %7926 = vmatpush.bf16.msra.mxu0 %v7899
  %7927 = vmatmul.bf16.gmra.mxu0 %v7902
  %v7928 = vpop.f32.mrf.mxu0
  %v7929 = vadd.f32 0.0, %v7928
  %v7930 = vpop.f32.mrf.mxu0
  %v7931 = vadd.f32 0.0, %v7930
  %7932 = vmatmul.bf16.gmra.mxu0 %v7904
  %v7933 = vpop.f32.mrf.mxu0
  %v7934 = vadd.f32 0.0, %v7933
  %v7935 = vpop.f32.mrf.mxu0
  %v7936 = vadd.f32 0.0, %v7935
  %7937 = vmatmul.bf16.gmra.mxu0 %v7906
  %v7938 = vpop.f32.mrf.mxu0
  %v7939 = vadd.f32 0.0, %v7938
  %v7940 = vpop.f32.mrf.mxu0
  %v7941 = vadd.f32 0.0, %v7940
  %7942 = vmatmul.bf16.gmra.mxu0 %v7908
  %v7943 = vpop.f32.mrf.mxu0
  %v7944 = vadd.f32 0.0, %v7943
  %v7945 = vpop.f32.mrf.mxu0
  %v7946 = vadd.f32 0.0, %v7945
  %7947 = vmatmul.bf16.gmra.mxu0 %v7910
  %v7948 = vpop.f32.mrf.mxu0
  %v7949 = vadd.f32 0.0, %v7948
  %v7950 = vpop.f32.mrf.mxu0
  %v7951 = vadd.f32 0.0, %v7950
  %7952 = vmatmul.bf16.gmra.mxu0 %v7912
  %v7953 = vpop.f32.mrf.mxu0
  %v7954 = vadd.f32 0.0, %v7953
  %v7955 = vpop.f32.mrf.mxu0
  %v7956 = vadd.f32 0.0, %v7955
  %7957 = vmatmul.bf16.gmra.mxu0 %v7914
  %v7958 = vpop.f32.mrf.mxu0
  %v7959 = vadd.f32 0.0, %v7958
  %v7960 = vpop.f32.mrf.mxu0
  %7961 = vdwg.mxu0
  %v7962 = vadd.f32 %v7407, %v7929
  %v7963 = vadd.f32 %v7408, %v7931
  %v7964 = vadd.f32 %v7409, %v7934
  %v7965 = vadd.f32 %v7410, %v7936
  %v7966 = vadd.f32 %v7411, %v7939
  %v7967 = vadd.f32 %v7412, %v7941
  %v7968 = vadd.f32 %v7413, %v7944
  %v7969 = vadd.f32 %v7414, %v7946
  %v7970 = vadd.f32 %v7415, %v7949
  %v7971 = vadd.f32 %v7416, %v7951
  %v7972 = vadd.f32 %v7417, %v7954
  %v7973 = vadd.f32 %v7418, %v7956
  %v7974 = vadd.f32 %v7419, %v7959
  %v7975 = vunpack.i.h.s16 %v6905
  %v7976 = vunpack.i.h.s16 %v6918
  %v7977 = vunpack.i.h.s16 %v6931
  %v7978 = vunpack.i.h.s16 %v6944
  %v7979 = vunpack.i.h.s16 %v6957
  %v7980 = vunpack.i.h.s16 %v6970
  %v7981 = vunpack.i.h.s16 %v6983
  %v7982 = vunpack.i.h.s16 %v6996
  %v7983 = vunpack.i.h.s16 %v7009
  %v7984 = vunpack.i.h.s16 %v7022
  %v7985 = vunpack.i.h.s16 %v7035
  %v7986 = vunpack.i.h.s16 %v7048
  %v7987 = vunpack.i.h.s16 %v7061
  %v7988 = vunpack.i.h.s16 %v7074
  %s7989 = scalar_lea.vmem %s3, 60
  %v7990 = vld [vmem:[%s7989] sm:$0xf]
  %v7991 = vld [vmem:[%s7989 + $0x4] sm:$0xf]
  %v7992 = vld [vmem:[%s7989 + $0x8] sm:$0xf]
  %v7993 = vpack.i.b16 %v7077, %v7076
  %v7994 = vpack.i.b16 %v7079, %v7078
  %v7995 = vpack.i.b16 %v7081, %v7080
  %v7996 = vpack.i.b16 %v7083, %v7975
  %v7997 = vpack.i.b16 %v7085, %v7084
  %v7998 = vpack.i.b16 %v7087, %v7086
  %v7999 = vpack.i.b16 %v7976, %v7088
  %v8000 = vpack.i.b16 %v7091, %v7090
  %v8001 = vpack.i.b16 %v7093, %v7092
  %v8002 = vpack.i.b16 %v7095, %v7094
  %v8003 = vpack.i.b16 %v7097, %v7977
  %v8004 = vpack.i.b16 %v7099, %v7098
  %v8005 = vpack.i.b16 %v7101, %v7100
  %v8006 = vpack.i.b16 %v7978, %v7102
  %v8007 = vpack.i.b16 %v7105, %v7104
  %v8008 = vpack.i.b16 %v7107, %v7106
  %v8009 = vpack.i.b16 %v7109, %v7108
  %v8010 = vpack.i.b16 %v7111, %v7979
  %v8011 = vpack.i.b16 %v7113, %v7112
  %v8012 = vpack.i.b16 %v7115, %v7114
  %v8013 = vpack.i.b16 %v7980, %v7116
  %v8014 = vpack.i.b16 %v7119, %v7118
  %v8015 = vpack.i.b16 %v7121, %v7120
  %v8016 = vpack.i.b16 %v7123, %v7122
  %v8017 = vpack.i.b16 %v7125, %v7981
  %v8018 = vpack.i.b16 %v7127, %v7126
  %v8019 = vpack.i.b16 %v7129, %v7128
  %v8020 = vpack.i.b16 %v7982, %v7130
  %v8021 = vpack.i.b16 %v7133, %v7132
  %v8022 = vpack.i.b16 %v7135, %v7134
  %v8023 = vpack.i.b16 %v7137, %v7136
  %v8024 = vpack.i.b16 %v7139, %v7983
  %v8025 = vpack.i.b16 %v7141, %v7140
  %v8026 = vpack.i.b16 %v7143, %v7142
  %v8027 = vpack.i.b16 %v7984, %v7144
  %v8028 = vpack.i.b16 %v7147, %v7146
  %v8029 = vpack.i.b16 %v7149, %v7148
  %v8030 = vpack.i.b16 %v7151, %v7150
  %v8031 = vpack.i.b16 %v7153, %v7985
  %v8032 = vpack.i.b16 %v7155, %v7154
  %v8033 = vpack.i.b16 %v7157, %v7156
  %v8034 = vpack.i.b16 %v7986, %v7158
  %v8035 = vpack.i.b16 %v7161, %v7160
  %v8036 = vpack.i.b16 %v7163, %v7162
  %v8037 = vpack.i.b16 %v7165, %v7164
  %v8038 = vpack.i.b16 %v7167, %v7987
  %v8039 = vpack.i.b16 %v7169, %v7168
  %v8040 = vpack.i.b16 %v7171, %v7170
  %v8041 = vpack.i.b16 %v7988, %v7172
  %8043 = vst [vmem:[#allocation1] ss:$9 sm:$0xff] %v7993
  %s8045 = scalar_lea.vmem [#allocation1], 1
  %8046 = vst [vmem:[%s8045] ss:$9 sm:$0xff] %v7994
  %s8048 = scalar_lea.vmem [#allocation1], 2
  %8049 = vst [vmem:[%s8048] ss:$9 sm:$0xff] %v7995
  %s8051 = scalar_lea.vmem [#allocation1], 3
  %8052 = vst [vmem:[%s8051] ss:$9 sm:$0xff] %v7996
  %s8054 = scalar_lea.vmem [#allocation1], 4
  %8055 = vst [vmem:[%s8054] ss:$9 sm:$0xff] %v7997
  %s8057 = scalar_lea.vmem [#allocation1], 5
  %8058 = vst [vmem:[%s8057] ss:$9 sm:$0xff] %v7998
  %s8060 = scalar_lea.vmem [#allocation1], 6
  %8061 = vst [vmem:[%s8060] ss:$9 sm:$0xff] %v7999
  %s8063 = scalar_lea.vmem [#allocation1], 7
  %8064 = vst [vmem:[%s8063] ss:$9 sm:$0xff] %v8000
  %v8065 = vld [vmem:[#allocation1] sm:$0xff]
  %8067 = vst [vmem:[#allocation1] ss:$9 sm:$0xff] %v8001
  %8069 = vst [vmem:[%s8045] ss:$9 sm:$0xff] %v8002
  %8071 = vst [vmem:[%s8048] ss:$9 sm:$0xff] %v8003
  %8073 = vst [vmem:[%s8051] ss:$9 sm:$0xff] %v8004
  %8075 = vst [vmem:[%s8054] ss:$9 sm:$0xff] %v8005
  %8077 = vst [vmem:[%s8057] ss:$9 sm:$0xff] %v8006
  %8079 = vst [vmem:[%s8060] ss:$9 sm:$0xff] %v8007
  %8081 = vst [vmem:[%s8063] ss:$9 sm:$0xff] %v8008
  %v8082 = vld [vmem:[#allocation1] sm:$0xff]
  %8084 = vst [vmem:[#allocation1] ss:$9 sm:$0xff] %v8009
  %8086 = vst [vmem:[%s8045] ss:$9 sm:$0xff] %v8010
  %8088 = vst [vmem:[%s8048] ss:$9 sm:$0xff] %v8011
  %8090 = vst [vmem:[%s8051] ss:$9 sm:$0xff] %v8012
  %8092 = vst [vmem:[%s8054] ss:$9 sm:$0xff] %v8013
  %8094 = vst [vmem:[%s8057] ss:$9 sm:$0xff] %v8014
  %8096 = vst [vmem:[%s8060] ss:$9 sm:$0xff] %v8015
  %8098 = vst [vmem:[%s8063] ss:$9 sm:$0xff] %v8016
  %v8099 = vld [vmem:[#allocation1] sm:$0xff]
  %8101 = vst [vmem:[#allocation1] ss:$9 sm:$0xff] %v8017
  %8103 = vst [vmem:[%s8045] ss:$9 sm:$0xff] %v8018
  %8105 = vst [vmem:[%s8048] ss:$9 sm:$0xff] %v8019
  %8107 = vst [vmem:[%s8051] ss:$9 sm:$0xff] %v8020
  %8109 = vst [vmem:[%s8054] ss:$9 sm:$0xff] %v8021
  %8111 = vst [vmem:[%s8057] ss:$9 sm:$0xff] %v8022
  %8113 = vst [vmem:[%s8060] ss:$9 sm:$0xff] %v8023
  %8115 = vst [vmem:[%s8063] ss:$9 sm:$0xff] %v8024
  %v8116 = vld [vmem:[#allocation1] sm:$0xff]
  %8118 = vst [vmem:[#allocation1] ss:$9 sm:$0xff] %v8025
  %8120 = vst [vmem:[%s8045] ss:$9 sm:$0xff] %v8026
  %8122 = vst [vmem:[%s8048] ss:$9 sm:$0xff] %v8027
  %8124 = vst [vmem:[%s8051] ss:$9 sm:$0xff] %v8028
  %8126 = vst [vmem:[%s8054] ss:$9 sm:$0xff] %v8029
  %8128 = vst [vmem:[%s8057] ss:$9 sm:$0xff] %v8030
  %8130 = vst [vmem:[%s8060] ss:$9 sm:$0xff] %v8031
  %8132 = vst [vmem:[%s8063] ss:$9 sm:$0xff] %v8032
  %v8133 = vld [vmem:[#allocation1] sm:$0xff]
  %8135 = vst [vmem:[#allocation1] ss:$9 sm:$0xff] %v8033
  %8137 = vst [vmem:[%s8045] ss:$9 sm:$0xff] %v8034
  %8139 = vst [vmem:[%s8048] ss:$9 sm:$0xff] %v8035
  %8141 = vst [vmem:[%s8051] ss:$9 sm:$0xff] %v8036
  %8143 = vst [vmem:[%s8054] ss:$9 sm:$0xff] %v8037
  %8145 = vst [vmem:[%s8057] ss:$9 sm:$0xff] %v8038
  %8147 = vst [vmem:[%s8060] ss:$9 sm:$0xff] %v8039
  %8149 = vst [vmem:[%s8063] ss:$9 sm:$0xff] %v8040
  %v8150 = vld [vmem:[#allocation1] sm:$0xff]
  %8152 = vst [vmem:[#allocation1] ss:$9 sm:$0xff] %v8041
  %v8153 = vld [vmem:[#allocation1] sm:$0xff]
  %v8157 = vunpack.c.l.b16 %v7990
  %v8158 = vunpack.c.l.b16 %v7991
  %v8159 = vunpack.c.l.b16 %v7992
  %v8160 = vpack.c.b16 %v8158, %v8157
  %v8161 = vpack.c.b16 %v8159, %v8159
  %v8163 = vsel %vm6312, %v8065, 0
  %v8165 = vsel %vm6312, %v8082, 0
  %v8167 = vsel %vm6312, %v8099, 0
  %v8169 = vsel %vm6312, %v8116, 0
  %v8171 = vsel %vm6312, %v8133, 0
  %v8173 = vsel %vm6312, %v8150, 0
  %v8175 = vsel %vm6312, %v8153, 0
  %v8178 = vsel %vm6327, %v8161, 0
  %8180 = vmatpush.bf16.msra.mxu0 0
  %8181 = vmatpush.bf16.msra.mxu0 0
  %8182 = vmatpush.bf16.msra.mxu0 0
  %8183 = vmatpush.bf16.msra.mxu0 0
  %8184 = vmatpush.bf16.msra.mxu0 0
  %8185 = vmatpush.bf16.msra.mxu0 0
  %8186 = vmatpush.bf16.msra.mxu0 %v8178
  %8187 = vmatpush.bf16.msra.mxu0 %v8160
  %8188 = vmatmul.bf16.gmra.mxu0 %v8163
  %v8189 = vpop.f32.mrf.mxu0
  %v8190 = vadd.f32 0.0, %v8189
  %v8191 = vpop.f32.mrf.mxu0
  %v8192 = vadd.f32 0.0, %v8191
  %8193 = vmatmul.bf16.gmra.mxu0 %v8165
  %v8194 = vpop.f32.mrf.mxu0
  %v8195 = vadd.f32 0.0, %v8194
  %v8196 = vpop.f32.mrf.mxu0
  %v8197 = vadd.f32 0.0, %v8196
  %8198 = vmatmul.bf16.gmra.mxu0 %v8167
  %v8199 = vpop.f32.mrf.mxu0
  %v8200 = vadd.f32 0.0, %v8199
  %v8201 = vpop.f32.mrf.mxu0
  %v8202 = vadd.f32 0.0, %v8201
  %8203 = vmatmul.bf16.gmra.mxu0 %v8169
  %v8204 = vpop.f32.mrf.mxu0
  %v8205 = vadd.f32 0.0, %v8204
  %v8206 = vpop.f32.mrf.mxu0
  %v8207 = vadd.f32 0.0, %v8206
  %8208 = vmatmul.bf16.gmra.mxu0 %v8171
  %v8209 = vpop.f32.mrf.mxu0
  %v8210 = vadd.f32 0.0, %v8209
  %v8211 = vpop.f32.mrf.mxu0
  %v8212 = vadd.f32 0.0, %v8211
  %8213 = vmatmul.bf16.gmra.mxu0 %v8173
  %v8214 = vpop.f32.mrf.mxu0
  %v8215 = vadd.f32 0.0, %v8214
  %v8216 = vpop.f32.mrf.mxu0
  %v8217 = vadd.f32 0.0, %v8216
  %8218 = vmatmul.bf16.gmra.mxu0 %v8175
  %v8219 = vpop.f32.mrf.mxu0
  %v8220 = vadd.f32 0.0, %v8219
  %v8221 = vpop.f32.mrf.mxu0
  %8222 = vdwg.mxu0
  %v8223 = vadd.f32 %v7962, %v8190
  %v8224 = vadd.f32 %v7963, %v8192
  %v8225 = vadd.f32 %v7964, %v8195
  %v8226 = vadd.f32 %v7965, %v8197
  %v8227 = vadd.f32 %v7966, %v8200
  %v8228 = vadd.f32 %v7967, %v8202
  %v8229 = vadd.f32 %v7968, %v8205
  %v8230 = vadd.f32 %v7969, %v8207
  %v8231 = vadd.f32 %v7970, %v8210
  %v8232 = vadd.f32 %v7971, %v8212
  %v8233 = vadd.f32 %v7972, %v8215
  %v8234 = vadd.f32 %v7973, %v8217
  %v8235 = vadd.f32 %v7974, %v8220
  %v8238 = vrot.slane %v1410, 3
  %v8239 = vrot.slane %v1418, 3
  %v8242 = vsel %vm273, %v1410, %v8238
  %v8244 = vsel %vm5548, %v1410, %v8238
  %v8246 = vrot.slane %v8244, 1
  %v8247 = vsel %vm5552, %v1410, %v8238
  %v8249 = vrot.slane %v8247, 2
  %v8250 = vsel %vm5556, %v1410, %v8238
  %v8252 = vrot.slane %v8250, 3
  %v8255 = vsel %vm273, %v1418, %v8239
  %v8257 = vsel %vm5548, %v1418, %v8239
  %v8259 = vrot.slane %v8257, 1
  %v8260 = vsel %vm5552, %v1418, %v8239
  %v8262 = vrot.slane %v8260, 2
  %v8263 = vsel %vm5556, %v1418, %v8239
  %v8265 = vrot.slane %v8263, 3
  %v8266 = vunpack.i.l.s16 %v8242
  %v8267 = vunpack.i.h.s16 %v8242
  %v8268 = vunpack.i.l.s16 %v8246
  %v8269 = vunpack.i.h.s16 %v8246
  %v8270 = vunpack.i.l.s16 %v8249
  %v8271 = vunpack.i.h.s16 %v8249
  %v8272 = vunpack.i.l.s16 %v8252
  %v8273 = vunpack.i.l.s16 %v8255
  %v8274 = vunpack.i.h.s16 %v8255
  %v8275 = vunpack.i.l.s16 %v8259
  %v8276 = vunpack.i.h.s16 %v8259
  %v8277 = vunpack.i.l.s16 %v8262
  %v8278 = vunpack.i.h.s16 %v8262
  %v8279 = vunpack.i.l.s16 %v8265
  %s8280 = scalar_lea.vmem %s3, 72
  %v8281 = vld [vmem:[%s8280] sm:$0xf]
  %v8282 = vld [vmem:[%s8280 + $0x4] sm:$0xf]
  %v8283 = vld [vmem:[%s8280 + $0x8] sm:$0xf]
  %v8284 = vpack.i.b16 %v5737, %v5736
  %v8285 = vpack.i.b16 %v5743, %v5742
  %v8286 = vpack.i.b16 %v5751, %v5750
  %v8287 = vpack.i.b16 %v5757, %v5756
  %v8288 = vpack.i.b16 %v5765, %v5764
  %v8289 = vpack.i.b16 %v5771, %v5770
  %v8290 = vpack.i.b16 %v8267, %v8266
  %v8291 = vpack.i.b16 %v8269, %v8268
  %v8292 = vpack.i.b16 %v8271, %v8270
  %v8293 = vpack.i.b16 %v5785, %v8272
  %v8294 = vpack.i.b16 %v5793, %v5792
  %v8295 = vpack.i.b16 %v5799, %v5798
  %v8296 = vpack.i.b16 %v5807, %v5806
  %v8297 = vpack.i.b16 %v5813, %v5812
  %v8298 = vpack.i.b16 %v5821, %v5820
  %v8299 = vpack.i.b16 %v8273, %v5826
  %v8300 = vpack.i.b16 %v8275, %v8274
  %v8301 = vpack.i.b16 %v8277, %v8276
  %v8302 = vpack.i.b16 %v8279, %v8278
  %8304 = vst [vmem:[#allocation1] ss:$9 sm:$0xff] %v8284
  %s8305 = scalar_lea.vmem [#allocation1], 1
  %8306 = vst [vmem:[%s8305] ss:$9 sm:$0xff] %v6626
  %s8307 = scalar_lea.vmem [#allocation1], 2
  %8308 = vst [vmem:[%s8307] ss:$9 sm:$0xff] %v6627
  %s8310 = scalar_lea.vmem [#allocation1], 3
  %8311 = vst [vmem:[%s8310] ss:$9 sm:$0xff] %v8285
  %s8312 = scalar_lea.vmem [#allocation1], 4
  %8313 = vst [vmem:[%s8312] ss:$9 sm:$0xff] %v6629
  %s8314 = scalar_lea.vmem [#allocation1], 5
  %8315 = vst [vmem:[%s8314] ss:$9 sm:$0xff] %v6630
  %s8316 = scalar_lea.vmem [#allocation1], 6
  %8317 = vst [vmem:[%s8316] ss:$9 sm:$0xff] %v6631
  %s8319 = scalar_lea.vmem [#allocation1], 7
  %8320 = vst [vmem:[%s8319] ss:$9 sm:$0xff] %v8286
  %v8321 = vld [vmem:[#allocation1] sm:$0xff]
  %8322 = vst [vmem:[#allocation1] ss:$9 sm:$0xff] %v6633
  %8323 = vst [vmem:[%s8305] ss:$9 sm:$0xff] %v6634
  %8325 = vst [vmem:[%s8307] ss:$9 sm:$0xff] %v8287
  %8326 = vst [vmem:[%s8310] ss:$9 sm:$0xff] %v6636
  %8327 = vst [vmem:[%s8312] ss:$9 sm:$0xff] %v6637
  %8328 = vst [vmem:[%s8314] ss:$9 sm:$0xff] %v6638
  %8330 = vst [vmem:[%s8316] ss:$9 sm:$0xff] %v8288
  %8331 = vst [vmem:[%s8319] ss:$9 sm:$0xff] %v6640
  %v8332 = vld [vmem:[#allocation1] sm:$0xff]
  %8333 = vst [vmem:[#allocation1] ss:$9 sm:$0xff] %v6641
  %8335 = vst [vmem:[%s8305] ss:$9 sm:$0xff] %v8289
  %8336 = vst [vmem:[%s8307] ss:$9 sm:$0xff] %v6643
  %8337 = vst [vmem:[%s8310] ss:$9 sm:$0xff] %v6644
  %8338 = vst [vmem:[%s8312] ss:$9 sm:$0xff] %v6645
  %8340 = vst [vmem:[%s8314] ss:$9 sm:$0xff] %v8290
  %8342 = vst [vmem:[%s8316] ss:$9 sm:$0xff] %v8291
  %8344 = vst [vmem:[%s8319] ss:$9 sm:$0xff] %v8292
  %v8345 = vld [vmem:[#allocation1] sm:$0xff]
  %8347 = vst [vmem:[#allocation1] ss:$9 sm:$0xff] %v8293
  %8348 = vst [vmem:[%s8305] ss:$9 sm:$0xff] %v6650
  %8349 = vst [vmem:[%s8307] ss:$9 sm:$0xff] %v6651
  %8350 = vst [vmem:[%s8310] ss:$9 sm:$0xff] %v6652
  %8352 = vst [vmem:[%s8312] ss:$9 sm:$0xff] %v8294
  %8353 = vst [vmem:[%s8314] ss:$9 sm:$0xff] %v6654
  %8354 = vst [vmem:[%s8316] ss:$9 sm:$0xff] %v6655
  %8356 = vst [vmem:[%s8319] ss:$9 sm:$0xff] %v8295
  %v8357 = vld [vmem:[#allocation1] sm:$0xff]
  %8358 = vst [vmem:[#allocation1] ss:$9 sm:$0xff] %v6657
  %8359 = vst [vmem:[%s8305] ss:$9 sm:$0xff] %v6658
  %8360 = vst [vmem:[%s8307] ss:$9 sm:$0xff] %v6659
  %8362 = vst [vmem:[%s8310] ss:$9 sm:$0xff] %v8296
  %8363 = vst [vmem:[%s8312] ss:$9 sm:$0xff] %v6661
  %8364 = vst [vmem:[%s8314] ss:$9 sm:$0xff] %v6662
  %8366 = vst [vmem:[%s8316] ss:$9 sm:$0xff] %v8297
  %8367 = vst [vmem:[%s8319] ss:$9 sm:$0xff] %v6664
  %v8368 = vld [vmem:[#allocation1] sm:$0xff]
  %8369 = vst [vmem:[#allocation1] ss:$9 sm:$0xff] %v6665
  %8370 = vst [vmem:[%s8305] ss:$9 sm:$0xff] %v6666
  %8372 = vst [vmem:[%s8307] ss:$9 sm:$0xff] %v8298
  %8373 = vst [vmem:[%s8310] ss:$9 sm:$0xff] %v6668
  %8374 = vst [vmem:[%s8312] ss:$9 sm:$0xff] %v6669
  %8376 = vst [vmem:[%s8314] ss:$9 sm:$0xff] %v8299
  %8378 = vst [vmem:[%s8316] ss:$9 sm:$0xff] %v8300
  %8380 = vst [vmem:[%s8319] ss:$9 sm:$0xff] %v8301
  %v8381 = vld [vmem:[#allocation1] sm:$0xff]
  %8383 = vst [vmem:[#allocation1] ss:$9 sm:$0xff] %v8302
  %v8384 = vld [vmem:[#allocation1] sm:$0xff]
  %v8388 = vunpack.c.l.b16 %v8281
  %v8389 = vunpack.c.l.b16 %v8282
  %v8390 = vunpack.c.l.b16 %v8283
  %v8391 = vpack.c.b16 %v8389, %v8388
  %v8392 = vpack.c.b16 %v8390, %v8390
  %v8394 = vsel %vm6312, %v8321, 0
  %v8396 = vsel %vm6312, %v8332, 0
  %v8398 = vsel %vm6312, %v8345, 0
  %v8400 = vsel %vm6312, %v8357, 0
  %v8402 = vsel %vm6312, %v8368, 0
  %v8404 = vsel %vm6312, %v8381, 0
  %v8406 = vsel %vm6312, %v8384, 0
  %v8409 = vsel %vm6327, %v8392, 0
  %8411 = vmatpush.bf16.msra.mxu0 0
  %8412 = vmatpush.bf16.msra.mxu0 0
  %8413 = vmatpush.bf16.msra.mxu0 0
  %8414 = vmatpush.bf16.msra.mxu0 0
  %8415 = vmatpush.bf16.msra.mxu0 0
  %8416 = vmatpush.bf16.msra.mxu0 0
  %8417 = vmatpush.bf16.msra.mxu0 %v8409
  %8418 = vmatpush.bf16.msra.mxu0 %v8391
  %8419 = vmatmul.bf16.gmra.mxu0 %v8394
  %v8420 = vpop.f32.mrf.mxu0
  %v8421 = vadd.f32 0.0, %v8420
  %v8422 = vpop.f32.mrf.mxu0
  %v8423 = vadd.f32 0.0, %v8422
  %8424 = vmatmul.bf16.gmra.mxu0 %v8396
  %v8425 = vpop.f32.mrf.mxu0
  %v8426 = vadd.f32 0.0, %v8425
  %v8427 = vpop.f32.mrf.mxu0
  %v8428 = vadd.f32 0.0, %v8427
  %8429 = vmatmul.bf16.gmra.mxu0 %v8398
  %v8430 = vpop.f32.mrf.mxu0
  %v8431 = vadd.f32 0.0, %v8430
  %v8432 = vpop.f32.mrf.mxu0
  %v8433 = vadd.f32 0.0, %v8432
  %8434 = vmatmul.bf16.gmra.mxu0 %v8400
  %v8435 = vpop.f32.mrf.mxu0
  %v8436 = vadd.f32 0.0, %v8435
  %v8437 = vpop.f32.mrf.mxu0
  %v8438 = vadd.f32 0.0, %v8437
  %8439 = vmatmul.bf16.gmra.mxu0 %v8402
  %v8440 = vpop.f32.mrf.mxu0
  %v8441 = vadd.f32 0.0, %v8440
  %v8442 = vpop.f32.mrf.mxu0
  %v8443 = vadd.f32 0.0, %v8442
  %8444 = vmatmul.bf16.gmra.mxu0 %v8404
  %v8445 = vpop.f32.mrf.mxu0
  %v8446 = vadd.f32 0.0, %v8445
  %v8447 = vpop.f32.mrf.mxu0
  %v8448 = vadd.f32 0.0, %v8447
  %8449 = vmatmul.bf16.gmra.mxu0 %v8406
  %v8450 = vpop.f32.mrf.mxu0
  %v8451 = vadd.f32 0.0, %v8450
  %v8452 = vpop.f32.mrf.mxu0
  %8453 = vdwg.mxu0
  %v8454 = vadd.f32 %v8223, %v8421
  %v8455 = vadd.f32 %v8224, %v8423
  %v8456 = vadd.f32 %v8225, %v8426
  %v8457 = vadd.f32 %v8226, %v8428
  %v8458 = vadd.f32 %v8227, %v8431
  %v8459 = vadd.f32 %v8228, %v8433
  %v8460 = vadd.f32 %v8229, %v8436
  %v8461 = vadd.f32 %v8230, %v8438
  %v8462 = vadd.f32 %v8231, %v8441
  %v8463 = vadd.f32 %v8232, %v8443
  %v8464 = vadd.f32 %v8233, %v8446
  %v8465 = vadd.f32 %v8234, %v8448
  %v8466 = vadd.f32 %v8235, %v8451
  %v8469 = vrot.slane %v3153, 3
  %v8470 = vrot.slane %v3161, 3
  %v8473 = vsel %vm273, %v3153, %v8469
  %v8475 = vsel %vm5548, %v3153, %v8469
  %v8477 = vrot.slane %v8475, 1
  %v8478 = vsel %vm5552, %v3153, %v8469
  %v8480 = vrot.slane %v8478, 2
  %v8481 = vsel %vm5556, %v3153, %v8469
  %v8483 = vrot.slane %v8481, 3
  %v8486 = vsel %vm273, %v3161, %v8470
  %v8488 = vsel %vm5548, %v3161, %v8470
  %v8490 = vrot.slane %v8488, 1
  %v8491 = vsel %vm5552, %v3161, %v8470
  %v8493 = vrot.slane %v8491, 2
  %v8494 = vsel %vm5556, %v3161, %v8470
  %v8496 = vrot.slane %v8494, 3
  %v8497 = vunpack.i.l.s16 %v8473
  %v8498 = vunpack.i.h.s16 %v8473
  %v8499 = vunpack.i.l.s16 %v8477
  %v8500 = vunpack.i.h.s16 %v8477
  %v8501 = vunpack.i.l.s16 %v8480
  %v8502 = vunpack.i.h.s16 %v8480
  %v8503 = vunpack.i.l.s16 %v8483
  %v8504 = vunpack.i.l.s16 %v8486
  %v8505 = vunpack.i.h.s16 %v8486
  %v8506 = vunpack.i.l.s16 %v8490
  %v8507 = vunpack.i.h.s16 %v8490
  %v8508 = vunpack.i.l.s16 %v8493
  %v8509 = vunpack.i.h.s16 %v8493
  %v8510 = vunpack.i.l.s16 %v8496
  %s8511 = scalar_lea.vmem %s3, 84
  %v8512 = vld [vmem:[%s8511] sm:$0xf]
  %v8513 = vld [vmem:[%s8511 + $0x4] sm:$0xf]
  %v8514 = vld [vmem:[%s8511 + $0x8] sm:$0xf]
  %v8515 = vpack.i.b16 %v6048, %v6047
  %v8516 = vpack.i.b16 %v6050, %v6049
  %v8517 = vpack.i.b16 %v6052, %v6051
  %v8518 = vpack.i.b16 %v6054, %v6053
  %v8519 = vpack.i.b16 %v6056, %v6055
  %v8520 = vpack.i.b16 %v6058, %v6057
  %v8521 = vpack.i.b16 %v6060, %v6059
  %v8522 = vpack.i.b16 %v6062, %v6061
  %v8523 = vpack.i.b16 %v6064, %v6063
  %v8524 = vpack.i.b16 %v6066, %v6065
  %v8525 = vpack.i.b16 %v6068, %v6067
  %v8526 = vpack.i.b16 %v6070, %v6069
  %v8527 = vpack.i.b16 %v6072, %v6071
  %v8528 = vpack.i.b16 %v6074, %v6073
  %v8529 = vpack.i.b16 %v6076, %v6075
  %v8530 = vpack.i.b16 %v6078, %v6077
  %v8531 = vpack.i.b16 %v6080, %v6079
  %v8532 = vpack.i.b16 %v6082, %v6081
  %v8533 = vpack.i.b16 %v6084, %v6083
  %v8534 = vpack.i.b16 %v6086, %v6085
  %v8535 = vpack.i.b16 %v6088, %v6087
  %v8536 = vpack.i.b16 %v8498, %v8497
  %v8537 = vpack.i.b16 %v8500, %v8499
  %v8538 = vpack.i.b16 %v8502, %v8501
  %v8539 = vpack.i.b16 %v6096, %v8503
  %v8540 = vpack.i.b16 %v6098, %v6097
  %v8541 = vpack.i.b16 %v6100, %v6099
  %v8542 = vpack.i.b16 %v6102, %v6101
  %v8543 = vpack.i.b16 %v6104, %v6103
  %v8544 = vpack.i.b16 %v6106, %v6105
  %v8545 = vpack.i.b16 %v6108, %v6107
  %v8546 = vpack.i.b16 %v6110, %v6109
  %v8547 = vpack.i.b16 %v6112, %v6111
  %v8548 = vpack.i.b16 %v6114, %v6113
  %v8549 = vpack.i.b16 %v6116, %v6115
  %v8550 = vpack.i.b16 %v6118, %v6117
  %v8551 = vpack.i.b16 %v6120, %v6119
  %v8552 = vpack.i.b16 %v6122, %v6121
  %v8553 = vpack.i.b16 %v6124, %v6123
  %v8554 = vpack.i.b16 %v6126, %v6125
  %v8555 = vpack.i.b16 %v6128, %v6127
  %v8556 = vpack.i.b16 %v6130, %v6129
  %v8557 = vpack.i.b16 %v6132, %v6131
  %v8558 = vpack.i.b16 %v6134, %v6133
  %v8559 = vpack.i.b16 %v6136, %v6135
  %v8560 = vpack.i.b16 %v8504, %v6137
  %v8561 = vpack.i.b16 %v8506, %v8505
  %v8562 = vpack.i.b16 %v8508, %v8507
  %v8563 = vpack.i.b16 %v8510, %v8509
  %8565 = vst [vmem:[#allocation1] ss:$9 sm:$0xff] %v8515
  %s8567 = scalar_lea.vmem [#allocation1], 1
  %8568 = vst [vmem:[%s8567] ss:$9 sm:$0xff] %v8516
  %s8570 = scalar_lea.vmem [#allocation1], 2
  %8571 = vst [vmem:[%s8570] ss:$9 sm:$0xff] %v8517
  %s8573 = scalar_lea.vmem [#allocation1], 3
  %8574 = vst [vmem:[%s8573] ss:$9 sm:$0xff] %v8518
  %s8576 = scalar_lea.vmem [#allocation1], 4
  %8577 = vst [vmem:[%s8576] ss:$9 sm:$0xff] %v8519
  %s8579 = scalar_lea.vmem [#allocation1], 5
  %8580 = vst [vmem:[%s8579] ss:$9 sm:$0xff] %v8520
  %s8582 = scalar_lea.vmem [#allocation1], 6
  %8583 = vst [vmem:[%s8582] ss:$9 sm:$0xff] %v8521
  %s8585 = scalar_lea.vmem [#allocation1], 7
  %8586 = vst [vmem:[%s8585] ss:$9 sm:$0xff] %v8522
  %v8587 = vld [vmem:[#allocation1] sm:$0xff]
  %8589 = vst [vmem:[#allocation1] ss:$9 sm:$0xff] %v8523
  %8591 = vst [vmem:[%s8567] ss:$9 sm:$0xff] %v8524
  %8593 = vst [vmem:[%s8570] ss:$9 sm:$0xff] %v8525
  %8595 = vst [vmem:[%s8573] ss:$9 sm:$0xff] %v8526
  %8597 = vst [vmem:[%s8576] ss:$9 sm:$0xff] %v8527
  %8599 = vst [vmem:[%s8579] ss:$9 sm:$0xff] %v8528
  %8601 = vst [vmem:[%s8582] ss:$9 sm:$0xff] %v8529
  %8603 = vst [vmem:[%s8585] ss:$9 sm:$0xff] %v8530
  %v8604 = vld [vmem:[#allocation1] sm:$0xff]
  %8606 = vst [vmem:[#allocation1] ss:$9 sm:$0xff] %v8531
  %8608 = vst [vmem:[%s8567] ss:$9 sm:$0xff] %v8532
  %8610 = vst [vmem:[%s8570] ss:$9 sm:$0xff] %v8533
  %8612 = vst [vmem:[%s8573] ss:$9 sm:$0xff] %v8534
  %8614 = vst [vmem:[%s8576] ss:$9 sm:$0xff] %v8535
  %8616 = vst [vmem:[%s8579] ss:$9 sm:$0xff] %v8536
  %8618 = vst [vmem:[%s8582] ss:$9 sm:$0xff] %v8537
  %8620 = vst [vmem:[%s8585] ss:$9 sm:$0xff] %v8538
  %v8621 = vld [vmem:[#allocation1] sm:$0xff]
  %8623 = vst [vmem:[#allocation1] ss:$9 sm:$0xff] %v8539
  %8625 = vst [vmem:[%s8567] ss:$9 sm:$0xff] %v8540
  %8627 = vst [vmem:[%s8570] ss:$9 sm:$0xff] %v8541
  %8629 = vst [vmem:[%s8573] ss:$9 sm:$0xff] %v8542
  %8631 = vst [vmem:[%s8576] ss:$9 sm:$0xff] %v8543
  %8633 = vst [vmem:[%s8579] ss:$9 sm:$0xff] %v8544
  %8635 = vst [vmem:[%s8582] ss:$9 sm:$0xff] %v8545
  %8637 = vst [vmem:[%s8585] ss:$9 sm:$0xff] %v8546
  %v8638 = vld [vmem:[#allocation1] sm:$0xff]
  %8640 = vst [vmem:[#allocation1] ss:$9 sm:$0xff] %v8547
  %8642 = vst [vmem:[%s8567] ss:$9 sm:$0xff] %v8548
  %8644 = vst [vmem:[%s8570] ss:$9 sm:$0xff] %v8549
  %8646 = vst [vmem:[%s8573] ss:$9 sm:$0xff] %v8550
  %8648 = vst [vmem:[%s8576] ss:$9 sm:$0xff] %v8551
  %8650 = vst [vmem:[%s8579] ss:$9 sm:$0xff] %v8552
  %8652 = vst [vmem:[%s8582] ss:$9 sm:$0xff] %v8553
  %8654 = vst [vmem:[%s8585] ss:$9 sm:$0xff] %v8554
  %v8655 = vld [vmem:[#allocation1] sm:$0xff]
  %8657 = vst [vmem:[#allocation1] ss:$9 sm:$0xff] %v8555
  %8659 = vst [vmem:[%s8567] ss:$9 sm:$0xff] %v8556
  %8661 = vst [vmem:[%s8570] ss:$9 sm:$0xff] %v8557
  %8663 = vst [vmem:[%s8573] ss:$9 sm:$0xff] %v8558
  %8665 = vst [vmem:[%s8576] ss:$9 sm:$0xff] %v8559
  %8667 = vst [vmem:[%s8579] ss:$9 sm:$0xff] %v8560
  %8669 = vst [vmem:[%s8582] ss:$9 sm:$0xff] %v8561
  %8671 = vst [vmem:[%s8585] ss:$9 sm:$0xff] %v8562
  %v8672 = vld [vmem:[#allocation1] sm:$0xff]
  %8674 = vst [vmem:[#allocation1] ss:$9 sm:$0xff] %v8563
  %v8675 = vld [vmem:[#allocation1] sm:$0xff]
  %v8679 = vunpack.c.l.b16 %v8512
  %v8680 = vunpack.c.l.b16 %v8513
  %v8681 = vunpack.c.l.b16 %v8514
  %v8682 = vpack.c.b16 %v8680, %v8679
  %v8683 = vpack.c.b16 %v8681, %v8681
  %v8685 = vsel %vm6312, %v8587, 0
  %v8687 = vsel %vm6312, %v8604, 0
  %v8689 = vsel %vm6312, %v8621, 0
  %v8691 = vsel %vm6312, %v8638, 0
  %v8693 = vsel %vm6312, %v8655, 0
  %v8695 = vsel %vm6312, %v8672, 0
  %v8697 = vsel %vm6312, %v8675, 0
  %v8700 = vsel %vm6327, %v8683, 0
  %8702 = vmatpush.bf16.msra.mxu0 0
  %8703 = vmatpush.bf16.msra.mxu0 0
  %8704 = vmatpush.bf16.msra.mxu0 0
  %8705 = vmatpush.bf16.msra.mxu0 0
  %8706 = vmatpush.bf16.msra.mxu0 0
  %8707 = vmatpush.bf16.msra.mxu0 0
  %8708 = vmatpush.bf16.msra.mxu0 %v8700
  %8709 = vmatpush.bf16.msra.mxu0 %v8682
  %8710 = vmatmul.bf16.gmra.mxu0 %v8685
  %v8711 = vpop.f32.mrf.mxu0
  %v8712 = vadd.f32 0.0, %v8711
  %v8713 = vpop.f32.mrf.mxu0
  %v8714 = vadd.f32 0.0, %v8713
  %8715 = vmatmul.bf16.gmra.mxu0 %v8687
  %v8716 = vpop.f32.mrf.mxu0
  %v8717 = vadd.f32 0.0, %v8716
  %v8718 = vpop.f32.mrf.mxu0
  %v8719 = vadd.f32 0.0, %v8718
  %8720 = vmatmul.bf16.gmra.mxu0 %v8689
  %v8721 = vpop.f32.mrf.mxu0
  %v8722 = vadd.f32 0.0, %v8721
  %v8723 = vpop.f32.mrf.mxu0
  %v8724 = vadd.f32 0.0, %v8723
  %8725 = vmatmul.bf16.gmra.mxu0 %v8691
  %v8726 = vpop.f32.mrf.mxu0
  %v8727 = vadd.f32 0.0, %v8726
  %v8728 = vpop.f32.mrf.mxu0
  %v8729 = vadd.f32 0.0, %v8728
  %8730 = vmatmul.bf16.gmra.mxu0 %v8693
  %v8731 = vpop.f32.mrf.mxu0
  %v8732 = vadd.f32 0.0, %v8731
  %v8733 = vpop.f32.mrf.mxu0
  %v8734 = vadd.f32 0.0, %v8733
  %8735 = vmatmul.bf16.gmra.mxu0 %v8695
  %v8736 = vpop.f32.mrf.mxu0
  %v8737 = vadd.f32 0.0, %v8736
  %v8738 = vpop.f32.mrf.mxu0
  %v8739 = vadd.f32 0.0, %v8738
  %8740 = vmatmul.bf16.gmra.mxu0 %v8697
  %v8741 = vpop.f32.mrf.mxu0
  %v8742 = vadd.f32 0.0, %v8741
  %v8743 = vpop.f32.mrf.mxu0
  %8744 = vdwg.mxu0
  %v8745 = vadd.f32 %v8454, %v8712
  %v8746 = vadd.f32 %v8455, %v8714
  %v8747 = vadd.f32 %v8456, %v8717
  %v8748 = vadd.f32 %v8457, %v8719
  %v8749 = vadd.f32 %v8458, %v8722
  %v8750 = vadd.f32 %v8459, %v8724
  %v8751 = vadd.f32 %v8460, %v8727
  %v8752 = vadd.f32 %v8461, %v8729
  %v8753 = vadd.f32 %v8462, %v8732
  %v8754 = vadd.f32 %v8463, %v8734
  %v8755 = vadd.f32 %v8464, %v8737
  %v8756 = vadd.f32 %v8465, %v8739
  %v8757 = vadd.f32 %v8466, %v8742
  %v8758 = vunpack.i.h.s16 %v8252
  %v8759 = vunpack.i.h.s16 %v8265
  %s8760 = scalar_lea.vmem %s3, 96
  %v8761 = vld [vmem:[%s8760] sm:$0xf]
  %v8762 = vld [vmem:[%s8760 + $0x4] sm:$0xf]
  %v8763 = vld [vmem:[%s8760 + $0x8] sm:$0xf]
  %v8764 = vpack.i.b16 %v5744, %v6605
  %v8765 = vpack.i.b16 %v6606, %v5749
  %v8766 = vpack.i.b16 %v5758, %v6607
  %v8767 = vpack.i.b16 %v6608, %v5763
  %v8768 = vpack.i.b16 %v5772, %v6609
  %v8769 = vpack.i.b16 %v6610, %v5777
  %v8770 = vpack.i.b16 %v8268, %v8267
  %v8771 = vpack.i.b16 %v8270, %v8269
  %v8772 = vpack.i.b16 %v8272, %v8271
  %v8773 = vpack.i.b16 %v5786, %v8758
  %v8774 = vpack.i.b16 %v6612, %v5791
  %v8775 = vpack.i.b16 %v5800, %v6613
  %v8776 = vpack.i.b16 %v6614, %v5805
  %v8777 = vpack.i.b16 %v5814, %v6615
  %v8778 = vpack.i.b16 %v6616, %v5819
  %v8779 = vpack.i.b16 %v8274, %v6617
  %v8780 = vpack.i.b16 %v8276, %v8275
  %v8781 = vpack.i.b16 %v8278, %v8277
  %v8782 = vpack.i.b16 %v8759, %v8279
  %8783 = vst [vmem:[#allocation1] ss:$9 sm:$0xff] %v6378
  %s8784 = scalar_lea.vmem [#allocation1], 1
  %8785 = vst [vmem:[%s8784] ss:$9 sm:$0xff] %v6379
  %s8786 = scalar_lea.vmem [#allocation1], 2
  %8787 = vst [vmem:[%s8786] ss:$9 sm:$0xff] %v6380
  %s8789 = scalar_lea.vmem [#allocation1], 3
  %8790 = vst [vmem:[%s8789] ss:$9 sm:$0xff] %v8764
  %s8791 = scalar_lea.vmem [#allocation1], 4
  %8792 = vst [vmem:[%s8791] ss:$9 sm:$0xff] %v6382
  %s8793 = scalar_lea.vmem [#allocation1], 5
  %8794 = vst [vmem:[%s8793] ss:$9 sm:$0xff] %v6383
  %s8796 = scalar_lea.vmem [#allocation1], 6
  %8797 = vst [vmem:[%s8796] ss:$9 sm:$0xff] %v8765
  %s8798 = scalar_lea.vmem [#allocation1], 7
  %8799 = vst [vmem:[%s8798] ss:$9 sm:$0xff] %v6385
  %v8800 = vld [vmem:[#allocation1] sm:$0xff]
  %8801 = vst [vmem:[#allocation1] ss:$9 sm:$0xff] %v6386
  %8802 = vst [vmem:[%s8784] ss:$9 sm:$0xff] %v6387
  %8804 = vst [vmem:[%s8786] ss:$9 sm:$0xff] %v8766
  %8805 = vst [vmem:[%s8789] ss:$9 sm:$0xff] %v6389
  %8806 = vst [vmem:[%s8791] ss:$9 sm:$0xff] %v6390
  %8808 = vst [vmem:[%s8793] ss:$9 sm:$0xff] %v8767
  %8809 = vst [vmem:[%s8796] ss:$9 sm:$0xff] %v6392
  %8810 = vst [vmem:[%s8798] ss:$9 sm:$0xff] %v6393
  %v8811 = vld [vmem:[#allocation1] sm:$0xff]
  %8812 = vst [vmem:[#allocation1] ss:$9 sm:$0xff] %v6394
  %8814 = vst [vmem:[%s8784] ss:$9 sm:$0xff] %v8768
  %8815 = vst [vmem:[%s8786] ss:$9 sm:$0xff] %v6396
  %8816 = vst [vmem:[%s8789] ss:$9 sm:$0xff] %v6397
  %8818 = vst [vmem:[%s8791] ss:$9 sm:$0xff] %v8769
  %8820 = vst [vmem:[%s8793] ss:$9 sm:$0xff] %v8770
  %8822 = vst [vmem:[%s8796] ss:$9 sm:$0xff] %v8771
  %8824 = vst [vmem:[%s8798] ss:$9 sm:$0xff] %v8772
  %v8825 = vld [vmem:[#allocation1] sm:$0xff]
  %8827 = vst [vmem:[#allocation1] ss:$9 sm:$0xff] %v8773
  %8828 = vst [vmem:[%s8784] ss:$9 sm:$0xff] %v6403
  %8829 = vst [vmem:[%s8786] ss:$9 sm:$0xff] %v6404
  %8831 = vst [vmem:[%s8789] ss:$9 sm:$0xff] %v8774
  %8832 = vst [vmem:[%s8791] ss:$9 sm:$0xff] %v6406
  %8833 = vst [vmem:[%s8793] ss:$9 sm:$0xff] %v6407
  %8834 = vst [vmem:[%s8796] ss:$9 sm:$0xff] %v6408
  %8836 = vst [vmem:[%s8798] ss:$9 sm:$0xff] %v8775
  %v8837 = vld [vmem:[#allocation1] sm:$0xff]
  %8838 = vst [vmem:[#allocation1] ss:$9 sm:$0xff] %v6410
  %8839 = vst [vmem:[%s8784] ss:$9 sm:$0xff] %v6411
  %8841 = vst [vmem:[%s8786] ss:$9 sm:$0xff] %v8776
  %8842 = vst [vmem:[%s8789] ss:$9 sm:$0xff] %v6413
  %8843 = vst [vmem:[%s8791] ss:$9 sm:$0xff] %v6414
  %8844 = vst [vmem:[%s8793] ss:$9 sm:$0xff] %v6415
  %8846 = vst [vmem:[%s8796] ss:$9 sm:$0xff] %v8777
  %8847 = vst [vmem:[%s8798] ss:$9 sm:$0xff] %v6417
  %v8848 = vld [vmem:[#allocation1] sm:$0xff]
  %8849 = vst [vmem:[#allocation1] ss:$9 sm:$0xff] %v6418
  %8851 = vst [vmem:[%s8784] ss:$9 sm:$0xff] %v8778
  %8852 = vst [vmem:[%s8786] ss:$9 sm:$0xff] %v6420
  %8853 = vst [vmem:[%s8789] ss:$9 sm:$0xff] %v6421
  %8854 = vst [vmem:[%s8791] ss:$9 sm:$0xff] %v6422
  %8856 = vst [vmem:[%s8793] ss:$9 sm:$0xff] %v8779
  %8858 = vst [vmem:[%s8796] ss:$9 sm:$0xff] %v8780
  %8860 = vst [vmem:[%s8798] ss:$9 sm:$0xff] %v8781
  %v8861 = vld [vmem:[#allocation1] sm:$0xff]
  %8863 = vst [vmem:[#allocation1] ss:$9 sm:$0xff] %v8782
  %v8864 = vld [vmem:[#allocation1] sm:$0xff]
  %v8868 = vunpack.c.l.b16 %v8761
  %v8869 = vunpack.c.l.b16 %v8762
  %v8870 = vunpack.c.l.b16 %v8763
  %v8871 = vpack.c.b16 %v8869, %v8868
  %v8872 = vpack.c.b16 %v8870, %v8870
  %v8874 = vsel %vm6312, %v8800, 0
  %v8876 = vsel %vm6312, %v8811, 0
  %v8878 = vsel %vm6312, %v8825, 0
  %v8880 = vsel %vm6312, %v8837, 0
  %v8882 = vsel %vm6312, %v8848, 0
  %v8884 = vsel %vm6312, %v8861, 0
  %v8886 = vsel %vm6312, %v8864, 0
  %v8889 = vsel %vm6327, %v8872, 0
  %8891 = vmatpush.bf16.msra.mxu0 0
  %8892 = vmatpush.bf16.msra.mxu0 0
  %8893 = vmatpush.bf16.msra.mxu0 0
  %8894 = vmatpush.bf16.msra.mxu0 0
  %8895 = vmatpush.bf16.msra.mxu0 0
  %8896 = vmatpush.bf16.msra.mxu0 0
  %8897 = vmatpush.bf16.msra.mxu0 %v8889
  %8898 = vmatpush.bf16.msra.mxu0 %v8871
  %8899 = vmatmul.bf16.gmra.mxu0 %v8874
  %v8900 = vpop.f32.mrf.mxu0
  %v8901 = vadd.f32 0.0, %v8900
  %v8902 = vpop.f32.mrf.mxu0
  %v8903 = vadd.f32 0.0, %v8902
  %8904 = vmatmul.bf16.gmra.mxu0 %v8876
  %v8905 = vpop.f32.mrf.mxu0
  %v8906 = vadd.f32 0.0, %v8905
  %v8907 = vpop.f32.mrf.mxu0
  %v8908 = vadd.f32 0.0, %v8907
  %8909 = vmatmul.bf16.gmra.mxu0 %v8878
  %v8910 = vpop.f32.mrf.mxu0
  %v8911 = vadd.f32 0.0, %v8910
  %v8912 = vpop.f32.mrf.mxu0
  %v8913 = vadd.f32 0.0, %v8912
  %8914 = vmatmul.bf16.gmra.mxu0 %v8880
  %v8915 = vpop.f32.mrf.mxu0
  %v8916 = vadd.f32 0.0, %v8915
  %v8917 = vpop.f32.mrf.mxu0
  %v8918 = vadd.f32 0.0, %v8917
  %8919 = vmatmul.bf16.gmra.mxu0 %v8882
  %v8920 = vpop.f32.mrf.mxu0
  %v8921 = vadd.f32 0.0, %v8920
  %v8922 = vpop.f32.mrf.mxu0
  %v8923 = vadd.f32 0.0, %v8922
  %8924 = vmatmul.bf16.gmra.mxu0 %v8884
  %v8925 = vpop.f32.mrf.mxu0
  %v8926 = vadd.f32 0.0, %v8925
  %v8927 = vpop.f32.mrf.mxu0
  %v8928 = vadd.f32 0.0, %v8927
  %8929 = vmatmul.bf16.gmra.mxu0 %v8886
  %v8930 = vpop.f32.mrf.mxu0
  %v8931 = vadd.f32 0.0, %v8930
  %v8932 = vpop.f32.mrf.mxu0
  %8933 = vdwg.mxu0
  %v8934 = vadd.f32 %v8745, %v8901
  %v8935 = vadd.f32 %v8746, %v8903
  %v8936 = vadd.f32 %v8747, %v8906
  %v8937 = vadd.f32 %v8748, %v8908
  %v8938 = vadd.f32 %v8749, %v8911
  %v8939 = vadd.f32 %v8750, %v8913
  %v8940 = vadd.f32 %v8751, %v8916
  %v8941 = vadd.f32 %v8752, %v8918
  %v8942 = vadd.f32 %v8753, %v8921
  %v8943 = vadd.f32 %v8754, %v8923
  %v8944 = vadd.f32 %v8755, %v8926
  %v8945 = vadd.f32 %v8756, %v8928
  %v8946 = vadd.f32 %v8757, %v8931
  %v8947 = vld [vmem:[%s4] sm:$0x1]
  %v8949 = vperm.slane %v8947, 0
  %v8951 = vadd.f32 %v8934, %v8949
  %v8952 = vadd.f32 %v8935, %v8949
  %v8953 = vadd.f32 %v8936, %v8949
  %v8954 = vadd.f32 %v8937, %v8949
  %v8955 = vadd.f32 %v8938, %v8949
  %v8956 = vadd.f32 %v8939, %v8949
  %v8957 = vadd.f32 %v8940, %v8949
  %v8958 = vadd.f32 %v8941, %v8949
  %v8959 = vadd.f32 %v8942, %v8949
  %v8960 = vadd.f32 %v8943, %v8949
  %v8961 = vadd.f32 %v8944, %v8949
  %v8962 = vadd.f32 %v8945, %v8949
  %v8963 = vadd.f32 %v8946, %v8949
  %v8977 = vrot.slane %v8951, 1
  %v8978 = vrot.slane %v8951, 2
  %v8979 = vrot.slane %v8951, 3
  %v8980 = vrot.slane %v8951, 4
  %v8981 = vrot.slane %v8951, 5
  %v8982 = vrot.slane %v8951, 6
  %v8983 = vrot.slane %v8951, 7
  %v8984 = vrot.slane %v8952, 1
  %v8985 = vrot.slane %v8952, 2
  %v8986 = vrot.slane %v8952, 3
  %v8987 = vrot.slane %v8952, 4
  %v8988 = vrot.slane %v8952, 5
  %v8989 = vrot.slane %v8952, 6
  %v8990 = vrot.slane %v8952, 7
  %v8991 = vrot.slane %v8953, 1
  %v8992 = vrot.slane %v8953, 2
  %v8993 = vrot.slane %v8953, 3
  %v8994 = vrot.slane %v8953, 4
  %v8995 = vrot.slane %v8953, 5
  %v8996 = vrot.slane %v8953, 6
  %v8997 = vrot.slane %v8953, 7
  %v8998 = vrot.slane %v8954, 1
  %v8999 = vrot.slane %v8954, 2
  %v9000 = vrot.slane %v8954, 3
  %v9001 = vrot.slane %v8954, 4
  %v9002 = vrot.slane %v8954, 5
  %v9003 = vrot.slane %v8954, 6
  %v9004 = vrot.slane %v8954, 7
  %v9005 = vrot.slane %v8955, 1
  %v9006 = vrot.slane %v8955, 2
  %v9007 = vrot.slane %v8955, 3
  %v9008 = vrot.slane %v8955, 4
  %v9009 = vrot.slane %v8955, 5
  %v9010 = vrot.slane %v8955, 6
  %v9011 = vrot.slane %v8955, 7
  %v9012 = vrot.slane %v8956, 1
  %v9013 = vrot.slane %v8956, 2
  %v9014 = vrot.slane %v8956, 3
  %v9015 = vrot.slane %v8956, 4
  %v9016 = vrot.slane %v8956, 5
  %v9017 = vrot.slane %v8956, 6
  %v9018 = vrot.slane %v8956, 7
  %v9019 = vrot.slane %v8957, 1
  %v9020 = vrot.slane %v8957, 2
  %v9021 = vrot.slane %v8957, 3
  %v9022 = vrot.slane %v8957, 4
  %v9023 = vrot.slane %v8957, 5
  %v9024 = vrot.slane %v8957, 6
  %v9025 = vrot.slane %v8957, 7
  %v9026 = vrot.slane %v8958, 1
  %v9027 = vrot.slane %v8958, 2
  %v9028 = vrot.slane %v8958, 3
  %v9029 = vrot.slane %v8958, 4
  %v9030 = vrot.slane %v8958, 5
  %v9031 = vrot.slane %v8958, 6
  %v9032 = vrot.slane %v8958, 7
  %v9033 = vrot.slane %v8959, 1
  %v9034 = vrot.slane %v8959, 2
  %v9035 = vrot.slane %v8959, 3
  %v9036 = vrot.slane %v8959, 4
  %v9037 = vrot.slane %v8959, 5
  %v9038 = vrot.slane %v8959, 6
  %v9039 = vrot.slane %v8959, 7
  %v9040 = vrot.slane %v8960, 1
  %v9041 = vrot.slane %v8960, 2
  %v9042 = vrot.slane %v8960, 3
  %v9043 = vrot.slane %v8960, 4
  %v9044 = vrot.slane %v8960, 5
  %v9045 = vrot.slane %v8960, 6
  %v9046 = vrot.slane %v8960, 7
  %v9047 = vrot.slane %v8961, 1
  %v9048 = vrot.slane %v8961, 2
  %v9049 = vrot.slane %v8961, 3
  %v9050 = vrot.slane %v8961, 4
  %v9051 = vrot.slane %v8961, 5
  %v9052 = vrot.slane %v8961, 6
  %v9053 = vrot.slane %v8961, 7
  %v9054 = vrot.slane %v8962, 1
  %v9055 = vrot.slane %v8962, 2
  %v9056 = vrot.slane %v8962, 3
  %v9057 = vrot.slane %v8962, 4
  %v9058 = vrot.slane %v8962, 5
  %v9059 = vrot.slane %v8962, 6
  %v9060 = vrot.slane %v8962, 7
  %v9061 = vrot.slane %v8963, 1
  %9062 = vst [vmem:[#allocation1] ss:$9 sm:$0xff] %v8951
  %s9063 = scalar_lea.vmem [#allocation1], 1
  %9064 = vst [vmem:[%s9063] ss:$9 sm:$0xff] %v8977
  %s9065 = scalar_lea.vmem [#allocation1], 2
  %9066 = vst [vmem:[%s9065] ss:$9 sm:$0xff] %v8978
  %s9067 = scalar_lea.vmem [#allocation1], 3
  %9068 = vst [vmem:[%s9067] ss:$9 sm:$0xff] %v8979
  %s9069 = scalar_lea.vmem [#allocation1], 4
  %9070 = vst [vmem:[%s9069] ss:$9 sm:$0xff] %v8980
  %s9071 = scalar_lea.vmem [#allocation1], 5
  %9072 = vst [vmem:[%s9071] ss:$9 sm:$0xff] %v8981
  %s9073 = scalar_lea.vmem [#allocation1], 6
  %9074 = vst [vmem:[%s9073] ss:$9 sm:$0xff] %v8982
  %v9075 = vld [vmem:[#allocation1] sm:$0xff]
  %9076 = vst [vmem:[#allocation1] ss:$9 sm:$0xff] %v8983
  %9077 = vst [vmem:[%s9063] ss:$9 sm:$0xff] %v8952
  %9078 = vst [vmem:[%s9065] ss:$9 sm:$0xff] %v8984
  %9079 = vst [vmem:[%s9067] ss:$9 sm:$0xff] %v8985
  %9080 = vst [vmem:[%s9069] ss:$9 sm:$0xff] %v8986
  %9081 = vst [vmem:[%s9071] ss:$9 sm:$0xff] %v8987
  %9082 = vst [vmem:[%s9073] ss:$9 sm:$0xff] %v8988
  %v9083 = vld [vmem:[#allocation1] sm:$0xff]
  %9084 = vst [vmem:[#allocation1] ss:$9 sm:$0xff] %v8989
  %9085 = vst [vmem:[%s9063] ss:$9 sm:$0xff] %v8990
  %9086 = vst [vmem:[%s9065] ss:$9 sm:$0xff] %v8953
  %9087 = vst [vmem:[%s9067] ss:$9 sm:$0xff] %v8991
  %9088 = vst [vmem:[%s9069] ss:$9 sm:$0xff] %v8992
  %9089 = vst [vmem:[%s9071] ss:$9 sm:$0xff] %v8993
  %9090 = vst [vmem:[%s9073] ss:$9 sm:$0xff] %v8994
  %v9091 = vld [vmem:[#allocation1] sm:$0xff]
  %9092 = vst [vmem:[#allocation1] ss:$9 sm:$0xff] %v8995
  %9093 = vst [vmem:[%s9063] ss:$9 sm:$0xff] %v8996
  %9094 = vst [vmem:[%s9065] ss:$9 sm:$0xff] %v8997
  %9095 = vst [vmem:[%s9067] ss:$9 sm:$0xff] %v8954
  %9096 = vst [vmem:[%s9069] ss:$9 sm:$0xff] %v8998
  %9097 = vst [vmem:[%s9071] ss:$9 sm:$0xff] %v8999
  %9098 = vst [vmem:[%s9073] ss:$9 sm:$0xff] %v9000
  %v9099 = vld [vmem:[#allocation1] sm:$0xff]
  %9100 = vst [vmem:[#allocation1] ss:$9 sm:$0xff] %v9001
  %9101 = vst [vmem:[%s9063] ss:$9 sm:$0xff] %v9002
  %9102 = vst [vmem:[%s9065] ss:$9 sm:$0xff] %v9003
  %9103 = vst [vmem:[%s9067] ss:$9 sm:$0xff] %v9004
  %9104 = vst [vmem:[%s9069] ss:$9 sm:$0xff] %v8955
  %9105 = vst [vmem:[%s9071] ss:$9 sm:$0xff] %v9005
  %9106 = vst [vmem:[%s9073] ss:$9 sm:$0xff] %v9006
  %v9107 = vld [vmem:[#allocation1] sm:$0xff]
  %9108 = vst [vmem:[#allocation1] ss:$9 sm:$0xff] %v9007
  %9109 = vst [vmem:[%s9063] ss:$9 sm:$0xff] %v9008
  %9110 = vst [vmem:[%s9065] ss:$9 sm:$0xff] %v9009
  %9111 = vst [vmem:[%s9067] ss:$9 sm:$0xff] %v9010
  %9112 = vst [vmem:[%s9069] ss:$9 sm:$0xff] %v9011
  %9113 = vst [vmem:[%s9071] ss:$9 sm:$0xff] %v8956
  %9114 = vst [vmem:[%s9073] ss:$9 sm:$0xff] %v9012
  %v9115 = vld [vmem:[#allocation1] sm:$0xff]
  %9116 = vst [vmem:[#allocation1] ss:$9 sm:$0xff] %v9013
  %9117 = vst [vmem:[%s9063] ss:$9 sm:$0xff] %v9014
  %9118 = vst [vmem:[%s9065] ss:$9 sm:$0xff] %v9015
  %9119 = vst [vmem:[%s9067] ss:$9 sm:$0xff] %v9016
  %9120 = vst [vmem:[%s9069] ss:$9 sm:$0xff] %v9017
  %9121 = vst [vmem:[%s9071] ss:$9 sm:$0xff] %v9018
  %9122 = vst [vmem:[%s9073] ss:$9 sm:$0xff] %v8957
  %v9123 = vld [vmem:[#allocation1] sm:$0xff]
  %9124 = vst [vmem:[#allocation1] ss:$9 sm:$0xff] %v9019
  %9125 = vst [vmem:[%s9063] ss:$9 sm:$0xff] %v9020
  %9126 = vst [vmem:[%s9065] ss:$9 sm:$0xff] %v9021
  %9127 = vst [vmem:[%s9067] ss:$9 sm:$0xff] %v9022
  %9128 = vst [vmem:[%s9069] ss:$9 sm:$0xff] %v9023
  %9129 = vst [vmem:[%s9071] ss:$9 sm:$0xff] %v9024
  %9130 = vst [vmem:[%s9073] ss:$9 sm:$0xff] %v9025
  %v9131 = vld [vmem:[#allocation1] sm:$0xff]
  %9132 = vst [vmem:[#allocation1] ss:$9 sm:$0xff] %v8958
  %9133 = vst [vmem:[%s9063] ss:$9 sm:$0xff] %v9026
  %9134 = vst [vmem:[%s9065] ss:$9 sm:$0xff] %v9027
  %9135 = vst [vmem:[%s9067] ss:$9 sm:$0xff] %v9028
  %9136 = vst [vmem:[%s9069] ss:$9 sm:$0xff] %v9029
  %9137 = vst [vmem:[%s9071] ss:$9 sm:$0xff] %v9030
  %9138 = vst [vmem:[%s9073] ss:$9 sm:$0xff] %v9031
  %v9139 = vld [vmem:[#allocation1] sm:$0xff]
  %9140 = vst [vmem:[#allocation1] ss:$9 sm:$0xff] %v9032
  %9141 = vst [vmem:[%s9063] ss:$9 sm:$0xff] %v8959
  %9142 = vst [vmem:[%s9065] ss:$9 sm:$0xff] %v9033
  %9143 = vst [vmem:[%s9067] ss:$9 sm:$0xff] %v9034
  %9144 = vst [vmem:[%s9069] ss:$9 sm:$0xff] %v9035
  %9145 = vst [vmem:[%s9071] ss:$9 sm:$0xff] %v9036
  %9146 = vst [vmem:[%s9073] ss:$9 sm:$0xff] %v9037
  %v9147 = vld [vmem:[#allocation1] sm:$0xff]
  %9148 = vst [vmem:[#allocation1] ss:$9 sm:$0xff] %v9038
  %9149 = vst [vmem:[%s9063] ss:$9 sm:$0xff] %v9039
  %9150 = vst [vmem:[%s9065] ss:$9 sm:$0xff] %v8960
  %9151 = vst [vmem:[%s9067] ss:$9 sm:$0xff] %v9040
  %9152 = vst [vmem:[%s9069] ss:$9 sm:$0xff] %v9041
  %9153 = vst [vmem:[%s9071] ss:$9 sm:$0xff] %v9042
  %9154 = vst [vmem:[%s9073] ss:$9 sm:$0xff] %v9043
  %v9155 = vld [vmem:[#allocation1] sm:$0xff]
  %9156 = vst [vmem:[#allocation1] ss:$9 sm:$0xff] %v9044
  %9157 = vst [vmem:[%s9063] ss:$9 sm:$0xff] %v9045
  %9158 = vst [vmem:[%s9065] ss:$9 sm:$0xff] %v9046
  %9159 = vst [vmem:[%s9067] ss:$9 sm:$0xff] %v8961
  %9160 = vst [vmem:[%s9069] ss:$9 sm:$0xff] %v9047
  %9161 = vst [vmem:[%s9071] ss:$9 sm:$0xff] %v9048
  %9162 = vst [vmem:[%s9073] ss:$9 sm:$0xff] %v9049
  %v9163 = vld [vmem:[#allocation1] sm:$0xff]
  %9164 = vst [vmem:[#allocation1] ss:$9 sm:$0xff] %v9050
  %9165 = vst [vmem:[%s9063] ss:$9 sm:$0xff] %v9051
  %9166 = vst [vmem:[%s9065] ss:$9 sm:$0xff] %v9052
  %9167 = vst [vmem:[%s9067] ss:$9 sm:$0xff] %v9053
  %9168 = vst [vmem:[%s9069] ss:$9 sm:$0xff] %v8962
  %9169 = vst [vmem:[%s9071] ss:$9 sm:$0xff] %v9054
  %9170 = vst [vmem:[%s9073] ss:$9 sm:$0xff] %v9055
  %v9171 = vld [vmem:[#allocation1] sm:$0xff]
  %9172 = vst [vmem:[#allocation1] ss:$9 sm:$0xff] %v9056
  %9173 = vst [vmem:[%s9063] ss:$9 sm:$0xff] %v9057
  %9174 = vst [vmem:[%s9065] ss:$9 sm:$0xff] %v9058
  %9175 = vst [vmem:[%s9067] ss:$9 sm:$0xff] %v9059
  %9176 = vst [vmem:[%s9069] ss:$9 sm:$0xff] %v9060
  %9177 = vst [vmem:[%s9071] ss:$9 sm:$0xff] %v8963
  %9178 = vst [vmem:[%s9073] ss:$9 sm:$0xff] %v9061
  %v9179 = vld [vmem:[#allocation1] sm:$0xff]
  %v9194 = vpack.c.bf16 %v9075, %v9075
  %v9195 = vpack.c.bf16 %v9083, %v9083
  %v9196 = vpack.c.bf16 %v9091, %v9091
  %v9197 = vpack.c.bf16 %v9099, %v9099
  %v9198 = vpack.c.bf16 %v9107, %v9107
  %v9199 = vpack.c.bf16 %v9115, %v9115
  %v9200 = vpack.c.bf16 %v9123, %v9123
  %v9201 = vpack.c.bf16 %v9131, %v9131
  %v9202 = vpack.c.bf16 %v9139, %v9139
  %v9203 = vpack.c.bf16 %v9147, %v9147
  %v9204 = vpack.c.bf16 %v9155, %v9155
  %v9205 = vpack.c.bf16 %v9163, %v9163
  %v9206 = vpack.c.bf16 %v9171, %v9171
  %v9207 = vpack.c.bf16 %v9179, %v9179
  %v9218 = vrot.slane %v9194, 3
  %v9219 = vrot.slane %v9195, 3
  %v9220 = vrot.slane %v9196, 3
  %v9221 = vrot.slane %v9197, 3
  %v9222 = vrot.slane %v9198, 3
  %v9223 = vrot.slane %v9201, 3
  %v9224 = vrot.slane %v9202, 3
  %v9225 = vrot.slane %v9203, 3
  %v9226 = vrot.slane %v9204, 3
  %v9227 = vrot.slane %v9205, 3
  %v9230 = vsel %vm273, %v9194, %v9218
  %v9232 = vsel %vm5548, %v9194, %v9218
  %v9234 = vrot.slane %v9232, 1
  %v9235 = vsel %vm5552, %v9194, %v9218
  %v9237 = vrot.slane %v9235, 2
  %v9240 = vsel %vm273, %v9195, %v9219
  %v9242 = vsel %vm5548, %v9195, %v9219
  %v9244 = vrot.slane %v9242, 1
  %v9245 = vsel %vm5552, %v9195, %v9219
  %v9247 = vrot.slane %v9245, 2
  %v9250 = vsel %vm273, %v9196, %v9220
  %v9252 = vsel %vm5548, %v9196, %v9220
  %v9254 = vrot.slane %v9252, 1
  %v9255 = vsel %vm5552, %v9196, %v9220
  %v9257 = vrot.slane %v9255, 2
  %v9260 = vsel %vm273, %v9197, %v9221
  %v9262 = vsel %vm5548, %v9197, %v9221
  %v9264 = vrot.slane %v9262, 1
  %v9265 = vsel %vm5552, %v9197, %v9221
  %v9267 = vrot.slane %v9265, 2
  %v9270 = vsel %vm273, %v9198, %v9222
  %v9272 = vsel %vm5548, %v9198, %v9222
  %v9274 = vrot.slane %v9272, 1
  %v9275 = vsel %vm5552, %v9198, %v9222
  %v9277 = vrot.slane %v9275, 2
  %v9280 = vsel %vm273, %v9201, %v9223
  %v9282 = vsel %vm5548, %v9201, %v9223
  %v9284 = vrot.slane %v9282, 1
  %v9285 = vsel %vm5552, %v9201, %v9223
  %v9287 = vrot.slane %v9285, 2
  %v9290 = vsel %vm273, %v9202, %v9224
  %v9292 = vsel %vm5548, %v9202, %v9224
  %v9294 = vrot.slane %v9292, 1
  %v9295 = vsel %vm5552, %v9202, %v9224
  %v9297 = vrot.slane %v9295, 2
  %v9300 = vsel %vm273, %v9203, %v9225
  %v9302 = vsel %vm5548, %v9203, %v9225
  %v9304 = vrot.slane %v9302, 1
  %v9305 = vsel %vm5552, %v9203, %v9225
  %v9307 = vrot.slane %v9305, 2
  %v9310 = vsel %vm273, %v9204, %v9226
  %v9312 = vsel %vm5548, %v9204, %v9226
  %v9314 = vrot.slane %v9312, 1
  %v9315 = vsel %vm5552, %v9204, %v9226
  %v9317 = vrot.slane %v9315, 2
  %v9320 = vsel %vm273, %v9205, %v9227
  %v9322 = vsel %vm5548, %v9205, %v9227
  %v9324 = vrot.slane %v9322, 1
  %v9325 = vsel %vm5552, %v9205, %v9227
  %v9327 = vrot.slane %v9325, 2
  %v9328 = vunpack.i.l.s16 %v9230
  %v9329 = vunpack.i.h.s16 %v9230
  %v9330 = vunpack.i.l.s16 %v9234
  %v9331 = vunpack.i.h.s16 %v9234
  %v9332 = vunpack.i.l.s16 %v9237
  %v9333 = vunpack.i.l.s16 %v9240
  %v9334 = vunpack.i.h.s16 %v9240
  %v9335 = vunpack.i.l.s16 %v9244
  %v9336 = vunpack.i.h.s16 %v9244
  %v9337 = vunpack.i.l.s16 %v9247
  %v9338 = vunpack.i.l.s16 %v9250
  %v9339 = vunpack.i.h.s16 %v9250
  %v9340 = vunpack.i.l.s16 %v9254
  %v9341 = vunpack.i.h.s16 %v9254
  %v9342 = vunpack.i.l.s16 %v9257
  %v9343 = vunpack.i.l.s16 %v9260
  %v9344 = vunpack.i.h.s16 %v9260
  %v9345 = vunpack.i.l.s16 %v9264
  %v9346 = vunpack.i.h.s16 %v9264
  %v9347 = vunpack.i.l.s16 %v9267
  %v9348 = vunpack.i.l.s16 %v9270
  %v9349 = vunpack.i.h.s16 %v9270
  %v9350 = vunpack.i.l.s16 %v9274
  %v9351 = vunpack.i.h.s16 %v9274
  %v9352 = vunpack.i.l.s16 %v9277
  %v9353 = vunpack.i.l.s16 %v9280
  %v9354 = vunpack.i.h.s16 %v9280
  %v9355 = vunpack.i.l.s16 %v9284
  %v9356 = vunpack.i.h.s16 %v9284
  %v9357 = vunpack.i.l.s16 %v9287
  %v9358 = vunpack.i.l.s16 %v9290
  %v9359 = vunpack.i.h.s16 %v9290
  %v9360 = vunpack.i.l.s16 %v9294
  %v9361 = vunpack.i.h.s16 %v9294
  %v9362 = vunpack.i.l.s16 %v9297
  %v9363 = vunpack.i.l.s16 %v9300
  %v9364 = vunpack.i.h.s16 %v9300
  %v9365 = vunpack.i.l.s16 %v9304
  %v9366 = vunpack.i.h.s16 %v9304
  %v9367 = vunpack.i.l.s16 %v9307
  %v9368 = vunpack.i.l.s16 %v9310
  %v9369 = vunpack.i.h.s16 %v9310
  %v9370 = vunpack.i.l.s16 %v9314
  %v9371 = vunpack.i.h.s16 %v9314
  %v9372 = vunpack.i.l.s16 %v9317
  %v9373 = vunpack.i.l.s16 %v9320
  %v9374 = vunpack.i.h.s16 %v9320
  %v9375 = vunpack.i.l.s16 %v9324
  %v9376 = vunpack.i.h.s16 %v9324
  %v9377 = vunpack.i.l.s16 %v9327
  %v9378 = vld [vmem:[%s5] sm:$0xf]
  %v9379 = vld [vmem:[%s5 + $0x4] sm:$0xf]
  %v9380 = vld [vmem:[%s5 + $0x8] sm:$0xf]
  %v9381 = vld [vmem:[%s5 + $0xc] sm:$0xf]
  %v9382 = vld [vmem:[%s5 + $0x10] sm:$0x3]
  %v9383 = vunpack.i.h.s16 %v9237
  %v9384 = vunpack.i.h.s16 %v9247
  %v9385 = vunpack.i.h.s16 %v9257
  %v9386 = vunpack.i.h.s16 %v9267
  %v9387 = vunpack.i.h.s16 %v9277
  %v9388 = vunpack.i.h.s16 %v9287
  %v9389 = vunpack.i.h.s16 %v9297
  %v9390 = vunpack.i.h.s16 %v9307
  %v9391 = vunpack.i.h.s16 %v9317
  %v9392 = vunpack.i.h.s16 %v9327
  %s9393 = scalar_lea.vmem %s5, 20
  %v9394 = vld [vmem:[%s9393] sm:$0xf]
  %v9395 = vld [vmem:[%s9393 + $0x4] sm:$0xf]
  %v9396 = vld [vmem:[%s9393 + $0x8] sm:$0xf]
  %v9397 = vld [vmem:[%s9393 + $0xc] sm:$0xf]
  %v9398 = vld [vmem:[%s9393 + $0x10] sm:$0x3]
  %v9399 = vpack.i.b16 %v9330, %v9329
  %v9400 = vpack.i.b16 %v9332, %v9331
  %v9401 = vpack.i.b16 %v9334, %v9383
  %v9402 = vpack.i.b16 %v9336, %v9335
  %v9403 = vpack.i.b16 %v9384, %v9337
  %v9404 = vpack.i.b16 %v9340, %v9339
  %v9405 = vpack.i.b16 %v9342, %v9341
  %v9406 = vpack.i.b16 %v9344, %v9385
  %v9407 = vpack.i.b16 %v9346, %v9345
  %v9408 = vpack.i.b16 %v9386, %v9347
  %v9409 = vpack.i.b16 %v9350, %v9349
  %v9410 = vpack.i.b16 %v9352, %v9351
  %v9411 = vpack.i.b16 %v9354, %v9387
  %v9412 = vpack.i.b16 %v9356, %v9355
  %v9413 = vpack.i.b16 %v9388, %v9357
  %v9414 = vpack.i.b16 %v9360, %v9359
  %v9415 = vpack.i.b16 %v9362, %v9361
  %v9416 = vpack.i.b16 %v9364, %v9389
  %v9417 = vpack.i.b16 %v9366, %v9365
  %v9418 = vpack.i.b16 %v9390, %v9367
  %v9419 = vpack.i.b16 %v9370, %v9369
  %v9420 = vpack.i.b16 %v9372, %v9371
  %v9421 = vpack.i.b16 %v9374, %v9391
  %v9422 = vpack.i.b16 %v9376, %v9375
  %v9423 = vpack.i.b16 %v9392, %v9377
  %9425 = vst [vmem:[#allocation1] ss:$9 sm:$0xff] %v9399
  %s9427 = scalar_lea.vmem [#allocation1], 1
  %9428 = vst [vmem:[%s9427] ss:$9 sm:$0xff] %v9400
  %s9430 = scalar_lea.vmem [#allocation1], 2
  %9431 = vst [vmem:[%s9430] ss:$9 sm:$0xff] %v9401
  %s9433 = scalar_lea.vmem [#allocation1], 3
  %9434 = vst [vmem:[%s9433] ss:$9 sm:$0xff] %v9402
  %s9436 = scalar_lea.vmem [#allocation1], 4
  %9437 = vst [vmem:[%s9436] ss:$9 sm:$0xff] %v9403
  %s9439 = scalar_lea.vmem [#allocation1], 5
  %9440 = vst [vmem:[%s9439] ss:$9 sm:$0xff] %v9404
  %s9442 = scalar_lea.vmem [#allocation1], 6
  %9443 = vst [vmem:[%s9442] ss:$9 sm:$0xff] %v9405
  %s9445 = scalar_lea.vmem [#allocation1], 7
  %9446 = vst [vmem:[%s9445] ss:$9 sm:$0xff] %v9406
  %v9447 = vld [vmem:[#allocation1] sm:$0xff]
  %9449 = vst [vmem:[#allocation1] ss:$9 sm:$0xff] %v9407
  %9451 = vst [vmem:[%s9427] ss:$9 sm:$0xff] %v9408
  %9453 = vst [vmem:[%s9430] ss:$9 sm:$0xff] %v9409
  %9455 = vst [vmem:[%s9433] ss:$9 sm:$0xff] %v9410
  %9457 = vst [vmem:[%s9436] ss:$9 sm:$0xff] %v9411
  %9459 = vst [vmem:[%s9439] ss:$9 sm:$0xff] %v9412
  %9461 = vst [vmem:[%s9442] ss:$9 sm:$0xff] %v9413
  %9463 = vst [vmem:[%s9445] ss:$9 sm:$0xff] %v9414
  %v9464 = vld [vmem:[#allocation1] sm:$0xff]
  %9466 = vst [vmem:[#allocation1] ss:$9 sm:$0xff] %v9415
  %9468 = vst [vmem:[%s9427] ss:$9 sm:$0xff] %v9416
  %9470 = vst [vmem:[%s9430] ss:$9 sm:$0xff] %v9417
  %9472 = vst [vmem:[%s9433] ss:$9 sm:$0xff] %v9418
  %9474 = vst [vmem:[%s9436] ss:$9 sm:$0xff] %v9419
  %9476 = vst [vmem:[%s9439] ss:$9 sm:$0xff] %v9420
  %9478 = vst [vmem:[%s9442] ss:$9 sm:$0xff] %v9421
  %9480 = vst [vmem:[%s9445] ss:$9 sm:$0xff] %v9422
  %v9481 = vld [vmem:[#allocation1] sm:$0xff]
  %9483 = vst [vmem:[#allocation1] ss:$9 sm:$0xff] %v9423
  %v9484 = vld [vmem:[#allocation1] sm:$0xff]
  %v9490 = vunpack.c.l.b16 %v9394
  %v9491 = vunpack.c.l.b16 %v9395
  %v9492 = vunpack.c.l.b16 %v9396
  %v9493 = vunpack.c.l.b16 %v9397
  %v9494 = vunpack.c.l.b16 %v9398
  %v9495 = vpack.c.b16 %v9491, %v9490
  %v9496 = vpack.c.b16 %v9493, %v9492
  %v9497 = vpack.c.b16 %v9494, %v9494
  %vm9500 = vcmask 293888
  %v9501 = vsel %vm9500, %v9447, 0
  %v9503 = vsel %vm9500, %v9464, 0
  %v9505 = vsel %vm9500, %v9481, 0
  %v9507 = vsel %vm9500, %v9484, 0
  %v9510 = vsel %vm274, %v9497, 0
  %9512 = vmatpush.bf16.msra.mxu0 0
  %9513 = vmatpush.bf16.msra.mxu0 0
  %9514 = vmatpush.bf16.msra.mxu0 0
  %9515 = vmatpush.bf16.msra.mxu0 0
  %9516 = vmatpush.bf16.msra.mxu0 0
  %9517 = vmatpush.bf16.msra.mxu0 %v9510
  %9518 = vmatpush.bf16.msra.mxu0 %v9496
  %9519 = vmatpush.bf16.msra.mxu0 %v9495
  %9520 = vmatmul.bf16.gmra.mxu0 %v9501
  %v9521 = vpop.f32.mrf.mxu0
  %v9522 = vadd.f32 0.0, %v9521
  %v9523 = vpop.f32.mrf.mxu0
  %v9524 = vadd.f32 0.0, %v9523
  %9525 = vmatmul.bf16.gmra.mxu0 %v9503
  %v9526 = vpop.f32.mrf.mxu0
  %v9527 = vadd.f32 0.0, %v9526
  %v9528 = vpop.f32.mrf.mxu0
  %v9529 = vadd.f32 0.0, %v9528
  %9530 = vmatmul.bf16.gmra.mxu0 %v9505
  %v9531 = vpop.f32.mrf.mxu0
  %v9532 = vadd.f32 0.0, %v9531
  %v9533 = vpop.f32.mrf.mxu0
  %v9534 = vadd.f32 0.0, %v9533
  %9535 = vmatmul.bf16.gmra.mxu0 %v9507
  %v9536 = vpop.f32.mrf.mxu0
  %v9537 = vadd.f32 0.0, %v9536
  %v9538 = vpop.f32.mrf.mxu0
  %9539 = vdwg.mxu0
  %v9540 = vpack.i.b16 %v9329, %v9328
  %v9541 = vpack.i.b16 %v9331, %v9330
  %v9542 = vpack.i.b16 %v9333, %v9332
  %v9543 = vpack.i.b16 %v9335, %v9334
  %v9544 = vpack.i.b16 %v9337, %v9336
  %v9545 = vpack.i.b16 %v9339, %v9338
  %v9546 = vpack.i.b16 %v9341, %v9340
  %v9547 = vpack.i.b16 %v9343, %v9342
  %v9548 = vpack.i.b16 %v9345, %v9344
  %v9549 = vpack.i.b16 %v9347, %v9346
  %v9550 = vpack.i.b16 %v9349, %v9348
  %v9551 = vpack.i.b16 %v9351, %v9350
  %v9552 = vpack.i.b16 %v9353, %v9352
  %v9553 = vpack.i.b16 %v9355, %v9354
  %v9554 = vpack.i.b16 %v9357, %v9356
  %v9555 = vpack.i.b16 %v9359, %v9358
  %v9556 = vpack.i.b16 %v9361, %v9360
  %v9557 = vpack.i.b16 %v9363, %v9362
  %v9558 = vpack.i.b16 %v9365, %v9364
  %v9559 = vpack.i.b16 %v9367, %v9366
  %v9560 = vpack.i.b16 %v9369, %v9368
  %v9561 = vpack.i.b16 %v9371, %v9370
  %v9562 = vpack.i.b16 %v9373, %v9372
  %v9563 = vpack.i.b16 %v9375, %v9374
  %v9564 = vpack.i.b16 %v9377, %v9376
  %9566 = vst [vmem:[#allocation1] ss:$9 sm:$0xff] %v9540
  %s9568 = scalar_lea.vmem [#allocation1], 1
  %9569 = vst [vmem:[%s9568] ss:$9 sm:$0xff] %v9541
  %s9571 = scalar_lea.vmem [#allocation1], 2
  %9572 = vst [vmem:[%s9571] ss:$9 sm:$0xff] %v9542
  %s9574 = scalar_lea.vmem [#allocation1], 3
  %9575 = vst [vmem:[%s9574] ss:$9 sm:$0xff] %v9543
  %s9577 = scalar_lea.vmem [#allocation1], 4
  %9578 = vst [vmem:[%s9577] ss:$9 sm:$0xff] %v9544
  %s9580 = scalar_lea.vmem [#allocation1], 5
  %9581 = vst [vmem:[%s9580] ss:$9 sm:$0xff] %v9545
  %s9583 = scalar_lea.vmem [#allocation1], 6
  %9584 = vst [vmem:[%s9583] ss:$9 sm:$0xff] %v9546
  %s9586 = scalar_lea.vmem [#allocation1], 7
  %9587 = vst [vmem:[%s9586] ss:$9 sm:$0xff] %v9547
  %v9588 = vld [vmem:[#allocation1] sm:$0xff]
  %9590 = vst [vmem:[#allocation1] ss:$9 sm:$0xff] %v9548
  %9592 = vst [vmem:[%s9568] ss:$9 sm:$0xff] %v9549
  %9594 = vst [vmem:[%s9571] ss:$9 sm:$0xff] %v9550
  %9596 = vst [vmem:[%s9574] ss:$9 sm:$0xff] %v9551
  %9598 = vst [vmem:[%s9577] ss:$9 sm:$0xff] %v9552
  %9600 = vst [vmem:[%s9580] ss:$9 sm:$0xff] %v9553
  %9602 = vst [vmem:[%s9583] ss:$9 sm:$0xff] %v9554
  %9604 = vst [vmem:[%s9586] ss:$9 sm:$0xff] %v9555
  %v9605 = vld [vmem:[#allocation1] sm:$0xff]
  %9607 = vst [vmem:[#allocation1] ss:$9 sm:$0xff] %v9556
  %9609 = vst [vmem:[%s9568] ss:$9 sm:$0xff] %v9557
  %9611 = vst [vmem:[%s9571] ss:$9 sm:$0xff] %v9558
  %9613 = vst [vmem:[%s9574] ss:$9 sm:$0xff] %v9559
  %9615 = vst [vmem:[%s9577] ss:$9 sm:$0xff] %v9560
  %9617 = vst [vmem:[%s9580] ss:$9 sm:$0xff] %v9561
  %9619 = vst [vmem:[%s9583] ss:$9 sm:$0xff] %v9562
  %9621 = vst [vmem:[%s9586] ss:$9 sm:$0xff] %v9563
  %v9622 = vld [vmem:[#allocation1] sm:$0xff]
  %9624 = vst [vmem:[#allocation1] ss:$9 sm:$0xff] %v9564
  %v9625 = vld [vmem:[#allocation1] sm:$0xff]
  %v9631 = vunpack.c.l.b16 %v9378
  %v9632 = vunpack.c.l.b16 %v9379
  %v9633 = vunpack.c.l.b16 %v9380
  %v9634 = vunpack.c.l.b16 %v9381
  %v9635 = vunpack.c.l.b16 %v9382
  %v9636 = vpack.c.b16 %v9632, %v9631
  %v9637 = vpack.c.b16 %v9634, %v9633
  %v9638 = vpack.c.b16 %v9635, %v9635
  %v9641 = vsel %vm9500, %v9588, 0
  %v9643 = vsel %vm9500, %v9605, 0
  %v9645 = vsel %vm9500, %v9622, 0
  %v9647 = vsel %vm9500, %v9625, 0
  %v9650 = vsel %vm274, %v9638, 0
  %9652 = vmatpush.bf16.msra.mxu0 0
  %9653 = vmatpush.bf16.msra.mxu0 0
  %9654 = vmatpush.bf16.msra.mxu0 0
  %9655 = vmatpush.bf16.msra.mxu0 0
  %9656 = vmatpush.bf16.msra.mxu0 0
  %9657 = vmatpush.bf16.msra.mxu0 %v9650
  %9658 = vmatpush.bf16.msra.mxu0 %v9637
  %9659 = vmatpush.bf16.msra.mxu0 %v9636
  %9660 = vmatmul.bf16.gmra.mxu0 %v9641
  %v9661 = vpop.f32.mrf.mxu0
  %v9662 = vadd.f32 %v9522, %v9661
  %v9663 = vpop.f32.mrf.mxu0
  %v9664 = vadd.f32 %v9524, %v9663
  %9665 = vmatmul.bf16.gmra.mxu0 %v9643
  %v9666 = vpop.f32.mrf.mxu0
  %v9667 = vadd.f32 %v9527, %v9666
  %v9668 = vpop.f32.mrf.mxu0
  %v9669 = vadd.f32 %v9529, %v9668
  %9670 = vmatmul.bf16.gmra.mxu0 %v9645
  %v9671 = vpop.f32.mrf.mxu0
  %v9672 = vadd.f32 %v9532, %v9671
  %v9673 = vpop.f32.mrf.mxu0
  %v9674 = vadd.f32 %v9534, %v9673
  %9675 = vmatmul.bf16.gmra.mxu0 %v9647
  %v9676 = vpop.f32.mrf.mxu0
  %v9677 = vadd.f32 %v9537, %v9676
  %v9678 = vpop.f32.mrf.mxu0
  %9679 = vdwg.mxu0
  %9680 = vst [vmem:[#allocation1] sm:$0xff] %v9194
  %s9681 = scalar_lea.vmem [#allocation1], 1
  %v9682 = vld [vmem:[%s9681] ss:$4 sm:$0xff]
  %s9684 = scalar_lea.vmem [#allocation1], 2
  %v9685 = vld [vmem:[%s9684] ss:$4 sm:$0xff]
  %s9687 = scalar_lea.vmem [#allocation1], 3
  %v9688 = vld [vmem:[%s9687] ss:$4 sm:$0xff]
  %9690 = vst [vmem:[#allocation1 + $0x20] sm:$0xff] %v9195
  %s9691 = scalar_lea.vmem [#allocation1], 33
  %v9692 = vld [vmem:[%s9691] ss:$4 sm:$0xff]
  %s9694 = scalar_lea.vmem [#allocation1], 34
  %v9695 = vld [vmem:[%s9694] ss:$4 sm:$0xff]
  %s9697 = scalar_lea.vmem [#allocation1], 35
  %v9698 = vld [vmem:[%s9697] ss:$4 sm:$0xff]
  %9700 = vst [vmem:[#allocation1] sm:$0xff] %v9196
  %v9701 = vld [vmem:[%s9681] ss:$4 sm:$0xff]
  %v9703 = vld [vmem:[%s9684] ss:$4 sm:$0xff]
  %v9705 = vld [vmem:[%s9687] ss:$4 sm:$0xff]
  %9707 = vst [vmem:[#allocation1 + $0x20] sm:$0xff] %v9197
  %v9708 = vld [vmem:[%s9691] ss:$4 sm:$0xff]
  %v9710 = vld [vmem:[%s9694] ss:$4 sm:$0xff]
  %v9712 = vld [vmem:[%s9697] ss:$4 sm:$0xff]
  %9714 = vst [vmem:[#allocation1] sm:$0xff] %v9198
  %v9715 = vld [vmem:[%s9681] ss:$4 sm:$0xff]
  %v9717 = vld [vmem:[%s9684] ss:$4 sm:$0xff]
  %v9719 = vld [vmem:[%s9687] ss:$4 sm:$0xff]
  %9721 = vst [vmem:[#allocation1 + $0x20] sm:$0xff] %v9201
  %v9722 = vld [vmem:[%s9691] ss:$4 sm:$0xff]
  %v9724 = vld [vmem:[%s9694] ss:$4 sm:$0xff]
  %v9726 = vld [vmem:[%s9697] ss:$4 sm:$0xff]
  %9728 = vst [vmem:[#allocation1] sm:$0xff] %v9202
  %v9729 = vld [vmem:[%s9681] ss:$4 sm:$0xff]
  %v9731 = vld [vmem:[%s9684] ss:$4 sm:$0xff]
  %v9733 = vld [vmem:[%s9687] ss:$4 sm:$0xff]
  %9735 = vst [vmem:[#allocation1 + $0x20] sm:$0xff] %v9203
  %v9736 = vld [vmem:[%s9691] ss:$4 sm:$0xff]
  %v9738 = vld [vmem:[%s9694] ss:$4 sm:$0xff]
  %v9740 = vld [vmem:[%s9697] ss:$4 sm:$0xff]
  %9742 = vst [vmem:[#allocation1] sm:$0xff] %v9204
  %v9743 = vld [vmem:[%s9681] ss:$4 sm:$0xff]
  %v9745 = vld [vmem:[%s9684] ss:$4 sm:$0xff]
  %v9747 = vld [vmem:[%s9687] ss:$4 sm:$0xff]
  %9749 = vst [vmem:[#allocation1 + $0x20] sm:$0xff] %v9205
  %v9750 = vld [vmem:[%s9691] ss:$4 sm:$0xff]
  %v9752 = vld [vmem:[%s9694] ss:$4 sm:$0xff]
  %v9754 = vld [vmem:[%s9697] ss:$4 sm:$0xff]
  %v9756 = vunpack.i.l.s16 %v9682
  %v9757 = vunpack.i.h.s16 %v9682
  %v9758 = vunpack.i.l.s16 %v9685
  %v9759 = vunpack.i.h.s16 %v9685
  %v9760 = vunpack.i.l.s16 %v9688
  %v9761 = vunpack.i.l.s16 %v9692
  %v9762 = vunpack.i.h.s16 %v9692
  %v9763 = vunpack.i.l.s16 %v9695
  %v9764 = vunpack.i.h.s16 %v9695
  %v9765 = vunpack.i.l.s16 %v9698
  %v9766 = vunpack.i.l.s16 %v9701
  %v9767 = vunpack.i.h.s16 %v9701
  %v9768 = vunpack.i.l.s16 %v9703
  %v9769 = vunpack.i.h.s16 %v9703
  %v9770 = vunpack.i.l.s16 %v9705
  %v9771 = vunpack.i.l.s16 %v9708
  %v9772 = vunpack.i.h.s16 %v9708
  %v9773 = vunpack.i.l.s16 %v9710
  %v9774 = vunpack.i.h.s16 %v9710
  %v9775 = vunpack.i.l.s16 %v9712
  %v9776 = vunpack.i.l.s16 %v9715
  %v9777 = vunpack.i.h.s16 %v9715
  %v9778 = vunpack.i.l.s16 %v9717
  %v9779 = vunpack.i.h.s16 %v9717
  %v9780 = vunpack.i.l.s16 %v9719
  %v9781 = vunpack.i.l.s16 %v9722
  %v9782 = vunpack.i.h.s16 %v9722
  %v9783 = vunpack.i.l.s16 %v9724
  %v9784 = vunpack.i.h.s16 %v9724
  %v9785 = vunpack.i.l.s16 %v9726
  %v9786 = vunpack.i.l.s16 %v9729
  %v9787 = vunpack.i.h.s16 %v9729
  %v9788 = vunpack.i.l.s16 %v9731
  %v9789 = vunpack.i.h.s16 %v9731
  %v9790 = vunpack.i.l.s16 %v9733
  %v9791 = vunpack.i.l.s16 %v9736
  %v9792 = vunpack.i.h.s16 %v9736
  %v9793 = vunpack.i.l.s16 %v9738
  %v9794 = vunpack.i.h.s16 %v9738
  %v9795 = vunpack.i.l.s16 %v9740
  %v9796 = vunpack.i.l.s16 %v9743
  %v9797 = vunpack.i.h.s16 %v9743
  %v9798 = vunpack.i.l.s16 %v9745
  %v9799 = vunpack.i.h.s16 %v9745
  %v9800 = vunpack.i.l.s16 %v9747
  %v9801 = vunpack.i.l.s16 %v9750
  %v9802 = vunpack.i.h.s16 %v9750
  %v9803 = vunpack.i.l.s16 %v9752
  %v9804 = vunpack.i.h.s16 %v9752
  %v9805 = vunpack.i.l.s16 %v9754
  %s9806 = scalar_lea.vmem %s5, 40
  %v9807 = vld [vmem:[%s9806] sm:$0xf]
  %v9808 = vld [vmem:[%s9806 + $0x4] sm:$0xf]
  %v9809 = vld [vmem:[%s9806 + $0x8] sm:$0xf]
  %v9810 = vld [vmem:[%s9806 + $0xc] sm:$0xf]
  %v9811 = vld [vmem:[%s9806 + $0x10] sm:$0x3]
  %v9812 = vpack.i.b16 %v9757, %v9756
  %v9813 = vpack.i.b16 %v9759, %v9758
  %v9814 = vpack.i.b16 %v9761, %v9760
  %v9815 = vpack.i.b16 %v9763, %v9762
  %v9816 = vpack.i.b16 %v9765, %v9764
  %v9817 = vpack.i.b16 %v9767, %v9766
  %v9818 = vpack.i.b16 %v9769, %v9768
  %v9819 = vpack.i.b16 %v9771, %v9770
  %v9820 = vpack.i.b16 %v9773, %v9772
  %v9821 = vpack.i.b16 %v9775, %v9774
  %v9822 = vpack.i.b16 %v9777, %v9776
  %v9823 = vpack.i.b16 %v9779, %v9778
  %v9824 = vpack.i.b16 %v9781, %v9780
  %v9825 = vpack.i.b16 %v9783, %v9782
  %v9826 = vpack.i.b16 %v9785, %v9784
  %v9827 = vpack.i.b16 %v9787, %v9786
  %v9828 = vpack.i.b16 %v9789, %v9788
  %v9829 = vpack.i.b16 %v9791, %v9790
  %v9830 = vpack.i.b16 %v9793, %v9792
  %v9831 = vpack.i.b16 %v9795, %v9794
  %v9832 = vpack.i.b16 %v9797, %v9796
  %v9833 = vpack.i.b16 %v9799, %v9798
  %v9834 = vpack.i.b16 %v9801, %v9800
  %v9835 = vpack.i.b16 %v9803, %v9802
  %v9836 = vpack.i.b16 %v9805, %v9804
  %9838 = vst [vmem:[#allocation1] ss:$9 sm:$0xff] %v9812
  %s9840 = scalar_lea.vmem [#allocation1], 1
  %9841 = vst [vmem:[%s9840] ss:$9 sm:$0xff] %v9813
  %s9843 = scalar_lea.vmem [#allocation1], 2
  %9844 = vst [vmem:[%s9843] ss:$9 sm:$0xff] %v9814
  %s9846 = scalar_lea.vmem [#allocation1], 3
  %9847 = vst [vmem:[%s9846] ss:$9 sm:$0xff] %v9815
  %s9849 = scalar_lea.vmem [#allocation1], 4
  %9850 = vst [vmem:[%s9849] ss:$9 sm:$0xff] %v9816
  %s9852 = scalar_lea.vmem [#allocation1], 5
  %9853 = vst [vmem:[%s9852] ss:$9 sm:$0xff] %v9817
  %s9855 = scalar_lea.vmem [#allocation1], 6
  %9856 = vst [vmem:[%s9855] ss:$9 sm:$0xff] %v9818
  %s9858 = scalar_lea.vmem [#allocation1], 7
  %9859 = vst [vmem:[%s9858] ss:$9 sm:$0xff] %v9819
  %v9860 = vld [vmem:[#allocation1] sm:$0xff]
  %9862 = vst [vmem:[#allocation1] ss:$9 sm:$0xff] %v9820
  %9864 = vst [vmem:[%s9840] ss:$9 sm:$0xff] %v9821
  %9866 = vst [vmem:[%s9843] ss:$9 sm:$0xff] %v9822
  %9868 = vst [vmem:[%s9846] ss:$9 sm:$0xff] %v9823
  %9870 = vst [vmem:[%s9849] ss:$9 sm:$0xff] %v9824
  %9872 = vst [vmem:[%s9852] ss:$9 sm:$0xff] %v9825
  %9874 = vst [vmem:[%s9855] ss:$9 sm:$0xff] %v9826
  %9876 = vst [vmem:[%s9858] ss:$9 sm:$0xff] %v9827
  %v9877 = vld [vmem:[#allocation1] sm:$0xff]
  %9879 = vst [vmem:[#allocation1] ss:$9 sm:$0xff] %v9828
  %9881 = vst [vmem:[%s9840] ss:$9 sm:$0xff] %v9829
  %9883 = vst [vmem:[%s9843] ss:$9 sm:$0xff] %v9830
  %9885 = vst [vmem:[%s9846] ss:$9 sm:$0xff] %v9831
  %9887 = vst [vmem:[%s9849] ss:$9 sm:$0xff] %v9832
  %9889 = vst [vmem:[%s9852] ss:$9 sm:$0xff] %v9833
  %9891 = vst [vmem:[%s9855] ss:$9 sm:$0xff] %v9834
  %9893 = vst [vmem:[%s9858] ss:$9 sm:$0xff] %v9835
  %v9894 = vld [vmem:[#allocation1] sm:$0xff]
  %9896 = vst [vmem:[#allocation1] ss:$9 sm:$0xff] %v9836
  %v9897 = vld [vmem:[#allocation1] sm:$0xff]
  %v9903 = vunpack.c.l.b16 %v9807
  %v9904 = vunpack.c.l.b16 %v9808
  %v9905 = vunpack.c.l.b16 %v9809
  %v9906 = vunpack.c.l.b16 %v9810
  %v9907 = vunpack.c.l.b16 %v9811
  %v9908 = vpack.c.b16 %v9904, %v9903
  %v9909 = vpack.c.b16 %v9906, %v9905
  %v9910 = vpack.c.b16 %v9907, %v9907
  %v9913 = vsel %vm9500, %v9860, 0
  %v9915 = vsel %vm9500, %v9877, 0
  %v9917 = vsel %vm9500, %v9894, 0
  %v9919 = vsel %vm9500, %v9897, 0
  %v9922 = vsel %vm274, %v9910, 0
  %9924 = vmatpush.bf16.msra.mxu0 0
  %9925 = vmatpush.bf16.msra.mxu0 0
  %9926 = vmatpush.bf16.msra.mxu0 0
  %9927 = vmatpush.bf16.msra.mxu0 0
  %9928 = vmatpush.bf16.msra.mxu0 0
  %9929 = vmatpush.bf16.msra.mxu0 %v9922
  %9930 = vmatpush.bf16.msra.mxu0 %v9909
  %9931 = vmatpush.bf16.msra.mxu0 %v9908
  %9932 = vmatmul.bf16.gmra.mxu0 %v9913
  %v9933 = vpop.f32.mrf.mxu0
  %v9934 = vadd.f32 0.0, %v9933
  %v9935 = vpop.f32.mrf.mxu0
  %v9936 = vadd.f32 0.0, %v9935
  %9937 = vmatmul.bf16.gmra.mxu0 %v9915
  %v9938 = vpop.f32.mrf.mxu0
  %v9939 = vadd.f32 0.0, %v9938
  %v9940 = vpop.f32.mrf.mxu0
  %v9941 = vadd.f32 0.0, %v9940
  %9942 = vmatmul.bf16.gmra.mxu0 %v9917
  %v9943 = vpop.f32.mrf.mxu0
  %v9944 = vadd.f32 0.0, %v9943
  %v9945 = vpop.f32.mrf.mxu0
  %v9946 = vadd.f32 0.0, %v9945
  %9947 = vmatmul.bf16.gmra.mxu0 %v9919
  %v9948 = vpop.f32.mrf.mxu0
  %v9949 = vadd.f32 0.0, %v9948
  %v9950 = vpop.f32.mrf.mxu0
  %9951 = vdwg.mxu0
  %v9952 = vadd.f32 %v9662, %v9934
  %v9953 = vadd.f32 %v9664, %v9936
  %v9954 = vadd.f32 %v9667, %v9939
  %v9955 = vadd.f32 %v9669, %v9941
  %v9956 = vadd.f32 %v9672, %v9944
  %v9957 = vadd.f32 %v9674, %v9946
  %v9958 = vadd.f32 %v9677, %v9949
  %v9961 = vrot.slane %v9199, 3
  %v9962 = vrot.slane %v9206, 3
  %v9965 = vsel %vm273, %v9199, %v9961
  %v9967 = vsel %vm5548, %v9199, %v9961
  %v9969 = vrot.slane %v9967, 1
  %v9970 = vsel %vm5552, %v9199, %v9961
  %v9972 = vrot.slane %v9970, 2
  %v9975 = vsel %vm273, %v9206, %v9962
  %v9977 = vsel %vm5548, %v9206, %v9962
  %v9979 = vrot.slane %v9977, 1
  %v9980 = vsel %vm5552, %v9206, %v9962
  %v9982 = vrot.slane %v9980, 2
  %v9983 = vunpack.i.l.s16 %v9965
  %v9984 = vunpack.i.h.s16 %v9965
  %v9985 = vunpack.i.l.s16 %v9969
  %v9986 = vunpack.i.h.s16 %v9969
  %v9987 = vunpack.i.l.s16 %v9972
  %v9988 = vunpack.i.l.s16 %v9975
  %v9989 = vunpack.i.h.s16 %v9975
  %v9990 = vunpack.i.l.s16 %v9979
  %v9991 = vunpack.i.h.s16 %v9979
  %v9992 = vunpack.i.l.s16 %v9982
  %s9993 = scalar_lea.vmem %s5, 60
  %v9994 = vld [vmem:[%s9993] sm:$0xf]
  %v9995 = vld [vmem:[%s9993 + $0x4] sm:$0xf]
  %v9996 = vld [vmem:[%s9993 + $0x8] sm:$0xf]
  %v9997 = vld [vmem:[%s9993 + $0xc] sm:$0xf]
  %v9998 = vld [vmem:[%s9993 + $0x10] sm:$0x3]
  %v9999 = vpack.i.b16 %v9334, %v9333
  %v10000 = vpack.i.b16 %v9338, %v9337
  %v10001 = vpack.i.b16 %v9344, %v9343
  %v10002 = vpack.i.b16 %v9348, %v9347
  %v10003 = vpack.i.b16 %v9984, %v9983
  %v10004 = vpack.i.b16 %v9986, %v9985
  %v10005 = vpack.i.b16 %v9358, %v9987
  %v10006 = vpack.i.b16 %v9364, %v9363
  %v10007 = vpack.i.b16 %v9368, %v9367
  %v10008 = vpack.i.b16 %v9374, %v9373
  %v10009 = vpack.i.b16 %v9988, %v9377
  %v10010 = vpack.i.b16 %v9990, %v9989
  %v10011 = vpack.i.b16 %v9992, %v9991
  %10013 = vst [vmem:[#allocation1] ss:$9 sm:$0xff] %v9999
  %s10014 = scalar_lea.vmem [#allocation1], 1
  %10015 = vst [vmem:[%s10014] ss:$9 sm:$0xff] %v9402
  %s10017 = scalar_lea.vmem [#allocation1], 2
  %10018 = vst [vmem:[%s10017] ss:$9 sm:$0xff] %v10000
  %s10019 = scalar_lea.vmem [#allocation1], 3
  %10020 = vst [vmem:[%s10019] ss:$9 sm:$0xff] %v9404
  %s10021 = scalar_lea.vmem [#allocation1], 4
  %10022 = vst [vmem:[%s10021] ss:$9 sm:$0xff] %v9405
  %s10024 = scalar_lea.vmem [#allocation1], 5
  %10025 = vst [vmem:[%s10024] ss:$9 sm:$0xff] %v10001
  %s10026 = scalar_lea.vmem [#allocation1], 6
  %10027 = vst [vmem:[%s10026] ss:$9 sm:$0xff] %v9407
  %s10029 = scalar_lea.vmem [#allocation1], 7
  %10030 = vst [vmem:[%s10029] ss:$9 sm:$0xff] %v10002
  %v10031 = vld [vmem:[#allocation1] sm:$0xff]
  %10032 = vst [vmem:[#allocation1] ss:$9 sm:$0xff] %v9409
  %10033 = vst [vmem:[%s10014] ss:$9 sm:$0xff] %v9410
  %10035 = vst [vmem:[%s10017] ss:$9 sm:$0xff] %v10003
  %10037 = vst [vmem:[%s10019] ss:$9 sm:$0xff] %v10004
  %10039 = vst [vmem:[%s10021] ss:$9 sm:$0xff] %v10005
  %10040 = vst [vmem:[%s10024] ss:$9 sm:$0xff] %v9414
  %10041 = vst [vmem:[%s10026] ss:$9 sm:$0xff] %v9415
  %10043 = vst [vmem:[%s10029] ss:$9 sm:$0xff] %v10006
  %v10044 = vld [vmem:[#allocation1] sm:$0xff]
  %10045 = vst [vmem:[#allocation1] ss:$9 sm:$0xff] %v9417
  %10047 = vst [vmem:[%s10014] ss:$9 sm:$0xff] %v10007
  %10048 = vst [vmem:[%s10017] ss:$9 sm:$0xff] %v9419
  %10049 = vst [vmem:[%s10019] ss:$9 sm:$0xff] %v9420
  %10051 = vst [vmem:[%s10021] ss:$9 sm:$0xff] %v10008
  %10052 = vst [vmem:[%s10024] ss:$9 sm:$0xff] %v9422
  %10054 = vst [vmem:[%s10026] ss:$9 sm:$0xff] %v10009
  %10056 = vst [vmem:[%s10029] ss:$9 sm:$0xff] %v10010
  %v10057 = vld [vmem:[#allocation1] sm:$0xff]
  %10059 = vst [vmem:[#allocation1] ss:$9 sm:$0xff] %v10011
  %v10060 = vld [vmem:[#allocation1] sm:$0xff]
  %v10066 = vunpack.c.l.b16 %v9994
  %v10067 = vunpack.c.l.b16 %v9995
  %v10068 = vunpack.c.l.b16 %v9996
  %v10069 = vunpack.c.l.b16 %v9997
  %v10070 = vunpack.c.l.b16 %v9998
  %v10071 = vpack.c.b16 %v10067, %v10066
  %v10072 = vpack.c.b16 %v10069, %v10068
  %v10073 = vpack.c.b16 %v10070, %v10070
  %v10076 = vsel %vm9500, %v10031, 0
  %v10078 = vsel %vm9500, %v10044, 0
  %v10080 = vsel %vm9500, %v10057, 0
  %v10082 = vsel %vm9500, %v10060, 0
  %v10085 = vsel %vm274, %v10073, 0
  %10087 = vmatpush.bf16.msra.mxu0 0
  %10088 = vmatpush.bf16.msra.mxu0 0
  %10089 = vmatpush.bf16.msra.mxu0 0
  %10090 = vmatpush.bf16.msra.mxu0 0
  %10091 = vmatpush.bf16.msra.mxu0 0
  %10092 = vmatpush.bf16.msra.mxu0 %v10085
  %10093 = vmatpush.bf16.msra.mxu0 %v10072
  %10094 = vmatpush.bf16.msra.mxu0 %v10071
  %10095 = vmatmul.bf16.gmra.mxu0 %v10076
  %v10096 = vpop.f32.mrf.mxu0
  %v10097 = vadd.f32 0.0, %v10096
  %v10098 = vpop.f32.mrf.mxu0
  %v10099 = vadd.f32 0.0, %v10098
  %10100 = vmatmul.bf16.gmra.mxu0 %v10078
  %v10101 = vpop.f32.mrf.mxu0
  %v10102 = vadd.f32 0.0, %v10101
  %v10103 = vpop.f32.mrf.mxu0
  %v10104 = vadd.f32 0.0, %v10103
  %10105 = vmatmul.bf16.gmra.mxu0 %v10080
  %v10106 = vpop.f32.mrf.mxu0
  %v10107 = vadd.f32 0.0, %v10106
  %v10108 = vpop.f32.mrf.mxu0
  %v10109 = vadd.f32 0.0, %v10108
  %10110 = vmatmul.bf16.gmra.mxu0 %v10082
  %v10111 = vpop.f32.mrf.mxu0
  %v10112 = vadd.f32 0.0, %v10111
  %v10113 = vpop.f32.mrf.mxu0
  %10114 = vdwg.mxu0
  %v10115 = vadd.f32 %v9952, %v10097
  %v10116 = vadd.f32 %v9953, %v10099
  %v10117 = vadd.f32 %v9954, %v10102
  %v10118 = vadd.f32 %v9955, %v10104
  %v10119 = vadd.f32 %v9956, %v10107
  %v10120 = vadd.f32 %v9957, %v10109
  %v10121 = vadd.f32 %v9958, %v10112
  %v10122 = vunpack.i.h.s16 %v9972
  %v10123 = vunpack.i.h.s16 %v9982
  %s10124 = scalar_lea.vmem %s5, 80
  %v10125 = vld [vmem:[%s10124] sm:$0xf]
  %v10126 = vld [vmem:[%s10124 + $0x4] sm:$0xf]
  %v10127 = vld [vmem:[%s10124 + $0x8] sm:$0xf]
  %v10128 = vld [vmem:[%s10124 + $0xc] sm:$0xf]
  %v10129 = vld [vmem:[%s10124 + $0x10] sm:$0x3]
  %v10130 = vpack.i.b16 %v9339, %v9384
  %v10131 = vpack.i.b16 %v9385, %v9342
  %v10132 = vpack.i.b16 %v9349, %v9386
  %v10133 = vpack.i.b16 %v9387, %v9352
  %v10134 = vpack.i.b16 %v9985, %v9984
  %v10135 = vpack.i.b16 %v9987, %v9986
  %v10136 = vpack.i.b16 %v9359, %v10122
  %v10137 = vpack.i.b16 %v9389, %v9362
  %v10138 = vpack.i.b16 %v9369, %v9390
  %v10139 = vpack.i.b16 %v9391, %v9372
  %v10140 = vpack.i.b16 %v9989, %v9392
  %v10141 = vpack.i.b16 %v9991, %v9990
  %v10142 = vpack.i.b16 %v10123, %v9992
  %10143 = vst [vmem:[#allocation1] ss:$9 sm:$0xff] %v9543
  %s10144 = scalar_lea.vmem [#allocation1], 1
  %10145 = vst [vmem:[%s10144] ss:$9 sm:$0xff] %v9544
  %s10147 = scalar_lea.vmem [#allocation1], 2
  %10148 = vst [vmem:[%s10147] ss:$9 sm:$0xff] %v10130
  %s10149 = scalar_lea.vmem [#allocation1], 3
  %10150 = vst [vmem:[%s10149] ss:$9 sm:$0xff] %v9546
  %s10152 = scalar_lea.vmem [#allocation1], 4
  %10153 = vst [vmem:[%s10152] ss:$9 sm:$0xff] %v10131
  %s10154 = scalar_lea.vmem [#allocation1], 5
  %10155 = vst [vmem:[%s10154] ss:$9 sm:$0xff] %v9548
  %s10156 = scalar_lea.vmem [#allocation1], 6
  %10157 = vst [vmem:[%s10156] ss:$9 sm:$0xff] %v9549
  %s10159 = scalar_lea.vmem [#allocation1], 7
  %10160 = vst [vmem:[%s10159] ss:$9 sm:$0xff] %v10132
  %v10161 = vld [vmem:[#allocation1] sm:$0xff]
  %10162 = vst [vmem:[#allocation1] ss:$9 sm:$0xff] %v9551
  %10164 = vst [vmem:[%s10144] ss:$9 sm:$0xff] %v10133
  %10166 = vst [vmem:[%s10147] ss:$9 sm:$0xff] %v10134
  %10168 = vst [vmem:[%s10149] ss:$9 sm:$0xff] %v10135
  %10170 = vst [vmem:[%s10152] ss:$9 sm:$0xff] %v10136
  %10171 = vst [vmem:[%s10154] ss:$9 sm:$0xff] %v9556
  %10173 = vst [vmem:[%s10156] ss:$9 sm:$0xff] %v10137
  %10174 = vst [vmem:[%s10159] ss:$9 sm:$0xff] %v9558
  %v10175 = vld [vmem:[#allocation1] sm:$0xff]
  %10176 = vst [vmem:[#allocation1] ss:$9 sm:$0xff] %v9559
  %10178 = vst [vmem:[%s10144] ss:$9 sm:$0xff] %v10138
  %10179 = vst [vmem:[%s10147] ss:$9 sm:$0xff] %v9561
  %10181 = vst [vmem:[%s10149] ss:$9 sm:$0xff] %v10139
  %10182 = vst [vmem:[%s10152] ss:$9 sm:$0xff] %v9563
  %10183 = vst [vmem:[%s10154] ss:$9 sm:$0xff] %v9564
  %10185 = vst [vmem:[%s10156] ss:$9 sm:$0xff] %v10140
  %10187 = vst [vmem:[%s10159] ss:$9 sm:$0xff] %v10141
  %v10188 = vld [vmem:[#allocation1] sm:$0xff]
  %10190 = vst [vmem:[#allocation1] ss:$9 sm:$0xff] %v10142
  %v10191 = vld [vmem:[#allocation1] sm:$0xff]
  %v10197 = vunpack.c.l.b16 %v10125
  %v10198 = vunpack.c.l.b16 %v10126
  %v10199 = vunpack.c.l.b16 %v10127
  %v10200 = vunpack.c.l.b16 %v10128
  %v10201 = vunpack.c.l.b16 %v10129
  %v10202 = vpack.c.b16 %v10198, %v10197
  %v10203 = vpack.c.b16 %v10200, %v10199
  %v10204 = vpack.c.b16 %v10201, %v10201
  %v10207 = vsel %vm9500, %v10161, 0
  %v10209 = vsel %vm9500, %v10175, 0
  %v10211 = vsel %vm9500, %v10188, 0
  %v10213 = vsel %vm9500, %v10191, 0
  %v10216 = vsel %vm274, %v10204, 0
  %10218 = vmatpush.bf16.msra.mxu0 0
  %10219 = vmatpush.bf16.msra.mxu0 0
  %10220 = vmatpush.bf16.msra.mxu0 0
  %10221 = vmatpush.bf16.msra.mxu0 0
  %10222 = vmatpush.bf16.msra.mxu0 0
  %10223 = vmatpush.bf16.msra.mxu0 %v10216
  %10224 = vmatpush.bf16.msra.mxu0 %v10203
  %10225 = vmatpush.bf16.msra.mxu0 %v10202
  %10226 = vmatmul.bf16.gmra.mxu0 %v10207
  %v10227 = vpop.f32.mrf.mxu0
  %v10228 = vadd.f32 0.0, %v10227
  %v10229 = vpop.f32.mrf.mxu0
  %v10230 = vadd.f32 0.0, %v10229
  %10231 = vmatmul.bf16.gmra.mxu0 %v10209
  %v10232 = vpop.f32.mrf.mxu0
  %v10233 = vadd.f32 0.0, %v10232
  %v10234 = vpop.f32.mrf.mxu0
  %v10235 = vadd.f32 0.0, %v10234
  %10236 = vmatmul.bf16.gmra.mxu0 %v10211
  %v10237 = vpop.f32.mrf.mxu0
  %v10238 = vadd.f32 0.0, %v10237
  %v10239 = vpop.f32.mrf.mxu0
  %v10240 = vadd.f32 0.0, %v10239
  %10241 = vmatmul.bf16.gmra.mxu0 %v10213
  %v10242 = vpop.f32.mrf.mxu0
  %v10243 = vadd.f32 0.0, %v10242
  %v10244 = vpop.f32.mrf.mxu0
  %10245 = vdwg.mxu0
  %v10246 = vadd.f32 %v10115, %v10228
  %v10247 = vadd.f32 %v10116, %v10230
  %v10248 = vadd.f32 %v10117, %v10233
  %v10249 = vadd.f32 %v10118, %v10235
  %v10250 = vadd.f32 %v10119, %v10238
  %v10251 = vadd.f32 %v10120, %v10240
  %v10252 = vadd.f32 %v10121, %v10243
  %10253 = vst [vmem:[#allocation1] sm:$0xff] %v9195
  %s10254 = scalar_lea.vmem [#allocation1], 1
  %v10255 = vld [vmem:[%s10254] ss:$4 sm:$0xff]
  %s10257 = scalar_lea.vmem [#allocation1], 2
  %v10258 = vld [vmem:[%s10257] ss:$4 sm:$0xff]
  %s10260 = scalar_lea.vmem [#allocation1], 3
  %v10261 = vld [vmem:[%s10260] ss:$4 sm:$0xff]
  %10263 = vst [vmem:[#allocation1 + $0x20] sm:$0xff] %v9196
  %s10264 = scalar_lea.vmem [#allocation1], 33
  %v10265 = vld [vmem:[%s10264] ss:$4 sm:$0xff]
  %s10267 = scalar_lea.vmem [#allocation1], 34
  %v10268 = vld [vmem:[%s10267] ss:$4 sm:$0xff]
  %s10270 = scalar_lea.vmem [#allocation1], 35
  %v10271 = vld [vmem:[%s10270] ss:$4 sm:$0xff]
  %10273 = vst [vmem:[#allocation1] sm:$0xff] %v9197
  %v10274 = vld [vmem:[%s10254] ss:$4 sm:$0xff]
  %v10276 = vld [vmem:[%s10257] ss:$4 sm:$0xff]
  %v10278 = vld [vmem:[%s10260] ss:$4 sm:$0xff]
  %10280 = vst [vmem:[#allocation1 + $0x20] sm:$0xff] %v9198
  %v10281 = vld [vmem:[%s10264] ss:$4 sm:$0xff]
  %v10283 = vld [vmem:[%s10267] ss:$4 sm:$0xff]
  %v10285 = vld [vmem:[%s10270] ss:$4 sm:$0xff]
  %10287 = vst [vmem:[#allocation1] sm:$0xff] %v9199
  %v10288 = vld [vmem:[%s10254] ss:$4 sm:$0xff]
  %v10290 = vld [vmem:[%s10257] ss:$4 sm:$0xff]
  %v10292 = vld [vmem:[%s10260] ss:$4 sm:$0xff]
  %10294 = vst [vmem:[#allocation1 + $0x20] sm:$0xff] %v9202
  %v10295 = vld [vmem:[%s10264] ss:$4 sm:$0xff]
  %v10297 = vld [vmem:[%s10267] ss:$4 sm:$0xff]
  %v10299 = vld [vmem:[%s10270] ss:$4 sm:$0xff]
  %10301 = vst [vmem:[#allocation1] sm:$0xff] %v9203
  %v10302 = vld [vmem:[%s10254] ss:$4 sm:$0xff]
  %v10304 = vld [vmem:[%s10257] ss:$4 sm:$0xff]
  %v10306 = vld [vmem:[%s10260] ss:$4 sm:$0xff]
  %10308 = vst [vmem:[#allocation1 + $0x20] sm:$0xff] %v9204
  %v10309 = vld [vmem:[%s10264] ss:$4 sm:$0xff]
  %v10311 = vld [vmem:[%s10267] ss:$4 sm:$0xff]
  %v10313 = vld [vmem:[%s10270] ss:$4 sm:$0xff]
  %10315 = vst [vmem:[#allocation1] sm:$0xff] %v9205
  %v10316 = vld [vmem:[%s10254] ss:$4 sm:$0xff]
  %v10318 = vld [vmem:[%s10257] ss:$4 sm:$0xff]
  %v10320 = vld [vmem:[%s10260] ss:$4 sm:$0xff]
  %10322 = vst [vmem:[#allocation1 + $0x20] sm:$0xff] %v9206
  %v10323 = vld [vmem:[%s10264] ss:$4 sm:$0xff]
  %v10325 = vld [vmem:[%s10267] ss:$4 sm:$0xff]
  %v10327 = vld [vmem:[%s10270] ss:$4 sm:$0xff]
  %v10329 = vunpack.i.l.s16 %v10255
  %v10330 = vunpack.i.h.s16 %v10255
  %v10331 = vunpack.i.l.s16 %v10258
  %v10332 = vunpack.i.h.s16 %v10258
  %v10333 = vunpack.i.l.s16 %v10261
  %v10334 = vunpack.i.l.s16 %v10265
  %v10335 = vunpack.i.h.s16 %v10265
  %v10336 = vunpack.i.l.s16 %v10268
  %v10337 = vunpack.i.h.s16 %v10268
  %v10338 = vunpack.i.l.s16 %v10271
  %v10339 = vunpack.i.l.s16 %v10274
  %v10340 = vunpack.i.h.s16 %v10274
  %v10341 = vunpack.i.l.s16 %v10276
  %v10342 = vunpack.i.h.s16 %v10276
  %v10343 = vunpack.i.l.s16 %v10278
  %v10344 = vunpack.i.l.s16 %v10281
  %v10345 = vunpack.i.h.s16 %v10281
  %v10346 = vunpack.i.l.s16 %v10283
  %v10347 = vunpack.i.h.s16 %v10283
  %v10348 = vunpack.i.l.s16 %v10285
  %v10349 = vunpack.i.l.s16 %v10288
  %v10350 = vunpack.i.h.s16 %v10288
  %v10351 = vunpack.i.l.s16 %v10290
  %v10352 = vunpack.i.h.s16 %v10290
  %v10353 = vunpack.i.l.s16 %v10292
  %v10354 = vunpack.i.l.s16 %v10295
  %v10355 = vunpack.i.h.s16 %v10295
  %v10356 = vunpack.i.l.s16 %v10297
  %v10357 = vunpack.i.h.s16 %v10297
  %v10358 = vunpack.i.l.s16 %v10299
  %v10359 = vunpack.i.l.s16 %v10302
  %v10360 = vunpack.i.h.s16 %v10302
  %v10361 = vunpack.i.l.s16 %v10304
  %v10362 = vunpack.i.h.s16 %v10304
  %v10363 = vunpack.i.l.s16 %v10306
  %v10364 = vunpack.i.l.s16 %v10309
  %v10365 = vunpack.i.h.s16 %v10309
  %v10366 = vunpack.i.l.s16 %v10311
  %v10367 = vunpack.i.h.s16 %v10311
  %v10368 = vunpack.i.l.s16 %v10313
  %v10369 = vunpack.i.l.s16 %v10316
  %v10370 = vunpack.i.h.s16 %v10316
  %v10371 = vunpack.i.l.s16 %v10318
  %v10372 = vunpack.i.h.s16 %v10318
  %v10373 = vunpack.i.l.s16 %v10320
  %v10374 = vunpack.i.l.s16 %v10323
  %v10375 = vunpack.i.h.s16 %v10323
  %v10376 = vunpack.i.l.s16 %v10325
  %v10377 = vunpack.i.h.s16 %v10325
  %v10378 = vunpack.i.l.s16 %v10327
  %s10379 = scalar_lea.vmem %s5, 100
  %v10380 = vld [vmem:[%s10379] sm:$0xf]
  %v10381 = vld [vmem:[%s10379 + $0x4] sm:$0xf]
  %v10382 = vld [vmem:[%s10379 + $0x8] sm:$0xf]
  %v10383 = vld [vmem:[%s10379 + $0xc] sm:$0xf]
  %v10384 = vld [vmem:[%s10379 + $0x10] sm:$0x3]
  %v10385 = vpack.i.b16 %v10330, %v10329
  %v10386 = vpack.i.b16 %v10332, %v10331
  %v10387 = vpack.i.b16 %v10334, %v10333
  %v10388 = vpack.i.b16 %v10336, %v10335
  %v10389 = vpack.i.b16 %v10338, %v10337
  %v10390 = vpack.i.b16 %v10340, %v10339
  %v10391 = vpack.i.b16 %v10342, %v10341
  %v10392 = vpack.i.b16 %v10344, %v10343
  %v10393 = vpack.i.b16 %v10346, %v10345
  %v10394 = vpack.i.b16 %v10348, %v10347
  %v10395 = vpack.i.b16 %v10350, %v10349
  %v10396 = vpack.i.b16 %v10352, %v10351
  %v10397 = vpack.i.b16 %v10354, %v10353
  %v10398 = vpack.i.b16 %v10356, %v10355
  %v10399 = vpack.i.b16 %v10358, %v10357
  %v10400 = vpack.i.b16 %v10360, %v10359
  %v10401 = vpack.i.b16 %v10362, %v10361
  %v10402 = vpack.i.b16 %v10364, %v10363
  %v10403 = vpack.i.b16 %v10366, %v10365
  %v10404 = vpack.i.b16 %v10368, %v10367
  %v10405 = vpack.i.b16 %v10370, %v10369
  %v10406 = vpack.i.b16 %v10372, %v10371
  %v10407 = vpack.i.b16 %v10374, %v10373
  %v10408 = vpack.i.b16 %v10376, %v10375
  %v10409 = vpack.i.b16 %v10378, %v10377
  %10411 = vst [vmem:[#allocation1] ss:$9 sm:$0xff] %v10385
  %s10413 = scalar_lea.vmem [#allocation1], 1
  %10414 = vst [vmem:[%s10413] ss:$9 sm:$0xff] %v10386
  %s10416 = scalar_lea.vmem [#allocation1], 2
  %10417 = vst [vmem:[%s10416] ss:$9 sm:$0xff] %v10387
  %s10419 = scalar_lea.vmem [#allocation1], 3
  %10420 = vst [vmem:[%s10419] ss:$9 sm:$0xff] %v10388
  %s10422 = scalar_lea.vmem [#allocation1], 4
  %10423 = vst [vmem:[%s10422] ss:$9 sm:$0xff] %v10389
  %s10425 = scalar_lea.vmem [#allocation1], 5
  %10426 = vst [vmem:[%s10425] ss:$9 sm:$0xff] %v10390
  %s10428 = scalar_lea.vmem [#allocation1], 6
  %10429 = vst [vmem:[%s10428] ss:$9 sm:$0xff] %v10391
  %s10431 = scalar_lea.vmem [#allocation1], 7
  %10432 = vst [vmem:[%s10431] ss:$9 sm:$0xff] %v10392
  %v10433 = vld [vmem:[#allocation1] sm:$0xff]
  %10435 = vst [vmem:[#allocation1] ss:$9 sm:$0xff] %v10393
  %10437 = vst [vmem:[%s10413] ss:$9 sm:$0xff] %v10394
  %10439 = vst [vmem:[%s10416] ss:$9 sm:$0xff] %v10395
  %10441 = vst [vmem:[%s10419] ss:$9 sm:$0xff] %v10396
  %10443 = vst [vmem:[%s10422] ss:$9 sm:$0xff] %v10397
  %10445 = vst [vmem:[%s10425] ss:$9 sm:$0xff] %v10398
  %10447 = vst [vmem:[%s10428] ss:$9 sm:$0xff] %v10399
  %10449 = vst [vmem:[%s10431] ss:$9 sm:$0xff] %v10400
  %v10450 = vld [vmem:[#allocation1] sm:$0xff]
  %10452 = vst [vmem:[#allocation1] ss:$9 sm:$0xff] %v10401
  %10454 = vst [vmem:[%s10413] ss:$9 sm:$0xff] %v10402
  %10456 = vst [vmem:[%s10416] ss:$9 sm:$0xff] %v10403
  %10458 = vst [vmem:[%s10419] ss:$9 sm:$0xff] %v10404
  %10460 = vst [vmem:[%s10422] ss:$9 sm:$0xff] %v10405
  %10462 = vst [vmem:[%s10425] ss:$9 sm:$0xff] %v10406
  %10464 = vst [vmem:[%s10428] ss:$9 sm:$0xff] %v10407
  %10466 = vst [vmem:[%s10431] ss:$9 sm:$0xff] %v10408
  %v10467 = vld [vmem:[#allocation1] sm:$0xff]
  %10469 = vst [vmem:[#allocation1] ss:$9 sm:$0xff] %v10409
  %v10470 = vld [vmem:[#allocation1] sm:$0xff]
  %v10476 = vunpack.c.l.b16 %v10380
  %v10477 = vunpack.c.l.b16 %v10381
  %v10478 = vunpack.c.l.b16 %v10382
  %v10479 = vunpack.c.l.b16 %v10383
  %v10480 = vunpack.c.l.b16 %v10384
  %v10481 = vpack.c.b16 %v10477, %v10476
  %v10482 = vpack.c.b16 %v10479, %v10478
  %v10483 = vpack.c.b16 %v10480, %v10480
  %v10486 = vsel %vm9500, %v10433, 0
  %v10488 = vsel %vm9500, %v10450, 0
  %v10490 = vsel %vm9500, %v10467, 0
  %v10492 = vsel %vm9500, %v10470, 0
  %v10495 = vsel %vm274, %v10483, 0
  %10497 = vmatpush.bf16.msra.mxu0 0
  %10498 = vmatpush.bf16.msra.mxu0 0
  %10499 = vmatpush.bf16.msra.mxu0 0
  %10500 = vmatpush.bf16.msra.mxu0 0
  %10501 = vmatpush.bf16.msra.mxu0 0
  %10502 = vmatpush.bf16.msra.mxu0 %v10495
  %10503 = vmatpush.bf16.msra.mxu0 %v10482
  %10504 = vmatpush.bf16.msra.mxu0 %v10481
  %10505 = vmatmul.bf16.gmra.mxu0 %v10486
  %v10506 = vpop.f32.mrf.mxu0
  %v10507 = vadd.f32 0.0, %v10506
  %v10508 = vpop.f32.mrf.mxu0
  %v10509 = vadd.f32 0.0, %v10508
  %10510 = vmatmul.bf16.gmra.mxu0 %v10488
  %v10511 = vpop.f32.mrf.mxu0
  %v10512 = vadd.f32 0.0, %v10511
  %v10513 = vpop.f32.mrf.mxu0
  %v10514 = vadd.f32 0.0, %v10513
  %10515 = vmatmul.bf16.gmra.mxu0 %v10490
  %v10516 = vpop.f32.mrf.mxu0
  %v10517 = vadd.f32 0.0, %v10516
  %v10518 = vpop.f32.mrf.mxu0
  %v10519 = vadd.f32 0.0, %v10518
  %10520 = vmatmul.bf16.gmra.mxu0 %v10492
  %v10521 = vpop.f32.mrf.mxu0
  %v10522 = vadd.f32 0.0, %v10521
  %v10523 = vpop.f32.mrf.mxu0
  %10524 = vdwg.mxu0
  %v10525 = vadd.f32 %v10246, %v10507
  %v10526 = vadd.f32 %v10247, %v10509
  %v10527 = vadd.f32 %v10248, %v10512
  %v10528 = vadd.f32 %v10249, %v10514
  %v10529 = vadd.f32 %v10250, %v10517
  %v10530 = vadd.f32 %v10251, %v10519
  %v10531 = vadd.f32 %v10252, %v10522
  %v10534 = vrot.slane %v9200, 3
  %v10535 = vrot.slane %v9207, 3
  %v10538 = vsel %vm273, %v9200, %v10534
  %v10540 = vsel %vm5548, %v9200, %v10534
  %v10542 = vrot.slane %v10540, 1
  %v10543 = vsel %vm5552, %v9200, %v10534
  %v10545 = vrot.slane %v10543, 2
  %v10548 = vsel %vm273, %v9207, %v10535
  %v10550 = vsel %vm5548, %v9207, %v10535
  %v10552 = vrot.slane %v10550, 1
  %v10553 = vsel %vm5552, %v9207, %v10535
  %v10555 = vrot.slane %v10553, 2
  %v10556 = vunpack.i.l.s16 %v10538
  %v10557 = vunpack.i.h.s16 %v10538
  %v10558 = vunpack.i.l.s16 %v10542
  %v10559 = vunpack.i.h.s16 %v10542
  %v10560 = vunpack.i.l.s16 %v10545
  %v10561 = vunpack.i.l.s16 %v10548
  %v10562 = vunpack.i.h.s16 %v10548
  %v10563 = vunpack.i.l.s16 %v10552
  %v10564 = vunpack.i.h.s16 %v10552
  %v10565 = vunpack.i.l.s16 %v10555
  %s10566 = scalar_lea.vmem %s5, 120
  %v10567 = vld [vmem:[%s10566] sm:$0xf]
  %v10568 = vld [vmem:[%s10566 + $0x4] sm:$0xf]
  %v10569 = vld [vmem:[%s10566 + $0x8] sm:$0xf]
  %v10570 = vld [vmem:[%s10566 + $0xc] sm:$0xf]
  %v10571 = vld [vmem:[%s10566 + $0x10] sm:$0x3]
  %v10572 = vpack.i.b16 %v9983, %v9352
  %v10573 = vpack.i.b16 %v10557, %v10556
  %v10574 = vpack.i.b16 %v10559, %v10558
  %v10575 = vpack.i.b16 %v9363, %v10560
  %v10576 = vpack.i.b16 %v9989, %v9988
  %v10577 = vpack.i.b16 %v10561, %v9992
  %v10578 = vpack.i.b16 %v10563, %v10562
  %v10579 = vpack.i.b16 %v10565, %v10564
  %10580 = vst [vmem:[#allocation1] ss:$9 sm:$0xff] %v9545
  %s10581 = scalar_lea.vmem [#allocation1], 1
  %10582 = vst [vmem:[%s10581] ss:$9 sm:$0xff] %v9546
  %s10583 = scalar_lea.vmem [#allocation1], 2
  %10584 = vst [vmem:[%s10583] ss:$9 sm:$0xff] %v9547
  %s10585 = scalar_lea.vmem [#allocation1], 3
  %10586 = vst [vmem:[%s10585] ss:$9 sm:$0xff] %v9548
  %s10587 = scalar_lea.vmem [#allocation1], 4
  %10588 = vst [vmem:[%s10587] ss:$9 sm:$0xff] %v9549
  %s10589 = scalar_lea.vmem [#allocation1], 5
  %10590 = vst [vmem:[%s10589] ss:$9 sm:$0xff] %v9550
  %s10591 = scalar_lea.vmem [#allocation1], 6
  %10592 = vst [vmem:[%s10591] ss:$9 sm:$0xff] %v9551
  %s10594 = scalar_lea.vmem [#allocation1], 7
  %10595 = vst [vmem:[%s10594] ss:$9 sm:$0xff] %v10572
  %v10596 = vld [vmem:[#allocation1] sm:$0xff]
  %10597 = vst [vmem:[#allocation1] ss:$9 sm:$0xff] %v10134
  %10598 = vst [vmem:[%s10581] ss:$9 sm:$0xff] %v10135
  %10600 = vst [vmem:[%s10583] ss:$9 sm:$0xff] %v10573
  %10602 = vst [vmem:[%s10585] ss:$9 sm:$0xff] %v10574
  %10604 = vst [vmem:[%s10587] ss:$9 sm:$0xff] %v10575
  %10605 = vst [vmem:[%s10589] ss:$9 sm:$0xff] %v9558
  %10606 = vst [vmem:[%s10591] ss:$9 sm:$0xff] %v9559
  %10607 = vst [vmem:[%s10594] ss:$9 sm:$0xff] %v9560
  %v10608 = vld [vmem:[#allocation1] sm:$0xff]
  %10609 = vst [vmem:[#allocation1] ss:$9 sm:$0xff] %v9561
  %10610 = vst [vmem:[%s10581] ss:$9 sm:$0xff] %v9562
  %10611 = vst [vmem:[%s10583] ss:$9 sm:$0xff] %v9563
  %10612 = vst [vmem:[%s10585] ss:$9 sm:$0xff] %v9564
  %10614 = vst [vmem:[%s10587] ss:$9 sm:$0xff] %v10576
  %10615 = vst [vmem:[%s10589] ss:$9 sm:$0xff] %v10141
  %10617 = vst [vmem:[%s10591] ss:$9 sm:$0xff] %v10577
  %10619 = vst [vmem:[%s10594] ss:$9 sm:$0xff] %v10578
  %v10620 = vld [vmem:[#allocation1] sm:$0xff]
  %10622 = vst [vmem:[#allocation1] ss:$9 sm:$0xff] %v10579
  %v10623 = vld [vmem:[#allocation1] sm:$0xff]
  %v10629 = vunpack.c.l.b16 %v10567
  %v10630 = vunpack.c.l.b16 %v10568
  %v10631 = vunpack.c.l.b16 %v10569
  %v10632 = vunpack.c.l.b16 %v10570
  %v10633 = vunpack.c.l.b16 %v10571
  %v10634 = vpack.c.b16 %v10630, %v10629
  %v10635 = vpack.c.b16 %v10632, %v10631
  %v10636 = vpack.c.b16 %v10633, %v10633
  %v10639 = vsel %vm9500, %v10596, 0
  %v10641 = vsel %vm9500, %v10608, 0
  %v10643 = vsel %vm9500, %v10620, 0
  %v10645 = vsel %vm9500, %v10623, 0
  %v10648 = vsel %vm274, %v10636, 0
  %10650 = vmatpush.bf16.msra.mxu0 0
  %10651 = vmatpush.bf16.msra.mxu0 0
  %10652 = vmatpush.bf16.msra.mxu0 0
  %10653 = vmatpush.bf16.msra.mxu0 0
  %10654 = vmatpush.bf16.msra.mxu0 0
  %10655 = vmatpush.bf16.msra.mxu0 %v10648
  %10656 = vmatpush.bf16.msra.mxu0 %v10635
  %10657 = vmatpush.bf16.msra.mxu0 %v10634
  %10658 = vmatmul.bf16.gmra.mxu0 %v10639
  %v10659 = vpop.f32.mrf.mxu0
  %v10660 = vadd.f32 0.0, %v10659
  %v10661 = vpop.f32.mrf.mxu0
  %v10662 = vadd.f32 0.0, %v10661
  %10663 = vmatmul.bf16.gmra.mxu0 %v10641
  %v10664 = vpop.f32.mrf.mxu0
  %v10665 = vadd.f32 0.0, %v10664
  %v10666 = vpop.f32.mrf.mxu0
  %v10667 = vadd.f32 0.0, %v10666
  %10668 = vmatmul.bf16.gmra.mxu0 %v10643
  %v10669 = vpop.f32.mrf.mxu0
  %v10670 = vadd.f32 0.0, %v10669
  %v10671 = vpop.f32.mrf.mxu0
  %v10672 = vadd.f32 0.0, %v10671
  %10673 = vmatmul.bf16.gmra.mxu0 %v10645
  %v10674 = vpop.f32.mrf.mxu0
  %v10675 = vadd.f32 0.0, %v10674
  %v10676 = vpop.f32.mrf.mxu0
  %10677 = vdwg.mxu0
  %v10678 = vadd.f32 %v10525, %v10660
  %v10679 = vadd.f32 %v10526, %v10662
  %v10680 = vadd.f32 %v10527, %v10665
  %v10681 = vadd.f32 %v10528, %v10667
  %v10682 = vadd.f32 %v10529, %v10670
  %v10683 = vadd.f32 %v10530, %v10672
  %v10684 = vadd.f32 %v10531, %v10675
  %v10685 = vunpack.i.h.s16 %v10545
  %v10686 = vunpack.i.h.s16 %v10555
  %s10687 = scalar_lea.vmem %s5, 140
  %v10688 = vld [vmem:[%s10687] sm:$0xf]
  %v10689 = vld [vmem:[%s10687 + $0x4] sm:$0xf]
  %v10690 = vld [vmem:[%s10687 + $0x8] sm:$0xf]
  %v10691 = vld [vmem:[%s10687 + $0xc] sm:$0xf]
  %v10692 = vld [vmem:[%s10687 + $0x10] sm:$0x3]
  %v10693 = vpack.i.b16 %v9984, %v9387
  %v10694 = vpack.i.b16 %v10122, %v9987
  %v10695 = vpack.i.b16 %v10558, %v10557
  %v10696 = vpack.i.b16 %v10560, %v10559
  %v10697 = vpack.i.b16 %v9364, %v10685
  %v10698 = vpack.i.b16 %v10562, %v10123
  %v10699 = vpack.i.b16 %v10564, %v10563
  %v10700 = vpack.i.b16 %v10686, %v10565
  %10701 = vst [vmem:[#allocation1] ss:$9 sm:$0xff] %v9404
  %s10702 = scalar_lea.vmem [#allocation1], 1
  %10703 = vst [vmem:[%s10702] ss:$9 sm:$0xff] %v9405
  %s10704 = scalar_lea.vmem [#allocation1], 2
  %10705 = vst [vmem:[%s10704] ss:$9 sm:$0xff] %v9406
  %s10706 = scalar_lea.vmem [#allocation1], 3
  %10707 = vst [vmem:[%s10706] ss:$9 sm:$0xff] %v9407
  %s10708 = scalar_lea.vmem [#allocation1], 4
  %10709 = vst [vmem:[%s10708] ss:$9 sm:$0xff] %v9408
  %s10710 = scalar_lea.vmem [#allocation1], 5
  %10711 = vst [vmem:[%s10710] ss:$9 sm:$0xff] %v9409
  %s10712 = scalar_lea.vmem [#allocation1], 6
  %10713 = vst [vmem:[%s10712] ss:$9 sm:$0xff] %v9410
  %s10715 = scalar_lea.vmem [#allocation1], 7
  %10716 = vst [vmem:[%s10715] ss:$9 sm:$0xff] %v10693
  %v10717 = vld [vmem:[#allocation1] sm:$0xff]
  %10718 = vst [vmem:[#allocation1] ss:$9 sm:$0xff] %v10004
  %10720 = vst [vmem:[%s10702] ss:$9 sm:$0xff] %v10694
  %10722 = vst [vmem:[%s10704] ss:$9 sm:$0xff] %v10695
  %10724 = vst [vmem:[%s10706] ss:$9 sm:$0xff] %v10696
  %10726 = vst [vmem:[%s10708] ss:$9 sm:$0xff] %v10697
  %10727 = vst [vmem:[%s10710] ss:$9 sm:$0xff] %v9417
  %10728 = vst [vmem:[%s10712] ss:$9 sm:$0xff] %v9418
  %10729 = vst [vmem:[%s10715] ss:$9 sm:$0xff] %v9419
  %v10730 = vld [vmem:[#allocation1] sm:$0xff]
  %10731 = vst [vmem:[#allocation1] ss:$9 sm:$0xff] %v9420
  %10732 = vst [vmem:[%s10702] ss:$9 sm:$0xff] %v9421
  %10733 = vst [vmem:[%s10704] ss:$9 sm:$0xff] %v9422
  %10734 = vst [vmem:[%s10706] ss:$9 sm:$0xff] %v9423
  %10735 = vst [vmem:[%s10708] ss:$9 sm:$0xff] %v10010
  %10736 = vst [vmem:[%s10710] ss:$9 sm:$0xff] %v10011
  %10738 = vst [vmem:[%s10712] ss:$9 sm:$0xff] %v10698
  %10740 = vst [vmem:[%s10715] ss:$9 sm:$0xff] %v10699
  %v10741 = vld [vmem:[#allocation1] sm:$0xff]
  %10743 = vst [vmem:[#allocation1] ss:$9 sm:$0xff] %v10700
  %v10744 = vld [vmem:[#allocation1] sm:$0xff]
  %v10750 = vunpack.c.l.b16 %v10688
  %v10751 = vunpack.c.l.b16 %v10689
  %v10752 = vunpack.c.l.b16 %v10690
  %v10753 = vunpack.c.l.b16 %v10691
  %v10754 = vunpack.c.l.b16 %v10692
  %v10755 = vpack.c.b16 %v10751, %v10750
  %v10756 = vpack.c.b16 %v10753, %v10752
  %v10757 = vpack.c.b16 %v10754, %v10754
  %v10760 = vsel %vm9500, %v10717, 0
  %v10762 = vsel %vm9500, %v10730, 0
  %v10764 = vsel %vm9500, %v10741, 0
  %v10766 = vsel %vm9500, %v10744, 0
  %v10769 = vsel %vm274, %v10757, 0
  %10771 = vmatpush.bf16.msra.mxu0 0
  %10772 = vmatpush.bf16.msra.mxu0 0
  %10773 = vmatpush.bf16.msra.mxu0 0
  %10774 = vmatpush.bf16.msra.mxu0 0
  %10775 = vmatpush.bf16.msra.mxu0 0
  %10776 = vmatpush.bf16.msra.mxu0 %v10769
  %10777 = vmatpush.bf16.msra.mxu0 %v10756
  %10778 = vmatpush.bf16.msra.mxu0 %v10755
  %10779 = vmatmul.bf16.gmra.mxu0 %v10760
  %v10780 = vpop.f32.mrf.mxu0
  %v10781 = vadd.f32 0.0, %v10780
  %v10782 = vpop.f32.mrf.mxu0
  %v10783 = vadd.f32 0.0, %v10782
  %10784 = vmatmul.bf16.gmra.mxu0 %v10762
  %v10785 = vpop.f32.mrf.mxu0
  %v10786 = vadd.f32 0.0, %v10785
  %v10787 = vpop.f32.mrf.mxu0
  %v10788 = vadd.f32 0.0, %v10787
  %10789 = vmatmul.bf16.gmra.mxu0 %v10764
  %v10790 = vpop.f32.mrf.mxu0
  %v10791 = vadd.f32 0.0, %v10790
  %v10792 = vpop.f32.mrf.mxu0
  %v10793 = vadd.f32 0.0, %v10792
  %10794 = vmatmul.bf16.gmra.mxu0 %v10766
  %v10795 = vpop.f32.mrf.mxu0
  %v10796 = vadd.f32 0.0, %v10795
  %v10797 = vpop.f32.mrf.mxu0
  %10798 = vdwg.mxu0
  %v10799 = vadd.f32 %v10678, %v10781
  %v10800 = vadd.f32 %v10679, %v10783
  %v10801 = vadd.f32 %v10680, %v10786
  %v10802 = vadd.f32 %v10681, %v10788
  %v10803 = vadd.f32 %v10682, %v10791
  %v10804 = vadd.f32 %v10683, %v10793
  %v10805 = vadd.f32 %v10684, %v10796
  %10806 = vst [vmem:[#allocation1] sm:$0xff] %v9196
  %s10807 = scalar_lea.vmem [#allocation1], 1
  %v10808 = vld [vmem:[%s10807] ss:$4 sm:$0xff]
  %s10810 = scalar_lea.vmem [#allocation1], 2
  %v10811 = vld [vmem:[%s10810] ss:$4 sm:$0xff]
  %s10813 = scalar_lea.vmem [#allocation1], 3
  %v10814 = vld [vmem:[%s10813] ss:$4 sm:$0xff]
  %10816 = vst [vmem:[#allocation1 + $0x20] sm:$0xff] %v9197
  %s10817 = scalar_lea.vmem [#allocation1], 33
  %v10818 = vld [vmem:[%s10817] ss:$4 sm:$0xff]
  %s10820 = scalar_lea.vmem [#allocation1], 34
  %v10821 = vld [vmem:[%s10820] ss:$4 sm:$0xff]
  %s10823 = scalar_lea.vmem [#allocation1], 35
  %v10824 = vld [vmem:[%s10823] ss:$4 sm:$0xff]
  %10826 = vst [vmem:[#allocation1] sm:$0xff] %v9198
  %v10827 = vld [vmem:[%s10807] ss:$4 sm:$0xff]
  %v10829 = vld [vmem:[%s10810] ss:$4 sm:$0xff]
  %v10831 = vld [vmem:[%s10813] ss:$4 sm:$0xff]
  %10833 = vst [vmem:[#allocation1 + $0x20] sm:$0xff] %v9199
  %v10834 = vld [vmem:[%s10817] ss:$4 sm:$0xff]
  %v10836 = vld [vmem:[%s10820] ss:$4 sm:$0xff]
  %v10838 = vld [vmem:[%s10823] ss:$4 sm:$0xff]
  %10840 = vst [vmem:[#allocation1] sm:$0xff] %v9200
  %v10841 = vld [vmem:[%s10807] ss:$4 sm:$0xff]
  %v10843 = vld [vmem:[%s10810] ss:$4 sm:$0xff]
  %v10845 = vld [vmem:[%s10813] ss:$4 sm:$0xff]
  %10847 = vst [vmem:[#allocation1 + $0x20] sm:$0xff] %v9203
  %v10848 = vld [vmem:[%s10817] ss:$4 sm:$0xff]
  %v10850 = vld [vmem:[%s10820] ss:$4 sm:$0xff]
  %v10852 = vld [vmem:[%s10823] ss:$4 sm:$0xff]
  %10854 = vst [vmem:[#allocation1] sm:$0xff] %v9204
  %v10855 = vld [vmem:[%s10807] ss:$4 sm:$0xff]
  %v10857 = vld [vmem:[%s10810] ss:$4 sm:$0xff]
  %v10859 = vld [vmem:[%s10813] ss:$4 sm:$0xff]
  %10861 = vst [vmem:[#allocation1 + $0x20] sm:$0xff] %v9205
  %v10862 = vld [vmem:[%s10817] ss:$4 sm:$0xff]
  %v10864 = vld [vmem:[%s10820] ss:$4 sm:$0xff]
  %v10866 = vld [vmem:[%s10823] ss:$4 sm:$0xff]
  %10868 = vst [vmem:[#allocation1] sm:$0xff] %v9206
  %v10869 = vld [vmem:[%s10807] ss:$4 sm:$0xff]
  %v10871 = vld [vmem:[%s10810] ss:$4 sm:$0xff]
  %v10873 = vld [vmem:[%s10813] ss:$4 sm:$0xff]
  %10875 = vst [vmem:[#allocation1 + $0x20] sm:$0xff] %v9207
  %v10876 = vld [vmem:[%s10817] ss:$4 sm:$0xff]
  %v10878 = vld [vmem:[%s10820] ss:$4 sm:$0xff]
  %v10880 = vld [vmem:[%s10823] ss:$4 sm:$0xff]
  %v10882 = vunpack.i.l.s16 %v10808
  %v10883 = vunpack.i.h.s16 %v10808
  %v10884 = vunpack.i.l.s16 %v10811
  %v10885 = vunpack.i.h.s16 %v10811
  %v10886 = vunpack.i.l.s16 %v10814
  %v10887 = vunpack.i.l.s16 %v10818
  %v10888 = vunpack.i.h.s16 %v10818
  %v10889 = vunpack.i.l.s16 %v10821
  %v10890 = vunpack.i.h.s16 %v10821
  %v10891 = vunpack.i.l.s16 %v10824
  %v10892 = vunpack.i.l.s16 %v10827
  %v10893 = vunpack.i.h.s16 %v10827
  %v10894 = vunpack.i.l.s16 %v10829
  %v10895 = vunpack.i.h.s16 %v10829
  %v10896 = vunpack.i.l.s16 %v10831
  %v10897 = vunpack.i.l.s16 %v10834
  %v10898 = vunpack.i.h.s16 %v10834
  %v10899 = vunpack.i.l.s16 %v10836
  %v10900 = vunpack.i.h.s16 %v10836
  %v10901 = vunpack.i.l.s16 %v10838
  %v10902 = vunpack.i.l.s16 %v10841
  %v10903 = vunpack.i.h.s16 %v10841
  %v10904 = vunpack.i.l.s16 %v10843
  %v10905 = vunpack.i.h.s16 %v10843
  %v10906 = vunpack.i.l.s16 %v10845
  %v10907 = vunpack.i.l.s16 %v10848
  %v10908 = vunpack.i.h.s16 %v10848
  %v10909 = vunpack.i.l.s16 %v10850
  %v10910 = vunpack.i.h.s16 %v10850
  %v10911 = vunpack.i.l.s16 %v10852
  %v10912 = vunpack.i.l.s16 %v10855
  %v10913 = vunpack.i.h.s16 %v10855
  %v10914 = vunpack.i.l.s16 %v10857
  %v10915 = vunpack.i.h.s16 %v10857
  %v10916 = vunpack.i.l.s16 %v10859
  %v10917 = vunpack.i.l.s16 %v10862
  %v10918 = vunpack.i.h.s16 %v10862
  %v10919 = vunpack.i.l.s16 %v10864
  %v10920 = vunpack.i.h.s16 %v10864
  %v10921 = vunpack.i.l.s16 %v10866
  %v10922 = vunpack.i.l.s16 %v10869
  %v10923 = vunpack.i.h.s16 %v10869
  %v10924 = vunpack.i.l.s16 %v10871
  %v10925 = vunpack.i.h.s16 %v10871
  %v10926 = vunpack.i.l.s16 %v10873
  %v10927 = vunpack.i.l.s16 %v10876
  %v10928 = vunpack.i.h.s16 %v10876
  %v10929 = vunpack.i.l.s16 %v10878
  %v10930 = vunpack.i.h.s16 %v10878
  %v10931 = vunpack.i.l.s16 %v10880
  %s10932 = scalar_lea.vmem %s5, 160
  %v10933 = vld [vmem:[%s10932] sm:$0xf]
  %v10934 = vld [vmem:[%s10932 + $0x4] sm:$0xf]
  %v10935 = vld [vmem:[%s10932 + $0x8] sm:$0xf]
  %v10936 = vld [vmem:[%s10932 + $0xc] sm:$0xf]
  %v10937 = vld [vmem:[%s10932 + $0x10] sm:$0x3]
  %v10938 = vpack.i.b16 %v10883, %v10882
  %v10939 = vpack.i.b16 %v10885, %v10884
  %v10940 = vpack.i.b16 %v10887, %v10886
  %v10941 = vpack.i.b16 %v10889, %v10888
  %v10942 = vpack.i.b16 %v10891, %v10890
  %v10943 = vpack.i.b16 %v10893, %v10892
  %v10944 = vpack.i.b16 %v10895, %v10894
  %v10945 = vpack.i.b16 %v10897, %v10896
  %v10946 = vpack.i.b16 %v10899, %v10898
  %v10947 = vpack.i.b16 %v10901, %v10900
  %v10948 = vpack.i.b16 %v10903, %v10902
  %v10949 = vpack.i.b16 %v10905, %v10904
  %v10950 = vpack.i.b16 %v10907, %v10906
  %v10951 = vpack.i.b16 %v10909, %v10908
  %v10952 = vpack.i.b16 %v10911, %v10910
  %v10953 = vpack.i.b16 %v10913, %v10912
  %v10954 = vpack.i.b16 %v10915, %v10914
  %v10955 = vpack.i.b16 %v10917, %v10916
  %v10956 = vpack.i.b16 %v10919, %v10918
  %v10957 = vpack.i.b16 %v10921, %v10920
  %v10958 = vpack.i.b16 %v10923, %v10922
  %v10959 = vpack.i.b16 %v10925, %v10924
  %v10960 = vpack.i.b16 %v10927, %v10926
  %v10961 = vpack.i.b16 %v10929, %v10928
  %v10962 = vpack.i.b16 %v10931, %v10930
  %10964 = vst [vmem:[#allocation1] ss:$9 sm:$0xff] %v10938
  %s10966 = scalar_lea.vmem [#allocation1], 1
  %10967 = vst [vmem:[%s10966] ss:$9 sm:$0xff] %v10939
  %s10969 = scalar_lea.vmem [#allocation1], 2
  %10970 = vst [vmem:[%s10969] ss:$9 sm:$0xff] %v10940
  %s10972 = scalar_lea.vmem [#allocation1], 3
  %10973 = vst [vmem:[%s10972] ss:$9 sm:$0xff] %v10941
  %s10975 = scalar_lea.vmem [#allocation1], 4
  %10976 = vst [vmem:[%s10975] ss:$9 sm:$0xff] %v10942
  %s10978 = scalar_lea.vmem [#allocation1], 5
  %10979 = vst [vmem:[%s10978] ss:$9 sm:$0xff] %v10943
  %s10981 = scalar_lea.vmem [#allocation1], 6
  %10982 = vst [vmem:[%s10981] ss:$9 sm:$0xff] %v10944
  %s10984 = scalar_lea.vmem [#allocation1], 7
  %10985 = vst [vmem:[%s10984] ss:$9 sm:$0xff] %v10945
  %v10986 = vld [vmem:[#allocation1] sm:$0xff]
  %10988 = vst [vmem:[#allocation1] ss:$9 sm:$0xff] %v10946
  %10990 = vst [vmem:[%s10966] ss:$9 sm:$0xff] %v10947
  %10992 = vst [vmem:[%s10969] ss:$9 sm:$0xff] %v10948
  %10994 = vst [vmem:[%s10972] ss:$9 sm:$0xff] %v10949
  %10996 = vst [vmem:[%s10975] ss:$9 sm:$0xff] %v10950
  %10998 = vst [vmem:[%s10978] ss:$9 sm:$0xff] %v10951
  %11000 = vst [vmem:[%s10981] ss:$9 sm:$0xff] %v10952
  %11002 = vst [vmem:[%s10984] ss:$9 sm:$0xff] %v10953
  %v11003 = vld [vmem:[#allocation1] sm:$0xff]
  %11005 = vst [vmem:[#allocation1] ss:$9 sm:$0xff] %v10954
  %11007 = vst [vmem:[%s10966] ss:$9 sm:$0xff] %v10955
  %11009 = vst [vmem:[%s10969] ss:$9 sm:$0xff] %v10956
  %11011 = vst [vmem:[%s10972] ss:$9 sm:$0xff] %v10957
  %11013 = vst [vmem:[%s10975] ss:$9 sm:$0xff] %v10958
  %11015 = vst [vmem:[%s10978] ss:$9 sm:$0xff] %v10959
  %11017 = vst [vmem:[%s10981] ss:$9 sm:$0xff] %v10960
  %11019 = vst [vmem:[%s10984] ss:$9 sm:$0xff] %v10961
  %v11020 = vld [vmem:[#allocation1] sm:$0xff]
  %11022 = vst [vmem:[#allocation1] ss:$9 sm:$0xff] %v10962
  %v11023 = vld [vmem:[#allocation1] sm:$0xff]
  %v11029 = vunpack.c.l.b16 %v10933
  %v11030 = vunpack.c.l.b16 %v10934
  %v11031 = vunpack.c.l.b16 %v10935
  %v11032 = vunpack.c.l.b16 %v10936
  %v11033 = vunpack.c.l.b16 %v10937
  %v11034 = vpack.c.b16 %v11030, %v11029
  %v11035 = vpack.c.b16 %v11032, %v11031
  %v11036 = vpack.c.b16 %v11033, %v11033
  %v11039 = vsel %vm9500, %v10986, 0
  %v11041 = vsel %vm9500, %v11003, 0
  %v11043 = vsel %vm9500, %v11020, 0
  %v11045 = vsel %vm9500, %v11023, 0
  %v11048 = vsel %vm274, %v11036, 0
  %11050 = vmatpush.bf16.msra.mxu0 0
  %11051 = vmatpush.bf16.msra.mxu0 0
  %11052 = vmatpush.bf16.msra.mxu0 0
  %11053 = vmatpush.bf16.msra.mxu0 0
  %11054 = vmatpush.bf16.msra.mxu0 0
  %11055 = vmatpush.bf16.msra.mxu0 %v11048
  %11056 = vmatpush.bf16.msra.mxu0 %v11035
  %11057 = vmatpush.bf16.msra.mxu0 %v11034
  %11058 = vmatmul.bf16.gmra.mxu0 %v11039
  %v11059 = vpop.f32.mrf.mxu0
  %v11060 = vadd.f32 0.0, %v11059
  %v11061 = vpop.f32.mrf.mxu0
  %v11062 = vadd.f32 0.0, %v11061
  %11063 = vmatmul.bf16.gmra.mxu0 %v11041
  %v11064 = vpop.f32.mrf.mxu0
  %v11065 = vadd.f32 0.0, %v11064
  %v11066 = vpop.f32.mrf.mxu0
  %v11067 = vadd.f32 0.0, %v11066
  %11068 = vmatmul.bf16.gmra.mxu0 %v11043
  %v11069 = vpop.f32.mrf.mxu0
  %v11070 = vadd.f32 0.0, %v11069
  %v11071 = vpop.f32.mrf.mxu0
  %v11072 = vadd.f32 0.0, %v11071
  %11073 = vmatmul.bf16.gmra.mxu0 %v11045
  %v11074 = vpop.f32.mrf.mxu0
  %v11075 = vadd.f32 0.0, %v11074
  %v11076 = vpop.f32.mrf.mxu0
  %11077 = vdwg.mxu0
  %v11078 = vadd.f32 %v10799, %v11060
  %v11079 = vadd.f32 %v10800, %v11062
  %v11080 = vadd.f32 %v10801, %v11065
  %v11081 = vadd.f32 %v10802, %v11067
  %v11082 = vadd.f32 %v10803, %v11070
  %v11083 = vadd.f32 %v10804, %v11072
  %v11084 = vadd.f32 %v10805, %v11075
  %v11085 = vld [vmem:[%s6] sm:$0x1]
  %v11087 = vperm.slane %v11085, 0
  %v11089 = vadd.f32 %v11078, %v11087
  %v11090 = vadd.f32 %v11079, %v11087
  %v11091 = vadd.f32 %v11080, %v11087
  %v11092 = vadd.f32 %v11081, %v11087
  %v11093 = vadd.f32 %v11082, %v11087
  %v11094 = vadd.f32 %v11083, %v11087
  %v11095 = vadd.f32 %v11084, %v11087
  %v11103 = vrot.slane %v11089, 1
  %v11104 = vrot.slane %v11089, 2
  %v11105 = vrot.slane %v11089, 3
  %v11106 = vrot.slane %v11089, 4
  %v11107 = vrot.slane %v11089, 5
  %v11108 = vrot.slane %v11089, 6
  %v11109 = vrot.slane %v11089, 7
  %v11110 = vrot.slane %v11090, 1
  %v11111 = vrot.slane %v11090, 2
  %v11112 = vrot.slane %v11090, 3
  %v11113 = vrot.slane %v11090, 4
  %v11114 = vrot.slane %v11090, 5
  %v11115 = vrot.slane %v11090, 6
  %v11116 = vrot.slane %v11090, 7
  %v11117 = vrot.slane %v11091, 1
  %v11118 = vrot.slane %v11091, 2
  %v11119 = vrot.slane %v11091, 3
  %v11120 = vrot.slane %v11091, 4
  %v11121 = vrot.slane %v11091, 5
  %v11122 = vrot.slane %v11091, 6
  %v11123 = vrot.slane %v11091, 7
  %v11124 = vrot.slane %v11092, 1
  %v11125 = vrot.slane %v11092, 2
  %v11126 = vrot.slane %v11092, 3
  %v11127 = vrot.slane %v11092, 4
  %v11128 = vrot.slane %v11092, 5
  %v11129 = vrot.slane %v11092, 6
  %v11130 = vrot.slane %v11092, 7
  %v11131 = vrot.slane %v11093, 1
  %v11132 = vrot.slane %v11093, 2
  %v11133 = vrot.slane %v11093, 3
  %v11134 = vrot.slane %v11093, 4
  %v11135 = vrot.slane %v11093, 5
  %v11136 = vrot.slane %v11093, 6
  %v11137 = vrot.slane %v11093, 7
  %v11138 = vrot.slane %v11094, 1
  %v11139 = vrot.slane %v11094, 2
  %v11140 = vrot.slane %v11094, 3
  %v11141 = vrot.slane %v11094, 4
  %v11142 = vrot.slane %v11094, 5
  %v11143 = vrot.slane %v11094, 6
  %v11144 = vrot.slane %v11094, 7
  %v11145 = vrot.slane %v11095, 1
  %11146 = vst [vmem:[#allocation1] ss:$9 sm:$0xff] %v11089
  %s11147 = scalar_lea.vmem [#allocation1], 1
  %11148 = vst [vmem:[%s11147] ss:$9 sm:$0xff] %v11103
  %s11149 = scalar_lea.vmem [#allocation1], 2
  %11150 = vst [vmem:[%s11149] ss:$9 sm:$0xff] %v11104
  %s11151 = scalar_lea.vmem [#allocation1], 3
  %11152 = vst [vmem:[%s11151] ss:$9 sm:$0xff] %v11105
  %s11153 = scalar_lea.vmem [#allocation1], 4
  %11154 = vst [vmem:[%s11153] ss:$9 sm:$0xff] %v11106
  %v11155 = vld [vmem:[#allocation1] sm:$0xff]
  %11156 = vst [vmem:[#allocation1] ss:$9 sm:$0xff] %v11107
  %11157 = vst [vmem:[%s11147] ss:$9 sm:$0xff] %v11108
  %11158 = vst [vmem:[%s11149] ss:$9 sm:$0xff] %v11109
  %11159 = vst [vmem:[%s11151] ss:$9 sm:$0xff] %v11090
  %11160 = vst [vmem:[%s11153] ss:$9 sm:$0xff] %v11110
  %v11161 = vld [vmem:[#allocation1] sm:$0xff]
  %11162 = vst [vmem:[#allocation1] ss:$9 sm:$0xff] %v11111
  %11163 = vst [vmem:[%s11147] ss:$9 sm:$0xff] %v11112
  %11164 = vst [vmem:[%s11149] ss:$9 sm:$0xff] %v11113
  %11165 = vst [vmem:[%s11151] ss:$9 sm:$0xff] %v11114
  %11166 = vst [vmem:[%s11153] ss:$9 sm:$0xff] %v11115
  %v11167 = vld [vmem:[#allocation1] sm:$0xff]
  %11168 = vst [vmem:[#allocation1] ss:$9 sm:$0xff] %v11116
  %11169 = vst [vmem:[%s11147] ss:$9 sm:$0xff] %v11091
  %11170 = vst [vmem:[%s11149] ss:$9 sm:$0xff] %v11117
  %11171 = vst [vmem:[%s11151] ss:$9 sm:$0xff] %v11118
  %11172 = vst [vmem:[%s11153] ss:$9 sm:$0xff] %v11119
  %v11173 = vld [vmem:[#allocation1] sm:$0xff]
  %11174 = vst [vmem:[#allocation1] ss:$9 sm:$0xff] %v11120
  %11175 = vst [vmem:[%s11147] ss:$9 sm:$0xff] %v11121
  %11176 = vst [vmem:[%s11149] ss:$9 sm:$0xff] %v11122
  %11177 = vst [vmem:[%s11151] ss:$9 sm:$0xff] %v11123
  %11178 = vst [vmem:[%s11153] ss:$9 sm:$0xff] %v11092
  %v11179 = vld [vmem:[#allocation1] sm:$0xff]
  %11180 = vst [vmem:[#allocation1] ss:$9 sm:$0xff] %v11124
  %11181 = vst [vmem:[%s11147] ss:$9 sm:$0xff] %v11125
  %11182 = vst [vmem:[%s11149] ss:$9 sm:$0xff] %v11126
  %11183 = vst [vmem:[%s11151] ss:$9 sm:$0xff] %v11127
  %11184 = vst [vmem:[%s11153] ss:$9 sm:$0xff] %v11128
  %v11185 = vld [vmem:[#allocation1] sm:$0xff]
  %11186 = vst [vmem:[#allocation1] ss:$9 sm:$0xff] %v11129
  %11187 = vst [vmem:[%s11147] ss:$9 sm:$0xff] %v11130
  %11188 = vst [vmem:[%s11149] ss:$9 sm:$0xff] %v11093
  %11189 = vst [vmem:[%s11151] ss:$9 sm:$0xff] %v11131
  %11190 = vst [vmem:[%s11153] ss:$9 sm:$0xff] %v11132
  %v11191 = vld [vmem:[#allocation1] sm:$0xff]
  %11192 = vst [vmem:[#allocation1] ss:$9 sm:$0xff] %v11133
  %11193 = vst [vmem:[%s11147] ss:$9 sm:$0xff] %v11134
  %11194 = vst [vmem:[%s11149] ss:$9 sm:$0xff] %v11135
  %11195 = vst [vmem:[%s11151] ss:$9 sm:$0xff] %v11136
  %11196 = vst [vmem:[%s11153] ss:$9 sm:$0xff] %v11137
  %v11197 = vld [vmem:[#allocation1] sm:$0xff]
  %11198 = vst [vmem:[#allocation1] ss:$9 sm:$0xff] %v11094
  %11199 = vst [vmem:[%s11147] ss:$9 sm:$0xff] %v11138
  %11200 = vst [vmem:[%s11149] ss:$9 sm:$0xff] %v11139
  %11201 = vst [vmem:[%s11151] ss:$9 sm:$0xff] %v11140
  %11202 = vst [vmem:[%s11153] ss:$9 sm:$0xff] %v11141
  %v11203 = vld [vmem:[#allocation1] sm:$0xff]
  %11204 = vst [vmem:[#allocation1] ss:$9 sm:$0xff] %v11142
  %11205 = vst [vmem:[%s11147] ss:$9 sm:$0xff] %v11143
  %11206 = vst [vmem:[%s11149] ss:$9 sm:$0xff] %v11144
  %11207 = vst [vmem:[%s11151] ss:$9 sm:$0xff] %v11095
  %11208 = vst [vmem:[%s11153] ss:$9 sm:$0xff] %v11145
  %v11209 = vld [vmem:[#allocation1] sm:$0xff]
  %v11220 = vpack.c.bf16 %v11155, %v11155
  %v11221 = vpack.c.bf16 %v11161, %v11161
  %v11222 = vpack.c.bf16 %v11167, %v11167
  %v11223 = vpack.c.bf16 %v11173, %v11173
  %v11224 = vpack.c.bf16 %v11179, %v11179
  %v11225 = vpack.c.bf16 %v11185, %v11185
  %v11226 = vpack.c.bf16 %v11191, %v11191
  %v11227 = vpack.c.bf16 %v11197, %v11197
  %v11228 = vpack.c.bf16 %v11203, %v11203
  %v11229 = vpack.c.bf16 %v11209, %v11209
  %v11236 = vrot.slane %v11220, 3
  %v11237 = vrot.slane %v11221, 3
  %v11238 = vrot.slane %v11222, 3
  %v11239 = vrot.slane %v11225, 3
  %v11240 = vrot.slane %v11226, 3
  %v11241 = vrot.slane %v11227, 3
  %v11244 = vsel %vm273, %v11220, %v11236
  %v11246 = vsel %vm5548, %v11220, %v11236
  %v11248 = vrot.slane %v11246, 1
  %v11251 = vsel %vm273, %v11221, %v11237
  %v11253 = vsel %vm5548, %v11221, %v11237
  %v11255 = vrot.slane %v11253, 1
  %v11258 = vsel %vm273, %v11222, %v11238
  %v11260 = vsel %vm5548, %v11222, %v11238
  %v11262 = vrot.slane %v11260, 1
  %v11265 = vsel %vm273, %v11225, %v11239
  %v11267 = vsel %vm5548, %v11225, %v11239
  %v11269 = vrot.slane %v11267, 1
  %v11272 = vsel %vm273, %v11226, %v11240
  %v11274 = vsel %vm5548, %v11226, %v11240
  %v11276 = vrot.slane %v11274, 1
  %v11279 = vsel %vm273, %v11227, %v11241
  %v11281 = vsel %vm5548, %v11227, %v11241
  %v11283 = vrot.slane %v11281, 1
  %v11284 = vunpack.i.l.s16 %v11244
  %v11285 = vunpack.i.h.s16 %v11244
  %v11286 = vunpack.i.l.s16 %v11248
  %v11287 = vunpack.i.l.s16 %v11251
  %v11288 = vunpack.i.h.s16 %v11251
  %v11289 = vunpack.i.l.s16 %v11255
  %v11290 = vunpack.i.l.s16 %v11258
  %v11291 = vunpack.i.h.s16 %v11258
  %v11292 = vunpack.i.l.s16 %v11262
  %v11293 = vunpack.i.l.s16 %v11265
  %v11294 = vunpack.i.h.s16 %v11265
  %v11295 = vunpack.i.l.s16 %v11269
  %v11296 = vunpack.i.l.s16 %v11272
  %v11297 = vunpack.i.h.s16 %v11272
  %v11298 = vunpack.i.l.s16 %v11276
  %v11299 = vunpack.i.l.s16 %v11279
  %v11300 = vunpack.i.h.s16 %v11279
  %v11301 = vunpack.i.l.s16 %v11283
  %v11302 = vld [vmem:[%s7] sm:$0xf]
  %v11303 = vld [vmem:[%s7 + $0x4] sm:$0xf]
  %v11304 = vld [vmem:[%s7 + $0x8] sm:$0xf]
  %v11305 = vld [vmem:[%s7 + $0xc] sm:$0xf]
  %v11306 = vld [vmem:[%s7 + $0x10] sm:$0xf]
  %v11307 = vld [vmem:[%s7 + $0x14] sm:$0xf]
  %v11308 = vunpack.i.h.s16 %v11248
  %v11309 = vunpack.i.h.s16 %v11255
  %v11310 = vunpack.i.h.s16 %v11262
  %v11311 = vunpack.i.h.s16 %v11269
  %v11312 = vunpack.i.h.s16 %v11276
  %v11313 = vunpack.i.h.s16 %v11283
  %s11314 = scalar_lea.vmem %s7, 24
  %v11315 = vld [vmem:[%s11314] sm:$0xf]
  %v11316 = vld [vmem:[%s11314 + $0x4] sm:$0xf]
  %v11317 = vld [vmem:[%s11314 + $0x8] sm:$0xf]
  %v11318 = vld [vmem:[%s11314 + $0xc] sm:$0xf]
  %v11319 = vld [vmem:[%s11314 + $0x10] sm:$0xf]
  %v11320 = vld [vmem:[%s11314 + $0x14] sm:$0xf]
  %v11321 = vpack.i.b16 %v11286, %v11285
  %v11322 = vpack.i.b16 %v11288, %v11308
  %v11323 = vpack.i.b16 %v11309, %v11289
  %v11324 = vpack.i.b16 %v11292, %v11291
  %v11325 = vpack.i.b16 %v11294, %v11310
  %v11326 = vpack.i.b16 %v11311, %v11295
  %v11327 = vpack.i.b16 %v11298, %v11297
  %v11328 = vpack.i.b16 %v11300, %v11312
  %v11329 = vpack.i.b16 %v11313, %v11301
  %11331 = vst [vmem:[#allocation1] ss:$9 sm:$0xff] %v11321
  %s11333 = scalar_lea.vmem [#allocation1], 1
  %11334 = vst [vmem:[%s11333] ss:$9 sm:$0xff] %v11322
  %s11336 = scalar_lea.vmem [#allocation1], 2
  %11337 = vst [vmem:[%s11336] ss:$9 sm:$0xff] %v11323
  %s11339 = scalar_lea.vmem [#allocation1], 3
  %11340 = vst [vmem:[%s11339] ss:$9 sm:$0xff] %v11324
  %s11342 = scalar_lea.vmem [#allocation1], 4
  %11343 = vst [vmem:[%s11342] ss:$9 sm:$0xff] %v11325
  %s11345 = scalar_lea.vmem [#allocation1], 5
  %11346 = vst [vmem:[%s11345] ss:$9 sm:$0xff] %v11326
  %s11348 = scalar_lea.vmem [#allocation1], 6
  %11349 = vst [vmem:[%s11348] ss:$9 sm:$0xff] %v11327
  %s11351 = scalar_lea.vmem [#allocation1], 7
  %11352 = vst [vmem:[%s11351] ss:$9 sm:$0xff] %v11328
  %v11353 = vld [vmem:[#allocation1] sm:$0xff]
  %11355 = vst [vmem:[#allocation1] ss:$9 sm:$0xff] %v11329
  %v11356 = vld [vmem:[#allocation1] sm:$0xff]
  %v11363 = vunpack.c.l.b16 %v11315
  %v11364 = vunpack.c.l.b16 %v11316
  %v11365 = vunpack.c.l.b16 %v11317
  %v11366 = vunpack.c.l.b16 %v11318
  %v11367 = vunpack.c.l.b16 %v11319
  %v11368 = vunpack.c.l.b16 %v11320
  %v11369 = vpack.c.b16 %v11364, %v11363
  %v11370 = vpack.c.b16 %v11366, %v11365
  %v11371 = vpack.c.b16 %v11368, %v11367
  %vm11375 = vcmask 392192
  %v11376 = vsel %vm11375, %v11353, 0
  %v11378 = vsel %vm11375, %v11356, 0
  %11380 = vmatpush.bf16.msra.mxu0 0
  %11381 = vmatpush.bf16.msra.mxu0 0
  %11382 = vmatpush.bf16.msra.mxu0 0
  %11383 = vmatpush.bf16.msra.mxu0 0
  %11384 = vmatpush.bf16.msra.mxu0 0
  %11385 = vmatpush.bf16.msra.mxu0 %v11371
  %11386 = vmatpush.bf16.msra.mxu0 %v11370
  %11387 = vmatpush.bf16.msra.mxu0 %v11369
  %11388 = vmatmul.bf16.gmra.mxu0 %v11376
  %v11389 = vpop.f32.mrf.mxu0
  %v11390 = vadd.f32 0.0, %v11389
  %v11391 = vpop.f32.mrf.mxu0
  %v11392 = vadd.f32 0.0, %v11391
  %11393 = vmatmul.bf16.gmra.mxu0 %v11378
  %v11394 = vpop.f32.mrf.mxu0
  %v11395 = vadd.f32 0.0, %v11394
  %v11396 = vpop.f32.mrf.mxu0
  %11397 = vdwg.mxu0
  %v11398 = vpack.i.b16 %v11285, %v11284
  %v11399 = vpack.i.b16 %v11287, %v11286
  %v11400 = vpack.i.b16 %v11289, %v11288
  %v11401 = vpack.i.b16 %v11291, %v11290
  %v11402 = vpack.i.b16 %v11293, %v11292
  %v11403 = vpack.i.b16 %v11295, %v11294
  %v11404 = vpack.i.b16 %v11297, %v11296
  %v11405 = vpack.i.b16 %v11299, %v11298
  %v11406 = vpack.i.b16 %v11301, %v11300
  %11408 = vst [vmem:[#allocation1] ss:$9 sm:$0xff] %v11398
  %s11410 = scalar_lea.vmem [#allocation1], 1
  %11411 = vst [vmem:[%s11410] ss:$9 sm:$0xff] %v11399
  %s11413 = scalar_lea.vmem [#allocation1], 2
  %11414 = vst [vmem:[%s11413] ss:$9 sm:$0xff] %v11400
  %s11416 = scalar_lea.vmem [#allocation1], 3
  %11417 = vst [vmem:[%s11416] ss:$9 sm:$0xff] %v11401
  %s11419 = scalar_lea.vmem [#allocation1], 4
  %11420 = vst [vmem:[%s11419] ss:$9 sm:$0xff] %v11402
  %s11422 = scalar_lea.vmem [#allocation1], 5
  %11423 = vst [vmem:[%s11422] ss:$9 sm:$0xff] %v11403
  %s11425 = scalar_lea.vmem [#allocation1], 6
  %11426 = vst [vmem:[%s11425] ss:$9 sm:$0xff] %v11404
  %s11428 = scalar_lea.vmem [#allocation1], 7
  %11429 = vst [vmem:[%s11428] ss:$9 sm:$0xff] %v11405
  %v11430 = vld [vmem:[#allocation1] sm:$0xff]
  %11432 = vst [vmem:[#allocation1] ss:$9 sm:$0xff] %v11406
  %v11433 = vld [vmem:[#allocation1] sm:$0xff]
  %v11440 = vunpack.c.l.b16 %v11302
  %v11441 = vunpack.c.l.b16 %v11303
  %v11442 = vunpack.c.l.b16 %v11304
  %v11443 = vunpack.c.l.b16 %v11305
  %v11444 = vunpack.c.l.b16 %v11306
  %v11445 = vunpack.c.l.b16 %v11307
  %v11446 = vpack.c.b16 %v11441, %v11440
  %v11447 = vpack.c.b16 %v11443, %v11442
  %v11448 = vpack.c.b16 %v11445, %v11444
  %v11452 = vsel %vm11375, %v11430, 0
  %v11454 = vsel %vm11375, %v11433, 0
  %11456 = vmatpush.bf16.msra.mxu0 0
  %11457 = vmatpush.bf16.msra.mxu0 0
  %11458 = vmatpush.bf16.msra.mxu0 0
  %11459 = vmatpush.bf16.msra.mxu0 0
  %11460 = vmatpush.bf16.msra.mxu0 0
  %11461 = vmatpush.bf16.msra.mxu0 %v11448
  %11462 = vmatpush.bf16.msra.mxu0 %v11447
  %11463 = vmatpush.bf16.msra.mxu0 %v11446
  %11464 = vmatmul.bf16.gmra.mxu0 %v11452
  %v11465 = vpop.f32.mrf.mxu0
  %v11466 = vadd.f32 %v11390, %v11465
  %v11467 = vpop.f32.mrf.mxu0
  %v11468 = vadd.f32 %v11392, %v11467
  %11469 = vmatmul.bf16.gmra.mxu0 %v11454
  %v11470 = vpop.f32.mrf.mxu0
  %v11471 = vadd.f32 %v11395, %v11470
  %v11472 = vpop.f32.mrf.mxu0
  %11473 = vdwg.mxu0
  %11474 = vst [vmem:[#allocation1] sm:$0xff] %v11220
  %s11475 = scalar_lea.vmem [#allocation1], 1
  %v11476 = vld [vmem:[%s11475] ss:$4 sm:$0xff]
  %s11478 = scalar_lea.vmem [#allocation1], 2
  %v11479 = vld [vmem:[%s11478] ss:$4 sm:$0xff]
  %11481 = vst [vmem:[#allocation1 + $0x20] sm:$0xff] %v11221
  %s11482 = scalar_lea.vmem [#allocation1], 33
  %v11483 = vld [vmem:[%s11482] ss:$4 sm:$0xff]
  %s11485 = scalar_lea.vmem [#allocation1], 34
  %v11486 = vld [vmem:[%s11485] ss:$4 sm:$0xff]
  %11488 = vst [vmem:[#allocation1] sm:$0xff] %v11222
  %v11489 = vld [vmem:[%s11475] ss:$4 sm:$0xff]
  %v11491 = vld [vmem:[%s11478] ss:$4 sm:$0xff]
  %11493 = vst [vmem:[#allocation1 + $0x20] sm:$0xff] %v11225
  %v11494 = vld [vmem:[%s11482] ss:$4 sm:$0xff]
  %v11496 = vld [vmem:[%s11485] ss:$4 sm:$0xff]
  %11498 = vst [vmem:[#allocation1] sm:$0xff] %v11226
  %v11499 = vld [vmem:[%s11475] ss:$4 sm:$0xff]
  %v11501 = vld [vmem:[%s11478] ss:$4 sm:$0xff]
  %11503 = vst [vmem:[#allocation1 + $0x20] sm:$0xff] %v11227
  %v11504 = vld [vmem:[%s11482] ss:$4 sm:$0xff]
  %v11506 = vld [vmem:[%s11485] ss:$4 sm:$0xff]
  %v11508 = vunpack.i.l.s16 %v11476
  %v11509 = vunpack.i.h.s16 %v11476
  %v11510 = vunpack.i.l.s16 %v11479
  %v11511 = vunpack.i.l.s16 %v11483
  %v11512 = vunpack.i.h.s16 %v11483
  %v11513 = vunpack.i.l.s16 %v11486
  %v11514 = vunpack.i.l.s16 %v11489
  %v11515 = vunpack.i.h.s16 %v11489
  %v11516 = vunpack.i.l.s16 %v11491
  %v11517 = vunpack.i.l.s16 %v11494
  %v11518 = vunpack.i.h.s16 %v11494
  %v11519 = vunpack.i.l.s16 %v11496
  %v11520 = vunpack.i.l.s16 %v11499
  %v11521 = vunpack.i.h.s16 %v11499
  %v11522 = vunpack.i.l.s16 %v11501
  %v11523 = vunpack.i.l.s16 %v11504
  %v11524 = vunpack.i.h.s16 %v11504
  %v11525 = vunpack.i.l.s16 %v11506
  %s11526 = scalar_lea.vmem %s7, 48
  %v11527 = vld [vmem:[%s11526] sm:$0xf]
  %v11528 = vld [vmem:[%s11526 + $0x4] sm:$0xf]
  %v11529 = vld [vmem:[%s11526 + $0x8] sm:$0xf]
  %v11530 = vld [vmem:[%s11526 + $0xc] sm:$0xf]
  %v11531 = vld [vmem:[%s11526 + $0x10] sm:$0xf]
  %v11532 = vld [vmem:[%s11526 + $0x14] sm:$0xf]
  %v11533 = vpack.i.b16 %v11509, %v11508
  %v11534 = vpack.i.b16 %v11511, %v11510
  %v11535 = vpack.i.b16 %v11513, %v11512
  %v11536 = vpack.i.b16 %v11515, %v11514
  %v11537 = vpack.i.b16 %v11517, %v11516
  %v11538 = vpack.i.b16 %v11519, %v11518
  %v11539 = vpack.i.b16 %v11521, %v11520
  %v11540 = vpack.i.b16 %v11523, %v11522
  %v11541 = vpack.i.b16 %v11525, %v11524
  %11543 = vst [vmem:[#allocation1] ss:$9 sm:$0xff] %v11533
  %s11545 = scalar_lea.vmem [#allocation1], 1
  %11546 = vst [vmem:[%s11545] ss:$9 sm:$0xff] %v11534
  %s11548 = scalar_lea.vmem [#allocation1], 2
  %11549 = vst [vmem:[%s11548] ss:$9 sm:$0xff] %v11535
  %s11551 = scalar_lea.vmem [#allocation1], 3
  %11552 = vst [vmem:[%s11551] ss:$9 sm:$0xff] %v11536
  %s11554 = scalar_lea.vmem [#allocation1], 4
  %11555 = vst [vmem:[%s11554] ss:$9 sm:$0xff] %v11537
  %s11557 = scalar_lea.vmem [#allocation1], 5
  %11558 = vst [vmem:[%s11557] ss:$9 sm:$0xff] %v11538
  %s11560 = scalar_lea.vmem [#allocation1], 6
  %11561 = vst [vmem:[%s11560] ss:$9 sm:$0xff] %v11539
  %s11563 = scalar_lea.vmem [#allocation1], 7
  %11564 = vst [vmem:[%s11563] ss:$9 sm:$0xff] %v11540
  %v11565 = vld [vmem:[#allocation1] sm:$0xff]
  %11567 = vst [vmem:[#allocation1] ss:$9 sm:$0xff] %v11541
  %v11568 = vld [vmem:[#allocation1] sm:$0xff]
  %v11575 = vunpack.c.l.b16 %v11527
  %v11576 = vunpack.c.l.b16 %v11528
  %v11577 = vunpack.c.l.b16 %v11529
  %v11578 = vunpack.c.l.b16 %v11530
  %v11579 = vunpack.c.l.b16 %v11531
  %v11580 = vunpack.c.l.b16 %v11532
  %v11581 = vpack.c.b16 %v11576, %v11575
  %v11582 = vpack.c.b16 %v11578, %v11577
  %v11583 = vpack.c.b16 %v11580, %v11579
  %v11587 = vsel %vm11375, %v11565, 0
  %v11589 = vsel %vm11375, %v11568, 0
  %11591 = vmatpush.bf16.msra.mxu0 0
  %11592 = vmatpush.bf16.msra.mxu0 0
  %11593 = vmatpush.bf16.msra.mxu0 0
  %11594 = vmatpush.bf16.msra.mxu0 0
  %11595 = vmatpush.bf16.msra.mxu0 0
  %11596 = vmatpush.bf16.msra.mxu0 %v11583
  %11597 = vmatpush.bf16.msra.mxu0 %v11582
  %11598 = vmatpush.bf16.msra.mxu0 %v11581
  %11599 = vmatmul.bf16.gmra.mxu0 %v11587
  %v11600 = vpop.f32.mrf.mxu0
  %v11601 = vadd.f32 0.0, %v11600
  %v11602 = vpop.f32.mrf.mxu0
  %v11603 = vadd.f32 0.0, %v11602
  %11604 = vmatmul.bf16.gmra.mxu0 %v11589
  %v11605 = vpop.f32.mrf.mxu0
  %v11606 = vadd.f32 0.0, %v11605
  %v11607 = vpop.f32.mrf.mxu0
  %11608 = vdwg.mxu0
  %v11609 = vadd.f32 %v11466, %v11601
  %v11610 = vadd.f32 %v11468, %v11603
  %v11611 = vadd.f32 %v11471, %v11606
  %v11614 = vrot.slane %v11223, 3
  %v11615 = vrot.slane %v11228, 3
  %v11618 = vsel %vm273, %v11223, %v11614
  %v11620 = vsel %vm5548, %v11223, %v11614
  %v11622 = vrot.slane %v11620, 1
  %v11625 = vsel %vm273, %v11228, %v11615
  %v11627 = vsel %vm5548, %v11228, %v11615
  %v11629 = vrot.slane %v11627, 1
  %v11630 = vunpack.i.l.s16 %v11618
  %v11631 = vunpack.i.h.s16 %v11618
  %v11632 = vunpack.i.l.s16 %v11622
  %v11633 = vunpack.i.l.s16 %v11625
  %v11634 = vunpack.i.h.s16 %v11625
  %v11635 = vunpack.i.l.s16 %v11629
  %s11636 = scalar_lea.vmem %s7, 72
  %v11637 = vld [vmem:[%s11636] sm:$0xf]
  %v11638 = vld [vmem:[%s11636 + $0x4] sm:$0xf]
  %v11639 = vld [vmem:[%s11636 + $0x8] sm:$0xf]
  %v11640 = vld [vmem:[%s11636 + $0xc] sm:$0xf]
  %v11641 = vld [vmem:[%s11636 + $0x10] sm:$0xf]
  %v11642 = vld [vmem:[%s11636 + $0x14] sm:$0xf]
  %v11643 = vpack.i.b16 %v11288, %v11287
  %v11644 = vpack.i.b16 %v11290, %v11289
  %v11645 = vpack.i.b16 %v11631, %v11630
  %v11646 = vpack.i.b16 %v11296, %v11632
  %v11647 = vpack.i.b16 %v11300, %v11299
  %v11648 = vpack.i.b16 %v11633, %v11301
  %v11649 = vpack.i.b16 %v11635, %v11634
  %11651 = vst [vmem:[#allocation1] ss:$9 sm:$0xff] %v11643
  %s11653 = scalar_lea.vmem [#allocation1], 1
  %11654 = vst [vmem:[%s11653] ss:$9 sm:$0xff] %v11644
  %s11655 = scalar_lea.vmem [#allocation1], 2
  %11656 = vst [vmem:[%s11655] ss:$9 sm:$0xff] %v11324
  %s11658 = scalar_lea.vmem [#allocation1], 3
  %11659 = vst [vmem:[%s11658] ss:$9 sm:$0xff] %v11645
  %s11661 = scalar_lea.vmem [#allocation1], 4
  %11662 = vst [vmem:[%s11661] ss:$9 sm:$0xff] %v11646
  %s11663 = scalar_lea.vmem [#allocation1], 5
  %11664 = vst [vmem:[%s11663] ss:$9 sm:$0xff] %v11327
  %s11666 = scalar_lea.vmem [#allocation1], 6
  %11667 = vst [vmem:[%s11666] ss:$9 sm:$0xff] %v11647
  %s11669 = scalar_lea.vmem [#allocation1], 7
  %11670 = vst [vmem:[%s11669] ss:$9 sm:$0xff] %v11648
  %v11671 = vld [vmem:[#allocation1] sm:$0xff]
  %11673 = vst [vmem:[#allocation1] ss:$9 sm:$0xff] %v11649
  %v11674 = vld [vmem:[#allocation1] sm:$0xff]
  %v11681 = vunpack.c.l.b16 %v11637
  %v11682 = vunpack.c.l.b16 %v11638
  %v11683 = vunpack.c.l.b16 %v11639
  %v11684 = vunpack.c.l.b16 %v11640
  %v11685 = vunpack.c.l.b16 %v11641
  %v11686 = vunpack.c.l.b16 %v11642
  %v11687 = vpack.c.b16 %v11682, %v11681
  %v11688 = vpack.c.b16 %v11684, %v11683
  %v11689 = vpack.c.b16 %v11686, %v11685
  %v11693 = vsel %vm11375, %v11671, 0
  %v11695 = vsel %vm11375, %v11674, 0
  %11697 = vmatpush.bf16.msra.mxu0 0
  %11698 = vmatpush.bf16.msra.mxu0 0
  %11699 = vmatpush.bf16.msra.mxu0 0
  %11700 = vmatpush.bf16.msra.mxu0 0
  %11701 = vmatpush.bf16.msra.mxu0 0
  %11702 = vmatpush.bf16.msra.mxu0 %v11689
  %11703 = vmatpush.bf16.msra.mxu0 %v11688
  %11704 = vmatpush.bf16.msra.mxu0 %v11687
  %11705 = vmatmul.bf16.gmra.mxu0 %v11693
  %v11706 = vpop.f32.mrf.mxu0
  %v11707 = vadd.f32 0.0, %v11706
  %v11708 = vpop.f32.mrf.mxu0
  %v11709 = vadd.f32 0.0, %v11708
  %11710 = vmatmul.bf16.gmra.mxu0 %v11695
  %v11711 = vpop.f32.mrf.mxu0
  %v11712 = vadd.f32 0.0, %v11711
  %v11713 = vpop.f32.mrf.mxu0
  %11714 = vdwg.mxu0
  %v11715 = vadd.f32 %v11609, %v11707
  %v11716 = vadd.f32 %v11610, %v11709
  %v11717 = vadd.f32 %v11611, %v11712
  %v11718 = vunpack.i.h.s16 %v11622
  %v11719 = vunpack.i.h.s16 %v11629
  %s11720 = scalar_lea.vmem %s7, 96
  %v11721 = vld [vmem:[%s11720] sm:$0xf]
  %v11722 = vld [vmem:[%s11720 + $0x4] sm:$0xf]
  %v11723 = vld [vmem:[%s11720 + $0x8] sm:$0xf]
  %v11724 = vld [vmem:[%s11720 + $0xc] sm:$0xf]
  %v11725 = vld [vmem:[%s11720 + $0x10] sm:$0xf]
  %v11726 = vld [vmem:[%s11720 + $0x14] sm:$0xf]
  %v11727 = vpack.i.b16 %v11291, %v11309
  %v11728 = vpack.i.b16 %v11310, %v11292
  %v11729 = vpack.i.b16 %v11632, %v11631
  %v11730 = vpack.i.b16 %v11297, %v11718
  %v11731 = vpack.i.b16 %v11312, %v11298
  %v11732 = vpack.i.b16 %v11634, %v11313
  %v11733 = vpack.i.b16 %v11719, %v11635
  %11734 = vst [vmem:[#allocation1] ss:$9 sm:$0xff] %v11400
  %s11736 = scalar_lea.vmem [#allocation1], 1
  %11737 = vst [vmem:[%s11736] ss:$9 sm:$0xff] %v11727
  %s11739 = scalar_lea.vmem [#allocation1], 2
  %11740 = vst [vmem:[%s11739] ss:$9 sm:$0xff] %v11728
  %s11742 = scalar_lea.vmem [#allocation1], 3
  %11743 = vst [vmem:[%s11742] ss:$9 sm:$0xff] %v11729
  %s11745 = scalar_lea.vmem [#allocation1], 4
  %11746 = vst [vmem:[%s11745] ss:$9 sm:$0xff] %v11730
  %s11748 = scalar_lea.vmem [#allocation1], 5
  %11749 = vst [vmem:[%s11748] ss:$9 sm:$0xff] %v11731
  %s11750 = scalar_lea.vmem [#allocation1], 6
  %11751 = vst [vmem:[%s11750] ss:$9 sm:$0xff] %v11406
  %s11753 = scalar_lea.vmem [#allocation1], 7
  %11754 = vst [vmem:[%s11753] ss:$9 sm:$0xff] %v11732
  %v11755 = vld [vmem:[#allocation1] sm:$0xff]
  %11757 = vst [vmem:[#allocation1] ss:$9 sm:$0xff] %v11733
  %v11758 = vld [vmem:[#allocation1] sm:$0xff]
  %v11765 = vunpack.c.l.b16 %v11721
  %v11766 = vunpack.c.l.b16 %v11722
  %v11767 = vunpack.c.l.b16 %v11723
  %v11768 = vunpack.c.l.b16 %v11724
  %v11769 = vunpack.c.l.b16 %v11725
  %v11770 = vunpack.c.l.b16 %v11726
  %v11771 = vpack.c.b16 %v11766, %v11765
  %v11772 = vpack.c.b16 %v11768, %v11767
  %v11773 = vpack.c.b16 %v11770, %v11769
  %v11777 = vsel %vm11375, %v11755, 0
  %v11779 = vsel %vm11375, %v11758, 0
  %11781 = vmatpush.bf16.msra.mxu0 0
  %11782 = vmatpush.bf16.msra.mxu0 0
  %11783 = vmatpush.bf16.msra.mxu0 0
  %11784 = vmatpush.bf16.msra.mxu0 0
  %11785 = vmatpush.bf16.msra.mxu0 0
  %11786 = vmatpush.bf16.msra.mxu0 %v11773
  %11787 = vmatpush.bf16.msra.mxu0 %v11772
  %11788 = vmatpush.bf16.msra.mxu0 %v11771
  %11789 = vmatmul.bf16.gmra.mxu0 %v11777
  %v11790 = vpop.f32.mrf.mxu0
  %v11791 = vadd.f32 0.0, %v11790
  %v11792 = vpop.f32.mrf.mxu0
  %v11793 = vadd.f32 0.0, %v11792
  %11794 = vmatmul.bf16.gmra.mxu0 %v11779
  %v11795 = vpop.f32.mrf.mxu0
  %v11796 = vadd.f32 0.0, %v11795
  %v11797 = vpop.f32.mrf.mxu0
  %11798 = vdwg.mxu0
  %v11799 = vadd.f32 %v11715, %v11791
  %v11800 = vadd.f32 %v11716, %v11793
  %v11801 = vadd.f32 %v11717, %v11796
  %11802 = vst [vmem:[#allocation1] sm:$0xff] %v11221
  %s11803 = scalar_lea.vmem [#allocation1], 1
  %v11804 = vld [vmem:[%s11803] ss:$4 sm:$0xff]
  %s11806 = scalar_lea.vmem [#allocation1], 2
  %v11807 = vld [vmem:[%s11806] ss:$4 sm:$0xff]
  %11809 = vst [vmem:[#allocation1 + $0x20] sm:$0xff] %v11222
  %s11810 = scalar_lea.vmem [#allocation1], 33
  %v11811 = vld [vmem:[%s11810] ss:$4 sm:$0xff]
  %s11813 = scalar_lea.vmem [#allocation1], 34
  %v11814 = vld [vmem:[%s11813] ss:$4 sm:$0xff]
  %11816 = vst [vmem:[#allocation1] sm:$0xff] %v11223
  %v11817 = vld [vmem:[%s11803] ss:$4 sm:$0xff]
  %v11819 = vld [vmem:[%s11806] ss:$4 sm:$0xff]
  %11821 = vst [vmem:[#allocation1 + $0x20] sm:$0xff] %v11226
  %v11822 = vld [vmem:[%s11810] ss:$4 sm:$0xff]
  %v11824 = vld [vmem:[%s11813] ss:$4 sm:$0xff]
  %11826 = vst [vmem:[#allocation1] sm:$0xff] %v11227
  %v11827 = vld [vmem:[%s11803] ss:$4 sm:$0xff]
  %v11829 = vld [vmem:[%s11806] ss:$4 sm:$0xff]
  %11831 = vst [vmem:[#allocation1 + $0x20] sm:$0xff] %v11228
  %v11832 = vld [vmem:[%s11810] ss:$4 sm:$0xff]
  %v11834 = vld [vmem:[%s11813] ss:$4 sm:$0xff]
  %v11836 = vunpack.i.l.s16 %v11804
  %v11837 = vunpack.i.h.s16 %v11804
  %v11838 = vunpack.i.l.s16 %v11807
  %v11839 = vunpack.i.l.s16 %v11811
  %v11840 = vunpack.i.h.s16 %v11811
  %v11841 = vunpack.i.l.s16 %v11814
  %v11842 = vunpack.i.l.s16 %v11817
  %v11843 = vunpack.i.h.s16 %v11817
  %v11844 = vunpack.i.l.s16 %v11819
  %v11845 = vunpack.i.l.s16 %v11822
  %v11846 = vunpack.i.h.s16 %v11822
  %v11847 = vunpack.i.l.s16 %v11824
  %v11848 = vunpack.i.l.s16 %v11827
  %v11849 = vunpack.i.h.s16 %v11827
  %v11850 = vunpack.i.l.s16 %v11829
  %v11851 = vunpack.i.l.s16 %v11832
  %v11852 = vunpack.i.h.s16 %v11832
  %v11853 = vunpack.i.l.s16 %v11834
  %s11854 = scalar_lea.vmem %s7, 120
  %v11855 = vld [vmem:[%s11854] sm:$0xf]
  %v11856 = vld [vmem:[%s11854 + $0x4] sm:$0xf]
  %v11857 = vld [vmem:[%s11854 + $0x8] sm:$0xf]
  %v11858 = vld [vmem:[%s11854 + $0xc] sm:$0xf]
  %v11859 = vld [vmem:[%s11854 + $0x10] sm:$0xf]
  %v11860 = vld [vmem:[%s11854 + $0x14] sm:$0xf]
  %v11861 = vpack.i.b16 %v11837, %v11836
  %v11862 = vpack.i.b16 %v11839, %v11838
  %v11863 = vpack.i.b16 %v11841, %v11840
  %v11864 = vpack.i.b16 %v11843, %v11842
  %v11865 = vpack.i.b16 %v11845, %v11844
  %v11866 = vpack.i.b16 %v11847, %v11846
  %v11867 = vpack.i.b16 %v11849, %v11848
  %v11868 = vpack.i.b16 %v11851, %v11850
  %v11869 = vpack.i.b16 %v11853, %v11852
  %11871 = vst [vmem:[#allocation1] ss:$9 sm:$0xff] %v11861
  %s11873 = scalar_lea.vmem [#allocation1], 1
  %11874 = vst [vmem:[%s11873] ss:$9 sm:$0xff] %v11862
  %s11876 = scalar_lea.vmem [#allocation1], 2
  %11877 = vst [vmem:[%s11876] ss:$9 sm:$0xff] %v11863
  %s11879 = scalar_lea.vmem [#allocation1], 3
  %11880 = vst [vmem:[%s11879] ss:$9 sm:$0xff] %v11864
  %s11882 = scalar_lea.vmem [#allocation1], 4
  %11883 = vst [vmem:[%s11882] ss:$9 sm:$0xff] %v11865
  %s11885 = scalar_lea.vmem [#allocation1], 5
  %11886 = vst [vmem:[%s11885] ss:$9 sm:$0xff] %v11866
  %s11888 = scalar_lea.vmem [#allocation1], 6
  %11889 = vst [vmem:[%s11888] ss:$9 sm:$0xff] %v11867
  %s11891 = scalar_lea.vmem [#allocation1], 7
  %11892 = vst [vmem:[%s11891] ss:$9 sm:$0xff] %v11868
  %v11893 = vld [vmem:[#allocation1] sm:$0xff]
  %11895 = vst [vmem:[#allocation1] ss:$9 sm:$0xff] %v11869
  %v11896 = vld [vmem:[#allocation1] sm:$0xff]
  %v11903 = vunpack.c.l.b16 %v11855
  %v11904 = vunpack.c.l.b16 %v11856
  %v11905 = vunpack.c.l.b16 %v11857
  %v11906 = vunpack.c.l.b16 %v11858
  %v11907 = vunpack.c.l.b16 %v11859
  %v11908 = vunpack.c.l.b16 %v11860
  %v11909 = vpack.c.b16 %v11904, %v11903
  %v11910 = vpack.c.b16 %v11906, %v11905
  %v11911 = vpack.c.b16 %v11908, %v11907
  %v11915 = vsel %vm11375, %v11893, 0
  %v11917 = vsel %vm11375, %v11896, 0
  %11919 = vmatpush.bf16.msra.mxu0 0
  %11920 = vmatpush.bf16.msra.mxu0 0
  %11921 = vmatpush.bf16.msra.mxu0 0
  %11922 = vmatpush.bf16.msra.mxu0 0
  %11923 = vmatpush.bf16.msra.mxu0 0
  %11924 = vmatpush.bf16.msra.mxu0 %v11911
  %11925 = vmatpush.bf16.msra.mxu0 %v11910
  %11926 = vmatpush.bf16.msra.mxu0 %v11909
  %11927 = vmatmul.bf16.gmra.mxu0 %v11915
  %v11928 = vpop.f32.mrf.mxu0
  %v11929 = vadd.f32 0.0, %v11928
  %v11930 = vpop.f32.mrf.mxu0
  %v11931 = vadd.f32 0.0, %v11930
  %11932 = vmatmul.bf16.gmra.mxu0 %v11917
  %v11933 = vpop.f32.mrf.mxu0
  %v11934 = vadd.f32 0.0, %v11933
  %v11935 = vpop.f32.mrf.mxu0
  %11936 = vdwg.mxu0
  %v11937 = vadd.f32 %v11799, %v11929
  %v11938 = vadd.f32 %v11800, %v11931
  %v11939 = vadd.f32 %v11801, %v11934
  %v11942 = vrot.slane %v11224, 3
  %v11943 = vrot.slane %v11229, 3
  %v11946 = vsel %vm273, %v11224, %v11942
  %v11948 = vsel %vm5548, %v11224, %v11942
  %v11950 = vrot.slane %v11948, 1
  %v11953 = vsel %vm273, %v11229, %v11943
  %v11955 = vsel %vm5548, %v11229, %v11943
  %v11957 = vrot.slane %v11955, 1
  %v11958 = vunpack.i.l.s16 %v11946
  %v11959 = vunpack.i.h.s16 %v11946
  %v11960 = vunpack.i.l.s16 %v11950
  %v11961 = vunpack.i.l.s16 %v11953
  %v11962 = vunpack.i.h.s16 %v11953
  %v11963 = vunpack.i.l.s16 %v11957
  %s11964 = scalar_lea.vmem %s7, 144
  %v11965 = vld [vmem:[%s11964] sm:$0xf]
  %v11966 = vld [vmem:[%s11964 + $0x4] sm:$0xf]
  %v11967 = vld [vmem:[%s11964 + $0x8] sm:$0xf]
  %v11968 = vld [vmem:[%s11964 + $0xc] sm:$0xf]
  %v11969 = vld [vmem:[%s11964 + $0x10] sm:$0xf]
  %v11970 = vld [vmem:[%s11964 + $0x14] sm:$0xf]
  %v11971 = vpack.i.b16 %v11630, %v11292
  %v11972 = vpack.i.b16 %v11959, %v11958
  %v11973 = vpack.i.b16 %v11299, %v11960
  %v11974 = vpack.i.b16 %v11634, %v11633
  %v11975 = vpack.i.b16 %v11961, %v11635
  %v11976 = vpack.i.b16 %v11963, %v11962
  %11977 = vst [vmem:[#allocation1] ss:$9 sm:$0xff] %v11401
  %s11979 = scalar_lea.vmem [#allocation1], 1
  %11980 = vst [vmem:[%s11979] ss:$9 sm:$0xff] %v11971
  %s11981 = scalar_lea.vmem [#allocation1], 2
  %11982 = vst [vmem:[%s11981] ss:$9 sm:$0xff] %v11729
  %s11984 = scalar_lea.vmem [#allocation1], 3
  %11985 = vst [vmem:[%s11984] ss:$9 sm:$0xff] %v11972
  %s11987 = scalar_lea.vmem [#allocation1], 4
  %11988 = vst [vmem:[%s11987] ss:$9 sm:$0xff] %v11973
  %s11989 = scalar_lea.vmem [#allocation1], 5
  %11990 = vst [vmem:[%s11989] ss:$9 sm:$0xff] %v11406
  %s11992 = scalar_lea.vmem [#allocation1], 6
  %11993 = vst [vmem:[%s11992] ss:$9 sm:$0xff] %v11974
  %s11995 = scalar_lea.vmem [#allocation1], 7
  %11996 = vst [vmem:[%s11995] ss:$9 sm:$0xff] %v11975
  %v11997 = vld [vmem:[#allocation1] sm:$0xff]
  %11999 = vst [vmem:[#allocation1] ss:$9 sm:$0xff] %v11976
  %v12000 = vld [vmem:[#allocation1] sm:$0xff]
  %v12007 = vunpack.c.l.b16 %v11965
  %v12008 = vunpack.c.l.b16 %v11966
  %v12009 = vunpack.c.l.b16 %v11967
  %v12010 = vunpack.c.l.b16 %v11968
  %v12011 = vunpack.c.l.b16 %v11969
  %v12012 = vunpack.c.l.b16 %v11970
  %v12013 = vpack.c.b16 %v12008, %v12007
  %v12014 = vpack.c.b16 %v12010, %v12009
  %v12015 = vpack.c.b16 %v12012, %v12011
  %v12019 = vsel %vm11375, %v11997, 0
  %v12021 = vsel %vm11375, %v12000, 0
  %12023 = vmatpush.bf16.msra.mxu0 0
  %12024 = vmatpush.bf16.msra.mxu0 0
  %12025 = vmatpush.bf16.msra.mxu0 0
  %12026 = vmatpush.bf16.msra.mxu0 0
  %12027 = vmatpush.bf16.msra.mxu0 0
  %12028 = vmatpush.bf16.msra.mxu0 %v12015
  %12029 = vmatpush.bf16.msra.mxu0 %v12014
  %12030 = vmatpush.bf16.msra.mxu0 %v12013
  %12031 = vmatmul.bf16.gmra.mxu0 %v12019
  %v12032 = vpop.f32.mrf.mxu0
  %v12033 = vadd.f32 0.0, %v12032
  %v12034 = vpop.f32.mrf.mxu0
  %v12035 = vadd.f32 0.0, %v12034
  %12036 = vmatmul.bf16.gmra.mxu0 %v12021
  %v12037 = vpop.f32.mrf.mxu0
  %v12038 = vadd.f32 0.0, %v12037
  %v12039 = vpop.f32.mrf.mxu0
  %12040 = vdwg.mxu0
  %v12041 = vadd.f32 %v11937, %v12033
  %v12042 = vadd.f32 %v11938, %v12035
  %v12043 = vadd.f32 %v11939, %v12038
  %v12044 = vunpack.i.h.s16 %v11950
  %v12045 = vunpack.i.h.s16 %v11957
  %s12046 = scalar_lea.vmem %s7, 168
  %v12047 = vld [vmem:[%s12046] sm:$0xf]
  %v12048 = vld [vmem:[%s12046 + $0x4] sm:$0xf]
  %v12049 = vld [vmem:[%s12046 + $0x8] sm:$0xf]
  %v12050 = vld [vmem:[%s12046 + $0xc] sm:$0xf]
  %v12051 = vld [vmem:[%s12046 + $0x10] sm:$0xf]
  %v12052 = vld [vmem:[%s12046 + $0x14] sm:$0xf]
  %v12053 = vpack.i.b16 %v11631, %v11310
  %v12054 = vpack.i.b16 %v11718, %v11632
  %v12055 = vpack.i.b16 %v11960, %v11959
  %v12056 = vpack.i.b16 %v11300, %v12044
  %v12057 = vpack.i.b16 %v11962, %v11719
  %v12058 = vpack.i.b16 %v12045, %v11963
  %12059 = vst [vmem:[#allocation1] ss:$9 sm:$0xff] %v11324
  %s12061 = scalar_lea.vmem [#allocation1], 1
  %12062 = vst [vmem:[%s12061] ss:$9 sm:$0xff] %v12053
  %s12064 = scalar_lea.vmem [#allocation1], 2
  %12065 = vst [vmem:[%s12064] ss:$9 sm:$0xff] %v12054
  %s12067 = scalar_lea.vmem [#allocation1], 3
  %12068 = vst [vmem:[%s12067] ss:$9 sm:$0xff] %v12055
  %s12070 = scalar_lea.vmem [#allocation1], 4
  %12071 = vst [vmem:[%s12070] ss:$9 sm:$0xff] %v12056
  %s12072 = scalar_lea.vmem [#allocation1], 5
  %12073 = vst [vmem:[%s12072] ss:$9 sm:$0xff] %v11329
  %s12074 = scalar_lea.vmem [#allocation1], 6
  %12075 = vst [vmem:[%s12074] ss:$9 sm:$0xff] %v11649
  %s12077 = scalar_lea.vmem [#allocation1], 7
  %12078 = vst [vmem:[%s12077] ss:$9 sm:$0xff] %v12057
  %v12079 = vld [vmem:[#allocation1] sm:$0xff]
  %12081 = vst [vmem:[#allocation1] ss:$9 sm:$0xff] %v12058
  %v12082 = vld [vmem:[#allocation1] sm:$0xff]
  %v12089 = vunpack.c.l.b16 %v12047
  %v12090 = vunpack.c.l.b16 %v12048
  %v12091 = vunpack.c.l.b16 %v12049
  %v12092 = vunpack.c.l.b16 %v12050
  %v12093 = vunpack.c.l.b16 %v12051
  %v12094 = vunpack.c.l.b16 %v12052
  %v12095 = vpack.c.b16 %v12090, %v12089
  %v12096 = vpack.c.b16 %v12092, %v12091
  %v12097 = vpack.c.b16 %v12094, %v12093
  %v12101 = vsel %vm11375, %v12079, 0
  %v12103 = vsel %vm11375, %v12082, 0
  %12105 = vmatpush.bf16.msra.mxu0 0
  %12106 = vmatpush.bf16.msra.mxu0 0
  %12107 = vmatpush.bf16.msra.mxu0 0
  %12108 = vmatpush.bf16.msra.mxu0 0
  %12109 = vmatpush.bf16.msra.mxu0 0
  %12110 = vmatpush.bf16.msra.mxu0 %v12097
  %12111 = vmatpush.bf16.msra.mxu0 %v12096
  %12112 = vmatpush.bf16.msra.mxu0 %v12095
  %12113 = vmatmul.bf16.gmra.mxu0 %v12101
  %v12114 = vpop.f32.mrf.mxu0
  %v12115 = vadd.f32 0.0, %v12114
  %v12116 = vpop.f32.mrf.mxu0
  %v12117 = vadd.f32 0.0, %v12116
  %12118 = vmatmul.bf16.gmra.mxu0 %v12103
  %v12119 = vpop.f32.mrf.mxu0
  %v12120 = vadd.f32 0.0, %v12119
  %v12121 = vpop.f32.mrf.mxu0
  %12122 = vdwg.mxu0
  %v12123 = vadd.f32 %v12041, %v12115
  %v12124 = vadd.f32 %v12042, %v12117
  %v12125 = vadd.f32 %v12043, %v12120
  %12126 = vst [vmem:[#allocation1] sm:$0xff] %v11222
  %s12127 = scalar_lea.vmem [#allocation1], 1
  %v12128 = vld [vmem:[%s12127] ss:$4 sm:$0xff]
  %s12130 = scalar_lea.vmem [#allocation1], 2
  %v12131 = vld [vmem:[%s12130] ss:$4 sm:$0xff]
  %12133 = vst [vmem:[#allocation1 + $0x20] sm:$0xff] %v11223
  %s12134 = scalar_lea.vmem [#allocation1], 33
  %v12135 = vld [vmem:[%s12134] ss:$4 sm:$0xff]
  %s12137 = scalar_lea.vmem [#allocation1], 34
  %v12138 = vld [vmem:[%s12137] ss:$4 sm:$0xff]
  %12140 = vst [vmem:[#allocation1] sm:$0xff] %v11224
  %v12141 = vld [vmem:[%s12127] ss:$4 sm:$0xff]
  %v12143 = vld [vmem:[%s12130] ss:$4 sm:$0xff]
  %12145 = vst [vmem:[#allocation1 + $0x20] sm:$0xff] %v11227
  %v12146 = vld [vmem:[%s12134] ss:$4 sm:$0xff]
  %v12148 = vld [vmem:[%s12137] ss:$4 sm:$0xff]
  %12150 = vst [vmem:[#allocation1] sm:$0xff] %v11228
  %v12151 = vld [vmem:[%s12127] ss:$4 sm:$0xff]
  %v12153 = vld [vmem:[%s12130] ss:$4 sm:$0xff]
  %12155 = vst [vmem:[#allocation1 + $0x20] sm:$0xff] %v11229
  %v12156 = vld [vmem:[%s12134] ss:$4 sm:$0xff]
  %v12158 = vld [vmem:[%s12137] ss:$4 sm:$0xff]
  %v12160 = vunpack.i.l.s16 %v12128
  %v12161 = vunpack.i.h.s16 %v12128
  %v12162 = vunpack.i.l.s16 %v12131
  %v12163 = vunpack.i.l.s16 %v12135
  %v12164 = vunpack.i.h.s16 %v12135
  %v12165 = vunpack.i.l.s16 %v12138
  %v12166 = vunpack.i.l.s16 %v12141
  %v12167 = vunpack.i.h.s16 %v12141
  %v12168 = vunpack.i.l.s16 %v12143
  %v12169 = vunpack.i.l.s16 %v12146
  %v12170 = vunpack.i.h.s16 %v12146
  %v12171 = vunpack.i.l.s16 %v12148
  %v12172 = vunpack.i.l.s16 %v12151
  %v12173 = vunpack.i.h.s16 %v12151
  %v12174 = vunpack.i.l.s16 %v12153
  %v12175 = vunpack.i.l.s16 %v12156
  %v12176 = vunpack.i.h.s16 %v12156
  %v12177 = vunpack.i.l.s16 %v12158
  %s12178 = scalar_lea.vmem %s7, 192
  %v12179 = vld [vmem:[%s12178] sm:$0xf]
  %v12180 = vld [vmem:[%s12178 + $0x4] sm:$0xf]
  %v12181 = vld [vmem:[%s12178 + $0x8] sm:$0xf]
  %v12182 = vld [vmem:[%s12178 + $0xc] sm:$0xf]
  %v12183 = vld [vmem:[%s12178 + $0x10] sm:$0xf]
  %v12184 = vld [vmem:[%s12178 + $0x14] sm:$0xf]
  %v12185 = vpack.i.b16 %v12161, %v12160
  %v12186 = vpack.i.b16 %v12163, %v12162
  %v12187 = vpack.i.b16 %v12165, %v12164
  %v12188 = vpack.i.b16 %v12167, %v12166
  %v12189 = vpack.i.b16 %v12169, %v12168
  %v12190 = vpack.i.b16 %v12171, %v12170
  %v12191 = vpack.i.b16 %v12173, %v12172
  %v12192 = vpack.i.b16 %v12175, %v12174
  %v12193 = vpack.i.b16 %v12177, %v12176
  %12195 = vst [vmem:[#allocation1] ss:$9 sm:$0xff] %v12185
  %s12197 = scalar_lea.vmem [#allocation1], 1
  %12198 = vst [vmem:[%s12197] ss:$9 sm:$0xff] %v12186
  %s12200 = scalar_lea.vmem [#allocation1], 2
  %12201 = vst [vmem:[%s12200] ss:$9 sm:$0xff] %v12187
  %s12203 = scalar_lea.vmem [#allocation1], 3
  %12204 = vst [vmem:[%s12203] ss:$9 sm:$0xff] %v12188
  %s12206 = scalar_lea.vmem [#allocation1], 4
  %12207 = vst [vmem:[%s12206] ss:$9 sm:$0xff] %v12189
  %s12209 = scalar_lea.vmem [#allocation1], 5
  %12210 = vst [vmem:[%s12209] ss:$9 sm:$0xff] %v12190
  %s12212 = scalar_lea.vmem [#allocation1], 6
  %12213 = vst [vmem:[%s12212] ss:$9 sm:$0xff] %v12191
  %s12215 = scalar_lea.vmem [#allocation1], 7
  %12216 = vst [vmem:[%s12215] ss:$9 sm:$0xff] %v12192
  %v12217 = vld [vmem:[#allocation1] sm:$0xff]
  %12219 = vst [vmem:[#allocation1] ss:$9 sm:$0xff] %v12193
  %v12220 = vld [vmem:[#allocation1] sm:$0xff]
  %v12227 = vunpack.c.l.b16 %v12179
  %v12228 = vunpack.c.l.b16 %v12180
  %v12229 = vunpack.c.l.b16 %v12181
  %v12230 = vunpack.c.l.b16 %v12182
  %v12231 = vunpack.c.l.b16 %v12183
  %v12232 = vunpack.c.l.b16 %v12184
  %v12233 = vpack.c.b16 %v12228, %v12227
  %v12234 = vpack.c.b16 %v12230, %v12229
  %v12235 = vpack.c.b16 %v12232, %v12231
  %v12239 = vsel %vm11375, %v12217, 0
  %v12241 = vsel %vm11375, %v12220, 0
  %12243 = vmatpush.bf16.msra.mxu0 0
  %12244 = vmatpush.bf16.msra.mxu0 0
  %12245 = vmatpush.bf16.msra.mxu0 0
  %12246 = vmatpush.bf16.msra.mxu0 0
  %12247 = vmatpush.bf16.msra.mxu0 0
  %12248 = vmatpush.bf16.msra.mxu0 %v12235
  %12249 = vmatpush.bf16.msra.mxu0 %v12234
  %12250 = vmatpush.bf16.msra.mxu0 %v12233
  %12251 = vmatmul.bf16.gmra.mxu0 %v12239
  %v12252 = vpop.f32.mrf.mxu0
  %v12253 = vadd.f32 0.0, %v12252
  %v12254 = vpop.f32.mrf.mxu0
  %v12255 = vadd.f32 0.0, %v12254
  %12256 = vmatmul.bf16.gmra.mxu0 %v12241
  %v12257 = vpop.f32.mrf.mxu0
  %v12258 = vadd.f32 0.0, %v12257
  %v12259 = vpop.f32.mrf.mxu0
  %12260 = vdwg.mxu0
  %v12261 = vadd.f32 %v12123, %v12253
  %v12262 = vadd.f32 %v12124, %v12255
  %v12263 = vadd.f32 %v12125, %v12258
  %v12264 = vld [vmem:[%s8] sm:$0x1]
  %v12266 = vperm.slane %v12264, 0
  %v12268 = vadd.f32 %v12261, %v12266
  %v12269 = vadd.f32 %v12262, %v12266
  %v12270 = vadd.f32 %v12263, %v12266
  %v12274 = vrot.slane %v12268, 1
  %v12275 = vrot.slane %v12268, 2
  %v12276 = vrot.slane %v12268, 3
  %v12277 = vrot.slane %v12268, 4
  %v12278 = vrot.slane %v12268, 5
  %v12279 = vrot.slane %v12268, 6
  %v12280 = vrot.slane %v12268, 7
  %v12281 = vrot.slane %v12269, 1
  %v12282 = vrot.slane %v12269, 2
  %v12283 = vrot.slane %v12269, 3
  %v12284 = vrot.slane %v12269, 4
  %v12285 = vrot.slane %v12269, 5
  %v12286 = vrot.slane %v12269, 6
  %v12287 = vrot.slane %v12269, 7
  %v12288 = vrot.slane %v12270, 1
  %12289 = vst [vmem:[#allocation1] ss:$9 sm:$0xff] %v12268
  %s12290 = scalar_lea.vmem [#allocation1], 1
  %12291 = vst [vmem:[%s12290] ss:$9 sm:$0xff] %v12274
  %s12292 = scalar_lea.vmem [#allocation1], 2
  %12293 = vst [vmem:[%s12292] ss:$9 sm:$0xff] %v12275
  %v12294 = vld [vmem:[#allocation1] sm:$0xff]
  %12295 = vst [vmem:[#allocation1] ss:$9 sm:$0xff] %v12276
  %12296 = vst [vmem:[%s12290] ss:$9 sm:$0xff] %v12277
  %12297 = vst [vmem:[%s12292] ss:$9 sm:$0xff] %v12278
  %v12298 = vld [vmem:[#allocation1] sm:$0xff]
  %12299 = vst [vmem:[#allocation1] ss:$9 sm:$0xff] %v12279
  %12300 = vst [vmem:[%s12290] ss:$9 sm:$0xff] %v12280
  %12301 = vst [vmem:[%s12292] ss:$9 sm:$0xff] %v12269
  %v12302 = vld [vmem:[#allocation1] sm:$0xff]
  %12303 = vst [vmem:[#allocation1] ss:$9 sm:$0xff] %v12281
  %12304 = vst [vmem:[%s12290] ss:$9 sm:$0xff] %v12282
  %12305 = vst [vmem:[%s12292] ss:$9 sm:$0xff] %v12283
  %v12306 = vld [vmem:[#allocation1] sm:$0xff]
  %12307 = vst [vmem:[#allocation1] ss:$9 sm:$0xff] %v12284
  %12308 = vst [vmem:[%s12290] ss:$9 sm:$0xff] %v12285
  %12309 = vst [vmem:[%s12292] ss:$9 sm:$0xff] %v12286
  %v12310 = vld [vmem:[#allocation1] sm:$0xff]
  %12311 = vst [vmem:[#allocation1] ss:$9 sm:$0xff] %v12287
  %12312 = vst [vmem:[%s12290] ss:$9 sm:$0xff] %v12270
  %12313 = vst [vmem:[%s12292] ss:$9 sm:$0xff] %v12288
  %v12314 = vld [vmem:[#allocation1] sm:$0xff]
  %v12321 = vpack.c.bf16 %v12294, %v12294
  %v12322 = vpack.c.bf16 %v12298, %v12298
  %v12323 = vpack.c.bf16 %v12302, %v12302
  %v12324 = vpack.c.bf16 %v12306, %v12306
  %v12325 = vpack.c.bf16 %v12310, %v12310
  %v12326 = vpack.c.bf16 %v12314, %v12314
  %v12327 = vld [vmem:[%s9] sm:$0xf]
  %v12328 = vld [vmem:[%s9 + $0x4] sm:$0xf]
  %v12329 = vld [vmem:[%s9 + $0x8] sm:$0xf]
  %v12330 = vld [vmem:[%s9 + $0xc] sm:$0xf]
  %v12331 = vld [vmem:[%s9 + $0x10] sm:$0xf]
  %v12332 = vld [vmem:[%s9 + $0x14] sm:$0xf]
  %v12333 = vld [vmem:[%s9 + $0x18] sm:$0xf]
  %v12334 = vld [vmem:[%s9 + $0x1c] sm:$0xf]
  %s12335 = scalar_lea.vmem %s9, 32
  %v12336 = vld [vmem:[%s12335] sm:$0xf]
  %v12337 = vld [vmem:[%s12335 + $0x4] sm:$0xf]
  %v12338 = vld [vmem:[%s12335 + $0x8] sm:$0xf]
  %v12339 = vld [vmem:[%s12335 + $0xc] sm:$0xf]
  %v12340 = vld [vmem:[%s12335 + $0x10] sm:$0xf]
  %v12341 = vld [vmem:[%s12335 + $0x14] sm:$0xf]
  %v12342 = vld [vmem:[%s12335 + $0x18] sm:$0xf]
  %v12343 = vld [vmem:[%s12335 + $0x1c] sm:$0xf]
  %v12346 = vunpack.c.l.b16 %v12321
  %v12347 = vunpack.c.l.b16 %v12324
  %v12348 = vpack.c.b16 %v12346, %v12346
  %v12349 = vpack.c.b16 %v12347, %v12347
  %v12350 = vunpack.c.l.b16 %v12348
  %v12351 = vunpack.c.l.b16 %v12349
  %v12352 = vrot.slane %v12350, 1
  %v12353 = vsel %vm5548, %v12351, %v12352
  %v12354 = vpack.c.b16 %v12353, %v12353
  %v12363 = vunpack.c.l.b16 %v12336
  %v12364 = vunpack.c.l.b16 %v12337
  %v12365 = vunpack.c.l.b16 %v12338
  %v12366 = vunpack.c.l.b16 %v12339
  %v12367 = vunpack.c.l.b16 %v12340
  %v12368 = vunpack.c.l.b16 %v12341
  %v12369 = vunpack.c.l.b16 %v12342
  %v12370 = vunpack.c.l.b16 %v12343
  %v12371 = vpack.c.b16 %v12364, %v12363
  %v12372 = vpack.c.b16 %v12366, %v12365
  %v12373 = vpack.c.b16 %v12368, %v12367
  %v12374 = vpack.c.b16 %v12370, %v12369
  %vm12379 = vcmask 523264
  %v12381 = vsel %vm12379, %v12354, 0
  %12383 = vmatpush.bf16.msra.mxu0 0
  %12384 = vmatpush.bf16.msra.mxu0 0
  %12385 = vmatpush.bf16.msra.mxu0 0
  %12386 = vmatpush.bf16.msra.mxu0 0
  %12387 = vmatpush.bf16.msra.mxu0 %v12374
  %12388 = vmatpush.bf16.msra.mxu0 %v12373
  %12389 = vmatpush.bf16.msra.mxu0 %v12372
  %12390 = vmatpush.bf16.msra.mxu0 %v12371
  %12391 = vmatmul.bf16.gmra.mxu0 %v12381
  %v12392 = vpop.f32.mrf.mxu0
  %v12393 = vadd.f32 0.0, %v12392
  %v12394 = vpop.f32.mrf.mxu0
  %12395 = vdwg.mxu0
  %v12396 = vrot.slane %v12351, 7
  %v12397 = vsel %vm5548, %v12396, %v12350
  %v12398 = vpack.c.b16 %v12397, %v12397
  %v12407 = vunpack.c.l.b16 %v12327
  %v12408 = vunpack.c.l.b16 %v12328
  %v12409 = vunpack.c.l.b16 %v12329
  %v12410 = vunpack.c.l.b16 %v12330
  %v12411 = vunpack.c.l.b16 %v12331
  %v12412 = vunpack.c.l.b16 %v12332
  %v12413 = vunpack.c.l.b16 %v12333
  %v12414 = vunpack.c.l.b16 %v12334
  %v12415 = vpack.c.b16 %v12408, %v12407
  %v12416 = vpack.c.b16 %v12410, %v12409
  %v12417 = vpack.c.b16 %v12412, %v12411
  %v12418 = vpack.c.b16 %v12414, %v12413
  %v12424 = vsel %vm12379, %v12398, 0
  %12426 = vmatpush.bf16.msra.mxu0 0
  %12427 = vmatpush.bf16.msra.mxu0 0
  %12428 = vmatpush.bf16.msra.mxu0 0
  %12429 = vmatpush.bf16.msra.mxu0 0
  %12430 = vmatpush.bf16.msra.mxu0 %v12418
  %12431 = vmatpush.bf16.msra.mxu0 %v12417
  %12432 = vmatpush.bf16.msra.mxu0 %v12416
  %12433 = vmatpush.bf16.msra.mxu0 %v12415
  %12434 = vmatmul.bf16.gmra.mxu0 %v12424
  %v12435 = vpop.f32.mrf.mxu0
  %v12436 = vadd.f32 %v12393, %v12435
  %v12437 = vpop.f32.mrf.mxu0
  %12438 = vdwg.mxu0
  %s12439 = scalar_lea.vmem %s9, 64
  %v12440 = vld [vmem:[%s12439] sm:$0xf]
  %v12441 = vld [vmem:[%s12439 + $0x4] sm:$0xf]
  %v12442 = vld [vmem:[%s12439 + $0x8] sm:$0xf]
  %v12443 = vld [vmem:[%s12439 + $0xc] sm:$0xf]
  %v12444 = vld [vmem:[%s12439 + $0x10] sm:$0xf]
  %v12445 = vld [vmem:[%s12439 + $0x14] sm:$0xf]
  %v12446 = vld [vmem:[%s12439 + $0x18] sm:$0xf]
  %v12447 = vld [vmem:[%s12439 + $0x1c] sm:$0xf]
  %v12448 = vrot.slane %v12350, 2
  %v12449 = vrot.slane %v12351, 1
  %v12450 = vsel %vm5548, %v12449, %v12448
  %v12451 = vpack.c.b16 %v12450, %v12450
  %v12460 = vunpack.c.l.b16 %v12440
  %v12461 = vunpack.c.l.b16 %v12441
  %v12462 = vunpack.c.l.b16 %v12442
  %v12463 = vunpack.c.l.b16 %v12443
  %v12464 = vunpack.c.l.b16 %v12444
  %v12465 = vunpack.c.l.b16 %v12445
  %v12466 = vunpack.c.l.b16 %v12446
  %v12467 = vunpack.c.l.b16 %v12447
  %v12468 = vpack.c.b16 %v12461, %v12460
  %v12469 = vpack.c.b16 %v12463, %v12462
  %v12470 = vpack.c.b16 %v12465, %v12464
  %v12471 = vpack.c.b16 %v12467, %v12466
  %v12477 = vsel %vm12379, %v12451, 0
  %12479 = vmatpush.bf16.msra.mxu0 0
  %12480 = vmatpush.bf16.msra.mxu0 0
  %12481 = vmatpush.bf16.msra.mxu0 0
  %12482 = vmatpush.bf16.msra.mxu0 0
  %12483 = vmatpush.bf16.msra.mxu0 %v12471
  %12484 = vmatpush.bf16.msra.mxu0 %v12470
  %12485 = vmatpush.bf16.msra.mxu0 %v12469
  %12486 = vmatpush.bf16.msra.mxu0 %v12468
  %12487 = vmatmul.bf16.gmra.mxu0 %v12477
  %v12488 = vpop.f32.mrf.mxu0
  %v12489 = vadd.f32 0.0, %v12488
  %v12490 = vpop.f32.mrf.mxu0
  %12491 = vdwg.mxu0
  %v12492 = vadd.f32 %v12436, %v12489
  %s12493 = scalar_lea.vmem %s9, 96
  %v12494 = vld [vmem:[%s12493] sm:$0xf]
  %v12495 = vld [vmem:[%s12493 + $0x4] sm:$0xf]
  %v12496 = vld [vmem:[%s12493 + $0x8] sm:$0xf]
  %v12497 = vld [vmem:[%s12493 + $0xc] sm:$0xf]
  %v12498 = vld [vmem:[%s12493 + $0x10] sm:$0xf]
  %v12499 = vld [vmem:[%s12493 + $0x14] sm:$0xf]
  %v12500 = vld [vmem:[%s12493 + $0x18] sm:$0xf]
  %v12501 = vld [vmem:[%s12493 + $0x1c] sm:$0xf]
  %v12504 = vunpack.c.l.b16 %v12322
  %v12505 = vunpack.c.l.b16 %v12325
  %v12506 = vpack.c.b16 %v12504, %v12504
  %v12507 = vpack.c.b16 %v12505, %v12505
  %v12508 = vunpack.c.l.b16 %v12506
  %v12509 = vunpack.c.l.b16 %v12507
  %v12510 = vrot.slane %v12509, 7
  %v12511 = vsel %vm5548, %v12510, %v12508
  %v12512 = vpack.c.b16 %v12511, %v12511
  %v12521 = vunpack.c.l.b16 %v12494
  %v12522 = vunpack.c.l.b16 %v12495
  %v12523 = vunpack.c.l.b16 %v12496
  %v12524 = vunpack.c.l.b16 %v12497
  %v12525 = vunpack.c.l.b16 %v12498
  %v12526 = vunpack.c.l.b16 %v12499
  %v12527 = vunpack.c.l.b16 %v12500
  %v12528 = vunpack.c.l.b16 %v12501
  %v12529 = vpack.c.b16 %v12522, %v12521
  %v12530 = vpack.c.b16 %v12524, %v12523
  %v12531 = vpack.c.b16 %v12526, %v12525
  %v12532 = vpack.c.b16 %v12528, %v12527
  %v12538 = vsel %vm12379, %v12512, 0
  %12540 = vmatpush.bf16.msra.mxu0 0
  %12541 = vmatpush.bf16.msra.mxu0 0
  %12542 = vmatpush.bf16.msra.mxu0 0
  %12543 = vmatpush.bf16.msra.mxu0 0
  %12544 = vmatpush.bf16.msra.mxu0 %v12532
  %12545 = vmatpush.bf16.msra.mxu0 %v12531
  %12546 = vmatpush.bf16.msra.mxu0 %v12530
  %12547 = vmatpush.bf16.msra.mxu0 %v12529
  %12548 = vmatmul.bf16.gmra.mxu0 %v12538
  %v12549 = vpop.f32.mrf.mxu0
  %v12550 = vadd.f32 0.0, %v12549
  %v12551 = vpop.f32.mrf.mxu0
  %12552 = vdwg.mxu0
  %v12553 = vadd.f32 %v12492, %v12550
  %s12554 = scalar_lea.vmem %s9, 128
  %v12555 = vld [vmem:[%s12554] sm:$0xf]
  %v12556 = vld [vmem:[%s12554 + $0x4] sm:$0xf]
  %v12557 = vld [vmem:[%s12554 + $0x8] sm:$0xf]
  %v12558 = vld [vmem:[%s12554 + $0xc] sm:$0xf]
  %v12559 = vld [vmem:[%s12554 + $0x10] sm:$0xf]
  %v12560 = vld [vmem:[%s12554 + $0x14] sm:$0xf]
  %v12561 = vld [vmem:[%s12554 + $0x18] sm:$0xf]
  %v12562 = vld [vmem:[%s12554 + $0x1c] sm:$0xf]
  %v12563 = vrot.slane %v12508, 1
  %v12564 = vsel %vm5548, %v12509, %v12563
  %v12565 = vpack.c.b16 %v12564, %v12564
  %v12574 = vunpack.c.l.b16 %v12555
  %v12575 = vunpack.c.l.b16 %v12556
  %v12576 = vunpack.c.l.b16 %v12557
  %v12577 = vunpack.c.l.b16 %v12558
  %v12578 = vunpack.c.l.b16 %v12559
  %v12579 = vunpack.c.l.b16 %v12560
  %v12580 = vunpack.c.l.b16 %v12561
  %v12581 = vunpack.c.l.b16 %v12562
  %v12582 = vpack.c.b16 %v12575, %v12574
  %v12583 = vpack.c.b16 %v12577, %v12576
  %v12584 = vpack.c.b16 %v12579, %v12578
  %v12585 = vpack.c.b16 %v12581, %v12580
  %v12591 = vsel %vm12379, %v12565, 0
  %12593 = vmatpush.bf16.msra.mxu0 0
  %12594 = vmatpush.bf16.msra.mxu0 0
  %12595 = vmatpush.bf16.msra.mxu0 0
  %12596 = vmatpush.bf16.msra.mxu0 0
  %12597 = vmatpush.bf16.msra.mxu0 %v12585
  %12598 = vmatpush.bf16.msra.mxu0 %v12584
  %12599 = vmatpush.bf16.msra.mxu0 %v12583
  %12600 = vmatpush.bf16.msra.mxu0 %v12582
  %12601 = vmatmul.bf16.gmra.mxu0 %v12591
  %v12602 = vpop.f32.mrf.mxu0
  %v12603 = vadd.f32 0.0, %v12602
  %v12604 = vpop.f32.mrf.mxu0
  %12605 = vdwg.mxu0
  %v12606 = vadd.f32 %v12553, %v12603
  %s12607 = scalar_lea.vmem %s9, 160
  %v12608 = vld [vmem:[%s12607] sm:$0xf]
  %v12609 = vld [vmem:[%s12607 + $0x4] sm:$0xf]
  %v12610 = vld [vmem:[%s12607 + $0x8] sm:$0xf]
  %v12611 = vld [vmem:[%s12607 + $0xc] sm:$0xf]
  %v12612 = vld [vmem:[%s12607 + $0x10] sm:$0xf]
  %v12613 = vld [vmem:[%s12607 + $0x14] sm:$0xf]
  %v12614 = vld [vmem:[%s12607 + $0x18] sm:$0xf]
  %v12615 = vld [vmem:[%s12607 + $0x1c] sm:$0xf]
  %v12616 = vrot.slane %v12508, 2
  %v12617 = vrot.slane %v12509, 1
  %v12618 = vsel %vm5548, %v12617, %v12616
  %v12619 = vpack.c.b16 %v12618, %v12618
  %v12628 = vunpack.c.l.b16 %v12608
  %v12629 = vunpack.c.l.b16 %v12609
  %v12630 = vunpack.c.l.b16 %v12610
  %v12631 = vunpack.c.l.b16 %v12611
  %v12632 = vunpack.c.l.b16 %v12612
  %v12633 = vunpack.c.l.b16 %v12613
  %v12634 = vunpack.c.l.b16 %v12614
  %v12635 = vunpack.c.l.b16 %v12615
  %v12636 = vpack.c.b16 %v12629, %v12628
  %v12637 = vpack.c.b16 %v12631, %v12630
  %v12638 = vpack.c.b16 %v12633, %v12632
  %v12639 = vpack.c.b16 %v12635, %v12634
  %v12645 = vsel %vm12379, %v12619, 0
  %12647 = vmatpush.bf16.msra.mxu0 0
  %12648 = vmatpush.bf16.msra.mxu0 0
  %12649 = vmatpush.bf16.msra.mxu0 0
  %12650 = vmatpush.bf16.msra.mxu0 0
  %12651 = vmatpush.bf16.msra.mxu0 %v12639
  %12652 = vmatpush.bf16.msra.mxu0 %v12638
  %12653 = vmatpush.bf16.msra.mxu0 %v12637
  %12654 = vmatpush.bf16.msra.mxu0 %v12636
  %12655 = vmatmul.bf16.gmra.mxu0 %v12645
  %v12656 = vpop.f32.mrf.mxu0
  %v12657 = vadd.f32 0.0, %v12656
  %v12658 = vpop.f32.mrf.mxu0
  %12659 = vdwg.mxu0
  %v12660 = vadd.f32 %v12606, %v12657
  %s12661 = scalar_lea.vmem %s9, 192
  %v12662 = vld [vmem:[%s12661] sm:$0xf]
  %v12663 = vld [vmem:[%s12661 + $0x4] sm:$0xf]
  %v12664 = vld [vmem:[%s12661 + $0x8] sm:$0xf]
  %v12665 = vld [vmem:[%s12661 + $0xc] sm:$0xf]
  %v12666 = vld [vmem:[%s12661 + $0x10] sm:$0xf]
  %v12667 = vld [vmem:[%s12661 + $0x14] sm:$0xf]
  %v12668 = vld [vmem:[%s12661 + $0x18] sm:$0xf]
  %v12669 = vld [vmem:[%s12661 + $0x1c] sm:$0xf]
  %v12672 = vunpack.c.l.b16 %v12323
  %v12673 = vunpack.c.l.b16 %v12326
  %v12674 = vpack.c.b16 %v12672, %v12672
  %v12675 = vpack.c.b16 %v12673, %v12673
  %v12676 = vunpack.c.l.b16 %v12674
  %v12677 = vunpack.c.l.b16 %v12675
  %v12678 = vrot.slane %v12677, 7
  %v12679 = vsel %vm5548, %v12678, %v12676
  %v12680 = vpack.c.b16 %v12679, %v12679
  %v12689 = vunpack.c.l.b16 %v12662
  %v12690 = vunpack.c.l.b16 %v12663
  %v12691 = vunpack.c.l.b16 %v12664
  %v12692 = vunpack.c.l.b16 %v12665
  %v12693 = vunpack.c.l.b16 %v12666
  %v12694 = vunpack.c.l.b16 %v12667
  %v12695 = vunpack.c.l.b16 %v12668
  %v12696 = vunpack.c.l.b16 %v12669
  %v12697 = vpack.c.b16 %v12690, %v12689
  %v12698 = vpack.c.b16 %v12692, %v12691
  %v12699 = vpack.c.b16 %v12694, %v12693
  %v12700 = vpack.c.b16 %v12696, %v12695
  %v12706 = vsel %vm12379, %v12680, 0
  %12708 = vmatpush.bf16.msra.mxu0 0
  %12709 = vmatpush.bf16.msra.mxu0 0
  %12710 = vmatpush.bf16.msra.mxu0 0
  %12711 = vmatpush.bf16.msra.mxu0 0
  %12712 = vmatpush.bf16.msra.mxu0 %v12700
  %12713 = vmatpush.bf16.msra.mxu0 %v12699
  %12714 = vmatpush.bf16.msra.mxu0 %v12698
  %12715 = vmatpush.bf16.msra.mxu0 %v12697
  %12716 = vmatmul.bf16.gmra.mxu0 %v12706
  %v12717 = vpop.f32.mrf.mxu0
  %v12718 = vadd.f32 0.0, %v12717
  %v12719 = vpop.f32.mrf.mxu0
  %12720 = vdwg.mxu0
  %v12721 = vadd.f32 %v12660, %v12718
  %s12722 = scalar_lea.vmem %s9, 224
  %v12723 = vld [vmem:[%s12722] sm:$0xf]
  %v12724 = vld [vmem:[%s12722 + $0x4] sm:$0xf]
  %v12725 = vld [vmem:[%s12722 + $0x8] sm:$0xf]
  %v12726 = vld [vmem:[%s12722 + $0xc] sm:$0xf]
  %v12727 = vld [vmem:[%s12722 + $0x10] sm:$0xf]
  %v12728 = vld [vmem:[%s12722 + $0x14] sm:$0xf]
  %v12729 = vld [vmem:[%s12722 + $0x18] sm:$0xf]
  %v12730 = vld [vmem:[%s12722 + $0x1c] sm:$0xf]
  %v12731 = vrot.slane %v12676, 1
  %v12732 = vsel %vm5548, %v12677, %v12731
  %v12733 = vpack.c.b16 %v12732, %v12732
  %v12742 = vunpack.c.l.b16 %v12723
  %v12743 = vunpack.c.l.b16 %v12724
  %v12744 = vunpack.c.l.b16 %v12725
  %v12745 = vunpack.c.l.b16 %v12726
  %v12746 = vunpack.c.l.b16 %v12727
  %v12747 = vunpack.c.l.b16 %v12728
  %v12748 = vunpack.c.l.b16 %v12729
  %v12749 = vunpack.c.l.b16 %v12730
  %v12750 = vpack.c.b16 %v12743, %v12742
  %v12751 = vpack.c.b16 %v12745, %v12744
  %v12752 = vpack.c.b16 %v12747, %v12746
  %v12753 = vpack.c.b16 %v12749, %v12748
  %v12759 = vsel %vm12379, %v12733, 0
  %12761 = vmatpush.bf16.msra.mxu0 0
  %12762 = vmatpush.bf16.msra.mxu0 0
  %12763 = vmatpush.bf16.msra.mxu0 0
  %12764 = vmatpush.bf16.msra.mxu0 0
  %12765 = vmatpush.bf16.msra.mxu0 %v12753
  %12766 = vmatpush.bf16.msra.mxu0 %v12752
  %12767 = vmatpush.bf16.msra.mxu0 %v12751
  %12768 = vmatpush.bf16.msra.mxu0 %v12750
  %12769 = vmatmul.bf16.gmra.mxu0 %v12759
  %v12770 = vpop.f32.mrf.mxu0
  %v12771 = vadd.f32 0.0, %v12770
  %v12772 = vpop.f32.mrf.mxu0
  %12773 = vdwg.mxu0
  %v12774 = vadd.f32 %v12721, %v12771
  %s12775 = scalar_lea.vmem %s9, 256
  %v12776 = vld [vmem:[%s12775] sm:$0xf]
  %v12777 = vld [vmem:[%s12775 + $0x4] sm:$0xf]
  %v12778 = vld [vmem:[%s12775 + $0x8] sm:$0xf]
  %v12779 = vld [vmem:[%s12775 + $0xc] sm:$0xf]
  %v12780 = vld [vmem:[%s12775 + $0x10] sm:$0xf]
  %v12781 = vld [vmem:[%s12775 + $0x14] sm:$0xf]
  %v12782 = vld [vmem:[%s12775 + $0x18] sm:$0xf]
  %v12783 = vld [vmem:[%s12775 + $0x1c] sm:$0xf]
  %v12784 = vrot.slane %v12676, 2
  %v12785 = vrot.slane %v12677, 1
  %v12786 = vsel %vm5548, %v12785, %v12784
  %v12787 = vpack.c.b16 %v12786, %v12786
  %v12796 = vunpack.c.l.b16 %v12776
  %v12797 = vunpack.c.l.b16 %v12777
  %v12798 = vunpack.c.l.b16 %v12778
  %v12799 = vunpack.c.l.b16 %v12779
  %v12800 = vunpack.c.l.b16 %v12780
  %v12801 = vunpack.c.l.b16 %v12781
  %v12802 = vunpack.c.l.b16 %v12782
  %v12803 = vunpack.c.l.b16 %v12783
  %v12804 = vpack.c.b16 %v12797, %v12796
  %v12805 = vpack.c.b16 %v12799, %v12798
  %v12806 = vpack.c.b16 %v12801, %v12800
  %v12807 = vpack.c.b16 %v12803, %v12802
  %v12813 = vsel %vm12379, %v12787, 0
  %12815 = vmatpush.bf16.msra.mxu0 0
  %12816 = vmatpush.bf16.msra.mxu0 0
  %12817 = vmatpush.bf16.msra.mxu0 0
  %12818 = vmatpush.bf16.msra.mxu0 0
  %12819 = vmatpush.bf16.msra.mxu0 %v12807
  %12820 = vmatpush.bf16.msra.mxu0 %v12806
  %12821 = vmatpush.bf16.msra.mxu0 %v12805
  %12822 = vmatpush.bf16.msra.mxu0 %v12804
  %12823 = vmatmul.bf16.gmra.mxu0 %v12813
  %v12824 = vpop.f32.mrf.mxu0
  %v12825 = vadd.f32 0.0, %v12824
  %v12826 = vpop.f32.mrf.mxu0
  %12827 = vdwg.mxu0
  %v12828 = vadd.f32 %v12774, %v12825
  %v12829 = vld [vmem:[%s10] sm:$0x1]
  %v12831 = vperm.slane %v12829, 0
  %v12833 = vadd.f32 %v12828, %v12831
  %v12835 = vrot.slane %v12833, 1
  %v12837 = vpack.c.bf16 %v12833, %v12833
  %v12838 = vpack.c.bf16 %v12835, %v12835
  %v12839 = vld [vmem:[%s11] sm:$0xf]
  %v12840 = vld [vmem:[%s11 + $0x4] sm:$0x1]
  %v12841 = vld [vmem:[%s12] sm:$0x1]
  %v12843 = vperm.slane %v12841, 0
  %v12847 = vunpack.c.l.b16 %v12837
  %v12848 = vunpack.c.l.b16 %v12838
  %v12849 = vpack.c.b16 %v12847, %v12847
  %v12850 = vpack.c.b16 %v12848, %v12848
  %v12851 = vunpack.c.l.b16 %v12849
  %v12852 = vunpack.c.l.b16 %v12850
  %v12853 = vrot.slane %v12852, 7
  %v12854 = vsel %vm5548, %v12853, %v12851
  %v12855 = vpack.c.b16 %v12854, %v12854
  %v12858 = vunpack.c.l.b16 %v12839
  %v12859 = vunpack.c.l.b16 %v12840
  %v12860 = vpack.c.b16 %v12859, %v12858
  %vm12861 = vcmask 80896
  %v12863 = vsel %vm12861, %v12855, 0
  %vm12865 = vcmask 1044480
  %v12867 = vsel %vm12865, %v12860, 0
  %12869 = vmatpush.bf16.msra.mxu0 0
  %12870 = vmatpush.bf16.msra.mxu0 0
  %12871 = vmatpush.bf16.msra.mxu0 0
  %12872 = vmatpush.bf16.msra.mxu0 0
  %12873 = vmatpush.bf16.msra.mxu0 0
  %12874 = vmatpush.bf16.msra.mxu0 0
  %12875 = vmatpush.bf16.msra.mxu0 0
  %12876 = vmatpush.bf16.msra.mxu0 %v12867
  %12877 = vmatmul.bf16.gmra.mxu0 %v12863
  %v12878 = vpop.f32.mrf.mxu0
  %v12879 = vadd.f32 %v12843, %v12878
  %v12880 = vpop.f32.mrf.mxu0
  %12881 = vdwg.mxu0
  %v12882 = vld [vmem:[%s13] sm:$0x1]
  %v12884 = vperm.slane %v12882, 0
  %v12886 = vmul.f32 %v12879, %v12884
  %vm12887 = vcmask 74752
  %v12888 = vsel %vm12887, %v12886, 0.0
  %12889 = vadd.xlane.f32.xlu0 %v12888
  %v12890 = vpop.xlane.xlu0 %12889
  %v12891 = vld [vmem:[#allocation2] sm:$0x1]
  %v12893 = vperm.slane %v12891, 0
  %v12895 = vadd.f32 %v12890, %v12893
  %vm12896 = vcmask 1024
  %12897 = vst.msk [vmem:[%s15] sm:$0x3] %vm12896, %v12895
  // Predicated region
  $region62: #{servonet_forward.1} parent=0 // pred_check
    _
  $region63: #{servonet_forward.1} parent=0 // pred_check_branch
    %12899 = sbr.rel (0) target = $region65
  $region64: #{servonet_forward.1} parent=0 // pred_region
    _
  $region65: #{servonet_forward.1} parent=0 // pred_fallthru
    _
  // Predicated region
  $region66: #{servonet_forward.1} parent=0 // pred_check
    _
  $region67: #{servonet_forward.1} parent=0 // pred_check_branch
    %12901 = sbr.rel (0) target = $region69
  $region68: #{servonet_forward.1} parent=0 // pred_region
    _
  $region69: #{servonet_forward.1} parent=0 // pred_fallthru
    _

</llo_original>
